<compile_context>
chip_gen: v7x
topology: tpu7x:2x2x1
jax: 0.10.0
libtpu: 0.0.40
codegen_flags: <defaults>
</compile_context>

<pallas_src>
import numpy as np
import jax
import jax.numpy as jnp
from jax import lax
from jax.experimental import pallas as pl
from jax.experimental.pallas import tpu as pltpu

# ----------------------------- static geometry -----------------------------
H_IN = W_IN = 23                       # model input spatial size
C_IN, C1, C2, C3, C4 = 3, 16, 32, 48, 3
C1P = 4                                # conv1 in-channels padded 3 -> 4 (bf16 alignment)

# conv1: 11x11, pad 5, stride 1
K1, P1 = 11, 5
WP1 = W_IN + 2 * P1                    # 33 (padded width == lane stride)
HP1 = H_IN + 2 * P1                    # 33
H1 = H_IN                              # 23x23 output
Q1 = (H1 - 1) * WP1 + W_IN             # 749 flat output-grid length

# conv2: 3x3, pad 1, stride 2 -- evaluated at stride 1 on the padded grid,
# the stride-2 subsample is applied afterwards via a precomputed 0/1 GEMM.
K2, P2 = 3, 1
WP2 = H1 + 2 * P2                      # 25
HP2 = H1 + 2 * P2                      # 25
H2F = WP2 - K2 + 1                     # 23 (stride-1 grid)
Q2 = (H2F - 1) * WP2 + H2F             # 573
H2 = W2 = 12                           # true stride-2 output
NQ = H2 * W2                           # 144

# conv4: 5x5, pad 2, stride 1, 48 single-channel 12x12 images, Cout=3
K4, P4 = 5, 2
OUT_W = 512                            # lane-dense output width (>= 3*144 = 432)

# ---------------- static (geometry-only) constants, built once ----------------
def _build_sel2():
    # (573, 144): column c = 12*y + x picks stride-1 grid column 2*25*y + 2*x.
    sel = np.zeros((Q2, NQ), np.float32)
    for y in range(H2):
        for x in range(W2):
            sel[2 * WP2 * y + 2 * x, y * W2 + x] = 1.0
    return sel

_SEL2_NP = _build_sel2()

_ys, _xs = np.divmod(np.arange(NQ), W2)
_DY = _ys[:, None] - _ys[None, :] + P4          # row = input pixel, col = output pixel
_DX = _xs[:, None] - _xs[None, :] + P4
_VALID4 = (_DY >= 0) & (_DY < K4) & (_DX >= 0) & (_DX < K4)
_TAP4 = np.where(_VALID4, _DY * K4 + _DX, 0)    # (144, 144) static tap index


def _fused_model_kernel(xpad1_ref, w1_ref, b1_ref, w2_ref, b2_ref,
                        w3_ref, b3_ref, sel2_ref, q4_ref, b4_ref,
                        out_ref, patches1, act1_s, xpad2, patches2):
    f32, bf16 = jnp.float32, jnp.bfloat16

    # ---------------- conv1 : 3(+1 zero) -> 16, 11x11, pad 5 ----------------
    # im2col^T: row block t holds the 4 (padded) input channels of tap (ki,kj);
    # columns are output positions on the WP1-stride grid (contiguous slices).
    for t in range(K1 * K1):
        ki, kj = divmod(t, K1)
        patches1[pl.ds(C1P * t, C1P), :] = xpad1_ref[:, pl.ds(ki * WP1 + kj, Q1)]
    a1 = jnp.dot(w1_ref[...], patches1[...], preferred_element_type=f32)       # (16, Q1)
    act1_s[...] = jnp.maximum(a1 + b1_ref[...], 0.0).astype(bf16)              # bias holds -0.5

    # ---- conv2 input: repack the valid 23x23 into a zero-padded 25x25 grid ----
    xpad2[...] = jnp.zeros(xpad2.shape, bf16)
    for y in range(H1):
        xpad2[:, pl.ds((y + P2) * WP2 + P2, W_IN)] = act1_s[:, pl.ds(y * WP1, W_IN)]

    # ---------------- conv2 : 16 -> 32, 3x3 (stride-1 grid) ----------------
    for t in range(K2 * K2):
        ki, kj = divmod(t, K2)
        patches2[pl.ds(C1 * t, C1), :] = xpad2[:, pl.ds(ki * WP2 + kj, Q2)]
    a2 = jnp.dot(w2_ref[...], patches2[...], preferred_element_type=f32)       # (32, Q2)
    act2 = jnp.maximum(a2 + b2_ref[...], 0.0).astype(bf16)                     # bias holds -0.1

    # ---- stride-2 subsample via precomputed 0/1 selection GEMM (573 -> 144) ----
    # Pure column pick of bf16 values with f32 accumulate => exact.
    act2s = jnp.dot(act2, sel2_ref[...], preferred_element_type=f32).astype(bf16)  # (32, 144)

    # ---------------- conv3 : 1x1 pointwise on the 144 real columns ----------------
    a3 = jnp.dot(w3_ref[...], act2s, preferred_element_type=f32)               # (48, 144)
    act3 = jnp.maximum(a3 + b3_ref[...], 0.0).astype(bf16)                     # bias holds -0.1

    # ---- conv4 : 48 single-channel 12x12 images, 5x5, pad 2, Cout=3 ----
    # One MXU GEMM against the precomputed weight/geometry matrix Q (144, 512).
    a4 = jnp.dot(act3, q4_ref[...], preferred_element_type=f32)                # (48, 512)
    out_ref[...] = jnp.maximum(a4 + b4_ref[...], 0.0)                          # bias row holds b4 - 0.1


def model_forward(params, x1):
    w1, b1 = params["conv1"]
    w2, b2 = params["conv2"]
    w3, b3 = params["conv3"]
    w4, b4 = params["conv4"]

    # conv1 input: zero-pad spatially AND pad channels 3->4 in the wrapper.
    xpad = jnp.pad(x1.reshape(C_IN, H_IN, W_IN),
                   ((0, C1P - C_IN), (P1, P1), (P1, P1)))
    xpad1 = xpad.reshape(C1P, HP1 * WP1).astype(jnp.bfloat16)

    # Weights in (Cout, tap*Cin) layout matching the in-kernel im2col row order.
    w1m = jnp.pad(jnp.transpose(w1, (0, 2, 3, 1)),
                  ((0, 0), (0, 0), (0, 0), (0, C1P - C_IN)))
    w1m = w1m.reshape(C1, K1 * K1 * C1P).astype(jnp.bfloat16)
    w2m = jnp.transpose(w2, (0, 2, 3, 1)).reshape(C2, K2 * K2 * C1).astype(jnp.bfloat16)
    w3m = w3.reshape(C3, C2).astype(jnp.bfloat16)

    # Epilogue constants folded into the biases.
    b1e = (b1 - 0.5).reshape(C1, 1).astype(jnp.float32)
    b2e = (b2 - 0.1).reshape(C2, 1).astype(jnp.float32)
    b3e = (b3 - 0.1).reshape(C3, 1).astype(jnp.float32)

    # Static stride-2 selector, hoisted out of the kernel.
    sel2 = jnp.asarray(_SEL2_NP, dtype=jnp.bfloat16)                    # (573, 144)

    # conv4 as GEMM: Q[p, c*144 + q] = w4[c, 0, yi-yo+2, xi-xo+2] (else 0),
    # p = 12*yi + xi (input pixel), q = 12*yo + xo (output pixel).
    w4f = w4.reshape(C4, K4 * K4)
    qc = jnp.where(jnp.asarray(_VALID4), w4f[:, _TAP4], 0.0)            # (3, 144, 144)
    q4 = jnp.transpose(qc, (1, 0, 2)).reshape(NQ, C4 * NQ)              # (144, 432)
    q4 = jnp.pad(q4, ((0, 0), (0, OUT_W - C4 * NQ))).astype(jnp.bfloat16)
    b4row = jnp.pad(jnp.repeat(b4 - 0.1, NQ),
                    (0, OUT_W - C4 * NQ)).reshape(1, OUT_W).astype(jnp.float32)

    out = pl.pallas_call(
        _fused_model_kernel,
        out_shape=jax.ShapeDtypeStruct((C3, OUT_W), jnp.float32),
        grid=(1,),
        in_specs=[
            pl.BlockSpec((C1P, HP1 * WP1), lambda i: (0, 0)),    # padded input
            pl.BlockSpec((C1, K1 * K1 * C1P), lambda i: (0, 0)),  # w1
            pl.BlockSpec((C1, 1), lambda i: (0, 0)),              # b1 - 0.5
            pl.BlockSpec((C2, K2 * K2 * C1), lambda i: (0, 0)),   # w2
            pl.BlockSpec((C2, 1), lambda i: (0, 0)),              # b2 - 0.1
            pl.BlockSpec((C3, C2), lambda i: (0, 0)),             # w3
            pl.BlockSpec((C3, 1), lambda i: (0, 0)),              # b3 - 0.1
            pl.BlockSpec((Q2, NQ), lambda i: (0, 0)),             # stride-2 selector
            pl.BlockSpec((NQ, OUT_W), lambda i: (0, 0)),          # conv4 geometry GEMM matrix
            pl.BlockSpec((1, OUT_W), lambda i: (0, 0)),           # conv4 bias row
        ],
        out_specs=pl.BlockSpec((C3, OUT_W), lambda i: (0, 0)),
        scratch_shapes=[
            pltpu.VMEM((K1 * K1 * C1P, Q1), jnp.bfloat16),   # patches1 (im2col^T, conv1)
            pltpu.VMEM((C1, Q1), jnp.bfloat16),              # act1
            pltpu.VMEM((C1, HP2 * WP2), jnp.bfloat16),       # xpad2 (padded conv2 input)
            pltpu.VMEM((K2 * K2 * C1, Q2), jnp.bfloat16),    # patches2 (im2col^T, conv2)
        ],
        compiler_params=pltpu.CompilerParams(dimension_semantics=("arbitrary",)),
    )(xpad1, w1m, b1e, w2m, b2e, w3m, b3e, sel2, q4, b4row)

    # (48, 512) -> drop garbage lanes -> (48, 3, 12, 12)
    return out[:, : C4 * NQ].reshape(C3, C4, H2, W2)


def init_params(key):
    """Deterministic PyTorch-style (uniform +-1/sqrt(fan_in)) init for all convs."""
    def conv_init(k, c_out, c_in, kh, kw):
        k1, k2 = jax.random.split(k)
        bound = 1.0 / float((c_in * kh * kw) ** 0.5)
        w = jax.random.uniform(k1, (c_out, c_in, kh, kw), jnp.float32, -bound, bound)
        b = jax.random.uniform(k2, (c_out,), jnp.float32, -bound, bound)
        return w, b

    keys = jax.random.split(key, 4)
    return {
        "conv1": conv_init(keys[0], 16, 3, 11, 11),
        "conv2": conv_init(keys[1], 32, 16, 3, 3),
        "conv3": conv_init(keys[2], 48, 32, 1, 1),
        "conv4": conv_init(keys[3], 3, 1, 5, 5),
    }


# ----------------------- pure-JAX reference for validation -----------------------
def _ref_conv_sub_relu(x, w, b, stride, padding, sub_const):
    out = lax.conv_general_dilated(
        x, w, window_strides=stride,
        padding=[(padding[0], padding[0]), (padding[1], padding[1])],
        dimension_numbers=("NCHW", "OIHW", "NCHW"),
        precision=lax.Precision.HIGHEST,
    )
    out = out + b[None, :, None, None]
    return jnp.maximum(out - sub_const, 0.0)


def ref_forward(params, x1):
    w1, b1 = params["conv1"]
    w2, b2 = params["conv2"]
    w3, b3 = params["conv3"]
    w4, b4 = params["conv4"]
    v3 = _ref_conv_sub_relu(x1, w1, b1, (1, 1), (5, 5), 0.5)
    v4 = jnp.squeeze(v3, 0)
    v6 = _ref_conv_sub_relu(v4[None], w2, b2, (2, 2), (1, 1), 0.1)
    v9 = _ref_conv_sub_relu(v6, w3, b3, (1, 1), (0, 0), 0.1)
    v11 = jnp.squeeze(v9, 0)
    # TODO(synk): the original PyTorch module raises here (conv4 expects 1 input
    # channel but receives 48); we keep the established shape-consistent reading:
    # 48 independent single-channel 12x12 images.
    return _ref_conv_sub_relu(v11[:, None, :, :], w4, b4, (1, 1), (2, 2), 0.1)


if __name__ == "__main__":
    key = jax.random.PRNGKey(0)
    kp, kx = jax.random.split(key)
    params = init_params(kp)
    x1 = jax.random.normal(kx, (1, 3, 23, 23), dtype=jnp.float32)

    out = jax.jit(model_forward)(params, x1)
    out = jax.block_until_ready(out)
    assert out.shape == (48, 3, 12, 12), out.shape

    ref = ref_forward(params, x1)
    err = float(jnp.max(jnp.abs(out - ref)))
    # bf16 MXU operands / f32 accumulation on all four convs: expect O(1e-3).
    assert err < 2e-2, f"max abs error vs reference: {err}"

    print("KERNEL_OK")
</pallas_src>

<mosaic_0001>
module attributes {stable_mosaic.version = 11 : i64} {
  func.func @_fused_model_kernel(%arg0: i32, %arg1: memref<4x1089xbf16, #tpu.memory_space<vmem>>, %arg2: memref<16x484xbf16, #tpu.memory_space<vmem>>, %arg3: memref<16x1xf32, #tpu.memory_space<vmem>>, %arg4: memref<32x144xbf16, #tpu.memory_space<vmem>>, %arg5: memref<32x1xf32, #tpu.memory_space<vmem>>, %arg6: memref<48x32xbf16, #tpu.memory_space<vmem>>, %arg7: memref<48x1xf32, #tpu.memory_space<vmem>>, %arg8: memref<573x144xbf16, #tpu.memory_space<vmem>>, %arg9: memref<144x512xbf16, #tpu.memory_space<vmem>>, %arg10: memref<1x512xf32, #tpu.memory_space<vmem>>, %arg11: memref<48x512xf32, #tpu.memory_space<vmem>>, %arg12: memref<484x749xbf16, #tpu.memory_space<vmem>>, %arg13: memref<16x749xbf16, #tpu.memory_space<vmem>>, %arg14: memref<16x625xbf16, #tpu.memory_space<vmem>>, %arg15: memref<144x573xbf16, #tpu.memory_space<vmem>>) attributes {dimension_semantics = [#tpu.dimension_semantics<arbitrary>], iteration_bounds = array<i64: 1>, scalar_prefetch = 0 : i64, scratch_operands = 4 : i64, tpu.core_type = #tpu.core_type<tc>, window_params = [{pipeline_mode = #tpu.pipeline_mode<synchronous>, transform_indices = @transform_0, window_bounds = array<i64: 4, 1089>}, {pipeline_mode = #tpu.pipeline_mode<synchronous>, transform_indices = @transform_1, window_bounds = array<i64: 16, 484>}, {pipeline_mode = #tpu.pipeline_mode<synchronous>, transform_indices = @transform_2, window_bounds = array<i64: 16, 1>}, {pipeline_mode = #tpu.pipeline_mode<synchronous>, transform_indices = @transform_3, window_bounds = array<i64: 32, 144>}, {pipeline_mode = #tpu.pipeline_mode<synchronous>, transform_indices = @transform_4, window_bounds = array<i64: 32, 1>}, {pipeline_mode = #tpu.pipeline_mode<synchronous>, transform_indices = @transform_5, window_bounds = array<i64: 48, 32>}, {pipeline_mode = #tpu.pipeline_mode<synchronous>, transform_indices = @transform_6, window_bounds = array<i64: 48, 1>}, {pipeline_mode = #tpu.pipeline_mode<synchronous>, transform_indices = @transform_7, window_bounds = array<i64: 573, 144>}, {pipeline_mode = #tpu.pipeline_mode<synchronous>, transform_indices = @transform_8, window_bounds = array<i64: 144, 512>}, {pipeline_mode = #tpu.pipeline_mode<synchronous>, transform_indices = @transform_9, window_bounds = array<i64: 1, 512>}, {pipeline_mode = #tpu.pipeline_mode<synchronous>, transform_indices = @transform_10, window_bounds = array<i64: 48, 512>}]} {
    %c0 = arith.constant 0 : index
    %c0_0 = arith.constant 0 : index
    %0 = vector.load %arg1[%c0, %c0_0] : memref<4x1089xbf16, #tpu.memory_space<vmem>>, vector<4x749xbf16>
    %c0_1 = arith.constant 0 : index
    %c0_2 = arith.constant 0 : index
    %1 = vector.load %arg12[%c0_1, %c0_2] : memref<484x749xbf16, #tpu.memory_space<vmem>>, vector<4x749xbf16>
    tpu.vector_store %arg12[%c0_1, %c0_2], %0 {strides = array<i32>} : memref<484x749xbf16, #tpu.memory_space<vmem>>, vector<4x749xbf16>,
    %c0_3 = arith.constant 0 : index
    %c1 = arith.constant 1 : index
    %2 = vector.load %arg1[%c0_3, %c1] : memref<4x1089xbf16, #tpu.memory_space<vmem>>, vector<4x749xbf16>
    %c4 = arith.constant 4 : index
    %c0_4 = arith.constant 0 : index
    %3 = vector.load %arg12[%c4, %c0_4] : memref<484x749xbf16, #tpu.memory_space<vmem>>, vector<4x749xbf16>
    tpu.vector_store %arg12[%c4, %c0_4], %2 {strides = array<i32>} : memref<484x749xbf16, #tpu.memory_space<vmem>>, vector<4x749xbf16>,
    %c0_5 = arith.constant 0 : index
    %c2 = arith.constant 2 : index
    %4 = vector.load %arg1[%c0_5, %c2] : memref<4x1089xbf16, #tpu.memory_space<vmem>>, vector<4x749xbf16>
    %c8 = arith.constant 8 : index
    %c0_6 = arith.constant 0 : index
    %5 = vector.load %arg12[%c8, %c0_6] : memref<484x749xbf16, #tpu.memory_space<vmem>>, vector<4x749xbf16>
    tpu.vector_store %arg12[%c8, %c0_6], %4 {strides = array<i32>} : memref<484x749xbf16, #tpu.memory_space<vmem>>, vector<4x749xbf16>,
    %c0_7 = arith.constant 0 : index
    %c3 = arith.constant 3 : index
    %6 = vector.load %arg1[%c0_7, %c3] : memref<4x1089xbf16, #tpu.memory_space<vmem>>, vector<4x749xbf16>
    %c12 = arith.constant 12 : index
    %c0_8 = arith.constant 0 : index
    %7 = vector.load %arg12[%c12, %c0_8] : memref<484x749xbf16, #tpu.memory_space<vmem>>, vector<4x749xbf16>
    tpu.vector_store %arg12[%c12, %c0_8], %6 {strides = array<i32>} : memref<484x749xbf16, #tpu.memory_space<vmem>>, vector<4x749xbf16>,
    %c0_9 = arith.constant 0 : index
    %c4_10 = arith.constant 4 : index
    %8 = vector.load %arg1[%c0_9, %c4_10] : memref<4x1089xbf16, #tpu.memory_space<vmem>>, vector<4x749xbf16>
    %c16 = arith.constant 16 : index
    %c0_11 = arith.constant 0 : index
    %9 = vector.load %arg12[%c16, %c0_11] : memref<484x749xbf16, #tpu.memory_space<vmem>>, vector<4x749xbf16>
    tpu.vector_store %arg12[%c16, %c0_11], %8 {strides = array<i32>} : memref<484x749xbf16, #tpu.memory_space<vmem>>, vector<4x749xbf16>,
    %c0_12 = arith.constant 0 : index
    %c5 = arith.constant 5 : index
    %10 = vector.load %arg1[%c0_12, %c5] : memref<4x1089xbf16, #tpu.memory_space<vmem>>, vector<4x749xbf16>
    %c20 = arith.constant 20 : index
    %c0_13 = arith.constant 0 : index
    %11 = vector.load %arg12[%c20, %c0_13] : memref<484x749xbf16, #tpu.memory_space<vmem>>, vector<4x749xbf16>
    tpu.vector_store %arg12[%c20, %c0_13], %10 {strides = array<i32>} : memref<484x749xbf16, #tpu.memory_space<vmem>>, vector<4x749xbf16>,
    %c0_14 = arith.constant 0 : index
    %c6 = arith.constant 6 : index
    %12 = vector.load %arg1[%c0_14, %c6] : memref<4x1089xbf16, #tpu.memory_space<vmem>>, vector<4x749xbf16>
    %c24 = arith.constant 24 : index
    %c0_15 = arith.constant 0 : index
    %13 = vector.load %arg12[%c24, %c0_15] : memref<484x749xbf16, #tpu.memory_space<vmem>>, vector<4x749xbf16>
    tpu.vector_store %arg12[%c24, %c0_15], %12 {strides = array<i32>} : memref<484x749xbf16, #tpu.memory_space<vmem>>, vector<4x749xbf16>,
    %c0_16 = arith.constant 0 : index
    %c7 = arith.constant 7 : index
    %14 = vector.load %arg1[%c0_16, %c7] : memref<4x1089xbf16, #tpu.memory_space<vmem>>, vector<4x749xbf16>
    %c28 = arith.constant 28 : index
    %c0_17 = arith.constant 0 : index
    %15 = vector.load %arg12[%c28, %c0_17] : memref<484x749xbf16, #tpu.memory_space<vmem>>, vector<4x749xbf16>
    tpu.vector_store %arg12[%c28, %c0_17], %14 {strides = array<i32>} : memref<484x749xbf16, #tpu.memory_space<vmem>>, vector<4x749xbf16>,
    %c0_18 = arith.constant 0 : index
    %c8_19 = arith.constant 8 : index
    %16 = vector.load %arg1[%c0_18, %c8_19] : memref<4x1089xbf16, #tpu.memory_space<vmem>>, vector<4x749xbf16>
    %c32 = arith.constant 32 : index
    %c0_20 = arith.constant 0 : index
    %17 = vector.load %arg12[%c32, %c0_20] : memref<484x749xbf16, #tpu.memory_space<vmem>>, vector<4x749xbf16>
    tpu.vector_store %arg12[%c32, %c0_20], %16 {strides = array<i32>} : memref<484x749xbf16, #tpu.memory_space<vmem>>, vector<4x749xbf16>,
    %c0_21 = arith.constant 0 : index
    %c9 = arith.constant 9 : index
    %18 = vector.load %arg1[%c0_21, %c9] : memref<4x1089xbf16, #tpu.memory_space<vmem>>, vector<4x749xbf16>
    %c36 = arith.constant 36 : index
    %c0_22 = arith.constant 0 : index
    %19 = vector.load %arg12[%c36, %c0_22] : memref<484x749xbf16, #tpu.memory_space<vmem>>, vector<4x749xbf16>
    tpu.vector_store %arg12[%c36, %c0_22], %18 {strides = array<i32>} : memref<484x749xbf16, #tpu.memory_space<vmem>>, vector<4x749xbf16>,
    %c0_23 = arith.constant 0 : index
    %c10 = arith.constant 10 : index
    %20 = vector.load %arg1[%c0_23, %c10] : memref<4x1089xbf16, #tpu.memory_space<vmem>>, vector<4x749xbf16>
    %c40 = arith.constant 40 : index
    %c0_24 = arith.constant 0 : index
    %21 = vector.load %arg12[%c40, %c0_24] : memref<484x749xbf16, #tpu.memory_space<vmem>>, vector<4x749xbf16>
    tpu.vector_store %arg12[%c40, %c0_24], %20 {strides = array<i32>} : memref<484x749xbf16, #tpu.memory_space<vmem>>, vector<4x749xbf16>,
    %c0_25 = arith.constant 0 : index
    %c33 = arith.constant 33 : index
    %22 = vector.load %arg1[%c0_25, %c33] : memref<4x1089xbf16, #tpu.memory_space<vmem>>, vector<4x749xbf16>
    %c44 = arith.constant 44 : index
    %c0_26 = arith.constant 0 : index
    %23 = vector.load %arg12[%c44, %c0_26] : memref<484x749xbf16, #tpu.memory_space<vmem>>, vector<4x749xbf16>
    tpu.vector_store %arg12[%c44, %c0_26], %22 {strides = array<i32>} : memref<484x749xbf16, #tpu.memory_space<vmem>>, vector<4x749xbf16>,
    %c0_27 = arith.constant 0 : index
    %c34 = arith.constant 34 : index
    %24 = vector.load %arg1[%c0_27, %c34] : memref<4x1089xbf16, #tpu.memory_space<vmem>>, vector<4x749xbf16>
    %c48 = arith.constant 48 : index
    %c0_28 = arith.constant 0 : index
    %25 = vector.load %arg12[%c48, %c0_28] : memref<484x749xbf16, #tpu.memory_space<vmem>>, vector<4x749xbf16>
    tpu.vector_store %arg12[%c48, %c0_28], %24 {strides = array<i32>} : memref<484x749xbf16, #tpu.memory_space<vmem>>, vector<4x749xbf16>,
    %c0_29 = arith.constant 0 : index
    %c35 = arith.constant 35 : index
    %26 = vector.load %arg1[%c0_29, %c35] : memref<4x1089xbf16, #tpu.memory_space<vmem>>, vector<4x749xbf16>
    %c52 = arith.constant 52 : index
    %c0_30 = arith.constant 0 : index
    %27 = vector.load %arg12[%c52, %c0_30] : memref<484x749xbf16, #tpu.memory_space<vmem>>, vector<4x749xbf16>
    tpu.vector_store %arg12[%c52, %c0_30], %26 {strides = array<i32>} : memref<484x749xbf16, #tpu.memory_space<vmem>>, vector<4x749xbf16>,
    %c0_31 = arith.constant 0 : index
    %c36_32 = arith.constant 36 : index
    %28 = vector.load %arg1[%c0_31, %c36_32] : memref<4x1089xbf16, #tpu.memory_space<vmem>>, vector<4x749xbf16>
    %c56 = arith.constant 56 : index
    %c0_33 = arith.constant 0 : index
    %29 = vector.load %arg12[%c56, %c0_33] : memref<484x749xbf16, #tpu.memory_space<vmem>>, vector<4x749xbf16>
    tpu.vector_store %arg12[%c56, %c0_33], %28 {strides = array<i32>} : memref<484x749xbf16, #tpu.memory_space<vmem>>, vector<4x749xbf16>,
    %c0_34 = arith.constant 0 : index
    %c37 = arith.constant 37 : index
    %30 = vector.load %arg1[%c0_34, %c37] : memref<4x1089xbf16, #tpu.memory_space<vmem>>, vector<4x749xbf16>
    %c60 = arith.constant 60 : index
    %c0_35 = arith.constant 0 : index
    %31 = vector.load %arg12[%c60, %c0_35] : memref<484x749xbf16, #tpu.memory_space<vmem>>, vector<4x749xbf16>
    tpu.vector_store %arg12[%c60, %c0_35], %30 {strides = array<i32>} : memref<484x749xbf16, #tpu.memory_space<vmem>>, vector<4x749xbf16>,
    %c0_36 = arith.constant 0 : index
    %c38 = arith.constant 38 : index
    %32 = vector.load %arg1[%c0_36, %c38] : memref<4x1089xbf16, #tpu.memory_space<vmem>>, vector<4x749xbf16>
    %c64 = arith.constant 64 : index
    %c0_37 = arith.constant 0 : index
    %33 = vector.load %arg12[%c64, %c0_37] : memref<484x749xbf16, #tpu.memory_space<vmem>>, vector<4x749xbf16>
    tpu.vector_store %arg12[%c64, %c0_37], %32 {strides = array<i32>} : memref<484x749xbf16, #tpu.memory_space<vmem>>, vector<4x749xbf16>,
    %c0_38 = arith.constant 0 : index
    %c39 = arith.constant 39 : index
    %34 = vector.load %arg1[%c0_38, %c39] : memref<4x1089xbf16, #tpu.memory_space<vmem>>, vector<4x749xbf16>
    %c68 = arith.constant 68 : index
    %c0_39 = arith.constant 0 : index
    %35 = vector.load %arg12[%c68, %c0_39] : memref<484x749xbf16, #tpu.memory_space<vmem>>, vector<4x749xbf16>
    tpu.vector_store %arg12[%c68, %c0_39], %34 {strides = array<i32>} : memref<484x749xbf16, #tpu.memory_space<vmem>>, vector<4x749xbf16>,
    %c0_40 = arith.constant 0 : index
    %c40_41 = arith.constant 40 : index
    %36 = vector.load %arg1[%c0_40, %c40_41] : memref<4x1089xbf16, #tpu.memory_space<vmem>>, vector<4x749xbf16>
    %c72 = arith.constant 72 : index
    %c0_42 = arith.constant 0 : index
    %37 = vector.load %arg12[%c72, %c0_42] : memref<484x749xbf16, #tpu.memory_space<vmem>>, vector<4x749xbf16>
    tpu.vector_store %arg12[%c72, %c0_42], %36 {strides = array<i32>} : memref<484x749xbf16, #tpu.memory_space<vmem>>, vector<4x749xbf16>,
    %c0_43 = arith.constant 0 : index
    %c41 = arith.constant 41 : index
    %38 = vector.load %arg1[%c0_43, %c41] : memref<4x1089xbf16, #tpu.memory_space<vmem>>, vector<4x749xbf16>
    %c76 = arith.constant 76 : index
    %c0_44 = arith.constant 0 : index
    %39 = vector.load %arg12[%c76, %c0_44] : memref<484x749xbf16, #tpu.memory_space<vmem>>, vector<4x749xbf16>
    tpu.vector_store %arg12[%c76, %c0_44], %38 {strides = array<i32>} : memref<484x749xbf16, #tpu.memory_space<vmem>>, vector<4x749xbf16>,
    %c0_45 = arith.constant 0 : index
    %c42 = arith.constant 42 : index
    %40 = vector.load %arg1[%c0_45, %c42] : memref<4x1089xbf16, #tpu.memory_space<vmem>>, vector<4x749xbf16>
    %c80 = arith.constant 80 : index
    %c0_46 = arith.constant 0 : index
    %41 = vector.load %arg12[%c80, %c0_46] : memref<484x749xbf16, #tpu.memory_space<vmem>>, vector<4x749xbf16>
    tpu.vector_store %arg12[%c80, %c0_46], %40 {strides = array<i32>} : memref<484x749xbf16, #tpu.memory_space<vmem>>, vector<4x749xbf16>,
    %c0_47 = arith.constant 0 : index
    %c43 = arith.constant 43 : index
    %42 = vector.load %arg1[%c0_47, %c43] : memref<4x1089xbf16, #tpu.memory_space<vmem>>, vector<4x749xbf16>
    %c84 = arith.constant 84 : index
    %c0_48 = arith.constant 0 : index
    %43 = vector.load %arg12[%c84, %c0_48] : memref<484x749xbf16, #tpu.memory_space<vmem>>, vector<4x749xbf16>
    tpu.vector_store %arg12[%c84, %c0_48], %42 {strides = array<i32>} : memref<484x749xbf16, #tpu.memory_space<vmem>>, vector<4x749xbf16>,
    %c0_49 = arith.constant 0 : index
    %c66 = arith.constant 66 : index
    %44 = vector.load %arg1[%c0_49, %c66] : memref<4x1089xbf16, #tpu.memory_space<vmem>>, vector<4x749xbf16>
    %c88 = arith.constant 88 : index
    %c0_50 = arith.constant 0 : index
    %45 = vector.load %arg12[%c88, %c0_50] : memref<484x749xbf16, #tpu.memory_space<vmem>>, vector<4x749xbf16>
    tpu.vector_store %arg12[%c88, %c0_50], %44 {strides = array<i32>} : memref<484x749xbf16, #tpu.memory_space<vmem>>, vector<4x749xbf16>,
    %c0_51 = arith.constant 0 : index
    %c67 = arith.constant 67 : index
    %46 = vector.load %arg1[%c0_51, %c67] : memref<4x1089xbf16, #tpu.memory_space<vmem>>, vector<4x749xbf16>
    %c92 = arith.constant 92 : index
    %c0_52 = arith.constant 0 : index
    %47 = vector.load %arg12[%c92, %c0_52] : memref<484x749xbf16, #tpu.memory_space<vmem>>, vector<4x749xbf16>
    tpu.vector_store %arg12[%c92, %c0_52], %46 {strides = array<i32>} : memref<484x749xbf16, #tpu.memory_space<vmem>>, vector<4x749xbf16>,
    %c0_53 = arith.constant 0 : index
    %c68_54 = arith.constant 68 : index
    %48 = vector.load %arg1[%c0_53, %c68_54] : memref<4x1089xbf16, #tpu.memory_space<vmem>>, vector<4x749xbf16>
    %c96 = arith.constant 96 : index
    %c0_55 = arith.constant 0 : index
    %49 = vector.load %arg12[%c96, %c0_55] : memref<484x749xbf16, #tpu.memory_space<vmem>>, vector<4x749xbf16>
    tpu.vector_store %arg12[%c96, %c0_55], %48 {strides = array<i32>} : memref<484x749xbf16, #tpu.memory_space<vmem>>, vector<4x749xbf16>,
    %c0_56 = arith.constant 0 : index
    %c69 = arith.constant 69 : index
    %50 = vector.load %arg1[%c0_56, %c69] : memref<4x1089xbf16, #tpu.memory_space<vmem>>, vector<4x749xbf16>
    %c100 = arith.constant 100 : index
    %c0_57 = arith.constant 0 : index
    %51 = vector.load %arg12[%c100, %c0_57] : memref<484x749xbf16, #tpu.memory_space<vmem>>, vector<4x749xbf16>
    tpu.vector_store %arg12[%c100, %c0_57], %50 {strides = array<i32>} : memref<484x749xbf16, #tpu.memory_space<vmem>>, vector<4x749xbf16>,
    %c0_58 = arith.constant 0 : index
    %c70 = arith.constant 70 : index
    %52 = vector.load %arg1[%c0_58, %c70] : memref<4x1089xbf16, #tpu.memory_space<vmem>>, vector<4x749xbf16>
    %c104 = arith.constant 104 : index
    %c0_59 = arith.constant 0 : index
    %53 = vector.load %arg12[%c104, %c0_59] : memref<484x749xbf16, #tpu.memory_space<vmem>>, vector<4x749xbf16>
    tpu.vector_store %arg12[%c104, %c0_59], %52 {strides = array<i32>} : memref<484x749xbf16, #tpu.memory_space<vmem>>, vector<4x749xbf16>,
    %c0_60 = arith.constant 0 : index
    %c71 = arith.constant 71 : index
    %54 = vector.load %arg1[%c0_60, %c71] : memref<4x1089xbf16, #tpu.memory_space<vmem>>, vector<4x749xbf16>
    %c108 = arith.constant 108 : index
    %c0_61 = arith.constant 0 : index
    %55 = vector.load %arg12[%c108, %c0_61] : memref<484x749xbf16, #tpu.memory_space<vmem>>, vector<4x749xbf16>
    tpu.vector_store %arg12[%c108, %c0_61], %54 {strides = array<i32>} : memref<484x749xbf16, #tpu.memory_space<vmem>>, vector<4x749xbf16>,
    %c0_62 = arith.constant 0 : index
    %c72_63 = arith.constant 72 : index
    %56 = vector.load %arg1[%c0_62, %c72_63] : memref<4x1089xbf16, #tpu.memory_space<vmem>>, vector<4x749xbf16>
    %c112 = arith.constant 112 : index
    %c0_64 = arith.constant 0 : index
    %57 = vector.load %arg12[%c112, %c0_64] : memref<484x749xbf16, #tpu.memory_space<vmem>>, vector<4x749xbf16>
    tpu.vector_store %arg12[%c112, %c0_64], %56 {strides = array<i32>} : memref<484x749xbf16, #tpu.memory_space<vmem>>, vector<4x749xbf16>,
    %c0_65 = arith.constant 0 : index
    %c73 = arith.constant 73 : index
    %58 = vector.load %arg1[%c0_65, %c73] : memref<4x1089xbf16, #tpu.memory_space<vmem>>, vector<4x749xbf16>
    %c116 = arith.constant 116 : index
    %c0_66 = arith.constant 0 : index
    %59 = vector.load %arg12[%c116, %c0_66] : memref<484x749xbf16, #tpu.memory_space<vmem>>, vector<4x749xbf16>
    tpu.vector_store %arg12[%c116, %c0_66], %58 {strides = array<i32>} : memref<484x749xbf16, #tpu.memory_space<vmem>>, vector<4x749xbf16>,
    %c0_67 = arith.constant 0 : index
    %c74 = arith.constant 74 : index
    %60 = vector.load %arg1[%c0_67, %c74] : memref<4x1089xbf16, #tpu.memory_space<vmem>>, vector<4x749xbf16>
    %c120 = arith.constant 120 : index
    %c0_68 = arith.constant 0 : index
    %61 = vector.load %arg12[%c120, %c0_68] : memref<484x749xbf16, #tpu.memory_space<vmem>>, vector<4x749xbf16>
    tpu.vector_store %arg12[%c120, %c0_68], %60 {strides = array<i32>} : memref<484x749xbf16, #tpu.memory_space<vmem>>, vector<4x749xbf16>,
    %c0_69 = arith.constant 0 : index
    %c75 = arith.constant 75 : index
    %62 = vector.load %arg1[%c0_69, %c75] : memref<4x1089xbf16, #tpu.memory_space<vmem>>, vector<4x749xbf16>
    %c124 = arith.constant 124 : index
    %c0_70 = arith.constant 0 : index
    %63 = vector.load %arg12[%c124, %c0_70] : memref<484x749xbf16, #tpu.memory_space<vmem>>, vector<4x749xbf16>
    tpu.vector_store %arg12[%c124, %c0_70], %62 {strides = array<i32>} : memref<484x749xbf16, #tpu.memory_space<vmem>>, vector<4x749xbf16>,
    %c0_71 = arith.constant 0 : index
    %c76_72 = arith.constant 76 : index
    %64 = vector.load %arg1[%c0_71, %c76_72] : memref<4x1089xbf16, #tpu.memory_space<vmem>>, vector<4x749xbf16>
    %c128 = arith.constant 128 : index
    %c0_73 = arith.constant 0 : index
    %65 = vector.load %arg12[%c128, %c0_73] : memref<484x749xbf16, #tpu.memory_space<vmem>>, vector<4x749xbf16>
    tpu.vector_store %arg12[%c128, %c0_73], %64 {strides = array<i32>} : memref<484x749xbf16, #tpu.memory_space<vmem>>, vector<4x749xbf16>,
    %c0_74 = arith.constant 0 : index
    %c99 = arith.constant 99 : index
    %66 = vector.load %arg1[%c0_74, %c99] : memref<4x1089xbf16, #tpu.memory_space<vmem>>, vector<4x749xbf16>
    %c132 = arith.constant 132 : index
    %c0_75 = arith.constant 0 : index
    %67 = vector.load %arg12[%c132, %c0_75] : memref<484x749xbf16, #tpu.memory_space<vmem>>, vector<4x749xbf16>
    tpu.vector_store %arg12[%c132, %c0_75], %66 {strides = array<i32>} : memref<484x749xbf16, #tpu.memory_space<vmem>>, vector<4x749xbf16>,
    %c0_76 = arith.constant 0 : index
    %c100_77 = arith.constant 100 : index
    %68 = vector.load %arg1[%c0_76, %c100_77] : memref<4x1089xbf16, #tpu.memory_space<vmem>>, vector<4x749xbf16>
    %c136 = arith.constant 136 : index
    %c0_78 = arith.constant 0 : index
    %69 = vector.load %arg12[%c136, %c0_78] : memref<484x749xbf16, #tpu.memory_space<vmem>>, vector<4x749xbf16>
    tpu.vector_store %arg12[%c136, %c0_78], %68 {strides = array<i32>} : memref<484x749xbf16, #tpu.memory_space<vmem>>, vector<4x749xbf16>,
    %c0_79 = arith.constant 0 : index
    %c101 = arith.constant 101 : index
    %70 = vector.load %arg1[%c0_79, %c101] : memref<4x1089xbf16, #tpu.memory_space<vmem>>, vector<4x749xbf16>
    %c140 = arith.constant 140 : index
    %c0_80 = arith.constant 0 : index
    %71 = vector.load %arg12[%c140, %c0_80] : memref<484x749xbf16, #tpu.memory_space<vmem>>, vector<4x749xbf16>
    tpu.vector_store %arg12[%c140, %c0_80], %70 {strides = array<i32>} : memref<484x749xbf16, #tpu.memory_space<vmem>>, vector<4x749xbf16>,
    %c0_81 = arith.constant 0 : index
    %c102 = arith.constant 102 : index
    %72 = vector.load %arg1[%c0_81, %c102] : memref<4x1089xbf16, #tpu.memory_space<vmem>>, vector<4x749xbf16>
    %c144 = arith.constant 144 : index
    %c0_82 = arith.constant 0 : index
    %73 = vector.load %arg12[%c144, %c0_82] : memref<484x749xbf16, #tpu.memory_space<vmem>>, vector<4x749xbf16>
    tpu.vector_store %arg12[%c144, %c0_82], %72 {strides = array<i32>} : memref<484x749xbf16, #tpu.memory_space<vmem>>, vector<4x749xbf16>,
    %c0_83 = arith.constant 0 : index
    %c103 = arith.constant 103 : index
    %74 = vector.load %arg1[%c0_83, %c103] : memref<4x1089xbf16, #tpu.memory_space<vmem>>, vector<4x749xbf16>
    %c148 = arith.constant 148 : index
    %c0_84 = arith.constant 0 : index
    %75 = vector.load %arg12[%c148, %c0_84] : memref<484x749xbf16, #tpu.memory_space<vmem>>, vector<4x749xbf16>
    tpu.vector_store %arg12[%c148, %c0_84], %74 {strides = array<i32>} : memref<484x749xbf16, #tpu.memory_space<vmem>>, vector<4x749xbf16>,
    %c0_85 = arith.constant 0 : index
    %c104_86 = arith.constant 104 : index
    %76 = vector.load %arg1[%c0_85, %c104_86] : memref<4x1089xbf16, #tpu.memory_space<vmem>>, vector<4x749xbf16>
    %c152 = arith.constant 152 : index
    %c0_87 = arith.constant 0 : index
    %77 = vector.load %arg12[%c152, %c0_87] : memref<484x749xbf16, #tpu.memory_space<vmem>>, vector<4x749xbf16>
    tpu.vector_store %arg12[%c152, %c0_87], %76 {strides = array<i32>} : memref<484x749xbf16, #tpu.memory_space<vmem>>, vector<4x749xbf16>,
    %c0_88 = arith.constant 0 : index
    %c105 = arith.constant 105 : index
    %78 = vector.load %arg1[%c0_88, %c105] : memref<4x1089xbf16, #tpu.memory_space<vmem>>, vector<4x749xbf16>
    %c156 = arith.constant 156 : index
    %c0_89 = arith.constant 0 : index
    %79 = vector.load %arg12[%c156, %c0_89] : memref<484x749xbf16, #tpu.memory_space<vmem>>, vector<4x749xbf16>
    tpu.vector_store %arg12[%c156, %c0_89], %78 {strides = array<i32>} : memref<484x749xbf16, #tpu.memory_space<vmem>>, vector<4x749xbf16>,
    %c0_90 = arith.constant 0 : index
    %c106 = arith.constant 106 : index
    %80 = vector.load %arg1[%c0_90, %c106] : memref<4x1089xbf16, #tpu.memory_space<vmem>>, vector<4x749xbf16>
    %c160 = arith.constant 160 : index
    %c0_91 = arith.constant 0 : index
    %81 = vector.load %arg12[%c160, %c0_91] : memref<484x749xbf16, #tpu.memory_space<vmem>>, vector<4x749xbf16>
    tpu.vector_store %arg12[%c160, %c0_91], %80 {strides = array<i32>} : memref<484x749xbf16, #tpu.memory_space<vmem>>, vector<4x749xbf16>,
    %c0_92 = arith.constant 0 : index
    %c107 = arith.constant 107 : index
    %82 = vector.load %arg1[%c0_92, %c107] : memref<4x1089xbf16, #tpu.memory_space<vmem>>, vector<4x749xbf16>
    %c164 = arith.constant 164 : index
    %c0_93 = arith.constant 0 : index
    %83 = vector.load %arg12[%c164, %c0_93] : memref<484x749xbf16, #tpu.memory_space<vmem>>, vector<4x749xbf16>
    tpu.vector_store %arg12[%c164, %c0_93], %82 {strides = array<i32>} : memref<484x749xbf16, #tpu.memory_space<vmem>>, vector<4x749xbf16>,
    %c0_94 = arith.constant 0 : index
    %c108_95 = arith.constant 108 : index
    %84 = vector.load %arg1[%c0_94, %c108_95] : memref<4x1089xbf16, #tpu.memory_space<vmem>>, vector<4x749xbf16>
    %c168 = arith.constant 168 : index
    %c0_96 = arith.constant 0 : index
    %85 = vector.load %arg12[%c168, %c0_96] : memref<484x749xbf16, #tpu.memory_space<vmem>>, vector<4x749xbf16>
    tpu.vector_store %arg12[%c168, %c0_96], %84 {strides = array<i32>} : memref<484x749xbf16, #tpu.memory_space<vmem>>, vector<4x749xbf16>,
    %c0_97 = arith.constant 0 : index
    %c109 = arith.constant 109 : index
    %86 = vector.load %arg1[%c0_97, %c109] : memref<4x1089xbf16, #tpu.memory_space<vmem>>, vector<4x749xbf16>
    %c172 = arith.constant 172 : index
    %c0_98 = arith.constant 0 : index
    %87 = vector.load %arg12[%c172, %c0_98] : memref<484x749xbf16, #tpu.memory_space<vmem>>, vector<4x749xbf16>
    tpu.vector_store %arg12[%c172, %c0_98], %86 {strides = array<i32>} : memref<484x749xbf16, #tpu.memory_space<vmem>>, vector<4x749xbf16>,
    %c0_99 = arith.constant 0 : index
    %c132_100 = arith.constant 132 : index
    %88 = vector.load %arg1[%c0_99, %c132_100] : memref<4x1089xbf16, #tpu.memory_space<vmem>>, vector<4x749xbf16>
    %c176 = arith.constant 176 : index
    %c0_101 = arith.constant 0 : index
    %89 = vector.load %arg12[%c176, %c0_101] : memref<484x749xbf16, #tpu.memory_space<vmem>>, vector<4x749xbf16>
    tpu.vector_store %arg12[%c176, %c0_101], %88 {strides = array<i32>} : memref<484x749xbf16, #tpu.memory_space<vmem>>, vector<4x749xbf16>,
    %c0_102 = arith.constant 0 : index
    %c133 = arith.constant 133 : index
    %90 = vector.load %arg1[%c0_102, %c133] : memref<4x1089xbf16, #tpu.memory_space<vmem>>, vector<4x749xbf16>
    %c180 = arith.constant 180 : index
    %c0_103 = arith.constant 0 : index
    %91 = vector.load %arg12[%c180, %c0_103] : memref<484x749xbf16, #tpu.memory_space<vmem>>, vector<4x749xbf16>
    tpu.vector_store %arg12[%c180, %c0_103], %90 {strides = array<i32>} : memref<484x749xbf16, #tpu.memory_space<vmem>>, vector<4x749xbf16>,
    %c0_104 = arith.constant 0 : index
    %c134 = arith.constant 134 : index
    %92 = vector.load %arg1[%c0_104, %c134] : memref<4x1089xbf16, #tpu.memory_space<vmem>>, vector<4x749xbf16>
    %c184 = arith.constant 184 : index
    %c0_105 = arith.constant 0 : index
    %93 = vector.load %arg12[%c184, %c0_105] : memref<484x749xbf16, #tpu.memory_space<vmem>>, vector<4x749xbf16>
    tpu.vector_store %arg12[%c184, %c0_105], %92 {strides = array<i32>} : memref<484x749xbf16, #tpu.memory_space<vmem>>, vector<4x749xbf16>,
    %c0_106 = arith.constant 0 : index
    %c135 = arith.constant 135 : index
    %94 = vector.load %arg1[%c0_106, %c135] : memref<4x1089xbf16, #tpu.memory_space<vmem>>, vector<4x749xbf16>
    %c188 = arith.constant 188 : index
    %c0_107 = arith.constant 0 : index
    %95 = vector.load %arg12[%c188, %c0_107] : memref<484x749xbf16, #tpu.memory_space<vmem>>, vector<4x749xbf16>
    tpu.vector_store %arg12[%c188, %c0_107], %94 {strides = array<i32>} : memref<484x749xbf16, #tpu.memory_space<vmem>>, vector<4x749xbf16>,
    %c0_108 = arith.constant 0 : index
    %c136_109 = arith.constant 136 : index
    %96 = vector.load %arg1[%c0_108, %c136_109] : memref<4x1089xbf16, #tpu.memory_space<vmem>>, vector<4x749xbf16>
    %c192 = arith.constant 192 : index
    %c0_110 = arith.constant 0 : index
    %97 = vector.load %arg12[%c192, %c0_110] : memref<484x749xbf16, #tpu.memory_space<vmem>>, vector<4x749xbf16>
    tpu.vector_store %arg12[%c192, %c0_110], %96 {strides = array<i32>} : memref<484x749xbf16, #tpu.memory_space<vmem>>, vector<4x749xbf16>,
    %c0_111 = arith.constant 0 : index
    %c137 = arith.constant 137 : index
    %98 = vector.load %arg1[%c0_111, %c137] : memref<4x1089xbf16, #tpu.memory_space<vmem>>, vector<4x749xbf16>
    %c196 = arith.constant 196 : index
    %c0_112 = arith.constant 0 : index
    %99 = vector.load %arg12[%c196, %c0_112] : memref<484x749xbf16, #tpu.memory_space<vmem>>, vector<4x749xbf16>
    tpu.vector_store %arg12[%c196, %c0_112], %98 {strides = array<i32>} : memref<484x749xbf16, #tpu.memory_space<vmem>>, vector<4x749xbf16>,
    %c0_113 = arith.constant 0 : index
    %c138 = arith.constant 138 : index
    %100 = vector.load %arg1[%c0_113, %c138] : memref<4x1089xbf16, #tpu.memory_space<vmem>>, vector<4x749xbf16>
    %c200 = arith.constant 200 : index
    %c0_114 = arith.constant 0 : index
    %101 = vector.load %arg12[%c200, %c0_114] : memref<484x749xbf16, #tpu.memory_space<vmem>>, vector<4x749xbf16>
    tpu.vector_store %arg12[%c200, %c0_114], %100 {strides = array<i32>} : memref<484x749xbf16, #tpu.memory_space<vmem>>, vector<4x749xbf16>,
    %c0_115 = arith.constant 0 : index
    %c139 = arith.constant 139 : index
    %102 = vector.load %arg1[%c0_115, %c139] : memref<4x1089xbf16, #tpu.memory_space<vmem>>, vector<4x749xbf16>
    %c204 = arith.constant 204 : index
    %c0_116 = arith.constant 0 : index
    %103 = vector.load %arg12[%c204, %c0_116] : memref<484x749xbf16, #tpu.memory_space<vmem>>, vector<4x749xbf16>
    tpu.vector_store %arg12[%c204, %c0_116], %102 {strides = array<i32>} : memref<484x749xbf16, #tpu.memory_space<vmem>>, vector<4x749xbf16>,
    %c0_117 = arith.constant 0 : index
    %c140_118 = arith.constant 140 : index
    %104 = vector.load %arg1[%c0_117, %c140_118] : memref<4x1089xbf16, #tpu.memory_space<vmem>>, vector<4x749xbf16>
    %c208 = arith.constant 208 : index
    %c0_119 = arith.constant 0 : index
    %105 = vector.load %arg12[%c208, %c0_119] : memref<484x749xbf16, #tpu.memory_space<vmem>>, vector<4x749xbf16>
    tpu.vector_store %arg12[%c208, %c0_119], %104 {strides = array<i32>} : memref<484x749xbf16, #tpu.memory_space<vmem>>, vector<4x749xbf16>,
    %c0_120 = arith.constant 0 : index
    %c141 = arith.constant 141 : index
    %106 = vector.load %arg1[%c0_120, %c141] : memref<4x1089xbf16, #tpu.memory_space<vmem>>, vector<4x749xbf16>
    %c212 = arith.constant 212 : index
    %c0_121 = arith.constant 0 : index
    %107 = vector.load %arg12[%c212, %c0_121] : memref<484x749xbf16, #tpu.memory_space<vmem>>, vector<4x749xbf16>
    tpu.vector_store %arg12[%c212, %c0_121], %106 {strides = array<i32>} : memref<484x749xbf16, #tpu.memory_space<vmem>>, vector<4x749xbf16>,
    %c0_122 = arith.constant 0 : index
    %c142 = arith.constant 142 : index
    %108 = vector.load %arg1[%c0_122, %c142] : memref<4x1089xbf16, #tpu.memory_space<vmem>>, vector<4x749xbf16>
    %c216 = arith.constant 216 : index
    %c0_123 = arith.constant 0 : index
    %109 = vector.load %arg12[%c216, %c0_123] : memref<484x749xbf16, #tpu.memory_space<vmem>>, vector<4x749xbf16>
    tpu.vector_store %arg12[%c216, %c0_123], %108 {strides = array<i32>} : memref<484x749xbf16, #tpu.memory_space<vmem>>, vector<4x749xbf16>,
    %c0_124 = arith.constant 0 : index
    %c165 = arith.constant 165 : index
    %110 = vector.load %arg1[%c0_124, %c165] : memref<4x1089xbf16, #tpu.memory_space<vmem>>, vector<4x749xbf16>
    %c220 = arith.constant 220 : index
    %c0_125 = arith.constant 0 : index
    %111 = vector.load %arg12[%c220, %c0_125] : memref<484x749xbf16, #tpu.memory_space<vmem>>, vector<4x749xbf16>
    tpu.vector_store %arg12[%c220, %c0_125], %110 {strides = array<i32>} : memref<484x749xbf16, #tpu.memory_space<vmem>>, vector<4x749xbf16>,
    %c0_126 = arith.constant 0 : index
    %c166 = arith.constant 166 : index
    %112 = vector.load %arg1[%c0_126, %c166] : memref<4x1089xbf16, #tpu.memory_space<vmem>>, vector<4x749xbf16>
    %c224 = arith.constant 224 : index
    %c0_127 = arith.constant 0 : index
    %113 = vector.load %arg12[%c224, %c0_127] : memref<484x749xbf16, #tpu.memory_space<vmem>>, vector<4x749xbf16>
    tpu.vector_store %arg12[%c224, %c0_127], %112 {strides = array<i32>} : memref<484x749xbf16, #tpu.memory_space<vmem>>, vector<4x749xbf16>,
    %c0_128 = arith.constant 0 : index
    %c167 = arith.constant 167 : index
    %114 = vector.load %arg1[%c0_128, %c167] : memref<4x1089xbf16, #tpu.memory_space<vmem>>, vector<4x749xbf16>
    %c228 = arith.constant 228 : index
    %c0_129 = arith.constant 0 : index
    %115 = vector.load %arg12[%c228, %c0_129] : memref<484x749xbf16, #tpu.memory_space<vmem>>, vector<4x749xbf16>
    tpu.vector_store %arg12[%c228, %c0_129], %114 {strides = array<i32>} : memref<484x749xbf16, #tpu.memory_space<vmem>>, vector<4x749xbf16>,
    %c0_130 = arith.constant 0 : index
    %c168_131 = arith.constant 168 : index
    %116 = vector.load %arg1[%c0_130, %c168_131] : memref<4x1089xbf16, #tpu.memory_space<vmem>>, vector<4x749xbf16>
    %c232 = arith.constant 232 : index
    %c0_132 = arith.constant 0 : index
    %117 = vector.load %arg12[%c232, %c0_132] : memref<484x749xbf16, #tpu.memory_space<vmem>>, vector<4x749xbf16>
    tpu.vector_store %arg12[%c232, %c0_132], %116 {strides = array<i32>} : memref<484x749xbf16, #tpu.memory_space<vmem>>, vector<4x749xbf16>,
    %c0_133 = arith.constant 0 : index
    %c169 = arith.constant 169 : index
    %118 = vector.load %arg1[%c0_133, %c169] : memref<4x1089xbf16, #tpu.memory_space<vmem>>, vector<4x749xbf16>
    %c236 = arith.constant 236 : index
    %c0_134 = arith.constant 0 : index
    %119 = vector.load %arg12[%c236, %c0_134] : memref<484x749xbf16, #tpu.memory_space<vmem>>, vector<4x749xbf16>
    tpu.vector_store %arg12[%c236, %c0_134], %118 {strides = array<i32>} : memref<484x749xbf16, #tpu.memory_space<vmem>>, vector<4x749xbf16>,
    %c0_135 = arith.constant 0 : index
    %c170 = arith.constant 170 : index
    %120 = vector.load %arg1[%c0_135, %c170] : memref<4x1089xbf16, #tpu.memory_space<vmem>>, vector<4x749xbf16>
    %c240 = arith.constant 240 : index
    %c0_136 = arith.constant 0 : index
    %121 = vector.load %arg12[%c240, %c0_136] : memref<484x749xbf16, #tpu.memory_space<vmem>>, vector<4x749xbf16>
    tpu.vector_store %arg12[%c240, %c0_136], %120 {strides = array<i32>} : memref<484x749xbf16, #tpu.memory_space<vmem>>, vector<4x749xbf16>,
    %c0_137 = arith.constant 0 : index
    %c171 = arith.constant 171 : index
    %122 = vector.load %arg1[%c0_137, %c171] : memref<4x1089xbf16, #tpu.memory_space<vmem>>, vector<4x749xbf16>
    %c244 = arith.constant 244 : index
    %c0_138 = arith.constant 0 : index
    %123 = vector.load %arg12[%c244, %c0_138] : memref<484x749xbf16, #tpu.memory_space<vmem>>, vector<4x749xbf16>
    tpu.vector_store %arg12[%c244, %c0_138], %122 {strides = array<i32>} : memref<484x749xbf16, #tpu.memory_space<vmem>>, vector<4x749xbf16>,
    %c0_139 = arith.constant 0 : index
    %c172_140 = arith.constant 172 : index
    %124 = vector.load %arg1[%c0_139, %c172_140] : memref<4x1089xbf16, #tpu.memory_space<vmem>>, vector<4x749xbf16>
    %c248 = arith.constant 248 : index
    %c0_141 = arith.constant 0 : index
    %125 = vector.load %arg12[%c248, %c0_141] : memref<484x749xbf16, #tpu.memory_space<vmem>>, vector<4x749xbf16>
    tpu.vector_store %arg12[%c248, %c0_141], %124 {strides = array<i32>} : memref<484x749xbf16, #tpu.memory_space<vmem>>, vector<4x749xbf16>,
    %c0_142 = arith.constant 0 : index
    %c173 = arith.constant 173 : index
    %126 = vector.load %arg1[%c0_142, %c173] : memref<4x1089xbf16, #tpu.memory_space<vmem>>, vector<4x749xbf16>
    %c252 = arith.constant 252 : index
    %c0_143 = arith.constant 0 : index
    %127 = vector.load %arg12[%c252, %c0_143] : memref<484x749xbf16, #tpu.memory_space<vmem>>, vector<4x749xbf16>
    tpu.vector_store %arg12[%c252, %c0_143], %126 {strides = array<i32>} : memref<484x749xbf16, #tpu.memory_space<vmem>>, vector<4x749xbf16>,
    %c0_144 = arith.constant 0 : index
    %c174 = arith.constant 174 : index
    %128 = vector.load %arg1[%c0_144, %c174] : memref<4x1089xbf16, #tpu.memory_space<vmem>>, vector<4x749xbf16>
    %c256 = arith.constant 256 : index
    %c0_145 = arith.constant 0 : index
    %129 = vector.load %arg12[%c256, %c0_145] : memref<484x749xbf16, #tpu.memory_space<vmem>>, vector<4x749xbf16>
    tpu.vector_store %arg12[%c256, %c0_145], %128 {strides = array<i32>} : memref<484x749xbf16, #tpu.memory_space<vmem>>, vector<4x749xbf16>,
    %c0_146 = arith.constant 0 : index
    %c175 = arith.constant 175 : index
    %130 = vector.load %arg1[%c0_146, %c175] : memref<4x1089xbf16, #tpu.memory_space<vmem>>, vector<4x749xbf16>
    %c260 = arith.constant 260 : index
    %c0_147 = arith.constant 0 : index
    %131 = vector.load %arg12[%c260, %c0_147] : memref<484x749xbf16, #tpu.memory_space<vmem>>, vector<4x749xbf16>
    tpu.vector_store %arg12[%c260, %c0_147], %130 {strides = array<i32>} : memref<484x749xbf16, #tpu.memory_space<vmem>>, vector<4x749xbf16>,
    %c0_148 = arith.constant 0 : index
    %c198 = arith.constant 198 : index
    %132 = vector.load %arg1[%c0_148, %c198] : memref<4x1089xbf16, #tpu.memory_space<vmem>>, vector<4x749xbf16>
    %c264 = arith.constant 264 : index
    %c0_149 = arith.constant 0 : index
    %133 = vector.load %arg12[%c264, %c0_149] : memref<484x749xbf16, #tpu.memory_space<vmem>>, vector<4x749xbf16>
    tpu.vector_store %arg12[%c264, %c0_149], %132 {strides = array<i32>} : memref<484x749xbf16, #tpu.memory_space<vmem>>, vector<4x749xbf16>,
    %c0_150 = arith.constant 0 : index
    %c199 = arith.constant 199 : index
    %134 = vector.load %arg1[%c0_150, %c199] : memref<4x1089xbf16, #tpu.memory_space<vmem>>, vector<4x749xbf16>
    %c268 = arith.constant 268 : index
    %c0_151 = arith.constant 0 : index
    %135 = vector.load %arg12[%c268, %c0_151] : memref<484x749xbf16, #tpu.memory_space<vmem>>, vector<4x749xbf16>
    tpu.vector_store %arg12[%c268, %c0_151], %134 {strides = array<i32>} : memref<484x749xbf16, #tpu.memory_space<vmem>>, vector<4x749xbf16>,
    %c0_152 = arith.constant 0 : index
    %c200_153 = arith.constant 200 : index
    %136 = vector.load %arg1[%c0_152, %c200_153] : memref<4x1089xbf16, #tpu.memory_space<vmem>>, vector<4x749xbf16>
    %c272 = arith.constant 272 : index
    %c0_154 = arith.constant 0 : index
    %137 = vector.load %arg12[%c272, %c0_154] : memref<484x749xbf16, #tpu.memory_space<vmem>>, vector<4x749xbf16>
    tpu.vector_store %arg12[%c272, %c0_154], %136 {strides = array<i32>} : memref<484x749xbf16, #tpu.memory_space<vmem>>, vector<4x749xbf16>,
    %c0_155 = arith.constant 0 : index
    %c201 = arith.constant 201 : index
    %138 = vector.load %arg1[%c0_155, %c201] : memref<4x1089xbf16, #tpu.memory_space<vmem>>, vector<4x749xbf16>
    %c276 = arith.constant 276 : index
    %c0_156 = arith.constant 0 : index
    %139 = vector.load %arg12[%c276, %c0_156] : memref<484x749xbf16, #tpu.memory_space<vmem>>, vector<4x749xbf16>
    tpu.vector_store %arg12[%c276, %c0_156], %138 {strides = array<i32>} : memref<484x749xbf16, #tpu.memory_space<vmem>>, vector<4x749xbf16>,
    %c0_157 = arith.constant 0 : index
    %c202 = arith.constant 202 : index
    %140 = vector.load %arg1[%c0_157, %c202] : memref<4x1089xbf16, #tpu.memory_space<vmem>>, vector<4x749xbf16>
    %c280 = arith.constant 280 : index
    %c0_158 = arith.constant 0 : index
    %141 = vector.load %arg12[%c280, %c0_158] : memref<484x749xbf16, #tpu.memory_space<vmem>>, vector<4x749xbf16>
    tpu.vector_store %arg12[%c280, %c0_158], %140 {strides = array<i32>} : memref<484x749xbf16, #tpu.memory_space<vmem>>, vector<4x749xbf16>,
    %c0_159 = arith.constant 0 : index
    %c203 = arith.constant 203 : index
    %142 = vector.load %arg1[%c0_159, %c203] : memref<4x1089xbf16, #tpu.memory_space<vmem>>, vector<4x749xbf16>
    %c284 = arith.constant 284 : index
    %c0_160 = arith.constant 0 : index
    %143 = vector.load %arg12[%c284, %c0_160] : memref<484x749xbf16, #tpu.memory_space<vmem>>, vector<4x749xbf16>
    tpu.vector_store %arg12[%c284, %c0_160], %142 {strides = array<i32>} : memref<484x749xbf16, #tpu.memory_space<vmem>>, vector<4x749xbf16>,
    %c0_161 = arith.constant 0 : index
    %c204_162 = arith.constant 204 : index
    %144 = vector.load %arg1[%c0_161, %c204_162] : memref<4x1089xbf16, #tpu.memory_space<vmem>>, vector<4x749xbf16>
    %c288 = arith.constant 288 : index
    %c0_163 = arith.constant 0 : index
    %145 = vector.load %arg12[%c288, %c0_163] : memref<484x749xbf16, #tpu.memory_space<vmem>>, vector<4x749xbf16>
    tpu.vector_store %arg12[%c288, %c0_163], %144 {strides = array<i32>} : memref<484x749xbf16, #tpu.memory_space<vmem>>, vector<4x749xbf16>,
    %c0_164 = arith.constant 0 : index
    %c205 = arith.constant 205 : index
    %146 = vector.load %arg1[%c0_164, %c205] : memref<4x1089xbf16, #tpu.memory_space<vmem>>, vector<4x749xbf16>
    %c292 = arith.constant 292 : index
    %c0_165 = arith.constant 0 : index
    %147 = vector.load %arg12[%c292, %c0_165] : memref<484x749xbf16, #tpu.memory_space<vmem>>, vector<4x749xbf16>
    tpu.vector_store %arg12[%c292, %c0_165], %146 {strides = array<i32>} : memref<484x749xbf16, #tpu.memory_space<vmem>>, vector<4x749xbf16>,
    %c0_166 = arith.constant 0 : index
    %c206 = arith.constant 206 : index
    %148 = vector.load %arg1[%c0_166, %c206] : memref<4x1089xbf16, #tpu.memory_space<vmem>>, vector<4x749xbf16>
    %c296 = arith.constant 296 : index
    %c0_167 = arith.constant 0 : index
    %149 = vector.load %arg12[%c296, %c0_167] : memref<484x749xbf16, #tpu.memory_space<vmem>>, vector<4x749xbf16>
    tpu.vector_store %arg12[%c296, %c0_167], %148 {strides = array<i32>} : memref<484x749xbf16, #tpu.memory_space<vmem>>, vector<4x749xbf16>,
    %c0_168 = arith.constant 0 : index
    %c207 = arith.constant 207 : index
    %150 = vector.load %arg1[%c0_168, %c207] : memref<4x1089xbf16, #tpu.memory_space<vmem>>, vector<4x749xbf16>
    %c300 = arith.constant 300 : index
    %c0_169 = arith.constant 0 : index
    %151 = vector.load %arg12[%c300, %c0_169] : memref<484x749xbf16, #tpu.memory_space<vmem>>, vector<4x749xbf16>
    tpu.vector_store %arg12[%c300, %c0_169], %150 {strides = array<i32>} : memref<484x749xbf16, #tpu.memory_space<vmem>>, vector<4x749xbf16>,
    %c0_170 = arith.constant 0 : index
    %c208_171 = arith.constant 208 : index
    %152 = vector.load %arg1[%c0_170, %c208_171] : memref<4x1089xbf16, #tpu.memory_space<vmem>>, vector<4x749xbf16>
    %c304 = arith.constant 304 : index
    %c0_172 = arith.constant 0 : index
    %153 = vector.load %arg12[%c304, %c0_172] : memref<484x749xbf16, #tpu.memory_space<vmem>>, vector<4x749xbf16>
    tpu.vector_store %arg12[%c304, %c0_172], %152 {strides = array<i32>} : memref<484x749xbf16, #tpu.memory_space<vmem>>, vector<4x749xbf16>,
    %c0_173 = arith.constant 0 : index
    %c231 = arith.constant 231 : index
    %154 = vector.load %arg1[%c0_173, %c231] : memref<4x1089xbf16, #tpu.memory_space<vmem>>, vector<4x749xbf16>
    %c308 = arith.constant 308 : index
    %c0_174 = arith.constant 0 : index
    %155 = vector.load %arg12[%c308, %c0_174] : memref<484x749xbf16, #tpu.memory_space<vmem>>, vector<4x749xbf16>
    tpu.vector_store %arg12[%c308, %c0_174], %154 {strides = array<i32>} : memref<484x749xbf16, #tpu.memory_space<vmem>>, vector<4x749xbf16>,
    %c0_175 = arith.constant 0 : index
    %c232_176 = arith.constant 232 : index
    %156 = vector.load %arg1[%c0_175, %c232_176] : memref<4x1089xbf16, #tpu.memory_space<vmem>>, vector<4x749xbf16>
    %c312 = arith.constant 312 : index
    %c0_177 = arith.constant 0 : index
    %157 = vector.load %arg12[%c312, %c0_177] : memref<484x749xbf16, #tpu.memory_space<vmem>>, vector<4x749xbf16>
    tpu.vector_store %arg12[%c312, %c0_177], %156 {strides = array<i32>} : memref<484x749xbf16, #tpu.memory_space<vmem>>, vector<4x749xbf16>,
    %c0_178 = arith.constant 0 : index
    %c233 = arith.constant 233 : index
    %158 = vector.load %arg1[%c0_178, %c233] : memref<4x1089xbf16, #tpu.memory_space<vmem>>, vector<4x749xbf16>
    %c316 = arith.constant 316 : index
    %c0_179 = arith.constant 0 : index
    %159 = vector.load %arg12[%c316, %c0_179] : memref<484x749xbf16, #tpu.memory_space<vmem>>, vector<4x749xbf16>
    tpu.vector_store %arg12[%c316, %c0_179], %158 {strides = array<i32>} : memref<484x749xbf16, #tpu.memory_space<vmem>>, vector<4x749xbf16>,
    %c0_180 = arith.constant 0 : index
    %c234 = arith.constant 234 : index
    %160 = vector.load %arg1[%c0_180, %c234] : memref<4x1089xbf16, #tpu.memory_space<vmem>>, vector<4x749xbf16>
    %c320 = arith.constant 320 : index
    %c0_181 = arith.constant 0 : index
    %161 = vector.load %arg12[%c320, %c0_181] : memref<484x749xbf16, #tpu.memory_space<vmem>>, vector<4x749xbf16>
    tpu.vector_store %arg12[%c320, %c0_181], %160 {strides = array<i32>} : memref<484x749xbf16, #tpu.memory_space<vmem>>, vector<4x749xbf16>,
    %c0_182 = arith.constant 0 : index
    %c235 = arith.constant 235 : index
    %162 = vector.load %arg1[%c0_182, %c235] : memref<4x1089xbf16, #tpu.memory_space<vmem>>, vector<4x749xbf16>
    %c324 = arith.constant 324 : index
    %c0_183 = arith.constant 0 : index
    %163 = vector.load %arg12[%c324, %c0_183] : memref<484x749xbf16, #tpu.memory_space<vmem>>, vector<4x749xbf16>
    tpu.vector_store %arg12[%c324, %c0_183], %162 {strides = array<i32>} : memref<484x749xbf16, #tpu.memory_space<vmem>>, vector<4x749xbf16>,
    %c0_184 = arith.constant 0 : index
    %c236_185 = arith.constant 236 : index
    %164 = vector.load %arg1[%c0_184, %c236_185] : memref<4x1089xbf16, #tpu.memory_space<vmem>>, vector<4x749xbf16>
    %c328 = arith.constant 328 : index
    %c0_186 = arith.constant 0 : index
    %165 = vector.load %arg12[%c328, %c0_186] : memref<484x749xbf16, #tpu.memory_space<vmem>>, vector<4x749xbf16>
    tpu.vector_store %arg12[%c328, %c0_186], %164 {strides = array<i32>} : memref<484x749xbf16, #tpu.memory_space<vmem>>, vector<4x749xbf16>,
    %c0_187 = arith.constant 0 : index
    %c237 = arith.constant 237 : index
    %166 = vector.load %arg1[%c0_187, %c237] : memref<4x1089xbf16, #tpu.memory_space<vmem>>, vector<4x749xbf16>
    %c332 = arith.constant 332 : index
    %c0_188 = arith.constant 0 : index
    %167 = vector.load %arg12[%c332, %c0_188] : memref<484x749xbf16, #tpu.memory_space<vmem>>, vector<4x749xbf16>
    tpu.vector_store %arg12[%c332, %c0_188], %166 {strides = array<i32>} : memref<484x749xbf16, #tpu.memory_space<vmem>>, vector<4x749xbf16>,
    %c0_189 = arith.constant 0 : index
    %c238 = arith.constant 238 : index
    %168 = vector.load %arg1[%c0_189, %c238] : memref<4x1089xbf16, #tpu.memory_space<vmem>>, vector<4x749xbf16>
    %c336 = arith.constant 336 : index
    %c0_190 = arith.constant 0 : index
    %169 = vector.load %arg12[%c336, %c0_190] : memref<484x749xbf16, #tpu.memory_space<vmem>>, vector<4x749xbf16>
    tpu.vector_store %arg12[%c336, %c0_190], %168 {strides = array<i32>} : memref<484x749xbf16, #tpu.memory_space<vmem>>, vector<4x749xbf16>,
    %c0_191 = arith.constant 0 : index
    %c239 = arith.constant 239 : index
    %170 = vector.load %arg1[%c0_191, %c239] : memref<4x1089xbf16, #tpu.memory_space<vmem>>, vector<4x749xbf16>
    %c340 = arith.constant 340 : index
    %c0_192 = arith.constant 0 : index
    %171 = vector.load %arg12[%c340, %c0_192] : memref<484x749xbf16, #tpu.memory_space<vmem>>, vector<4x749xbf16>
    tpu.vector_store %arg12[%c340, %c0_192], %170 {strides = array<i32>} : memref<484x749xbf16, #tpu.memory_space<vmem>>, vector<4x749xbf16>,
    %c0_193 = arith.constant 0 : index
    %c240_194 = arith.constant 240 : index
    %172 = vector.load %arg1[%c0_193, %c240_194] : memref<4x1089xbf16, #tpu.memory_space<vmem>>, vector<4x749xbf16>
    %c344 = arith.constant 344 : index
    %c0_195 = arith.constant 0 : index
    %173 = vector.load %arg12[%c344, %c0_195] : memref<484x749xbf16, #tpu.memory_space<vmem>>, vector<4x749xbf16>
    tpu.vector_store %arg12[%c344, %c0_195], %172 {strides = array<i32>} : memref<484x749xbf16, #tpu.memory_space<vmem>>, vector<4x749xbf16>,
    %c0_196 = arith.constant 0 : index
    %c241 = arith.constant 241 : index
    %174 = vector.load %arg1[%c0_196, %c241] : memref<4x1089xbf16, #tpu.memory_space<vmem>>, vector<4x749xbf16>
    %c348 = arith.constant 348 : index
    %c0_197 = arith.constant 0 : index
    %175 = vector.load %arg12[%c348, %c0_197] : memref<484x749xbf16, #tpu.memory_space<vmem>>, vector<4x749xbf16>
    tpu.vector_store %arg12[%c348, %c0_197], %174 {strides = array<i32>} : memref<484x749xbf16, #tpu.memory_space<vmem>>, vector<4x749xbf16>,
    %c0_198 = arith.constant 0 : index
    %c264_199 = arith.constant 264 : index
    %176 = vector.load %arg1[%c0_198, %c264_199] : memref<4x1089xbf16, #tpu.memory_space<vmem>>, vector<4x749xbf16>
    %c352 = arith.constant 352 : index
    %c0_200 = arith.constant 0 : index
    %177 = vector.load %arg12[%c352, %c0_200] : memref<484x749xbf16, #tpu.memory_space<vmem>>, vector<4x749xbf16>
    tpu.vector_store %arg12[%c352, %c0_200], %176 {strides = array<i32>} : memref<484x749xbf16, #tpu.memory_space<vmem>>, vector<4x749xbf16>,
    %c0_201 = arith.constant 0 : index
    %c265 = arith.constant 265 : index
    %178 = vector.load %arg1[%c0_201, %c265] : memref<4x1089xbf16, #tpu.memory_space<vmem>>, vector<4x749xbf16>
    %c356 = arith.constant 356 : index
    %c0_202 = arith.constant 0 : index
    %179 = vector.load %arg12[%c356, %c0_202] : memref<484x749xbf16, #tpu.memory_space<vmem>>, vector<4x749xbf16>
    tpu.vector_store %arg12[%c356, %c0_202], %178 {strides = array<i32>} : memref<484x749xbf16, #tpu.memory_space<vmem>>, vector<4x749xbf16>,
    %c0_203 = arith.constant 0 : index
    %c266 = arith.constant 266 : index
    %180 = vector.load %arg1[%c0_203, %c266] : memref<4x1089xbf16, #tpu.memory_space<vmem>>, vector<4x749xbf16>
    %c360 = arith.constant 360 : index
    %c0_204 = arith.constant 0 : index
    %181 = vector.load %arg12[%c360, %c0_204] : memref<484x749xbf16, #tpu.memory_space<vmem>>, vector<4x749xbf16>
    tpu.vector_store %arg12[%c360, %c0_204], %180 {strides = array<i32>} : memref<484x749xbf16, #tpu.memory_space<vmem>>, vector<4x749xbf16>,
    %c0_205 = arith.constant 0 : index
    %c267 = arith.constant 267 : index
    %182 = vector.load %arg1[%c0_205, %c267] : memref<4x1089xbf16, #tpu.memory_space<vmem>>, vector<4x749xbf16>
    %c364 = arith.constant 364 : index
    %c0_206 = arith.constant 0 : index
    %183 = vector.load %arg12[%c364, %c0_206] : memref<484x749xbf16, #tpu.memory_space<vmem>>, vector<4x749xbf16>
    tpu.vector_store %arg12[%c364, %c0_206], %182 {strides = array<i32>} : memref<484x749xbf16, #tpu.memory_space<vmem>>, vector<4x749xbf16>,
    %c0_207 = arith.constant 0 : index
    %c268_208 = arith.constant 268 : index
    %184 = vector.load %arg1[%c0_207, %c268_208] : memref<4x1089xbf16, #tpu.memory_space<vmem>>, vector<4x749xbf16>
    %c368 = arith.constant 368 : index
    %c0_209 = arith.constant 0 : index
    %185 = vector.load %arg12[%c368, %c0_209] : memref<484x749xbf16, #tpu.memory_space<vmem>>, vector<4x749xbf16>
    tpu.vector_store %arg12[%c368, %c0_209], %184 {strides = array<i32>} : memref<484x749xbf16, #tpu.memory_space<vmem>>, vector<4x749xbf16>,
    %c0_210 = arith.constant 0 : index
    %c269 = arith.constant 269 : index
    %186 = vector.load %arg1[%c0_210, %c269] : memref<4x1089xbf16, #tpu.memory_space<vmem>>, vector<4x749xbf16>
    %c372 = arith.constant 372 : index
    %c0_211 = arith.constant 0 : index
    %187 = vector.load %arg12[%c372, %c0_211] : memref<484x749xbf16, #tpu.memory_space<vmem>>, vector<4x749xbf16>
    tpu.vector_store %arg12[%c372, %c0_211], %186 {strides = array<i32>} : memref<484x749xbf16, #tpu.memory_space<vmem>>, vector<4x749xbf16>,
    %c0_212 = arith.constant 0 : index
    %c270 = arith.constant 270 : index
    %188 = vector.load %arg1[%c0_212, %c270] : memref<4x1089xbf16, #tpu.memory_space<vmem>>, vector<4x749xbf16>
    %c376 = arith.constant 376 : index
    %c0_213 = arith.constant 0 : index
    %189 = vector.load %arg12[%c376, %c0_213] : memref<484x749xbf16, #tpu.memory_space<vmem>>, vector<4x749xbf16>
    tpu.vector_store %arg12[%c376, %c0_213], %188 {strides = array<i32>} : memref<484x749xbf16, #tpu.memory_space<vmem>>, vector<4x749xbf16>,
    %c0_214 = arith.constant 0 : index
    %c271 = arith.constant 271 : index
    %190 = vector.load %arg1[%c0_214, %c271] : memref<4x1089xbf16, #tpu.memory_space<vmem>>, vector<4x749xbf16>
    %c380 = arith.constant 380 : index
    %c0_215 = arith.constant 0 : index
    %191 = vector.load %arg12[%c380, %c0_215] : memref<484x749xbf16, #tpu.memory_space<vmem>>, vector<4x749xbf16>
    tpu.vector_store %arg12[%c380, %c0_215], %190 {strides = array<i32>} : memref<484x749xbf16, #tpu.memory_space<vmem>>, vector<4x749xbf16>,
    %c0_216 = arith.constant 0 : index
    %c272_217 = arith.constant 272 : index
    %192 = vector.load %arg1[%c0_216, %c272_217] : memref<4x1089xbf16, #tpu.memory_space<vmem>>, vector<4x749xbf16>
    %c384 = arith.constant 384 : index
    %c0_218 = arith.constant 0 : index
    %193 = vector.load %arg12[%c384, %c0_218] : memref<484x749xbf16, #tpu.memory_space<vmem>>, vector<4x749xbf16>
    tpu.vector_store %arg12[%c384, %c0_218], %192 {strides = array<i32>} : memref<484x749xbf16, #tpu.memory_space<vmem>>, vector<4x749xbf16>,
    %c0_219 = arith.constant 0 : index
    %c273 = arith.constant 273 : index
    %194 = vector.load %arg1[%c0_219, %c273] : memref<4x1089xbf16, #tpu.memory_space<vmem>>, vector<4x749xbf16>
    %c388 = arith.constant 388 : index
    %c0_220 = arith.constant 0 : index
    %195 = vector.load %arg12[%c388, %c0_220] : memref<484x749xbf16, #tpu.memory_space<vmem>>, vector<4x749xbf16>
    tpu.vector_store %arg12[%c388, %c0_220], %194 {strides = array<i32>} : memref<484x749xbf16, #tpu.memory_space<vmem>>, vector<4x749xbf16>,
    %c0_221 = arith.constant 0 : index
    %c274 = arith.constant 274 : index
    %196 = vector.load %arg1[%c0_221, %c274] : memref<4x1089xbf16, #tpu.memory_space<vmem>>, vector<4x749xbf16>
    %c392 = arith.constant 392 : index
    %c0_222 = arith.constant 0 : index
    %197 = vector.load %arg12[%c392, %c0_222] : memref<484x749xbf16, #tpu.memory_space<vmem>>, vector<4x749xbf16>
    tpu.vector_store %arg12[%c392, %c0_222], %196 {strides = array<i32>} : memref<484x749xbf16, #tpu.memory_space<vmem>>, vector<4x749xbf16>,
    %c0_223 = arith.constant 0 : index
    %c297 = arith.constant 297 : index
    %198 = vector.load %arg1[%c0_223, %c297] : memref<4x1089xbf16, #tpu.memory_space<vmem>>, vector<4x749xbf16>
    %c396 = arith.constant 396 : index
    %c0_224 = arith.constant 0 : index
    %199 = vector.load %arg12[%c396, %c0_224] : memref<484x749xbf16, #tpu.memory_space<vmem>>, vector<4x749xbf16>
    tpu.vector_store %arg12[%c396, %c0_224], %198 {strides = array<i32>} : memref<484x749xbf16, #tpu.memory_space<vmem>>, vector<4x749xbf16>,
    %c0_225 = arith.constant 0 : index
    %c298 = arith.constant 298 : index
    %200 = vector.load %arg1[%c0_225, %c298] : memref<4x1089xbf16, #tpu.memory_space<vmem>>, vector<4x749xbf16>
    %c400 = arith.constant 400 : index
    %c0_226 = arith.constant 0 : index
    %201 = vector.load %arg12[%c400, %c0_226] : memref<484x749xbf16, #tpu.memory_space<vmem>>, vector<4x749xbf16>
    tpu.vector_store %arg12[%c400, %c0_226], %200 {strides = array<i32>} : memref<484x749xbf16, #tpu.memory_space<vmem>>, vector<4x749xbf16>,
    %c0_227 = arith.constant 0 : index
    %c299 = arith.constant 299 : index
    %202 = vector.load %arg1[%c0_227, %c299] : memref<4x1089xbf16, #tpu.memory_space<vmem>>, vector<4x749xbf16>
    %c404 = arith.constant 404 : index
    %c0_228 = arith.constant 0 : index
    %203 = vector.load %arg12[%c404, %c0_228] : memref<484x749xbf16, #tpu.memory_space<vmem>>, vector<4x749xbf16>
    tpu.vector_store %arg12[%c404, %c0_228], %202 {strides = array<i32>} : memref<484x749xbf16, #tpu.memory_space<vmem>>, vector<4x749xbf16>,
    %c0_229 = arith.constant 0 : index
    %c300_230 = arith.constant 300 : index
    %204 = vector.load %arg1[%c0_229, %c300_230] : memref<4x1089xbf16, #tpu.memory_space<vmem>>, vector<4x749xbf16>
    %c408 = arith.constant 408 : index
    %c0_231 = arith.constant 0 : index
    %205 = vector.load %arg12[%c408, %c0_231] : memref<484x749xbf16, #tpu.memory_space<vmem>>, vector<4x749xbf16>
    tpu.vector_store %arg12[%c408, %c0_231], %204 {strides = array<i32>} : memref<484x749xbf16, #tpu.memory_space<vmem>>, vector<4x749xbf16>,
    %c0_232 = arith.constant 0 : index
    %c301 = arith.constant 301 : index
    %206 = vector.load %arg1[%c0_232, %c301] : memref<4x1089xbf16, #tpu.memory_space<vmem>>, vector<4x749xbf16>
    %c412 = arith.constant 412 : index
    %c0_233 = arith.constant 0 : index
    %207 = vector.load %arg12[%c412, %c0_233] : memref<484x749xbf16, #tpu.memory_space<vmem>>, vector<4x749xbf16>
    tpu.vector_store %arg12[%c412, %c0_233], %206 {strides = array<i32>} : memref<484x749xbf16, #tpu.memory_space<vmem>>, vector<4x749xbf16>,
    %c0_234 = arith.constant 0 : index
    %c302 = arith.constant 302 : index
    %208 = vector.load %arg1[%c0_234, %c302] : memref<4x1089xbf16, #tpu.memory_space<vmem>>, vector<4x749xbf16>
    %c416 = arith.constant 416 : index
    %c0_235 = arith.constant 0 : index
    %209 = vector.load %arg12[%c416, %c0_235] : memref<484x749xbf16, #tpu.memory_space<vmem>>, vector<4x749xbf16>
    tpu.vector_store %arg12[%c416, %c0_235], %208 {strides = array<i32>} : memref<484x749xbf16, #tpu.memory_space<vmem>>, vector<4x749xbf16>,
    %c0_236 = arith.constant 0 : index
    %c303 = arith.constant 303 : index
    %210 = vector.load %arg1[%c0_236, %c303] : memref<4x1089xbf16, #tpu.memory_space<vmem>>, vector<4x749xbf16>
    %c420 = arith.constant 420 : index
    %c0_237 = arith.constant 0 : index
    %211 = vector.load %arg12[%c420, %c0_237] : memref<484x749xbf16, #tpu.memory_space<vmem>>, vector<4x749xbf16>
    tpu.vector_store %arg12[%c420, %c0_237], %210 {strides = array<i32>} : memref<484x749xbf16, #tpu.memory_space<vmem>>, vector<4x749xbf16>,
    %c0_238 = arith.constant 0 : index
    %c304_239 = arith.constant 304 : index
    %212 = vector.load %arg1[%c0_238, %c304_239] : memref<4x1089xbf16, #tpu.memory_space<vmem>>, vector<4x749xbf16>
    %c424 = arith.constant 424 : index
    %c0_240 = arith.constant 0 : index
    %213 = vector.load %arg12[%c424, %c0_240] : memref<484x749xbf16, #tpu.memory_space<vmem>>, vector<4x749xbf16>
    tpu.vector_store %arg12[%c424, %c0_240], %212 {strides = array<i32>} : memref<484x749xbf16, #tpu.memory_space<vmem>>, vector<4x749xbf16>,
    %c0_241 = arith.constant 0 : index
    %c305 = arith.constant 305 : index
    %214 = vector.load %arg1[%c0_241, %c305] : memref<4x1089xbf16, #tpu.memory_space<vmem>>, vector<4x749xbf16>
    %c428 = arith.constant 428 : index
    %c0_242 = arith.constant 0 : index
    %215 = vector.load %arg12[%c428, %c0_242] : memref<484x749xbf16, #tpu.memory_space<vmem>>, vector<4x749xbf16>
    tpu.vector_store %arg12[%c428, %c0_242], %214 {strides = array<i32>} : memref<484x749xbf16, #tpu.memory_space<vmem>>, vector<4x749xbf16>,
    %c0_243 = arith.constant 0 : index
    %c306 = arith.constant 306 : index
    %216 = vector.load %arg1[%c0_243, %c306] : memref<4x1089xbf16, #tpu.memory_space<vmem>>, vector<4x749xbf16>
    %c432 = arith.constant 432 : index
    %c0_244 = arith.constant 0 : index
    %217 = vector.load %arg12[%c432, %c0_244] : memref<484x749xbf16, #tpu.memory_space<vmem>>, vector<4x749xbf16>
    tpu.vector_store %arg12[%c432, %c0_244], %216 {strides = array<i32>} : memref<484x749xbf16, #tpu.memory_space<vmem>>, vector<4x749xbf16>,
    %c0_245 = arith.constant 0 : index
    %c307 = arith.constant 307 : index
    %218 = vector.load %arg1[%c0_245, %c307] : memref<4x1089xbf16, #tpu.memory_space<vmem>>, vector<4x749xbf16>
    %c436 = arith.constant 436 : index
    %c0_246 = arith.constant 0 : index
    %219 = vector.load %arg12[%c436, %c0_246] : memref<484x749xbf16, #tpu.memory_space<vmem>>, vector<4x749xbf16>
    tpu.vector_store %arg12[%c436, %c0_246], %218 {strides = array<i32>} : memref<484x749xbf16, #tpu.memory_space<vmem>>, vector<4x749xbf16>,
    %c0_247 = arith.constant 0 : index
    %c330 = arith.constant 330 : index
    %220 = vector.load %arg1[%c0_247, %c330] : memref<4x1089xbf16, #tpu.memory_space<vmem>>, vector<4x749xbf16>
    %c440 = arith.constant 440 : index
    %c0_248 = arith.constant 0 : index
    %221 = vector.load %arg12[%c440, %c0_248] : memref<484x749xbf16, #tpu.memory_space<vmem>>, vector<4x749xbf16>
    tpu.vector_store %arg12[%c440, %c0_248], %220 {strides = array<i32>} : memref<484x749xbf16, #tpu.memory_space<vmem>>, vector<4x749xbf16>,
    %c0_249 = arith.constant 0 : index
    %c331 = arith.constant 331 : index
    %222 = vector.load %arg1[%c0_249, %c331] : memref<4x1089xbf16, #tpu.memory_space<vmem>>, vector<4x749xbf16>
    %c444 = arith.constant 444 : index
    %c0_250 = arith.constant 0 : index
    %223 = vector.load %arg12[%c444, %c0_250] : memref<484x749xbf16, #tpu.memory_space<vmem>>, vector<4x749xbf16>
    tpu.vector_store %arg12[%c444, %c0_250], %222 {strides = array<i32>} : memref<484x749xbf16, #tpu.memory_space<vmem>>, vector<4x749xbf16>,
    %c0_251 = arith.constant 0 : index
    %c332_252 = arith.constant 332 : index
    %224 = vector.load %arg1[%c0_251, %c332_252] : memref<4x1089xbf16, #tpu.memory_space<vmem>>, vector<4x749xbf16>
    %c448 = arith.constant 448 : index
    %c0_253 = arith.constant 0 : index
    %225 = vector.load %arg12[%c448, %c0_253] : memref<484x749xbf16, #tpu.memory_space<vmem>>, vector<4x749xbf16>
    tpu.vector_store %arg12[%c448, %c0_253], %224 {strides = array<i32>} : memref<484x749xbf16, #tpu.memory_space<vmem>>, vector<4x749xbf16>,
    %c0_254 = arith.constant 0 : index
    %c333 = arith.constant 333 : index
    %226 = vector.load %arg1[%c0_254, %c333] : memref<4x1089xbf16, #tpu.memory_space<vmem>>, vector<4x749xbf16>
    %c452 = arith.constant 452 : index
    %c0_255 = arith.constant 0 : index
    %227 = vector.load %arg12[%c452, %c0_255] : memref<484x749xbf16, #tpu.memory_space<vmem>>, vector<4x749xbf16>
    tpu.vector_store %arg12[%c452, %c0_255], %226 {strides = array<i32>} : memref<484x749xbf16, #tpu.memory_space<vmem>>, vector<4x749xbf16>,
    %c0_256 = arith.constant 0 : index
    %c334 = arith.constant 334 : index
    %228 = vector.load %arg1[%c0_256, %c334] : memref<4x1089xbf16, #tpu.memory_space<vmem>>, vector<4x749xbf16>
    %c456 = arith.constant 456 : index
    %c0_257 = arith.constant 0 : index
    %229 = vector.load %arg12[%c456, %c0_257] : memref<484x749xbf16, #tpu.memory_space<vmem>>, vector<4x749xbf16>
    tpu.vector_store %arg12[%c456, %c0_257], %228 {strides = array<i32>} : memref<484x749xbf16, #tpu.memory_space<vmem>>, vector<4x749xbf16>,
    %c0_258 = arith.constant 0 : index
    %c335 = arith.constant 335 : index
    %230 = vector.load %arg1[%c0_258, %c335] : memref<4x1089xbf16, #tpu.memory_space<vmem>>, vector<4x749xbf16>
    %c460 = arith.constant 460 : index
    %c0_259 = arith.constant 0 : index
    %231 = vector.load %arg12[%c460, %c0_259] : memref<484x749xbf16, #tpu.memory_space<vmem>>, vector<4x749xbf16>
    tpu.vector_store %arg12[%c460, %c0_259], %230 {strides = array<i32>} : memref<484x749xbf16, #tpu.memory_space<vmem>>, vector<4x749xbf16>,
    %c0_260 = arith.constant 0 : index
    %c336_261 = arith.constant 336 : index
    %232 = vector.load %arg1[%c0_260, %c336_261] : memref<4x1089xbf16, #tpu.memory_space<vmem>>, vector<4x749xbf16>
    %c464 = arith.constant 464 : index
    %c0_262 = arith.constant 0 : index
    %233 = vector.load %arg12[%c464, %c0_262] : memref<484x749xbf16, #tpu.memory_space<vmem>>, vector<4x749xbf16>
    tpu.vector_store %arg12[%c464, %c0_262], %232 {strides = array<i32>} : memref<484x749xbf16, #tpu.memory_space<vmem>>, vector<4x749xbf16>,
    %c0_263 = arith.constant 0 : index
    %c337 = arith.constant 337 : index
    %234 = vector.load %arg1[%c0_263, %c337] : memref<4x1089xbf16, #tpu.memory_space<vmem>>, vector<4x749xbf16>
    %c468 = arith.constant 468 : index
    %c0_264 = arith.constant 0 : index
    %235 = vector.load %arg12[%c468, %c0_264] : memref<484x749xbf16, #tpu.memory_space<vmem>>, vector<4x749xbf16>
    tpu.vector_store %arg12[%c468, %c0_264], %234 {strides = array<i32>} : memref<484x749xbf16, #tpu.memory_space<vmem>>, vector<4x749xbf16>,
    %c0_265 = arith.constant 0 : index
    %c338 = arith.constant 338 : index
    %236 = vector.load %arg1[%c0_265, %c338] : memref<4x1089xbf16, #tpu.memory_space<vmem>>, vector<4x749xbf16>
    %c472 = arith.constant 472 : index
    %c0_266 = arith.constant 0 : index
    %237 = vector.load %arg12[%c472, %c0_266] : memref<484x749xbf16, #tpu.memory_space<vmem>>, vector<4x749xbf16>
    tpu.vector_store %arg12[%c472, %c0_266], %236 {strides = array<i32>} : memref<484x749xbf16, #tpu.memory_space<vmem>>, vector<4x749xbf16>,
    %c0_267 = arith.constant 0 : index
    %c339 = arith.constant 339 : index
    %238 = vector.load %arg1[%c0_267, %c339] : memref<4x1089xbf16, #tpu.memory_space<vmem>>, vector<4x749xbf16>
    %c476 = arith.constant 476 : index
    %c0_268 = arith.constant 0 : index
    %239 = vector.load %arg12[%c476, %c0_268] : memref<484x749xbf16, #tpu.memory_space<vmem>>, vector<4x749xbf16>
    tpu.vector_store %arg12[%c476, %c0_268], %238 {strides = array<i32>} : memref<484x749xbf16, #tpu.memory_space<vmem>>, vector<4x749xbf16>,
    %c0_269 = arith.constant 0 : index
    %c340_270 = arith.constant 340 : index
    %240 = vector.load %arg1[%c0_269, %c340_270] : memref<4x1089xbf16, #tpu.memory_space<vmem>>, vector<4x749xbf16>
    %c480 = arith.constant 480 : index
    %c0_271 = arith.constant 0 : index
    %241 = vector.load %arg12[%c480, %c0_271] : memref<484x749xbf16, #tpu.memory_space<vmem>>, vector<4x749xbf16>
    tpu.vector_store %arg12[%c480, %c0_271], %240 {strides = array<i32>} : memref<484x749xbf16, #tpu.memory_space<vmem>>, vector<4x749xbf16>,
    %c0_272 = arith.constant 0 : index
    %c0_273 = arith.constant 0 : index
    %242 = vector.load %arg2[%c0_272, %c0_273] : memref<16x484xbf16, #tpu.memory_space<vmem>>, vector<16x484xbf16>
    %c0_274 = arith.constant 0 : index
    %c0_275 = arith.constant 0 : index
    %243 = vector.load %arg12[%c0_274, %c0_275] : memref<484x749xbf16, #tpu.memory_space<vmem>>, vector<484x749xbf16>
    %cst = arith.constant dense<0.000000e+00> : vector<16x749xf32>
    %244 = tpu.matmul %242, %243, %cst {dimension_numbers = #tpu.dot_dimension_numbers<[1], [0], [0], [1], [0, 0, 1, 1], [], []>} : vector<16x484xbf16>, vector<484x749xbf16>, vector<16x749xf32> -> vector<16x749xf32>
    %c0_276 = arith.constant 0 : index
    %c0_277 = arith.constant 0 : index
    %245 = vector.load %arg3[%c0_276, %c0_277] : memref<16x1xf32, #tpu.memory_space<vmem>>, vector<16x1xf32>
    %246 = vector.broadcast %245 : vector<16x1xf32> to vector<16x749xf32>
    %247 = arith.addf %244, %246 : vector<16x749xf32>
    %cst_278 = arith.constant 0.000000e+00 : f32
    %248 = vector.broadcast %cst_278 : f32 to vector<16x749xf32>
    %249 = arith.maximumf %247, %248 : vector<16x749xf32>
    %250 = arith.truncf %249 : vector<16x749xf32> to vector<16x749xbf16>
    %c0_279 = arith.constant 0 : index
    %c0_280 = arith.constant 0 : index
    %251 = vector.load %arg13[%c0_279, %c0_280] : memref<16x749xbf16, #tpu.memory_space<vmem>>, vector<16x749xbf16>
    tpu.vector_store %arg13[%c0_279, %c0_280], %250 {strides = array<i32>} : memref<16x749xbf16, #tpu.memory_space<vmem>>, vector<16x749xbf16>,
    %cst_281 = arith.constant 0.000000e+00 : bf16
    %252 = vector.broadcast %cst_281 : bf16 to vector<16x625xbf16>
    %c0_282 = arith.constant 0 : index
    %c0_283 = arith.constant 0 : index
    %253 = vector.load %arg14[%c0_282, %c0_283] : memref<16x625xbf16, #tpu.memory_space<vmem>>, vector<16x625xbf16>
    tpu.vector_store %arg14[%c0_282, %c0_283], %252 {strides = array<i32>} : memref<16x625xbf16, #tpu.memory_space<vmem>>, vector<16x625xbf16>,
    %c0_284 = arith.constant 0 : index
    %c0_285 = arith.constant 0 : index
    %254 = vector.load %arg13[%c0_284, %c0_285] : memref<16x749xbf16, #tpu.memory_space<vmem>>, vector<16x23xbf16>
    %c0_286 = arith.constant 0 : index
    %c26 = arith.constant 26 : index
    %255 = vector.load %arg14[%c0_286, %c26] : memref<16x625xbf16, #tpu.memory_space<vmem>>, vector<16x23xbf16>
    tpu.vector_store %arg14[%c0_286, %c26], %254 {strides = array<i32>} : memref<16x625xbf16, #tpu.memory_space<vmem>>, vector<16x23xbf16>,
    %c0_287 = arith.constant 0 : index
    %c33_288 = arith.constant 33 : index
    %256 = vector.load %arg13[%c0_287, %c33_288] : memref<16x749xbf16, #tpu.memory_space<vmem>>, vector<16x23xbf16>
    %c0_289 = arith.constant 0 : index
    %c51 = arith.constant 51 : index
    %257 = vector.load %arg14[%c0_289, %c51] : memref<16x625xbf16, #tpu.memory_space<vmem>>, vector<16x23xbf16>
    tpu.vector_store %arg14[%c0_289, %c51], %256 {strides = array<i32>} : memref<16x625xbf16, #tpu.memory_space<vmem>>, vector<16x23xbf16>,
    %c0_290 = arith.constant 0 : index
    %c66_291 = arith.constant 66 : index
    %258 = vector.load %arg13[%c0_290, %c66_291] : memref<16x749xbf16, #tpu.memory_space<vmem>>, vector<16x23xbf16>
    %c0_292 = arith.constant 0 : index
    %c76_293 = arith.constant 76 : index
    %259 = vector.load %arg14[%c0_292, %c76_293] : memref<16x625xbf16, #tpu.memory_space<vmem>>, vector<16x23xbf16>
    tpu.vector_store %arg14[%c0_292, %c76_293], %258 {strides = array<i32>} : memref<16x625xbf16, #tpu.memory_space<vmem>>, vector<16x23xbf16>,
    %c0_294 = arith.constant 0 : index
    %c99_295 = arith.constant 99 : index
    %260 = vector.load %arg13[%c0_294, %c99_295] : memref<16x749xbf16, #tpu.memory_space<vmem>>, vector<16x23xbf16>
    %c0_296 = arith.constant 0 : index
    %c101_297 = arith.constant 101 : index
    %261 = vector.load %arg14[%c0_296, %c101_297] : memref<16x625xbf16, #tpu.memory_space<vmem>>, vector<16x23xbf16>
    tpu.vector_store %arg14[%c0_296, %c101_297], %260 {strides = array<i32>} : memref<16x625xbf16, #tpu.memory_space<vmem>>, vector<16x23xbf16>,
    %c0_298 = arith.constant 0 : index
    %c132_299 = arith.constant 132 : index
    %262 = vector.load %arg13[%c0_298, %c132_299] : memref<16x749xbf16, #tpu.memory_space<vmem>>, vector<16x23xbf16>
    %c0_300 = arith.constant 0 : index
    %c126 = arith.constant 126 : index
    %263 = vector.load %arg14[%c0_300, %c126] : memref<16x625xbf16, #tpu.memory_space<vmem>>, vector<16x23xbf16>
    tpu.vector_store %arg14[%c0_300, %c126], %262 {strides = array<i32>} : memref<16x625xbf16, #tpu.memory_space<vmem>>, vector<16x23xbf16>,
    %c0_301 = arith.constant 0 : index
    %c165_302 = arith.constant 165 : index
    %264 = vector.load %arg13[%c0_301, %c165_302] : memref<16x749xbf16, #tpu.memory_space<vmem>>, vector<16x23xbf16>
    %c0_303 = arith.constant 0 : index
    %c151 = arith.constant 151 : index
    %265 = vector.load %arg14[%c0_303, %c151] : memref<16x625xbf16, #tpu.memory_space<vmem>>, vector<16x23xbf16>
    tpu.vector_store %arg14[%c0_303, %c151], %264 {strides = array<i32>} : memref<16x625xbf16, #tpu.memory_space<vmem>>, vector<16x23xbf16>,
    %c0_304 = arith.constant 0 : index
    %c198_305 = arith.constant 198 : index
    %266 = vector.load %arg13[%c0_304, %c198_305] : memref<16x749xbf16, #tpu.memory_space<vmem>>, vector<16x23xbf16>
    %c0_306 = arith.constant 0 : index
    %c176_307 = arith.constant 176 : index
    %267 = vector.load %arg14[%c0_306, %c176_307] : memref<16x625xbf16, #tpu.memory_space<vmem>>, vector<16x23xbf16>
    tpu.vector_store %arg14[%c0_306, %c176_307], %266 {strides = array<i32>} : memref<16x625xbf16, #tpu.memory_space<vmem>>, vector<16x23xbf16>,
    %c0_308 = arith.constant 0 : index
    %c231_309 = arith.constant 231 : index
    %268 = vector.load %arg13[%c0_308, %c231_309] : memref<16x749xbf16, #tpu.memory_space<vmem>>, vector<16x23xbf16>
    %c0_310 = arith.constant 0 : index
    %c201_311 = arith.constant 201 : index
    %269 = vector.load %arg14[%c0_310, %c201_311] : memref<16x625xbf16, #tpu.memory_space<vmem>>, vector<16x23xbf16>
    tpu.vector_store %arg14[%c0_310, %c201_311], %268 {strides = array<i32>} : memref<16x625xbf16, #tpu.memory_space<vmem>>, vector<16x23xbf16>,
    %c0_312 = arith.constant 0 : index
    %c264_313 = arith.constant 264 : index
    %270 = vector.load %arg13[%c0_312, %c264_313] : memref<16x749xbf16, #tpu.memory_space<vmem>>, vector<16x23xbf16>
    %c0_314 = arith.constant 0 : index
    %c226 = arith.constant 226 : index
    %271 = vector.load %arg14[%c0_314, %c226] : memref<16x625xbf16, #tpu.memory_space<vmem>>, vector<16x23xbf16>
    tpu.vector_store %arg14[%c0_314, %c226], %270 {strides = array<i32>} : memref<16x625xbf16, #tpu.memory_space<vmem>>, vector<16x23xbf16>,
    %c0_315 = arith.constant 0 : index
    %c297_316 = arith.constant 297 : index
    %272 = vector.load %arg13[%c0_315, %c297_316] : memref<16x749xbf16, #tpu.memory_space<vmem>>, vector<16x23xbf16>
    %c0_317 = arith.constant 0 : index
    %c251 = arith.constant 251 : index
    %273 = vector.load %arg14[%c0_317, %c251] : memref<16x625xbf16, #tpu.memory_space<vmem>>, vector<16x23xbf16>
    tpu.vector_store %arg14[%c0_317, %c251], %272 {strides = array<i32>} : memref<16x625xbf16, #tpu.memory_space<vmem>>, vector<16x23xbf16>,
    %c0_318 = arith.constant 0 : index
    %c330_319 = arith.constant 330 : index
    %274 = vector.load %arg13[%c0_318, %c330_319] : memref<16x749xbf16, #tpu.memory_space<vmem>>, vector<16x23xbf16>
    %c0_320 = arith.constant 0 : index
    %c276_321 = arith.constant 276 : index
    %275 = vector.load %arg14[%c0_320, %c276_321] : memref<16x625xbf16, #tpu.memory_space<vmem>>, vector<16x23xbf16>
    tpu.vector_store %arg14[%c0_320, %c276_321], %274 {strides = array<i32>} : memref<16x625xbf16, #tpu.memory_space<vmem>>, vector<16x23xbf16>,
    %c0_322 = arith.constant 0 : index
    %c363 = arith.constant 363 : index
    %276 = vector.load %arg13[%c0_322, %c363] : memref<16x749xbf16, #tpu.memory_space<vmem>>, vector<16x23xbf16>
    %c0_323 = arith.constant 0 : index
    %c301_324 = arith.constant 301 : index
    %277 = vector.load %arg14[%c0_323, %c301_324] : memref<16x625xbf16, #tpu.memory_space<vmem>>, vector<16x23xbf16>
    tpu.vector_store %arg14[%c0_323, %c301_324], %276 {strides = array<i32>} : memref<16x625xbf16, #tpu.memory_space<vmem>>, vector<16x23xbf16>,
    %c0_325 = arith.constant 0 : index
    %c396_326 = arith.constant 396 : index
    %278 = vector.load %arg13[%c0_325, %c396_326] : memref<16x749xbf16, #tpu.memory_space<vmem>>, vector<16x23xbf16>
    %c0_327 = arith.constant 0 : index
    %c326 = arith.constant 326 : index
    %279 = vector.load %arg14[%c0_327, %c326] : memref<16x625xbf16, #tpu.memory_space<vmem>>, vector<16x23xbf16>
    tpu.vector_store %arg14[%c0_327, %c326], %278 {strides = array<i32>} : memref<16x625xbf16, #tpu.memory_space<vmem>>, vector<16x23xbf16>,
    %c0_328 = arith.constant 0 : index
    %c429 = arith.constant 429 : index
    %280 = vector.load %arg13[%c0_328, %c429] : memref<16x749xbf16, #tpu.memory_space<vmem>>, vector<16x23xbf16>
    %c0_329 = arith.constant 0 : index
    %c351 = arith.constant 351 : index
    %281 = vector.load %arg14[%c0_329, %c351] : memref<16x625xbf16, #tpu.memory_space<vmem>>, vector<16x23xbf16>
    tpu.vector_store %arg14[%c0_329, %c351], %280 {strides = array<i32>} : memref<16x625xbf16, #tpu.memory_space<vmem>>, vector<16x23xbf16>,
    %c0_330 = arith.constant 0 : index
    %c462 = arith.constant 462 : index
    %282 = vector.load %arg13[%c0_330, %c462] : memref<16x749xbf16, #tpu.memory_space<vmem>>, vector<16x23xbf16>
    %c0_331 = arith.constant 0 : index
    %c376_332 = arith.constant 376 : index
    %283 = vector.load %arg14[%c0_331, %c376_332] : memref<16x625xbf16, #tpu.memory_space<vmem>>, vector<16x23xbf16>
    tpu.vector_store %arg14[%c0_331, %c376_332], %282 {strides = array<i32>} : memref<16x625xbf16, #tpu.memory_space<vmem>>, vector<16x23xbf16>,
    %c0_333 = arith.constant 0 : index
    %c495 = arith.constant 495 : index
    %284 = vector.load %arg13[%c0_333, %c495] : memref<16x749xbf16, #tpu.memory_space<vmem>>, vector<16x23xbf16>
    %c0_334 = arith.constant 0 : index
    %c401 = arith.constant 401 : index
    %285 = vector.load %arg14[%c0_334, %c401] : memref<16x625xbf16, #tpu.memory_space<vmem>>, vector<16x23xbf16>
    tpu.vector_store %arg14[%c0_334, %c401], %284 {strides = array<i32>} : memref<16x625xbf16, #tpu.memory_space<vmem>>, vector<16x23xbf16>,
    %c0_335 = arith.constant 0 : index
    %c528 = arith.constant 528 : index
    %286 = vector.load %arg13[%c0_335, %c528] : memref<16x749xbf16, #tpu.memory_space<vmem>>, vector<16x23xbf16>
    %c0_336 = arith.constant 0 : index
    %c426 = arith.constant 426 : index
    %287 = vector.load %arg14[%c0_336, %c426] : memref<16x625xbf16, #tpu.memory_space<vmem>>, vector<16x23xbf16>
    tpu.vector_store %arg14[%c0_336, %c426], %286 {strides = array<i32>} : memref<16x625xbf16, #tpu.memory_space<vmem>>, vector<16x23xbf16>,
    %c0_337 = arith.constant 0 : index
    %c561 = arith.constant 561 : index
    %288 = vector.load %arg13[%c0_337, %c561] : memref<16x749xbf16, #tpu.memory_space<vmem>>, vector<16x23xbf16>
    %c0_338 = arith.constant 0 : index
    %c451 = arith.constant 451 : index
    %289 = vector.load %arg14[%c0_338, %c451] : memref<16x625xbf16, #tpu.memory_space<vmem>>, vector<16x23xbf16>
    tpu.vector_store %arg14[%c0_338, %c451], %288 {strides = array<i32>} : memref<16x625xbf16, #tpu.memory_space<vmem>>, vector<16x23xbf16>,
    %c0_339 = arith.constant 0 : index
    %c594 = arith.constant 594 : index
    %290 = vector.load %arg13[%c0_339, %c594] : memref<16x749xbf16, #tpu.memory_space<vmem>>, vector<16x23xbf16>
    %c0_340 = arith.constant 0 : index
    %c476_341 = arith.constant 476 : index
    %291 = vector.load %arg14[%c0_340, %c476_341] : memref<16x625xbf16, #tpu.memory_space<vmem>>, vector<16x23xbf16>
    tpu.vector_store %arg14[%c0_340, %c476_341], %290 {strides = array<i32>} : memref<16x625xbf16, #tpu.memory_space<vmem>>, vector<16x23xbf16>,
    %c0_342 = arith.constant 0 : index
    %c627 = arith.constant 627 : index
    %292 = vector.load %arg13[%c0_342, %c627] : memref<16x749xbf16, #tpu.memory_space<vmem>>, vector<16x23xbf16>
    %c0_343 = arith.constant 0 : index
    %c501 = arith.constant 501 : index
    %293 = vector.load %arg14[%c0_343, %c501] : memref<16x625xbf16, #tpu.memory_space<vmem>>, vector<16x23xbf16>
    tpu.vector_store %arg14[%c0_343, %c501], %292 {strides = array<i32>} : memref<16x625xbf16, #tpu.memory_space<vmem>>, vector<16x23xbf16>,
    %c0_344 = arith.constant 0 : index
    %c660 = arith.constant 660 : index
    %294 = vector.load %arg13[%c0_344, %c660] : memref<16x749xbf16, #tpu.memory_space<vmem>>, vector<16x23xbf16>
    %c0_345 = arith.constant 0 : index
    %c526 = arith.constant 526 : index
    %295 = vector.load %arg14[%c0_345, %c526] : memref<16x625xbf16, #tpu.memory_space<vmem>>, vector<16x23xbf16>
    tpu.vector_store %arg14[%c0_345, %c526], %294 {strides = array<i32>} : memref<16x625xbf16, #tpu.memory_space<vmem>>, vector<16x23xbf16>,
    %c0_346 = arith.constant 0 : index
    %c693 = arith.constant 693 : index
    %296 = vector.load %arg13[%c0_346, %c693] : memref<16x749xbf16, #tpu.memory_space<vmem>>, vector<16x23xbf16>
    %c0_347 = arith.constant 0 : index
    %c551 = arith.constant 551 : index
    %297 = vector.load %arg14[%c0_347, %c551] : memref<16x625xbf16, #tpu.memory_space<vmem>>, vector<16x23xbf16>
    tpu.vector_store %arg14[%c0_347, %c551], %296 {strides = array<i32>} : memref<16x625xbf16, #tpu.memory_space<vmem>>, vector<16x23xbf16>,
    %c0_348 = arith.constant 0 : index
    %c726 = arith.constant 726 : index
    %298 = vector.load %arg13[%c0_348, %c726] : memref<16x749xbf16, #tpu.memory_space<vmem>>, vector<16x23xbf16>
    %c0_349 = arith.constant 0 : index
    %c576 = arith.constant 576 : index
    %299 = vector.load %arg14[%c0_349, %c576] : memref<16x625xbf16, #tpu.memory_space<vmem>>, vector<16x23xbf16>
    tpu.vector_store %arg14[%c0_349, %c576], %298 {strides = array<i32>} : memref<16x625xbf16, #tpu.memory_space<vmem>>, vector<16x23xbf16>,
    %c0_350 = arith.constant 0 : index
    %c0_351 = arith.constant 0 : index
    %300 = vector.load %arg14[%c0_350, %c0_351] : memref<16x625xbf16, #tpu.memory_space<vmem>>, vector<16x573xbf16>
    %c0_352 = arith.constant 0 : index
    %c0_353 = arith.constant 0 : index
    %301 = vector.load %arg15[%c0_352, %c0_353] : memref<144x573xbf16, #tpu.memory_space<vmem>>, vector<16x573xbf16>
    tpu.vector_store %arg15[%c0_352, %c0_353], %300 {strides = array<i32>} : memref<144x573xbf16, #tpu.memory_space<vmem>>, vector<16x573xbf16>,
    %c0_354 = arith.constant 0 : index
    %c1_355 = arith.constant 1 : index
    %302 = vector.load %arg14[%c0_354, %c1_355] : memref<16x625xbf16, #tpu.memory_space<vmem>>, vector<16x573xbf16>
    %c16_356 = arith.constant 16 : index
    %c0_357 = arith.constant 0 : index
    %303 = vector.load %arg15[%c16_356, %c0_357] : memref<144x573xbf16, #tpu.memory_space<vmem>>, vector<16x573xbf16>
    tpu.vector_store %arg15[%c16_356, %c0_357], %302 {strides = array<i32>} : memref<144x573xbf16, #tpu.memory_space<vmem>>, vector<16x573xbf16>,
    %c0_358 = arith.constant 0 : index
    %c2_359 = arith.constant 2 : index
    %304 = vector.load %arg14[%c0_358, %c2_359] : memref<16x625xbf16, #tpu.memory_space<vmem>>, vector<16x573xbf16>
    %c32_360 = arith.constant 32 : index
    %c0_361 = arith.constant 0 : index
    %305 = vector.load %arg15[%c32_360, %c0_361] : memref<144x573xbf16, #tpu.memory_space<vmem>>, vector<16x573xbf16>
    tpu.vector_store %arg15[%c32_360, %c0_361], %304 {strides = array<i32>} : memref<144x573xbf16, #tpu.memory_space<vmem>>, vector<16x573xbf16>,
    %c0_362 = arith.constant 0 : index
    %c25 = arith.constant 25 : index
    %306 = vector.load %arg14[%c0_362, %c25] : memref<16x625xbf16, #tpu.memory_space<vmem>>, vector<16x573xbf16>
    %c48_363 = arith.constant 48 : index
    %c0_364 = arith.constant 0 : index
    %307 = vector.load %arg15[%c48_363, %c0_364] : memref<144x573xbf16, #tpu.memory_space<vmem>>, vector<16x573xbf16>
    tpu.vector_store %arg15[%c48_363, %c0_364], %306 {strides = array<i32>} : memref<144x573xbf16, #tpu.memory_space<vmem>>, vector<16x573xbf16>,
    %c0_365 = arith.constant 0 : index
    %c26_366 = arith.constant 26 : index
    %308 = vector.load %arg14[%c0_365, %c26_366] : memref<16x625xbf16, #tpu.memory_space<vmem>>, vector<16x573xbf16>
    %c64_367 = arith.constant 64 : index
    %c0_368 = arith.constant 0 : index
    %309 = vector.load %arg15[%c64_367, %c0_368] : memref<144x573xbf16, #tpu.memory_space<vmem>>, vector<16x573xbf16>
    tpu.vector_store %arg15[%c64_367, %c0_368], %308 {strides = array<i32>} : memref<144x573xbf16, #tpu.memory_space<vmem>>, vector<16x573xbf16>,
    %c0_369 = arith.constant 0 : index
    %c27 = arith.constant 27 : index
    %310 = vector.load %arg14[%c0_369, %c27] : memref<16x625xbf16, #tpu.memory_space<vmem>>, vector<16x573xbf16>
    %c80_370 = arith.constant 80 : index
    %c0_371 = arith.constant 0 : index
    %311 = vector.load %arg15[%c80_370, %c0_371] : memref<144x573xbf16, #tpu.memory_space<vmem>>, vector<16x573xbf16>
    tpu.vector_store %arg15[%c80_370, %c0_371], %310 {strides = array<i32>} : memref<144x573xbf16, #tpu.memory_space<vmem>>, vector<16x573xbf16>,
    %c0_372 = arith.constant 0 : index
    %c50 = arith.constant 50 : index
    %312 = vector.load %arg14[%c0_372, %c50] : memref<16x625xbf16, #tpu.memory_space<vmem>>, vector<16x573xbf16>
    %c96_373 = arith.constant 96 : index
    %c0_374 = arith.constant 0 : index
    %313 = vector.load %arg15[%c96_373, %c0_374] : memref<144x573xbf16, #tpu.memory_space<vmem>>, vector<16x573xbf16>
    tpu.vector_store %arg15[%c96_373, %c0_374], %312 {strides = array<i32>} : memref<144x573xbf16, #tpu.memory_space<vmem>>, vector<16x573xbf16>,
    %c0_375 = arith.constant 0 : index
    %c51_376 = arith.constant 51 : index
    %314 = vector.load %arg14[%c0_375, %c51_376] : memref<16x625xbf16, #tpu.memory_space<vmem>>, vector<16x573xbf16>
    %c112_377 = arith.constant 112 : index
    %c0_378 = arith.constant 0 : index
    %315 = vector.load %arg15[%c112_377, %c0_378] : memref<144x573xbf16, #tpu.memory_space<vmem>>, vector<16x573xbf16>
    tpu.vector_store %arg15[%c112_377, %c0_378], %314 {strides = array<i32>} : memref<144x573xbf16, #tpu.memory_space<vmem>>, vector<16x573xbf16>,
    %c0_379 = arith.constant 0 : index
    %c52_380 = arith.constant 52 : index
    %316 = vector.load %arg14[%c0_379, %c52_380] : memref<16x625xbf16, #tpu.memory_space<vmem>>, vector<16x573xbf16>
    %c128_381 = arith.constant 128 : index
    %c0_382 = arith.constant 0 : index
    %317 = vector.load %arg15[%c128_381, %c0_382] : memref<144x573xbf16, #tpu.memory_space<vmem>>, vector<16x573xbf16>
    tpu.vector_store %arg15[%c128_381, %c0_382], %316 {strides = array<i32>} : memref<144x573xbf16, #tpu.memory_space<vmem>>, vector<16x573xbf16>,
    %c0_383 = arith.constant 0 : index
    %c0_384 = arith.constant 0 : index
    %318 = vector.load %arg4[%c0_383, %c0_384] : memref<32x144xbf16, #tpu.memory_space<vmem>>, vector<32x144xbf16>
    %c0_385 = arith.constant 0 : index
    %c0_386 = arith.constant 0 : index
    %319 = vector.load %arg15[%c0_385, %c0_386] : memref<144x573xbf16, #tpu.memory_space<vmem>>, vector<144x573xbf16>
    %cst_387 = arith.constant dense<0.000000e+00> : vector<32x573xf32>
    %320 = tpu.matmul %318, %319, %cst_387 {dimension_numbers = #tpu.dot_dimension_numbers<[1], [0], [0], [1], [0, 0, 1, 1], [], []>} : vector<32x144xbf16>, vector<144x573xbf16>, vector<32x573xf32> -> vector<32x573xf32>
    %c0_388 = arith.constant 0 : index
    %c0_389 = arith.constant 0 : index
    %321 = vector.load %arg5[%c0_388, %c0_389] : memref<32x1xf32, #tpu.memory_space<vmem>>, vector<32x1xf32>
    %322 = vector.broadcast %321 : vector<32x1xf32> to vector<32x573xf32>
    %323 = arith.addf %320, %322 : vector<32x573xf32>
    %cst_390 = arith.constant 0.000000e+00 : f32
    %324 = vector.broadcast %cst_390 : f32 to vector<32x573xf32>
    %325 = arith.maximumf %323, %324 : vector<32x573xf32>
    %326 = arith.truncf %325 : vector<32x573xf32> to vector<32x573xbf16>
    %c0_391 = arith.constant 0 : index
    %c0_392 = arith.constant 0 : index
    %327 = vector.load %arg8[%c0_391, %c0_392] : memref<573x144xbf16, #tpu.memory_space<vmem>>, vector<573x144xbf16>
    %cst_393 = arith.constant dense<0.000000e+00> : vector<32x144xf32>
    %328 = tpu.matmul %326, %327, %cst_393 {dimension_numbers = #tpu.dot_dimension_numbers<[1], [0], [0], [1], [0, 0, 1, 1], [], []>} : vector<32x573xbf16>, vector<573x144xbf16>, vector<32x144xf32> -> vector<32x144xf32>
    %329 = arith.truncf %328 : vector<32x144xf32> to vector<32x144xbf16>
    %c0_394 = arith.constant 0 : index
    %c0_395 = arith.constant 0 : index
    %330 = vector.load %arg6[%c0_394, %c0_395] : memref<48x32xbf16, #tpu.memory_space<vmem>>, vector<48x32xbf16>
    %cst_396 = arith.constant dense<0.000000e+00> : vector<48x144xf32>
    %331 = tpu.matmul %330, %329, %cst_396 {dimension_numbers = #tpu.dot_dimension_numbers<[1], [0], [0], [1], [0, 0, 1, 1], [], []>} : vector<48x32xbf16>, vector<32x144xbf16>, vector<48x144xf32> -> vector<48x144xf32>
    %c0_397 = arith.constant 0 : index
    %c0_398 = arith.constant 0 : index
    %332 = vector.load %arg7[%c0_397, %c0_398] : memref<48x1xf32, #tpu.memory_space<vmem>>, vector<48x1xf32>
    %333 = vector.broadcast %332 : vector<48x1xf32> to vector<48x144xf32>
    %334 = arith.addf %331, %333 : vector<48x144xf32>
    %cst_399 = arith.constant 0.000000e+00 : f32
    %335 = vector.broadcast %cst_399 : f32 to vector<48x144xf32>
    %336 = arith.maximumf %334, %335 : vector<48x144xf32>
    %337 = arith.truncf %336 : vector<48x144xf32> to vector<48x144xbf16>
    %c0_400 = arith.constant 0 : index
    %c0_401 = arith.constant 0 : index
    %338 = vector.load %arg9[%c0_400, %c0_401] : memref<144x512xbf16, #tpu.memory_space<vmem>>, vector<144x512xbf16>
    %cst_402 = arith.constant dense<0.000000e+00> : vector<48x512xf32>
    %339 = tpu.matmul %337, %338, %cst_402 {dimension_numbers = #tpu.dot_dimension_numbers<[1], [0], [0], [1], [0, 0, 1, 1], [], []>} : vector<48x144xbf16>, vector<144x512xbf16>, vector<48x512xf32> -> vector<48x512xf32>
    %c0_403 = arith.constant 0 : index
    %c0_404 = arith.constant 0 : index
    %340 = vector.load %arg10[%c0_403, %c0_404] : memref<1x512xf32, #tpu.memory_space<vmem>>, vector<1x512xf32>
    %341 = vector.broadcast %340 : vector<1x512xf32> to vector<48x512xf32>
    %342 = arith.addf %339, %341 : vector<48x512xf32>
    %cst_405 = arith.constant 0.000000e+00 : f32
    %343 = vector.broadcast %cst_405 : f32 to vector<48x512xf32>
    %344 = arith.maximumf %342, %343 : vector<48x512xf32>
    %c0_406 = arith.constant 0 : index
    %c0_407 = arith.constant 0 : index
    %345 = vector.load %arg11[%c0_406, %c0_407] : memref<48x512xf32, #tpu.memory_space<vmem>>, vector<48x512xf32>
    tpu.vector_store %arg11[%c0_406, %c0_407], %344 {strides = array<i32>} : memref<48x512xf32, #tpu.memory_space<vmem>>, vector<48x512xf32>,
    return
  }
  func.func @transform_0(%arg0: i32) -> (i32, i32) {
    %c0_i32 = arith.constant 0 : i32
    %c0_i32_0 = arith.constant 0 : i32
    %c0_i32_1 = arith.constant 0 : i32
    return %c0_i32, %c0_i32_0 : i32, i32
  }
  func.func @transform_1(%arg0: i32) -> (i32, i32) {
    %c0_i32 = arith.constant 0 : i32
    %c0_i32_0 = arith.constant 0 : i32
    %c0_i32_1 = arith.constant 0 : i32
    return %c0_i32, %c0_i32_0 : i32, i32
  }
  func.func @transform_2(%arg0: i32) -> (i32, i32) {
    %c0_i32 = arith.constant 0 : i32
    %c0_i32_0 = arith.constant 0 : i32
    %c0_i32_1 = arith.constant 0 : i32
    return %c0_i32, %c0_i32_0 : i32, i32
  }
  func.func @transform_3(%arg0: i32) -> (i32, i32) {
    %c0_i32 = arith.constant 0 : i32
    %c0_i32_0 = arith.constant 0 : i32
    %c0_i32_1 = arith.constant 0 : i32
    return %c0_i32, %c0_i32_0 : i32, i32
  }
  func.func @transform_4(%arg0: i32) -> (i32, i32) {
    %c0_i32 = arith.constant 0 : i32
    %c0_i32_0 = arith.constant 0 : i32
    %c0_i32_1 = arith.constant 0 : i32
    return %c0_i32, %c0_i32_0 : i32, i32
  }
  func.func @transform_5(%arg0: i32) -> (i32, i32) {
    %c0_i32 = arith.constant 0 : i32
    %c0_i32_0 = arith.constant 0 : i32
    %c0_i32_1 = arith.constant 0 : i32
    return %c0_i32, %c0_i32_0 : i32, i32
  }
  func.func @transform_6(%arg0: i32) -> (i32, i32) {
    %c0_i32 = arith.constant 0 : i32
    %c0_i32_0 = arith.constant 0 : i32
    %c0_i32_1 = arith.constant 0 : i32
    return %c0_i32, %c0_i32_0 : i32, i32
  }
  func.func @transform_7(%arg0: i32) -> (i32, i32) {
    %c0_i32 = arith.constant 0 : i32
    %c0_i32_0 = arith.constant 0 : i32
    %c0_i32_1 = arith.constant 0 : i32
    return %c0_i32, %c0_i32_0 : i32, i32
  }
  func.func @transform_8(%arg0: i32) -> (i32, i32) {
    %c0_i32 = arith.constant 0 : i32
    %c0_i32_0 = arith.constant 0 : i32
    %c0_i32_1 = arith.constant 0 : i32
    return %c0_i32, %c0_i32_0 : i32, i32
  }
  func.func @transform_9(%arg0: i32) -> (i32, i32) {
    %c0_i32 = arith.constant 0 : i32
    %c0_i32_0 = arith.constant 0 : i32
    %c0_i32_1 = arith.constant 0 : i32
    return %c0_i32, %c0_i32_0 : i32, i32
  }
  func.func @transform_10(%arg0: i32) -> (i32, i32) {
    %c0_i32 = arith.constant 0 : i32
    %c0_i32_0 = arith.constant 0 : i32
    %c0_i32_1 = arith.constant 0 : i32
    return %c0_i32, %c0_i32_0 : i32, i32
  }
}

</mosaic_0001>

<llo_original>
// kernel: model_forward.1
$region0: #{model_forward.1}
  #allocation0 [shape = 'u32[]', space=smem, size = 0x4, offset = 0x4, fixed_abs, tag = 'smem constant byte address 0x4 - core index']
  #allocation1 [shape = 'u32[144,128]{1,0:T(1,128)}', space=vmem, size = 0x12000, scoped, tag = 'internal scratch']
  #allocation2 [shape = 'bf16[484,749]{1,0:T(8,128)(2,1)}', space=vmem, size = 0xb7000, scoped, tag = 'scratch operand']
  #allocation3 [shape = 'bf16[16,749]{1,0:T(16,128)(2,1)}', space=vmem, size = 0x6000, scoped, tag = 'scratch operand']
  #allocation4 [shape = 'bf16[16,625]{1,0:T(16,128)(2,1)}', space=vmem, size = 0x5000, scoped, tag = 'scratch operand']
  #allocation5 [shape = 'bf16[144,573]{1,0:T(16,128)(2,1)}', space=vmem, size = 0x2d000, scoped, tag = 'scratch operand']
  %s0 = inlined_call_operand.vmem [shape: bf16[4,1089], index: 0, kind: input, shape index: {}]
  %s1 = inlined_call_operand.vmem [shape: bf16[16,484], index: 1, kind: input, shape index: {}]
  %s2 = inlined_call_operand.vmem [shape: f32[16,1], index: 2, kind: input, shape index: {}]
  %s3 = inlined_call_operand.vmem [shape: bf16[32,144], index: 3, kind: input, shape index: {}]
  %s4 = inlined_call_operand.vmem [shape: f32[32,1], index: 4, kind: input, shape index: {}]
  %s5 = inlined_call_operand.vmem [shape: bf16[48,32], index: 5, kind: input, shape index: {}]
  %s6 = inlined_call_operand.vmem [shape: f32[48,1], index: 6, kind: input, shape index: {}]
  %s7 = inlined_call_operand.vmem [shape: bf16[573,144], index: 7, kind: input, shape index: {}]
  %s8 = inlined_call_operand.vmem [shape: bf16[144,512], index: 8, kind: input, shape index: {}]
  %s9 = inlined_call_operand.vmem [shape: f32[1,512], index: 9, kind: input, shape index: {}]
  %s10 = inlined_call_operand.vmem [shape: f32[48,512], index: 10, kind: output, shape index: {}]
  %s11 = sld [smem:[#allocation0]]
  $region50: #{model_forward.1} parent=0
    _
  %s13 = ssub.s32 1, %s11
  %s14 = scalar_select 0, %s13, %s11
  // Predicated region
  $region2: #{model_forward.1} parent=0 // pred_check
    _
  $region3: #{model_forward.1} parent=0 // pred_check_branch
    %16 = sbr.rel (0) target = $region5
  $region4: #{model_forward.1} parent=0 // pred_region
    _
  $region5: #{model_forward.1} parent=0 // pred_fallthru
    _
  // Predicated region
  $region6: #{model_forward.1} parent=0 // pred_check
    _
  $region7: #{model_forward.1} parent=0 // pred_check_branch
    %18 = sbr.rel (0) target = $region9
  $region8: #{model_forward.1} parent=0 // pred_region
    _
  $region9: #{model_forward.1} parent=0 // pred_fallthru
    _
  // Predicated region
  $region10: #{model_forward.1} parent=0 // pred_check
    _
  $region11: #{model_forward.1} parent=0 // pred_check_branch
    %20 = sbr.rel (0) target = $region13
  $region12: #{model_forward.1} parent=0 // pred_region
    _
  $region13: #{model_forward.1} parent=0 // pred_fallthru
    _
  // Predicated region
  $region14: #{model_forward.1} parent=0 // pred_check
    _
  $region15: #{model_forward.1} parent=0 // pred_check_branch
    %22 = sbr.rel (0) target = $region17
  $region16: #{model_forward.1} parent=0 // pred_region
    _
  $region17: #{model_forward.1} parent=0 // pred_fallthru
    _
  // Predicated region
  $region18: #{model_forward.1} parent=0 // pred_check
    _
  $region19: #{model_forward.1} parent=0 // pred_check_branch
    %24 = sbr.rel (0) target = $region21
  $region20: #{model_forward.1} parent=0 // pred_region
    _
  $region21: #{model_forward.1} parent=0 // pred_fallthru
    _
  // Predicated region
  $region22: #{model_forward.1} parent=0 // pred_check
    _
  $region23: #{model_forward.1} parent=0 // pred_check_branch
    %26 = sbr.rel (0) target = $region25
  $region24: #{model_forward.1} parent=0 // pred_region
    _
  $region25: #{model_forward.1} parent=0 // pred_fallthru
    _
  // Predicated region
  $region26: #{model_forward.1} parent=0 // pred_check
    _
  $region27: #{model_forward.1} parent=0 // pred_check_branch
    %28 = sbr.rel (0) target = $region29
  $region28: #{model_forward.1} parent=0 // pred_region
    _
  $region29: #{model_forward.1} parent=0 // pred_fallthru
    _
  // Predicated region
  $region30: #{model_forward.1} parent=0 // pred_check
    _
  $region31: #{model_forward.1} parent=0 // pred_check_branch
    %30 = sbr.rel (0) target = $region33
  $region32: #{model_forward.1} parent=0 // pred_region
    _
  $region33: #{model_forward.1} parent=0 // pred_fallthru
    _
  // Predicated region
  $region34: #{model_forward.1} parent=0 // pred_check
    _
  $region35: #{model_forward.1} parent=0 // pred_check_branch
    %32 = sbr.rel (0) target = $region37
  $region36: #{model_forward.1} parent=0 // pred_region
    _
  $region37: #{model_forward.1} parent=0 // pred_fallthru
    _
  // Predicated region
  $region38: #{model_forward.1} parent=0 // pred_check
    _
  $region39: #{model_forward.1} parent=0 // pred_check_branch
    %34 = sbr.rel (0) target = $region41
  $region40: #{model_forward.1} parent=0 // pred_region
    _
  $region41: #{model_forward.1} parent=0 // pred_fallthru
    _
  %v36 = vld [vmem:[%s0] sm:$0xff]
  %v37 = vld [vmem:[%s0 + $0x8] sm:$0xf]
  %v40 = vcombine.high %v36, %v36
  %v42 = vunpack.c.l.s4 1983009808
  %v43 = vunpack.c.0.s8 %v42
  %v44 = vlaneseq
  %v45 = vshrl.u32 %v44, 7
  %v46 = vsub.s32 %v43, %v45
  %v47 = vrot.slane %v36, %v46
  %v49 = vunpack.c.l.s4 1983009808
  %v50 = vunpack.c.0.s8 %v49
  %v51 = vlaneseq
  %v52 = vshrl.u32 %v51, 7
  %v53 = vsub.s32 %v50, %v52
  %v54 = vrot.slane %v40, %v53
  %v56 = vunpack.c.l.s4 1983009808
  %v57 = vunpack.c.0.s8 %v56
  %v58 = vlaneseq
  %v59 = vshrl.u32 %v58, 7
  %v60 = vsub.s32 %v57, %v59
  %v61 = vrot.slane %v37, %v60
  %65 = vst [vmem:[#allocation2] sm:$0x33] %v47
  %66 = vst [vmem:[#allocation2 + $0x8] sm:$0x33] %v54
  %vm67 = vcmask 1041408
  %vm68 = vcmask 889860
  %vm69 = vmor %vm68, %vm67
  %70 = vst.msk [vmem:[#allocation2 + $0x10] sm:$0x33] %vm69, %v61
  %v71 = vld [vmem:[%s0] sm:$0xff]
  %v72 = vld [vmem:[%s0 + $0x8] sm:$0xf]
  %v75 = vcombine.low %v71, %v71
  %v77 = vunpack.c.l.s4 1983009808
  %v78 = vunpack.c.0.s8 %v77
  %v79 = vlaneseq
  %v80 = vshrl.u32 %v79, 7
  %v81 = vsub.s32 %v78, %v80
  %v82 = vrot.slane %v75, %v81
  %v84 = vunpack.c.l.s4 1983009808
  %v85 = vunpack.c.0.s8 %v84
  %v86 = vlaneseq
  %v87 = vshrl.u32 %v86, 7
  %v88 = vsub.s32 %v85, %v87
  %v89 = vrot.slane %v71, %v88
  %v90 = vcombine.low %v72, %v72
  %v92 = vunpack.c.l.s4 1983009808
  %v93 = vunpack.c.0.s8 %v92
  %v94 = vlaneseq
  %v95 = vshrl.u32 %v94, 7
  %v96 = vsub.s32 %v93, %v95
  %v97 = vrot.slane %v90, %v96
  %98 = vrot.lane.b32.xlu0 %v82, 127
  %v99 = vpop.permute.xlu0 %98
  %100 = vrot.lane.b32.xlu0 %v89, 127
  %v101 = vpop.permute.xlu0 %100
  %102 = vrot.lane.b32.xlu0 %v97, 127
  %v103 = vpop.permute.xlu0 %102
  %v104 = vrot.slane %v99, 4
  %v105 = vrot.slane %v101, 4
  %v106 = vrot.slane %v103, 4
  %vm107 = vcmask 1043456
  %v108 = vsel %vm107, %v104, %v105
  %vm109 = vcmask 1039360
  %v110 = vsel %vm109, %v99, %v108
  %v111 = vsel %vm107, %v105, %v106
  %v112 = vsel %vm109, %v101, %v111
  %v113 = vsel %vm109, %v103, %v106
  %117 = vst [vmem:[#allocation2] sm:$0xcc] %v110
  %118 = vst [vmem:[#allocation2 + $0x8] sm:$0xcc] %v112
  %vm119 = vcmask 1043458
  %vm120 = vcmask 891910
  %vm121 = vmor %vm120, %vm119
  %122 = vst.msk [vmem:[#allocation2 + $0x10] sm:$0xcc] %vm121, %v113
  %v123 = vld [vmem:[%s0] sm:$0xff]
  %v124 = vld [vmem:[%s0 + $0x8] sm:$0xf]
  %v127 = vcombine.high %v123, %v123
  %v129 = vunpack.c.l.s4 1983009808
  %v130 = vunpack.c.0.s8 %v129
  %v131 = vlaneseq
  %v132 = vshrl.u32 %v131, 7
  %v133 = vsub.s32 %v130, %v132
  %v134 = vrot.slane %v123, %v133
  %v136 = vunpack.c.l.s4 1983009808
  %v137 = vunpack.c.0.s8 %v136
  %v138 = vlaneseq
  %v139 = vshrl.u32 %v138, 7
  %v140 = vsub.s32 %v137, %v139
  %v141 = vrot.slane %v127, %v140
  %v143 = vunpack.c.l.s4 1983009808
  %v144 = vunpack.c.0.s8 %v143
  %v145 = vlaneseq
  %v146 = vshrl.u32 %v145, 7
  %v147 = vsub.s32 %v144, %v146
  %v148 = vrot.slane %v124, %v147
  %149 = vrot.lane.b32.xlu0 %v134, 126
  %v150 = vpop.permute.xlu0 %149
  %151 = vrot.lane.b32.xlu0 %v141, 126
  %v152 = vpop.permute.xlu0 %151
  %153 = vrot.lane.b32.xlu0 %v148, 126
  %v154 = vpop.permute.xlu0 %153
  %v155 = vrot.slane %v150, 4
  %v156 = vrot.slane %v152, 4
  %v157 = vrot.slane %v154, 4
  %v158 = vsel %vm107, %v155, %v156
  %vm159 = vcmask 1031168
  %v160 = vsel %vm159, %v150, %v158
  %v161 = vsel %vm107, %v156, %v157
  %v162 = vsel %vm159, %v152, %v161
  %v163 = vsel %vm159, %v154, %v157
  %167 = vst [vmem:[#allocation2 + $0x18] sm:$0x33] %v160
  %168 = vst [vmem:[#allocation2 + $0x20] sm:$0x33] %v162
  %169 = vst.msk [vmem:[#allocation2 + $0x28] sm:$0x33] %vm69, %v163
  %v170 = vld [vmem:[%s0] sm:$0xff]
  %v171 = vld [vmem:[%s0 + $0x8] sm:$0xf]
  %v174 = vcombine.low %v170, %v170
  %v176 = vunpack.c.l.s4 1983009808
  %v177 = vunpack.c.0.s8 %v176
  %v178 = vlaneseq
  %v179 = vshrl.u32 %v178, 7
  %v180 = vsub.s32 %v177, %v179
  %v181 = vrot.slane %v174, %v180
  %v183 = vunpack.c.l.s4 1983009808
  %v184 = vunpack.c.0.s8 %v183
  %v185 = vlaneseq
  %v186 = vshrl.u32 %v185, 7
  %v187 = vsub.s32 %v184, %v186
  %v188 = vrot.slane %v170, %v187
  %v189 = vcombine.low %v171, %v171
  %v191 = vunpack.c.l.s4 1983009808
  %v192 = vunpack.c.0.s8 %v191
  %v193 = vlaneseq
  %v194 = vshrl.u32 %v193, 7
  %v195 = vsub.s32 %v192, %v194
  %v196 = vrot.slane %v189, %v195
  %197 = vrot.lane.b32.xlu0 %v181, 125
  %v198 = vpop.permute.xlu0 %197
  %199 = vrot.lane.b32.xlu0 %v188, 125
  %v200 = vpop.permute.xlu0 %199
  %201 = vrot.lane.b32.xlu0 %v196, 125
  %v202 = vpop.permute.xlu0 %201
  %v203 = vrot.slane %v198, 4
  %v204 = vrot.slane %v200, 4
  %v205 = vrot.slane %v202, 4
  %v206 = vsel %vm107, %v203, %v204
  %vm207 = vcmask 1022976
  %v208 = vsel %vm207, %v198, %v206
  %v209 = vsel %vm107, %v204, %v205
  %v210 = vsel %vm207, %v200, %v209
  %v211 = vsel %vm207, %v202, %v205
  %215 = vst [vmem:[#allocation2 + $0x18] sm:$0xcc] %v208
  %216 = vst [vmem:[#allocation2 + $0x20] sm:$0xcc] %v210
  %217 = vst.msk [vmem:[#allocation2 + $0x28] sm:$0xcc] %vm121, %v211
  %v218 = vld [vmem:[%s0] sm:$0xff]
  %v219 = vld [vmem:[%s0 + $0x8] sm:$0xf]
  %v222 = vcombine.high %v218, %v218
  %v224 = vunpack.c.l.s4 1983009808
  %v225 = vunpack.c.0.s8 %v224
  %v226 = vlaneseq
  %v227 = vshrl.u32 %v226, 7
  %v228 = vsub.s32 %v225, %v227
  %v229 = vrot.slane %v218, %v228
  %v231 = vunpack.c.l.s4 1983009808
  %v232 = vunpack.c.0.s8 %v231
  %v233 = vlaneseq
  %v234 = vshrl.u32 %v233, 7
  %v235 = vsub.s32 %v232, %v234
  %v236 = vrot.slane %v222, %v235
  %v238 = vunpack.c.l.s4 1983009808
  %v239 = vunpack.c.0.s8 %v238
  %v240 = vlaneseq
  %v241 = vshrl.u32 %v240, 7
  %v242 = vsub.s32 %v239, %v241
  %v243 = vrot.slane %v219, %v242
  %244 = vrot.lane.b32.xlu0 %v229, 124
  %v245 = vpop.permute.xlu0 %244
  %246 = vrot.lane.b32.xlu0 %v236, 124
  %v247 = vpop.permute.xlu0 %246
  %248 = vrot.lane.b32.xlu0 %v243, 124
  %v249 = vpop.permute.xlu0 %248
  %v250 = vrot.slane %v245, 4
  %v251 = vrot.slane %v247, 4
  %v252 = vrot.slane %v249, 4
  %v253 = vsel %vm107, %v250, %v251
  %vm254 = vcmask 1014784
  %v255 = vsel %vm254, %v245, %v253
  %v256 = vsel %vm107, %v251, %v252
  %v257 = vsel %vm254, %v247, %v256
  %v258 = vsel %vm254, %v249, %v252
  %262 = vst [vmem:[#allocation2 + $0x30] sm:$0x33] %v255
  %263 = vst [vmem:[#allocation2 + $0x38] sm:$0x33] %v257
  %264 = vst.msk [vmem:[#allocation2 + $0x40] sm:$0x33] %vm69, %v258
  %v265 = vld [vmem:[%s0] sm:$0xff]
  %v266 = vld [vmem:[%s0 + $0x8] sm:$0xf]
  %v269 = vcombine.low %v265, %v265
  %v271 = vunpack.c.l.s4 1983009808
  %v272 = vunpack.c.0.s8 %v271
  %v273 = vlaneseq
  %v274 = vshrl.u32 %v273, 7
  %v275 = vsub.s32 %v272, %v274
  %v276 = vrot.slane %v269, %v275
  %v278 = vunpack.c.l.s4 1983009808
  %v279 = vunpack.c.0.s8 %v278
  %v280 = vlaneseq
  %v281 = vshrl.u32 %v280, 7
  %v282 = vsub.s32 %v279, %v281
  %v283 = vrot.slane %v265, %v282
  %v284 = vcombine.low %v266, %v266
  %v286 = vunpack.c.l.s4 1983009808
  %v287 = vunpack.c.0.s8 %v286
  %v288 = vlaneseq
  %v289 = vshrl.u32 %v288, 7
  %v290 = vsub.s32 %v287, %v289
  %v291 = vrot.slane %v284, %v290
  %292 = vrot.lane.b32.xlu0 %v276, 123
  %v293 = vpop.permute.xlu0 %292
  %294 = vrot.lane.b32.xlu0 %v283, 123
  %v295 = vpop.permute.xlu0 %294
  %296 = vrot.lane.b32.xlu0 %v291, 123
  %v297 = vpop.permute.xlu0 %296
  %v298 = vrot.slane %v293, 4
  %v299 = vrot.slane %v295, 4
  %v300 = vrot.slane %v297, 4
  %v301 = vsel %vm107, %v298, %v299
  %vm302 = vcmask 1006592
  %v303 = vsel %vm302, %v293, %v301
  %v304 = vsel %vm107, %v299, %v300
  %v305 = vsel %vm302, %v295, %v304
  %v306 = vsel %vm302, %v297, %v300
  %310 = vst [vmem:[#allocation2 + $0x30] sm:$0xcc] %v303
  %311 = vst [vmem:[#allocation2 + $0x38] sm:$0xcc] %v305
  %312 = vst.msk [vmem:[#allocation2 + $0x40] sm:$0xcc] %vm121, %v306
  %v313 = vld [vmem:[%s0] sm:$0xff]
  %v314 = vld [vmem:[%s0 + $0x8] sm:$0xf]
  %v317 = vcombine.high %v313, %v313
  %v319 = vunpack.c.l.s4 1983009808
  %v320 = vunpack.c.0.s8 %v319
  %v321 = vlaneseq
  %v322 = vshrl.u32 %v321, 7
  %v323 = vsub.s32 %v320, %v322
  %v324 = vrot.slane %v313, %v323
  %v326 = vunpack.c.l.s4 1983009808
  %v327 = vunpack.c.0.s8 %v326
  %v328 = vlaneseq
  %v329 = vshrl.u32 %v328, 7
  %v330 = vsub.s32 %v327, %v329
  %v331 = vrot.slane %v317, %v330
  %v333 = vunpack.c.l.s4 1983009808
  %v334 = vunpack.c.0.s8 %v333
  %v335 = vlaneseq
  %v336 = vshrl.u32 %v335, 7
  %v337 = vsub.s32 %v334, %v336
  %v338 = vrot.slane %v314, %v337
  %339 = vrot.lane.b32.xlu0 %v324, 122
  %v340 = vpop.permute.xlu0 %339
  %341 = vrot.lane.b32.xlu0 %v331, 122
  %v342 = vpop.permute.xlu0 %341
  %343 = vrot.lane.b32.xlu0 %v338, 122
  %v344 = vpop.permute.xlu0 %343
  %v345 = vrot.slane %v340, 4
  %v346 = vrot.slane %v342, 4
  %v347 = vrot.slane %v344, 4
  %v348 = vsel %vm107, %v345, %v346
  %vm349 = vcmask 998400
  %v350 = vsel %vm349, %v340, %v348
  %v351 = vsel %vm107, %v346, %v347
  %v352 = vsel %vm349, %v342, %v351
  %v353 = vsel %vm349, %v344, %v347
  %357 = vst [vmem:[#allocation2 + $0x48] sm:$0x33] %v350
  %358 = vst [vmem:[#allocation2 + $0x50] sm:$0x33] %v352
  %359 = vst.msk [vmem:[#allocation2 + $0x58] sm:$0x33] %vm69, %v353
  %v360 = vld [vmem:[%s0] sm:$0xff]
  %v361 = vld [vmem:[%s0 + $0x8] sm:$0xf]
  %v364 = vcombine.low %v360, %v360
  %v366 = vunpack.c.l.s4 1983009808
  %v367 = vunpack.c.0.s8 %v366
  %v368 = vlaneseq
  %v369 = vshrl.u32 %v368, 7
  %v370 = vsub.s32 %v367, %v369
  %v371 = vrot.slane %v364, %v370
  %v373 = vunpack.c.l.s4 1983009808
  %v374 = vunpack.c.0.s8 %v373
  %v375 = vlaneseq
  %v376 = vshrl.u32 %v375, 7
  %v377 = vsub.s32 %v374, %v376
  %v378 = vrot.slane %v360, %v377
  %v379 = vcombine.low %v361, %v361
  %v381 = vunpack.c.l.s4 1983009808
  %v382 = vunpack.c.0.s8 %v381
  %v383 = vlaneseq
  %v384 = vshrl.u32 %v383, 7
  %v385 = vsub.s32 %v382, %v384
  %v386 = vrot.slane %v379, %v385
  %387 = vrot.lane.b32.xlu0 %v371, 121
  %v388 = vpop.permute.xlu0 %387
  %389 = vrot.lane.b32.xlu0 %v378, 121
  %v390 = vpop.permute.xlu0 %389
  %391 = vrot.lane.b32.xlu0 %v386, 121
  %v392 = vpop.permute.xlu0 %391
  %v393 = vrot.slane %v388, 4
  %v394 = vrot.slane %v390, 4
  %v395 = vrot.slane %v392, 4
  %v396 = vsel %vm107, %v393, %v394
  %vm397 = vcmask 990208
  %v398 = vsel %vm397, %v388, %v396
  %v399 = vsel %vm107, %v394, %v395
  %v400 = vsel %vm397, %v390, %v399
  %v401 = vsel %vm397, %v392, %v395
  %405 = vst [vmem:[#allocation2 + $0x48] sm:$0xcc] %v398
  %406 = vst [vmem:[#allocation2 + $0x50] sm:$0xcc] %v400
  %407 = vst.msk [vmem:[#allocation2 + $0x58] sm:$0xcc] %vm121, %v401
  %v408 = vld [vmem:[%s0] sm:$0xff]
  %v409 = vld [vmem:[%s0 + $0x8] sm:$0xf]
  %v412 = vcombine.high %v408, %v408
  %v414 = vunpack.c.l.s4 1983009808
  %v415 = vunpack.c.0.s8 %v414
  %v416 = vlaneseq
  %v417 = vshrl.u32 %v416, 7
  %v418 = vsub.s32 %v415, %v417
  %v419 = vrot.slane %v408, %v418
  %v421 = vunpack.c.l.s4 1983009808
  %v422 = vunpack.c.0.s8 %v421
  %v423 = vlaneseq
  %v424 = vshrl.u32 %v423, 7
  %v425 = vsub.s32 %v422, %v424
  %v426 = vrot.slane %v412, %v425
  %v428 = vunpack.c.l.s4 1983009808
  %v429 = vunpack.c.0.s8 %v428
  %v430 = vlaneseq
  %v431 = vshrl.u32 %v430, 7
  %v432 = vsub.s32 %v429, %v431
  %v433 = vrot.slane %v409, %v432
  %434 = vrot.lane.b32.xlu0 %v419, 120
  %v435 = vpop.permute.xlu0 %434
  %436 = vrot.lane.b32.xlu0 %v426, 120
  %v437 = vpop.permute.xlu0 %436
  %438 = vrot.lane.b32.xlu0 %v433, 120
  %v439 = vpop.permute.xlu0 %438
  %v440 = vrot.slane %v435, 4
  %v441 = vrot.slane %v437, 4
  %v442 = vrot.slane %v439, 4
  %v443 = vsel %vm107, %v440, %v441
  %vm444 = vcmask 982016
  %v445 = vsel %vm444, %v435, %v443
  %v446 = vsel %vm107, %v441, %v442
  %v447 = vsel %vm444, %v437, %v446
  %v448 = vsel %vm444, %v439, %v442
  %452 = vst [vmem:[#allocation2 + $0x60] sm:$0x33] %v445
  %453 = vst [vmem:[#allocation2 + $0x68] sm:$0x33] %v447
  %454 = vst.msk [vmem:[#allocation2 + $0x70] sm:$0x33] %vm69, %v448
  %v455 = vld [vmem:[%s0] sm:$0xff]
  %v456 = vld [vmem:[%s0 + $0x8] sm:$0xf]
  %v459 = vcombine.low %v455, %v455
  %v461 = vunpack.c.l.s4 1983009808
  %v462 = vunpack.c.0.s8 %v461
  %v463 = vlaneseq
  %v464 = vshrl.u32 %v463, 7
  %v465 = vsub.s32 %v462, %v464
  %v466 = vrot.slane %v459, %v465
  %v468 = vunpack.c.l.s4 1983009808
  %v469 = vunpack.c.0.s8 %v468
  %v470 = vlaneseq
  %v471 = vshrl.u32 %v470, 7
  %v472 = vsub.s32 %v469, %v471
  %v473 = vrot.slane %v455, %v472
  %v474 = vcombine.low %v456, %v456
  %v476 = vunpack.c.l.s4 1983009808
  %v477 = vunpack.c.0.s8 %v476
  %v478 = vlaneseq
  %v479 = vshrl.u32 %v478, 7
  %v480 = vsub.s32 %v477, %v479
  %v481 = vrot.slane %v474, %v480
  %482 = vrot.lane.b32.xlu0 %v466, 119
  %v483 = vpop.permute.xlu0 %482
  %484 = vrot.lane.b32.xlu0 %v473, 119
  %v485 = vpop.permute.xlu0 %484
  %486 = vrot.lane.b32.xlu0 %v481, 119
  %v487 = vpop.permute.xlu0 %486
  %v488 = vrot.slane %v483, 4
  %v489 = vrot.slane %v485, 4
  %v490 = vrot.slane %v487, 4
  %v491 = vsel %vm107, %v488, %v489
  %vm492 = vcmask 973824
  %v493 = vsel %vm492, %v483, %v491
  %v494 = vsel %vm107, %v489, %v490
  %v495 = vsel %vm492, %v485, %v494
  %v496 = vsel %vm492, %v487, %v490
  %500 = vst [vmem:[#allocation2 + $0x60] sm:$0xcc] %v493
  %501 = vst [vmem:[#allocation2 + $0x68] sm:$0xcc] %v495
  %502 = vst.msk [vmem:[#allocation2 + $0x70] sm:$0xcc] %vm121, %v496
  %v503 = vld [vmem:[%s0] sm:$0xff]
  %v504 = vld [vmem:[%s0 + $0x8] sm:$0xf]
  %v507 = vcombine.high %v503, %v503
  %v509 = vunpack.c.l.s4 1983009808
  %v510 = vunpack.c.0.s8 %v509
  %v511 = vlaneseq
  %v512 = vshrl.u32 %v511, 7
  %v513 = vsub.s32 %v510, %v512
  %v514 = vrot.slane %v503, %v513
  %v516 = vunpack.c.l.s4 1983009808
  %v517 = vunpack.c.0.s8 %v516
  %v518 = vlaneseq
  %v519 = vshrl.u32 %v518, 7
  %v520 = vsub.s32 %v517, %v519
  %v521 = vrot.slane %v507, %v520
  %v523 = vunpack.c.l.s4 1983009808
  %v524 = vunpack.c.0.s8 %v523
  %v525 = vlaneseq
  %v526 = vshrl.u32 %v525, 7
  %v527 = vsub.s32 %v524, %v526
  %v528 = vrot.slane %v504, %v527
  %529 = vrot.lane.b32.xlu0 %v514, 118
  %v530 = vpop.permute.xlu0 %529
  %531 = vrot.lane.b32.xlu0 %v521, 118
  %v532 = vpop.permute.xlu0 %531
  %533 = vrot.lane.b32.xlu0 %v528, 118
  %v534 = vpop.permute.xlu0 %533
  %v535 = vrot.slane %v530, 4
  %v536 = vrot.slane %v532, 4
  %v537 = vrot.slane %v534, 4
  %v538 = vsel %vm107, %v535, %v536
  %vm539 = vcmask 965632
  %v540 = vsel %vm539, %v530, %v538
  %v541 = vsel %vm107, %v536, %v537
  %v542 = vsel %vm539, %v532, %v541
  %v543 = vsel %vm539, %v534, %v537
  %547 = vst [vmem:[#allocation2 + $0x78] sm:$0x33] %v540
  %548 = vst [vmem:[#allocation2 + $0x80] sm:$0x33] %v542
  %549 = vst.msk [vmem:[#allocation2 + $0x88] sm:$0x33] %vm69, %v543
  %v550 = vld [vmem:[%s0] sm:$0xff]
  %v551 = vld [vmem:[%s0 + $0x8] sm:$0x3f]
  %v554 = vcombine.low %v550, %v550
  %v556 = vunpack.c.l.s4 1983009808
  %v557 = vunpack.c.0.s8 %v556
  %v558 = vlaneseq
  %v559 = vshrl.u32 %v558, 7
  %v560 = vsub.s32 %v557, %v559
  %v561 = vrot.slane %v554, %v560
  %v563 = vunpack.c.l.s4 1983009808
  %v564 = vunpack.c.0.s8 %v563
  %v565 = vlaneseq
  %v566 = vshrl.u32 %v565, 7
  %v567 = vsub.s32 %v564, %v566
  %v568 = vrot.slane %v550, %v567
  %v569 = vcombine.low %v551, %v551
  %v571 = vunpack.c.l.s4 1983009808
  %v572 = vunpack.c.0.s8 %v571
  %v573 = vlaneseq
  %v574 = vshrl.u32 %v573, 7
  %v575 = vsub.s32 %v572, %v574
  %v576 = vrot.slane %v569, %v575
  %v578 = vunpack.c.l.s4 1983009808
  %v579 = vunpack.c.0.s8 %v578
  %v580 = vlaneseq
  %v581 = vshrl.u32 %v580, 7
  %v582 = vsub.s32 %v579, %v581
  %v583 = vrot.slane %v551, %v582
  %584 = vrot.lane.b32.xlu0 %v561, 95
  %v585 = vpop.permute.xlu0 %584
  %586 = vrot.lane.b32.xlu0 %v568, 95
  %v587 = vpop.permute.xlu0 %586
  %588 = vrot.lane.b32.xlu0 %v576, 95
  %v589 = vpop.permute.xlu0 %588
  %590 = vrot.lane.b32.xlu0 %v583, 95
  %v591 = vpop.permute.xlu0 %590
  %v592 = vrot.slane %v585, 4
  %v593 = vrot.slane %v587, 4
  %v594 = vrot.slane %v589, 4
  %v595 = vrot.slane %v591, 4
  %v596 = vsel %vm107, %v592, %v593
  %vm597 = vcmask 777216
  %v598 = vsel %vm597, %v585, %v596
  %v599 = vsel %vm107, %v593, %v594
  %v600 = vsel %vm597, %v587, %v599
  %v601 = vsel %vm107, %v594, %v595
  %v602 = vsel %vm597, %v589, %v601
  %606 = vst [vmem:[#allocation2 + $0x78] sm:$0xcc] %v598
  %607 = vst [vmem:[#allocation2 + $0x80] sm:$0xcc] %v600
  %608 = vst.msk [vmem:[#allocation2 + $0x88] sm:$0xcc] %vm121, %v602
  %v609 = vld [vmem:[%s0] sm:$0xff]
  %v610 = vld [vmem:[%s0 + $0x8] sm:$0x3f]
  %v613 = vcombine.high %v609, %v609
  %v615 = vunpack.c.l.s4 1983009808
  %v616 = vunpack.c.0.s8 %v615
  %v617 = vlaneseq
  %v618 = vshrl.u32 %v617, 7
  %v619 = vsub.s32 %v616, %v618
  %v620 = vrot.slane %v609, %v619
  %v622 = vunpack.c.l.s4 1983009808
  %v623 = vunpack.c.0.s8 %v622
  %v624 = vlaneseq
  %v625 = vshrl.u32 %v624, 7
  %v626 = vsub.s32 %v623, %v625
  %v627 = vrot.slane %v613, %v626
  %v628 = vcombine.high %v610, %v610
  %v630 = vunpack.c.l.s4 1983009808
  %v631 = vunpack.c.0.s8 %v630
  %v632 = vlaneseq
  %v633 = vshrl.u32 %v632, 7
  %v634 = vsub.s32 %v631, %v633
  %v635 = vrot.slane %v610, %v634
  %v637 = vunpack.c.l.s4 1983009808
  %v638 = vunpack.c.0.s8 %v637
  %v639 = vlaneseq
  %v640 = vshrl.u32 %v639, 7
  %v641 = vsub.s32 %v638, %v640
  %v642 = vrot.slane %v628, %v641
  %643 = vrot.lane.b32.xlu0 %v620, 94
  %v644 = vpop.permute.xlu0 %643
  %645 = vrot.lane.b32.xlu0 %v627, 94
  %v646 = vpop.permute.xlu0 %645
  %647 = vrot.lane.b32.xlu0 %v635, 94
  %v648 = vpop.permute.xlu0 %647
  %649 = vrot.lane.b32.xlu0 %v642, 94
  %v650 = vpop.permute.xlu0 %649
  %v651 = vrot.slane %v644, 4
  %v652 = vrot.slane %v646, 4
  %v653 = vrot.slane %v648, 4
  %v654 = vrot.slane %v650, 4
  %v655 = vsel %vm107, %v651, %v652
  %vm656 = vcmask 769024
  %v657 = vsel %vm656, %v644, %v655
  %v658 = vsel %vm107, %v652, %v653
  %v659 = vsel %vm656, %v646, %v658
  %v660 = vsel %vm107, %v653, %v654
  %v661 = vsel %vm656, %v648, %v660
  %665 = vst [vmem:[#allocation2 + $0x90] sm:$0x33] %v657
  %666 = vst [vmem:[#allocation2 + $0x98] sm:$0x33] %v659
  %667 = vst.msk [vmem:[#allocation2 + $0xa0] sm:$0x33] %vm69, %v661
  %v668 = vld [vmem:[%s0] sm:$0xff]
  %v669 = vld [vmem:[%s0 + $0x8] sm:$0x3f]
  %v672 = vcombine.low %v668, %v668
  %v674 = vunpack.c.l.s4 1983009808
  %v675 = vunpack.c.0.s8 %v674
  %v676 = vlaneseq
  %v677 = vshrl.u32 %v676, 7
  %v678 = vsub.s32 %v675, %v677
  %v679 = vrot.slane %v672, %v678
  %v681 = vunpack.c.l.s4 1983009808
  %v682 = vunpack.c.0.s8 %v681
  %v683 = vlaneseq
  %v684 = vshrl.u32 %v683, 7
  %v685 = vsub.s32 %v682, %v684
  %v686 = vrot.slane %v668, %v685
  %v687 = vcombine.low %v669, %v669
  %v689 = vunpack.c.l.s4 1983009808
  %v690 = vunpack.c.0.s8 %v689
  %v691 = vlaneseq
  %v692 = vshrl.u32 %v691, 7
  %v693 = vsub.s32 %v690, %v692
  %v694 = vrot.slane %v687, %v693
  %v696 = vunpack.c.l.s4 1983009808
  %v697 = vunpack.c.0.s8 %v696
  %v698 = vlaneseq
  %v699 = vshrl.u32 %v698, 7
  %v700 = vsub.s32 %v697, %v699
  %v701 = vrot.slane %v669, %v700
  %702 = vrot.lane.b32.xlu0 %v679, 93
  %v703 = vpop.permute.xlu0 %702
  %704 = vrot.lane.b32.xlu0 %v686, 93
  %v705 = vpop.permute.xlu0 %704
  %706 = vrot.lane.b32.xlu0 %v694, 93
  %v707 = vpop.permute.xlu0 %706
  %708 = vrot.lane.b32.xlu0 %v701, 93
  %v709 = vpop.permute.xlu0 %708
  %v710 = vrot.slane %v703, 4
  %v711 = vrot.slane %v705, 4
  %v712 = vrot.slane %v707, 4
  %v713 = vrot.slane %v709, 4
  %v714 = vsel %vm107, %v710, %v711
  %vm715 = vcmask 760832
  %v716 = vsel %vm715, %v703, %v714
  %v717 = vsel %vm107, %v711, %v712
  %v718 = vsel %vm715, %v705, %v717
  %v719 = vsel %vm107, %v712, %v713
  %v720 = vsel %vm715, %v707, %v719
  %724 = vst [vmem:[#allocation2 + $0x90] sm:$0xcc] %v716
  %725 = vst [vmem:[#allocation2 + $0x98] sm:$0xcc] %v718
  %726 = vst.msk [vmem:[#allocation2 + $0xa0] sm:$0xcc] %vm121, %v720
  %v727 = vld [vmem:[%s0] sm:$0xff]
  %v728 = vld [vmem:[%s0 + $0x8] sm:$0x3f]
  %v731 = vcombine.high %v727, %v727
  %v733 = vunpack.c.l.s4 1983009808
  %v734 = vunpack.c.0.s8 %v733
  %v735 = vlaneseq
  %v736 = vshrl.u32 %v735, 7
  %v737 = vsub.s32 %v734, %v736
  %v738 = vrot.slane %v727, %v737
  %v740 = vunpack.c.l.s4 1983009808
  %v741 = vunpack.c.0.s8 %v740
  %v742 = vlaneseq
  %v743 = vshrl.u32 %v742, 7
  %v744 = vsub.s32 %v741, %v743
  %v745 = vrot.slane %v731, %v744
  %v746 = vcombine.high %v728, %v728
  %v748 = vunpack.c.l.s4 1983009808
  %v749 = vunpack.c.0.s8 %v748
  %v750 = vlaneseq
  %v751 = vshrl.u32 %v750, 7
  %v752 = vsub.s32 %v749, %v751
  %v753 = vrot.slane %v728, %v752
  %v755 = vunpack.c.l.s4 1983009808
  %v756 = vunpack.c.0.s8 %v755
  %v757 = vlaneseq
  %v758 = vshrl.u32 %v757, 7
  %v759 = vsub.s32 %v756, %v758
  %v760 = vrot.slane %v746, %v759
  %761 = vrot.lane.b32.xlu0 %v738, 92
  %v762 = vpop.permute.xlu0 %761
  %763 = vrot.lane.b32.xlu0 %v745, 92
  %v764 = vpop.permute.xlu0 %763
  %765 = vrot.lane.b32.xlu0 %v753, 92
  %v766 = vpop.permute.xlu0 %765
  %767 = vrot.lane.b32.xlu0 %v760, 92
  %v768 = vpop.permute.xlu0 %767
  %v769 = vrot.slane %v762, 4
  %v770 = vrot.slane %v764, 4
  %v771 = vrot.slane %v766, 4
  %v772 = vrot.slane %v768, 4
  %v773 = vsel %vm107, %v769, %v770
  %vm774 = vcmask 752640
  %v775 = vsel %vm774, %v762, %v773
  %v776 = vsel %vm107, %v770, %v771
  %v777 = vsel %vm774, %v764, %v776
  %v778 = vsel %vm107, %v771, %v772
  %v779 = vsel %vm774, %v766, %v778
  %783 = vst [vmem:[#allocation2 + $0xa8] sm:$0x33] %v775
  %784 = vst [vmem:[#allocation2 + $0xb0] sm:$0x33] %v777
  %785 = vst.msk [vmem:[#allocation2 + $0xb8] sm:$0x33] %vm69, %v779
  %v786 = vld [vmem:[%s0] sm:$0xff]
  %v787 = vld [vmem:[%s0 + $0x8] sm:$0x3f]
  %v790 = vcombine.low %v786, %v786
  %v792 = vunpack.c.l.s4 1983009808
  %v793 = vunpack.c.0.s8 %v792
  %v794 = vlaneseq
  %v795 = vshrl.u32 %v794, 7
  %v796 = vsub.s32 %v793, %v795
  %v797 = vrot.slane %v790, %v796
  %v799 = vunpack.c.l.s4 1983009808
  %v800 = vunpack.c.0.s8 %v799
  %v801 = vlaneseq
  %v802 = vshrl.u32 %v801, 7
  %v803 = vsub.s32 %v800, %v802
  %v804 = vrot.slane %v786, %v803
  %v805 = vcombine.low %v787, %v787
  %v807 = vunpack.c.l.s4 1983009808
  %v808 = vunpack.c.0.s8 %v807
  %v809 = vlaneseq
  %v810 = vshrl.u32 %v809, 7
  %v811 = vsub.s32 %v808, %v810
  %v812 = vrot.slane %v805, %v811
  %v814 = vunpack.c.l.s4 1983009808
  %v815 = vunpack.c.0.s8 %v814
  %v816 = vlaneseq
  %v817 = vshrl.u32 %v816, 7
  %v818 = vsub.s32 %v815, %v817
  %v819 = vrot.slane %v787, %v818
  %820 = vrot.lane.b32.xlu0 %v797, 91
  %v821 = vpop.permute.xlu0 %820
  %822 = vrot.lane.b32.xlu0 %v804, 91
  %v823 = vpop.permute.xlu0 %822
  %824 = vrot.lane.b32.xlu0 %v812, 91
  %v825 = vpop.permute.xlu0 %824
  %826 = vrot.lane.b32.xlu0 %v819, 91
  %v827 = vpop.permute.xlu0 %826
  %v828 = vrot.slane %v821, 4
  %v829 = vrot.slane %v823, 4
  %v830 = vrot.slane %v825, 4
  %v831 = vrot.slane %v827, 4
  %v832 = vsel %vm107, %v828, %v829
  %vm833 = vcmask 744448
  %v834 = vsel %vm833, %v821, %v832
  %v835 = vsel %vm107, %v829, %v830
  %v836 = vsel %vm833, %v823, %v835
  %v837 = vsel %vm107, %v830, %v831
  %v838 = vsel %vm833, %v825, %v837
  %842 = vst [vmem:[#allocation2 + $0xa8] sm:$0xcc] %v834
  %843 = vst [vmem:[#allocation2 + $0xb0] sm:$0xcc] %v836
  %844 = vst.msk [vmem:[#allocation2 + $0xb8] sm:$0xcc] %vm121, %v838
  %v845 = vld [vmem:[%s0] sm:$0xff]
  %v846 = vld [vmem:[%s0 + $0x8] sm:$0x3f]
  %v849 = vcombine.high %v845, %v845
  %v851 = vunpack.c.l.s4 1983009808
  %v852 = vunpack.c.0.s8 %v851
  %v853 = vlaneseq
  %v854 = vshrl.u32 %v853, 7
  %v855 = vsub.s32 %v852, %v854
  %v856 = vrot.slane %v845, %v855
  %v858 = vunpack.c.l.s4 1983009808
  %v859 = vunpack.c.0.s8 %v858
  %v860 = vlaneseq
  %v861 = vshrl.u32 %v860, 7
  %v862 = vsub.s32 %v859, %v861
  %v863 = vrot.slane %v849, %v862
  %v864 = vcombine.high %v846, %v846
  %v866 = vunpack.c.l.s4 1983009808
  %v867 = vunpack.c.0.s8 %v866
  %v868 = vlaneseq
  %v869 = vshrl.u32 %v868, 7
  %v870 = vsub.s32 %v867, %v869
  %v871 = vrot.slane %v846, %v870
  %v873 = vunpack.c.l.s4 1983009808
  %v874 = vunpack.c.0.s8 %v873
  %v875 = vlaneseq
  %v876 = vshrl.u32 %v875, 7
  %v877 = vsub.s32 %v874, %v876
  %v878 = vrot.slane %v864, %v877
  %879 = vrot.lane.b32.xlu0 %v856, 90
  %v880 = vpop.permute.xlu0 %879
  %881 = vrot.lane.b32.xlu0 %v863, 90
  %v882 = vpop.permute.xlu0 %881
  %883 = vrot.lane.b32.xlu0 %v871, 90
  %v884 = vpop.permute.xlu0 %883
  %885 = vrot.lane.b32.xlu0 %v878, 90
  %v886 = vpop.permute.xlu0 %885
  %v887 = vrot.slane %v880, 4
  %v888 = vrot.slane %v882, 4
  %v889 = vrot.slane %v884, 4
  %v890 = vrot.slane %v886, 4
  %v891 = vsel %vm107, %v887, %v888
  %vm892 = vcmask 736256
  %v893 = vsel %vm892, %v880, %v891
  %v894 = vsel %vm107, %v888, %v889
  %v895 = vsel %vm892, %v882, %v894
  %v896 = vsel %vm107, %v889, %v890
  %v897 = vsel %vm892, %v884, %v896
  %901 = vst [vmem:[#allocation2 + $0xc0] sm:$0x33] %v893
  %902 = vst [vmem:[#allocation2 + $0xc8] sm:$0x33] %v895
  %903 = vst.msk [vmem:[#allocation2 + $0xd0] sm:$0x33] %vm69, %v897
  %v904 = vld [vmem:[%s0] sm:$0xff]
  %v905 = vld [vmem:[%s0 + $0x8] sm:$0x3f]
  %v908 = vcombine.low %v904, %v904
  %v910 = vunpack.c.l.s4 1983009808
  %v911 = vunpack.c.0.s8 %v910
  %v912 = vlaneseq
  %v913 = vshrl.u32 %v912, 7
  %v914 = vsub.s32 %v911, %v913
  %v915 = vrot.slane %v908, %v914
  %v917 = vunpack.c.l.s4 1983009808
  %v918 = vunpack.c.0.s8 %v917
  %v919 = vlaneseq
  %v920 = vshrl.u32 %v919, 7
  %v921 = vsub.s32 %v918, %v920
  %v922 = vrot.slane %v904, %v921
  %v923 = vcombine.low %v905, %v905
  %v925 = vunpack.c.l.s4 1983009808
  %v926 = vunpack.c.0.s8 %v925
  %v927 = vlaneseq
  %v928 = vshrl.u32 %v927, 7
  %v929 = vsub.s32 %v926, %v928
  %v930 = vrot.slane %v923, %v929
  %v932 = vunpack.c.l.s4 1983009808
  %v933 = vunpack.c.0.s8 %v932
  %v934 = vlaneseq
  %v935 = vshrl.u32 %v934, 7
  %v936 = vsub.s32 %v933, %v935
  %v937 = vrot.slane %v905, %v936
  %938 = vrot.lane.b32.xlu0 %v915, 89
  %v939 = vpop.permute.xlu0 %938
  %940 = vrot.lane.b32.xlu0 %v922, 89
  %v941 = vpop.permute.xlu0 %940
  %942 = vrot.lane.b32.xlu0 %v930, 89
  %v943 = vpop.permute.xlu0 %942
  %944 = vrot.lane.b32.xlu0 %v937, 89
  %v945 = vpop.permute.xlu0 %944
  %v946 = vrot.slane %v939, 4
  %v947 = vrot.slane %v941, 4
  %v948 = vrot.slane %v943, 4
  %v949 = vrot.slane %v945, 4
  %v950 = vsel %vm107, %v946, %v947
  %vm951 = vcmask 728064
  %v952 = vsel %vm951, %v939, %v950
  %v953 = vsel %vm107, %v947, %v948
  %v954 = vsel %vm951, %v941, %v953
  %v955 = vsel %vm107, %v948, %v949
  %v956 = vsel %vm951, %v943, %v955
  %960 = vst [vmem:[#allocation2 + $0xc0] sm:$0xcc] %v952
  %961 = vst [vmem:[#allocation2 + $0xc8] sm:$0xcc] %v954
  %962 = vst.msk [vmem:[#allocation2 + $0xd0] sm:$0xcc] %vm121, %v956
  %v963 = vld [vmem:[%s0] sm:$0xff]
  %v964 = vld [vmem:[%s0 + $0x8] sm:$0x3f]
  %v967 = vcombine.high %v963, %v963
  %v969 = vunpack.c.l.s4 1983009808
  %v970 = vunpack.c.0.s8 %v969
  %v971 = vlaneseq
  %v972 = vshrl.u32 %v971, 7
  %v973 = vsub.s32 %v970, %v972
  %v974 = vrot.slane %v963, %v973
  %v976 = vunpack.c.l.s4 1983009808
  %v977 = vunpack.c.0.s8 %v976
  %v978 = vlaneseq
  %v979 = vshrl.u32 %v978, 7
  %v980 = vsub.s32 %v977, %v979
  %v981 = vrot.slane %v967, %v980
  %v982 = vcombine.high %v964, %v964
  %v984 = vunpack.c.l.s4 1983009808
  %v985 = vunpack.c.0.s8 %v984
  %v986 = vlaneseq
  %v987 = vshrl.u32 %v986, 7
  %v988 = vsub.s32 %v985, %v987
  %v989 = vrot.slane %v964, %v988
  %v991 = vunpack.c.l.s4 1983009808
  %v992 = vunpack.c.0.s8 %v991
  %v993 = vlaneseq
  %v994 = vshrl.u32 %v993, 7
  %v995 = vsub.s32 %v992, %v994
  %v996 = vrot.slane %v982, %v995
  %997 = vrot.lane.b32.xlu0 %v974, 88
  %v998 = vpop.permute.xlu0 %997
  %999 = vrot.lane.b32.xlu0 %v981, 88
  %v1000 = vpop.permute.xlu0 %999
  %1001 = vrot.lane.b32.xlu0 %v989, 88
  %v1002 = vpop.permute.xlu0 %1001
  %1003 = vrot.lane.b32.xlu0 %v996, 88
  %v1004 = vpop.permute.xlu0 %1003
  %v1005 = vrot.slane %v998, 4
  %v1006 = vrot.slane %v1000, 4
  %v1007 = vrot.slane %v1002, 4
  %v1008 = vrot.slane %v1004, 4
  %v1009 = vsel %vm107, %v1005, %v1006
  %vm1010 = vcmask 719872
  %v1011 = vsel %vm1010, %v998, %v1009
  %v1012 = vsel %vm107, %v1006, %v1007
  %v1013 = vsel %vm1010, %v1000, %v1012
  %v1014 = vsel %vm107, %v1007, %v1008
  %v1015 = vsel %vm1010, %v1002, %v1014
  %1019 = vst [vmem:[#allocation2 + $0xd8] sm:$0x33] %v1011
  %1020 = vst [vmem:[#allocation2 + $0xe0] sm:$0x33] %v1013
  %1021 = vst.msk [vmem:[#allocation2 + $0xe8] sm:$0x33] %vm69, %v1015
  %v1022 = vld [vmem:[%s0] sm:$0xff]
  %v1023 = vld [vmem:[%s0 + $0x8] sm:$0x3f]
  %v1026 = vcombine.low %v1022, %v1022
  %v1028 = vunpack.c.l.s4 1983009808
  %v1029 = vunpack.c.0.s8 %v1028
  %v1030 = vlaneseq
  %v1031 = vshrl.u32 %v1030, 7
  %v1032 = vsub.s32 %v1029, %v1031
  %v1033 = vrot.slane %v1026, %v1032
  %v1035 = vunpack.c.l.s4 1983009808
  %v1036 = vunpack.c.0.s8 %v1035
  %v1037 = vlaneseq
  %v1038 = vshrl.u32 %v1037, 7
  %v1039 = vsub.s32 %v1036, %v1038
  %v1040 = vrot.slane %v1022, %v1039
  %v1041 = vcombine.low %v1023, %v1023
  %v1043 = vunpack.c.l.s4 1983009808
  %v1044 = vunpack.c.0.s8 %v1043
  %v1045 = vlaneseq
  %v1046 = vshrl.u32 %v1045, 7
  %v1047 = vsub.s32 %v1044, %v1046
  %v1048 = vrot.slane %v1041, %v1047
  %v1050 = vunpack.c.l.s4 1983009808
  %v1051 = vunpack.c.0.s8 %v1050
  %v1052 = vlaneseq
  %v1053 = vshrl.u32 %v1052, 7
  %v1054 = vsub.s32 %v1051, %v1053
  %v1055 = vrot.slane %v1023, %v1054
  %1056 = vrot.lane.b32.xlu0 %v1033, 87
  %v1057 = vpop.permute.xlu0 %1056
  %1058 = vrot.lane.b32.xlu0 %v1040, 87
  %v1059 = vpop.permute.xlu0 %1058
  %1060 = vrot.lane.b32.xlu0 %v1048, 87
  %v1061 = vpop.permute.xlu0 %1060
  %1062 = vrot.lane.b32.xlu0 %v1055, 87
  %v1063 = vpop.permute.xlu0 %1062
  %v1064 = vrot.slane %v1057, 4
  %v1065 = vrot.slane %v1059, 4
  %v1066 = vrot.slane %v1061, 4
  %v1067 = vrot.slane %v1063, 4
  %v1068 = vsel %vm107, %v1064, %v1065
  %vm1069 = vcmask 711680
  %v1070 = vsel %vm1069, %v1057, %v1068
  %v1071 = vsel %vm107, %v1065, %v1066
  %v1072 = vsel %vm1069, %v1059, %v1071
  %v1073 = vsel %vm107, %v1066, %v1067
  %v1074 = vsel %vm1069, %v1061, %v1073
  %1078 = vst [vmem:[#allocation2 + $0xd8] sm:$0xcc] %v1070
  %1079 = vst [vmem:[#allocation2 + $0xe0] sm:$0xcc] %v1072
  %1080 = vst.msk [vmem:[#allocation2 + $0xe8] sm:$0xcc] %vm121, %v1074
  %v1081 = vld [vmem:[%s0] sm:$0xff]
  %v1082 = vld [vmem:[%s0 + $0x8] sm:$0x3f]
  %v1085 = vcombine.high %v1081, %v1081
  %v1087 = vunpack.c.l.s4 1983009808
  %v1088 = vunpack.c.0.s8 %v1087
  %v1089 = vlaneseq
  %v1090 = vshrl.u32 %v1089, 7
  %v1091 = vsub.s32 %v1088, %v1090
  %v1092 = vrot.slane %v1081, %v1091
  %v1094 = vunpack.c.l.s4 1983009808
  %v1095 = vunpack.c.0.s8 %v1094
  %v1096 = vlaneseq
  %v1097 = vshrl.u32 %v1096, 7
  %v1098 = vsub.s32 %v1095, %v1097
  %v1099 = vrot.slane %v1085, %v1098
  %v1100 = vcombine.high %v1082, %v1082
  %v1102 = vunpack.c.l.s4 1983009808
  %v1103 = vunpack.c.0.s8 %v1102
  %v1104 = vlaneseq
  %v1105 = vshrl.u32 %v1104, 7
  %v1106 = vsub.s32 %v1103, %v1105
  %v1107 = vrot.slane %v1082, %v1106
  %v1109 = vunpack.c.l.s4 1983009808
  %v1110 = vunpack.c.0.s8 %v1109
  %v1111 = vlaneseq
  %v1112 = vshrl.u32 %v1111, 7
  %v1113 = vsub.s32 %v1110, %v1112
  %v1114 = vrot.slane %v1100, %v1113
  %1115 = vrot.lane.b32.xlu0 %v1092, 86
  %v1116 = vpop.permute.xlu0 %1115
  %1117 = vrot.lane.b32.xlu0 %v1099, 86
  %v1118 = vpop.permute.xlu0 %1117
  %1119 = vrot.lane.b32.xlu0 %v1107, 86
  %v1120 = vpop.permute.xlu0 %1119
  %1121 = vrot.lane.b32.xlu0 %v1114, 86
  %v1122 = vpop.permute.xlu0 %1121
  %v1123 = vrot.slane %v1116, 4
  %v1124 = vrot.slane %v1118, 4
  %v1125 = vrot.slane %v1120, 4
  %v1126 = vrot.slane %v1122, 4
  %v1127 = vsel %vm107, %v1123, %v1124
  %vm1128 = vcmask 703488
  %v1129 = vsel %vm1128, %v1116, %v1127
  %v1130 = vsel %vm107, %v1124, %v1125
  %v1131 = vsel %vm1128, %v1118, %v1130
  %v1132 = vsel %vm107, %v1125, %v1126
  %v1133 = vsel %vm1128, %v1120, %v1132
  %1137 = vst [vmem:[#allocation2 + $0xf0] sm:$0x33] %v1129
  %1138 = vst [vmem:[#allocation2 + $0xf8] sm:$0x33] %v1131
  %1139 = vst.msk [vmem:[#allocation2 + $0x100] sm:$0x33] %vm69, %v1133
  %v1140 = vld [vmem:[%s0] sm:$0xff]
  %v1141 = vld [vmem:[%s0 + $0x8] sm:$0x3f]
  %v1144 = vcombine.low %v1140, %v1140
  %v1146 = vunpack.c.l.s4 1983009808
  %v1147 = vunpack.c.0.s8 %v1146
  %v1148 = vlaneseq
  %v1149 = vshrl.u32 %v1148, 7
  %v1150 = vsub.s32 %v1147, %v1149
  %v1151 = vrot.slane %v1144, %v1150
  %v1153 = vunpack.c.l.s4 1983009808
  %v1154 = vunpack.c.0.s8 %v1153
  %v1155 = vlaneseq
  %v1156 = vshrl.u32 %v1155, 7
  %v1157 = vsub.s32 %v1154, %v1156
  %v1158 = vrot.slane %v1140, %v1157
  %v1159 = vcombine.low %v1141, %v1141
  %v1161 = vunpack.c.l.s4 1983009808
  %v1162 = vunpack.c.0.s8 %v1161
  %v1163 = vlaneseq
  %v1164 = vshrl.u32 %v1163, 7
  %v1165 = vsub.s32 %v1162, %v1164
  %v1166 = vrot.slane %v1159, %v1165
  %v1168 = vunpack.c.l.s4 1983009808
  %v1169 = vunpack.c.0.s8 %v1168
  %v1170 = vlaneseq
  %v1171 = vshrl.u32 %v1170, 7
  %v1172 = vsub.s32 %v1169, %v1171
  %v1173 = vrot.slane %v1141, %v1172
  %1174 = vrot.lane.b32.xlu0 %v1151, 85
  %v1175 = vpop.permute.xlu0 %1174
  %1176 = vrot.lane.b32.xlu0 %v1158, 85
  %v1177 = vpop.permute.xlu0 %1176
  %1178 = vrot.lane.b32.xlu0 %v1166, 85
  %v1179 = vpop.permute.xlu0 %1178
  %1180 = vrot.lane.b32.xlu0 %v1173, 85
  %v1181 = vpop.permute.xlu0 %1180
  %v1182 = vrot.slane %v1175, 4
  %v1183 = vrot.slane %v1177, 4
  %v1184 = vrot.slane %v1179, 4
  %v1185 = vrot.slane %v1181, 4
  %v1186 = vsel %vm107, %v1182, %v1183
  %vm1187 = vcmask 695296
  %v1188 = vsel %vm1187, %v1175, %v1186
  %v1189 = vsel %vm107, %v1183, %v1184
  %v1190 = vsel %vm1187, %v1177, %v1189
  %v1191 = vsel %vm107, %v1184, %v1185
  %v1192 = vsel %vm1187, %v1179, %v1191
  %1196 = vst [vmem:[#allocation2 + $0xf0] sm:$0xcc] %v1188
  %1197 = vst [vmem:[#allocation2 + $0xf8] sm:$0xcc] %v1190
  %1198 = vst.msk [vmem:[#allocation2 + $0x100] sm:$0xcc] %vm121, %v1192
  %v1199 = vld [vmem:[%s0] sm:$0xff]
  %v1200 = vld [vmem:[%s0 + $0x8] sm:$0x3f]
  %v1203 = vcombine.high %v1199, %v1199
  %v1205 = vunpack.c.l.s4 1983009808
  %v1206 = vunpack.c.0.s8 %v1205
  %v1207 = vlaneseq
  %v1208 = vshrl.u32 %v1207, 7
  %v1209 = vsub.s32 %v1206, %v1208
  %v1210 = vrot.slane %v1199, %v1209
  %v1212 = vunpack.c.l.s4 1983009808
  %v1213 = vunpack.c.0.s8 %v1212
  %v1214 = vlaneseq
  %v1215 = vshrl.u32 %v1214, 7
  %v1216 = vsub.s32 %v1213, %v1215
  %v1217 = vrot.slane %v1203, %v1216
  %v1218 = vcombine.high %v1200, %v1200
  %v1220 = vunpack.c.l.s4 1983009808
  %v1221 = vunpack.c.0.s8 %v1220
  %v1222 = vlaneseq
  %v1223 = vshrl.u32 %v1222, 7
  %v1224 = vsub.s32 %v1221, %v1223
  %v1225 = vrot.slane %v1200, %v1224
  %v1227 = vunpack.c.l.s4 1983009808
  %v1228 = vunpack.c.0.s8 %v1227
  %v1229 = vlaneseq
  %v1230 = vshrl.u32 %v1229, 7
  %v1231 = vsub.s32 %v1228, %v1230
  %v1232 = vrot.slane %v1218, %v1231
  %1233 = vrot.lane.b32.xlu0 %v1210, 62
  %v1234 = vpop.permute.xlu0 %1233
  %1235 = vrot.lane.b32.xlu0 %v1217, 62
  %v1236 = vpop.permute.xlu0 %1235
  %1237 = vrot.lane.b32.xlu0 %v1225, 62
  %v1238 = vpop.permute.xlu0 %1237
  %1239 = vrot.lane.b32.xlu0 %v1232, 62
  %v1240 = vpop.permute.xlu0 %1239
  %v1241 = vrot.slane %v1234, 4
  %v1242 = vrot.slane %v1236, 4
  %v1243 = vrot.slane %v1238, 4
  %v1244 = vrot.slane %v1240, 4
  %v1245 = vsel %vm107, %v1241, %v1242
  %vm1246 = vcmask 506880
  %v1247 = vsel %vm1246, %v1234, %v1245
  %v1248 = vsel %vm107, %v1242, %v1243
  %v1249 = vsel %vm1246, %v1236, %v1248
  %v1250 = vsel %vm107, %v1243, %v1244
  %v1251 = vsel %vm1246, %v1238, %v1250
  %1255 = vst [vmem:[#allocation2 + $0x108] sm:$0x33] %v1247
  %1256 = vst [vmem:[#allocation2 + $0x110] sm:$0x33] %v1249
  %1257 = vst.msk [vmem:[#allocation2 + $0x118] sm:$0x33] %vm69, %v1251
  %v1258 = vld [vmem:[%s0] sm:$0xff]
  %v1259 = vld [vmem:[%s0 + $0x8] sm:$0x3f]
  %v1262 = vcombine.low %v1258, %v1258
  %v1264 = vunpack.c.l.s4 1983009808
  %v1265 = vunpack.c.0.s8 %v1264
  %v1266 = vlaneseq
  %v1267 = vshrl.u32 %v1266, 7
  %v1268 = vsub.s32 %v1265, %v1267
  %v1269 = vrot.slane %v1262, %v1268
  %v1271 = vunpack.c.l.s4 1983009808
  %v1272 = vunpack.c.0.s8 %v1271
  %v1273 = vlaneseq
  %v1274 = vshrl.u32 %v1273, 7
  %v1275 = vsub.s32 %v1272, %v1274
  %v1276 = vrot.slane %v1258, %v1275
  %v1277 = vcombine.low %v1259, %v1259
  %v1279 = vunpack.c.l.s4 1983009808
  %v1280 = vunpack.c.0.s8 %v1279
  %v1281 = vlaneseq
  %v1282 = vshrl.u32 %v1281, 7
  %v1283 = vsub.s32 %v1280, %v1282
  %v1284 = vrot.slane %v1277, %v1283
  %v1286 = vunpack.c.l.s4 1983009808
  %v1287 = vunpack.c.0.s8 %v1286
  %v1288 = vlaneseq
  %v1289 = vshrl.u32 %v1288, 7
  %v1290 = vsub.s32 %v1287, %v1289
  %v1291 = vrot.slane %v1259, %v1290
  %1292 = vrot.lane.b32.xlu0 %v1269, 61
  %v1293 = vpop.permute.xlu0 %1292
  %1294 = vrot.lane.b32.xlu0 %v1276, 61
  %v1295 = vpop.permute.xlu0 %1294
  %1296 = vrot.lane.b32.xlu0 %v1284, 61
  %v1297 = vpop.permute.xlu0 %1296
  %1298 = vrot.lane.b32.xlu0 %v1291, 61
  %v1299 = vpop.permute.xlu0 %1298
  %v1300 = vrot.slane %v1293, 4
  %v1301 = vrot.slane %v1295, 4
  %v1302 = vrot.slane %v1297, 4
  %v1303 = vrot.slane %v1299, 4
  %v1304 = vsel %vm107, %v1300, %v1301
  %vm1305 = vcmask 498688
  %v1306 = vsel %vm1305, %v1293, %v1304
  %v1307 = vsel %vm107, %v1301, %v1302
  %v1308 = vsel %vm1305, %v1295, %v1307
  %v1309 = vsel %vm107, %v1302, %v1303
  %v1310 = vsel %vm1305, %v1297, %v1309
  %1314 = vst [vmem:[#allocation2 + $0x108] sm:$0xcc] %v1306
  %1315 = vst [vmem:[#allocation2 + $0x110] sm:$0xcc] %v1308
  %1316 = vst.msk [vmem:[#allocation2 + $0x118] sm:$0xcc] %vm121, %v1310
  %v1317 = vld [vmem:[%s0] sm:$0xff]
  %v1318 = vld [vmem:[%s0 + $0x8] sm:$0x3f]
  %v1321 = vcombine.high %v1317, %v1317
  %v1323 = vunpack.c.l.s4 1983009808
  %v1324 = vunpack.c.0.s8 %v1323
  %v1325 = vlaneseq
  %v1326 = vshrl.u32 %v1325, 7
  %v1327 = vsub.s32 %v1324, %v1326
  %v1328 = vrot.slane %v1317, %v1327
  %v1330 = vunpack.c.l.s4 1983009808
  %v1331 = vunpack.c.0.s8 %v1330
  %v1332 = vlaneseq
  %v1333 = vshrl.u32 %v1332, 7
  %v1334 = vsub.s32 %v1331, %v1333
  %v1335 = vrot.slane %v1321, %v1334
  %v1336 = vcombine.high %v1318, %v1318
  %v1338 = vunpack.c.l.s4 1983009808
  %v1339 = vunpack.c.0.s8 %v1338
  %v1340 = vlaneseq
  %v1341 = vshrl.u32 %v1340, 7
  %v1342 = vsub.s32 %v1339, %v1341
  %v1343 = vrot.slane %v1318, %v1342
  %v1345 = vunpack.c.l.s4 1983009808
  %v1346 = vunpack.c.0.s8 %v1345
  %v1347 = vlaneseq
  %v1348 = vshrl.u32 %v1347, 7
  %v1349 = vsub.s32 %v1346, %v1348
  %v1350 = vrot.slane %v1336, %v1349
  %1351 = vrot.lane.b32.xlu0 %v1328, 60
  %v1352 = vpop.permute.xlu0 %1351
  %1353 = vrot.lane.b32.xlu0 %v1335, 60
  %v1354 = vpop.permute.xlu0 %1353
  %1355 = vrot.lane.b32.xlu0 %v1343, 60
  %v1356 = vpop.permute.xlu0 %1355
  %1357 = vrot.lane.b32.xlu0 %v1350, 60
  %v1358 = vpop.permute.xlu0 %1357
  %v1359 = vrot.slane %v1352, 4
  %v1360 = vrot.slane %v1354, 4
  %v1361 = vrot.slane %v1356, 4
  %v1362 = vrot.slane %v1358, 4
  %v1363 = vsel %vm107, %v1359, %v1360
  %vm1364 = vcmask 490496
  %v1365 = vsel %vm1364, %v1352, %v1363
  %v1366 = vsel %vm107, %v1360, %v1361
  %v1367 = vsel %vm1364, %v1354, %v1366
  %v1368 = vsel %vm107, %v1361, %v1362
  %v1369 = vsel %vm1364, %v1356, %v1368
  %1373 = vst [vmem:[#allocation2 + $0x120] sm:$0x33] %v1365
  %1374 = vst [vmem:[#allocation2 + $0x128] sm:$0x33] %v1367
  %1375 = vst.msk [vmem:[#allocation2 + $0x130] sm:$0x33] %vm69, %v1369
  %v1376 = vld [vmem:[%s0] sm:$0xff]
  %v1377 = vld [vmem:[%s0 + $0x8] sm:$0x3f]
  %v1380 = vcombine.low %v1376, %v1376
  %v1382 = vunpack.c.l.s4 1983009808
  %v1383 = vunpack.c.0.s8 %v1382
  %v1384 = vlaneseq
  %v1385 = vshrl.u32 %v1384, 7
  %v1386 = vsub.s32 %v1383, %v1385
  %v1387 = vrot.slane %v1380, %v1386
  %v1389 = vunpack.c.l.s4 1983009808
  %v1390 = vunpack.c.0.s8 %v1389
  %v1391 = vlaneseq
  %v1392 = vshrl.u32 %v1391, 7
  %v1393 = vsub.s32 %v1390, %v1392
  %v1394 = vrot.slane %v1376, %v1393
  %v1395 = vcombine.low %v1377, %v1377
  %v1397 = vunpack.c.l.s4 1983009808
  %v1398 = vunpack.c.0.s8 %v1397
  %v1399 = vlaneseq
  %v1400 = vshrl.u32 %v1399, 7
  %v1401 = vsub.s32 %v1398, %v1400
  %v1402 = vrot.slane %v1395, %v1401
  %v1404 = vunpack.c.l.s4 1983009808
  %v1405 = vunpack.c.0.s8 %v1404
  %v1406 = vlaneseq
  %v1407 = vshrl.u32 %v1406, 7
  %v1408 = vsub.s32 %v1405, %v1407
  %v1409 = vrot.slane %v1377, %v1408
  %1410 = vrot.lane.b32.xlu0 %v1387, 59
  %v1411 = vpop.permute.xlu0 %1410
  %1412 = vrot.lane.b32.xlu0 %v1394, 59
  %v1413 = vpop.permute.xlu0 %1412
  %1414 = vrot.lane.b32.xlu0 %v1402, 59
  %v1415 = vpop.permute.xlu0 %1414
  %1416 = vrot.lane.b32.xlu0 %v1409, 59
  %v1417 = vpop.permute.xlu0 %1416
  %v1418 = vrot.slane %v1411, 4
  %v1419 = vrot.slane %v1413, 4
  %v1420 = vrot.slane %v1415, 4
  %v1421 = vrot.slane %v1417, 4
  %v1422 = vsel %vm107, %v1418, %v1419
  %vm1423 = vcmask 482304
  %v1424 = vsel %vm1423, %v1411, %v1422
  %v1425 = vsel %vm107, %v1419, %v1420
  %v1426 = vsel %vm1423, %v1413, %v1425
  %v1427 = vsel %vm107, %v1420, %v1421
  %v1428 = vsel %vm1423, %v1415, %v1427
  %1432 = vst [vmem:[#allocation2 + $0x120] sm:$0xcc] %v1424
  %1433 = vst [vmem:[#allocation2 + $0x128] sm:$0xcc] %v1426
  %1434 = vst.msk [vmem:[#allocation2 + $0x130] sm:$0xcc] %vm121, %v1428
  %v1435 = vld [vmem:[%s0] sm:$0xff]
  %v1436 = vld [vmem:[%s0 + $0x8] sm:$0x3f]
  %v1439 = vcombine.high %v1435, %v1435
  %v1441 = vunpack.c.l.s4 1983009808
  %v1442 = vunpack.c.0.s8 %v1441
  %v1443 = vlaneseq
  %v1444 = vshrl.u32 %v1443, 7
  %v1445 = vsub.s32 %v1442, %v1444
  %v1446 = vrot.slane %v1435, %v1445
  %v1448 = vunpack.c.l.s4 1983009808
  %v1449 = vunpack.c.0.s8 %v1448
  %v1450 = vlaneseq
  %v1451 = vshrl.u32 %v1450, 7
  %v1452 = vsub.s32 %v1449, %v1451
  %v1453 = vrot.slane %v1439, %v1452
  %v1454 = vcombine.high %v1436, %v1436
  %v1456 = vunpack.c.l.s4 1983009808
  %v1457 = vunpack.c.0.s8 %v1456
  %v1458 = vlaneseq
  %v1459 = vshrl.u32 %v1458, 7
  %v1460 = vsub.s32 %v1457, %v1459
  %v1461 = vrot.slane %v1436, %v1460
  %v1463 = vunpack.c.l.s4 1983009808
  %v1464 = vunpack.c.0.s8 %v1463
  %v1465 = vlaneseq
  %v1466 = vshrl.u32 %v1465, 7
  %v1467 = vsub.s32 %v1464, %v1466
  %v1468 = vrot.slane %v1454, %v1467
  %1469 = vrot.lane.b32.xlu0 %v1446, 58
  %v1470 = vpop.permute.xlu0 %1469
  %1471 = vrot.lane.b32.xlu0 %v1453, 58
  %v1472 = vpop.permute.xlu0 %1471
  %1473 = vrot.lane.b32.xlu0 %v1461, 58
  %v1474 = vpop.permute.xlu0 %1473
  %1475 = vrot.lane.b32.xlu0 %v1468, 58
  %v1476 = vpop.permute.xlu0 %1475
  %v1477 = vrot.slane %v1470, 4
  %v1478 = vrot.slane %v1472, 4
  %v1479 = vrot.slane %v1474, 4
  %v1480 = vrot.slane %v1476, 4
  %v1481 = vsel %vm107, %v1477, %v1478
  %vm1482 = vcmask 474112
  %v1483 = vsel %vm1482, %v1470, %v1481
  %v1484 = vsel %vm107, %v1478, %v1479
  %v1485 = vsel %vm1482, %v1472, %v1484
  %v1486 = vsel %vm107, %v1479, %v1480
  %v1487 = vsel %vm1482, %v1474, %v1486
  %1491 = vst [vmem:[#allocation2 + $0x138] sm:$0x33] %v1483
  %1492 = vst [vmem:[#allocation2 + $0x140] sm:$0x33] %v1485
  %1493 = vst.msk [vmem:[#allocation2 + $0x148] sm:$0x33] %vm69, %v1487
  %v1494 = vld [vmem:[%s0] sm:$0xff]
  %v1495 = vld [vmem:[%s0 + $0x8] sm:$0x3f]
  %v1498 = vcombine.low %v1494, %v1494
  %v1500 = vunpack.c.l.s4 1983009808
  %v1501 = vunpack.c.0.s8 %v1500
  %v1502 = vlaneseq
  %v1503 = vshrl.u32 %v1502, 7
  %v1504 = vsub.s32 %v1501, %v1503
  %v1505 = vrot.slane %v1498, %v1504
  %v1507 = vunpack.c.l.s4 1983009808
  %v1508 = vunpack.c.0.s8 %v1507
  %v1509 = vlaneseq
  %v1510 = vshrl.u32 %v1509, 7
  %v1511 = vsub.s32 %v1508, %v1510
  %v1512 = vrot.slane %v1494, %v1511
  %v1513 = vcombine.low %v1495, %v1495
  %v1515 = vunpack.c.l.s4 1983009808
  %v1516 = vunpack.c.0.s8 %v1515
  %v1517 = vlaneseq
  %v1518 = vshrl.u32 %v1517, 7
  %v1519 = vsub.s32 %v1516, %v1518
  %v1520 = vrot.slane %v1513, %v1519
  %v1522 = vunpack.c.l.s4 1983009808
  %v1523 = vunpack.c.0.s8 %v1522
  %v1524 = vlaneseq
  %v1525 = vshrl.u32 %v1524, 7
  %v1526 = vsub.s32 %v1523, %v1525
  %v1527 = vrot.slane %v1495, %v1526
  %1528 = vrot.lane.b32.xlu0 %v1505, 57
  %v1529 = vpop.permute.xlu0 %1528
  %1530 = vrot.lane.b32.xlu0 %v1512, 57
  %v1531 = vpop.permute.xlu0 %1530
  %1532 = vrot.lane.b32.xlu0 %v1520, 57
  %v1533 = vpop.permute.xlu0 %1532
  %1534 = vrot.lane.b32.xlu0 %v1527, 57
  %v1535 = vpop.permute.xlu0 %1534
  %v1536 = vrot.slane %v1529, 4
  %v1537 = vrot.slane %v1531, 4
  %v1538 = vrot.slane %v1533, 4
  %v1539 = vrot.slane %v1535, 4
  %v1540 = vsel %vm107, %v1536, %v1537
  %vm1541 = vcmask 465920
  %v1542 = vsel %vm1541, %v1529, %v1540
  %v1543 = vsel %vm107, %v1537, %v1538
  %v1544 = vsel %vm1541, %v1531, %v1543
  %v1545 = vsel %vm107, %v1538, %v1539
  %v1546 = vsel %vm1541, %v1533, %v1545
  %1550 = vst [vmem:[#allocation2 + $0x138] sm:$0xcc] %v1542
  %1551 = vst [vmem:[#allocation2 + $0x140] sm:$0xcc] %v1544
  %1552 = vst.msk [vmem:[#allocation2 + $0x148] sm:$0xcc] %vm121, %v1546
  %v1553 = vld [vmem:[%s0] sm:$0xff]
  %v1554 = vld [vmem:[%s0 + $0x8] sm:$0x3f]
  %v1557 = vcombine.high %v1553, %v1553
  %v1559 = vunpack.c.l.s4 1983009808
  %v1560 = vunpack.c.0.s8 %v1559
  %v1561 = vlaneseq
  %v1562 = vshrl.u32 %v1561, 7
  %v1563 = vsub.s32 %v1560, %v1562
  %v1564 = vrot.slane %v1553, %v1563
  %v1566 = vunpack.c.l.s4 1983009808
  %v1567 = vunpack.c.0.s8 %v1566
  %v1568 = vlaneseq
  %v1569 = vshrl.u32 %v1568, 7
  %v1570 = vsub.s32 %v1567, %v1569
  %v1571 = vrot.slane %v1557, %v1570
  %v1572 = vcombine.high %v1554, %v1554
  %v1574 = vunpack.c.l.s4 1983009808
  %v1575 = vunpack.c.0.s8 %v1574
  %v1576 = vlaneseq
  %v1577 = vshrl.u32 %v1576, 7
  %v1578 = vsub.s32 %v1575, %v1577
  %v1579 = vrot.slane %v1554, %v1578
  %v1581 = vunpack.c.l.s4 1983009808
  %v1582 = vunpack.c.0.s8 %v1581
  %v1583 = vlaneseq
  %v1584 = vshrl.u32 %v1583, 7
  %v1585 = vsub.s32 %v1582, %v1584
  %v1586 = vrot.slane %v1572, %v1585
  %1587 = vrot.lane.b32.xlu0 %v1564, 56
  %v1588 = vpop.permute.xlu0 %1587
  %1589 = vrot.lane.b32.xlu0 %v1571, 56
  %v1590 = vpop.permute.xlu0 %1589
  %1591 = vrot.lane.b32.xlu0 %v1579, 56
  %v1592 = vpop.permute.xlu0 %1591
  %1593 = vrot.lane.b32.xlu0 %v1586, 56
  %v1594 = vpop.permute.xlu0 %1593
  %v1595 = vrot.slane %v1588, 4
  %v1596 = vrot.slane %v1590, 4
  %v1597 = vrot.slane %v1592, 4
  %v1598 = vrot.slane %v1594, 4
  %v1599 = vsel %vm107, %v1595, %v1596
  %vm1600 = vcmask 457728
  %v1601 = vsel %vm1600, %v1588, %v1599
  %v1602 = vsel %vm107, %v1596, %v1597
  %v1603 = vsel %vm1600, %v1590, %v1602
  %v1604 = vsel %vm107, %v1597, %v1598
  %v1605 = vsel %vm1600, %v1592, %v1604
  %1609 = vst [vmem:[#allocation2 + $0x150] sm:$0x33] %v1601
  %1610 = vst [vmem:[#allocation2 + $0x158] sm:$0x33] %v1603
  %1611 = vst.msk [vmem:[#allocation2 + $0x160] sm:$0x33] %vm69, %v1605
  %v1612 = vld [vmem:[%s0] sm:$0xff]
  %v1613 = vld [vmem:[%s0 + $0x8] sm:$0x3f]
  %v1616 = vcombine.low %v1612, %v1612
  %v1618 = vunpack.c.l.s4 1983009808
  %v1619 = vunpack.c.0.s8 %v1618
  %v1620 = vlaneseq
  %v1621 = vshrl.u32 %v1620, 7
  %v1622 = vsub.s32 %v1619, %v1621
  %v1623 = vrot.slane %v1616, %v1622
  %v1625 = vunpack.c.l.s4 1983009808
  %v1626 = vunpack.c.0.s8 %v1625
  %v1627 = vlaneseq
  %v1628 = vshrl.u32 %v1627, 7
  %v1629 = vsub.s32 %v1626, %v1628
  %v1630 = vrot.slane %v1612, %v1629
  %v1631 = vcombine.low %v1613, %v1613
  %v1633 = vunpack.c.l.s4 1983009808
  %v1634 = vunpack.c.0.s8 %v1633
  %v1635 = vlaneseq
  %v1636 = vshrl.u32 %v1635, 7
  %v1637 = vsub.s32 %v1634, %v1636
  %v1638 = vrot.slane %v1631, %v1637
  %v1640 = vunpack.c.l.s4 1983009808
  %v1641 = vunpack.c.0.s8 %v1640
  %v1642 = vlaneseq
  %v1643 = vshrl.u32 %v1642, 7
  %v1644 = vsub.s32 %v1641, %v1643
  %v1645 = vrot.slane %v1613, %v1644
  %1646 = vrot.lane.b32.xlu0 %v1623, 55
  %v1647 = vpop.permute.xlu0 %1646
  %1648 = vrot.lane.b32.xlu0 %v1630, 55
  %v1649 = vpop.permute.xlu0 %1648
  %1650 = vrot.lane.b32.xlu0 %v1638, 55
  %v1651 = vpop.permute.xlu0 %1650
  %1652 = vrot.lane.b32.xlu0 %v1645, 55
  %v1653 = vpop.permute.xlu0 %1652
  %v1654 = vrot.slane %v1647, 4
  %v1655 = vrot.slane %v1649, 4
  %v1656 = vrot.slane %v1651, 4
  %v1657 = vrot.slane %v1653, 4
  %v1658 = vsel %vm107, %v1654, %v1655
  %vm1659 = vcmask 449536
  %v1660 = vsel %vm1659, %v1647, %v1658
  %v1661 = vsel %vm107, %v1655, %v1656
  %v1662 = vsel %vm1659, %v1649, %v1661
  %v1663 = vsel %vm107, %v1656, %v1657
  %v1664 = vsel %vm1659, %v1651, %v1663
  %1668 = vst [vmem:[#allocation2 + $0x150] sm:$0xcc] %v1660
  %1669 = vst [vmem:[#allocation2 + $0x158] sm:$0xcc] %v1662
  %1670 = vst.msk [vmem:[#allocation2 + $0x160] sm:$0xcc] %vm121, %v1664
  %v1671 = vld [vmem:[%s0] sm:$0xff]
  %v1672 = vld [vmem:[%s0 + $0x8] sm:$0x3f]
  %v1675 = vcombine.high %v1671, %v1671
  %v1677 = vunpack.c.l.s4 1983009808
  %v1678 = vunpack.c.0.s8 %v1677
  %v1679 = vlaneseq
  %v1680 = vshrl.u32 %v1679, 7
  %v1681 = vsub.s32 %v1678, %v1680
  %v1682 = vrot.slane %v1671, %v1681
  %v1684 = vunpack.c.l.s4 1983009808
  %v1685 = vunpack.c.0.s8 %v1684
  %v1686 = vlaneseq
  %v1687 = vshrl.u32 %v1686, 7
  %v1688 = vsub.s32 %v1685, %v1687
  %v1689 = vrot.slane %v1675, %v1688
  %v1690 = vcombine.high %v1672, %v1672
  %v1692 = vunpack.c.l.s4 1983009808
  %v1693 = vunpack.c.0.s8 %v1692
  %v1694 = vlaneseq
  %v1695 = vshrl.u32 %v1694, 7
  %v1696 = vsub.s32 %v1693, %v1695
  %v1697 = vrot.slane %v1672, %v1696
  %v1699 = vunpack.c.l.s4 1983009808
  %v1700 = vunpack.c.0.s8 %v1699
  %v1701 = vlaneseq
  %v1702 = vshrl.u32 %v1701, 7
  %v1703 = vsub.s32 %v1700, %v1702
  %v1704 = vrot.slane %v1690, %v1703
  %1705 = vrot.lane.b32.xlu0 %v1682, 54
  %v1706 = vpop.permute.xlu0 %1705
  %1707 = vrot.lane.b32.xlu0 %v1689, 54
  %v1708 = vpop.permute.xlu0 %1707
  %1709 = vrot.lane.b32.xlu0 %v1697, 54
  %v1710 = vpop.permute.xlu0 %1709
  %1711 = vrot.lane.b32.xlu0 %v1704, 54
  %v1712 = vpop.permute.xlu0 %1711
  %v1713 = vrot.slane %v1706, 4
  %v1714 = vrot.slane %v1708, 4
  %v1715 = vrot.slane %v1710, 4
  %v1716 = vrot.slane %v1712, 4
  %v1717 = vsel %vm107, %v1713, %v1714
  %vm1718 = vcmask 441344
  %v1719 = vsel %vm1718, %v1706, %v1717
  %v1720 = vsel %vm107, %v1714, %v1715
  %v1721 = vsel %vm1718, %v1708, %v1720
  %v1722 = vsel %vm107, %v1715, %v1716
  %v1723 = vsel %vm1718, %v1710, %v1722
  %1727 = vst [vmem:[#allocation2 + $0x168] sm:$0x33] %v1719
  %1728 = vst [vmem:[#allocation2 + $0x170] sm:$0x33] %v1721
  %1729 = vst.msk [vmem:[#allocation2 + $0x178] sm:$0x33] %vm69, %v1723
  %v1730 = vld [vmem:[%s0] sm:$0xff]
  %v1731 = vld [vmem:[%s0 + $0x8] sm:$0x3f]
  %v1734 = vcombine.low %v1730, %v1730
  %v1736 = vunpack.c.l.s4 1983009808
  %v1737 = vunpack.c.0.s8 %v1736
  %v1738 = vlaneseq
  %v1739 = vshrl.u32 %v1738, 7
  %v1740 = vsub.s32 %v1737, %v1739
  %v1741 = vrot.slane %v1734, %v1740
  %v1743 = vunpack.c.l.s4 1983009808
  %v1744 = vunpack.c.0.s8 %v1743
  %v1745 = vlaneseq
  %v1746 = vshrl.u32 %v1745, 7
  %v1747 = vsub.s32 %v1744, %v1746
  %v1748 = vrot.slane %v1730, %v1747
  %v1749 = vcombine.low %v1731, %v1731
  %v1751 = vunpack.c.l.s4 1983009808
  %v1752 = vunpack.c.0.s8 %v1751
  %v1753 = vlaneseq
  %v1754 = vshrl.u32 %v1753, 7
  %v1755 = vsub.s32 %v1752, %v1754
  %v1756 = vrot.slane %v1749, %v1755
  %v1758 = vunpack.c.l.s4 1983009808
  %v1759 = vunpack.c.0.s8 %v1758
  %v1760 = vlaneseq
  %v1761 = vshrl.u32 %v1760, 7
  %v1762 = vsub.s32 %v1759, %v1761
  %v1763 = vrot.slane %v1731, %v1762
  %1764 = vrot.lane.b32.xlu0 %v1741, 53
  %v1765 = vpop.permute.xlu0 %1764
  %1766 = vrot.lane.b32.xlu0 %v1748, 53
  %v1767 = vpop.permute.xlu0 %1766
  %1768 = vrot.lane.b32.xlu0 %v1756, 53
  %v1769 = vpop.permute.xlu0 %1768
  %1770 = vrot.lane.b32.xlu0 %v1763, 53
  %v1771 = vpop.permute.xlu0 %1770
  %v1772 = vrot.slane %v1765, 4
  %v1773 = vrot.slane %v1767, 4
  %v1774 = vrot.slane %v1769, 4
  %v1775 = vrot.slane %v1771, 4
  %v1776 = vsel %vm107, %v1772, %v1773
  %vm1777 = vcmask 433152
  %v1778 = vsel %vm1777, %v1765, %v1776
  %v1779 = vsel %vm107, %v1773, %v1774
  %v1780 = vsel %vm1777, %v1767, %v1779
  %v1781 = vsel %vm107, %v1774, %v1775
  %v1782 = vsel %vm1777, %v1769, %v1781
  %1786 = vst [vmem:[#allocation2 + $0x168] sm:$0xcc] %v1778
  %1787 = vst [vmem:[#allocation2 + $0x170] sm:$0xcc] %v1780
  %1788 = vst.msk [vmem:[#allocation2 + $0x178] sm:$0xcc] %vm121, %v1782
  %v1789 = vld [vmem:[%s0] sm:$0xff]
  %v1790 = vld [vmem:[%s0 + $0x8] sm:$0x3f]
  %v1793 = vcombine.high %v1789, %v1789
  %v1795 = vunpack.c.l.s4 1983009808
  %v1796 = vunpack.c.0.s8 %v1795
  %v1797 = vlaneseq
  %v1798 = vshrl.u32 %v1797, 7
  %v1799 = vsub.s32 %v1796, %v1798
  %v1800 = vrot.slane %v1789, %v1799
  %v1802 = vunpack.c.l.s4 1983009808
  %v1803 = vunpack.c.0.s8 %v1802
  %v1804 = vlaneseq
  %v1805 = vshrl.u32 %v1804, 7
  %v1806 = vsub.s32 %v1803, %v1805
  %v1807 = vrot.slane %v1793, %v1806
  %v1808 = vcombine.high %v1790, %v1790
  %v1810 = vunpack.c.l.s4 1983009808
  %v1811 = vunpack.c.0.s8 %v1810
  %v1812 = vlaneseq
  %v1813 = vshrl.u32 %v1812, 7
  %v1814 = vsub.s32 %v1811, %v1813
  %v1815 = vrot.slane %v1790, %v1814
  %v1817 = vunpack.c.l.s4 1983009808
  %v1818 = vunpack.c.0.s8 %v1817
  %v1819 = vlaneseq
  %v1820 = vshrl.u32 %v1819, 7
  %v1821 = vsub.s32 %v1818, %v1820
  %v1822 = vrot.slane %v1808, %v1821
  %1823 = vrot.lane.b32.xlu0 %v1800, 52
  %v1824 = vpop.permute.xlu0 %1823
  %1825 = vrot.lane.b32.xlu0 %v1807, 52
  %v1826 = vpop.permute.xlu0 %1825
  %1827 = vrot.lane.b32.xlu0 %v1815, 52
  %v1828 = vpop.permute.xlu0 %1827
  %1829 = vrot.lane.b32.xlu0 %v1822, 52
  %v1830 = vpop.permute.xlu0 %1829
  %v1831 = vrot.slane %v1824, 4
  %v1832 = vrot.slane %v1826, 4
  %v1833 = vrot.slane %v1828, 4
  %v1834 = vrot.slane %v1830, 4
  %v1835 = vsel %vm107, %v1831, %v1832
  %vm1836 = vcmask 424960
  %v1837 = vsel %vm1836, %v1824, %v1835
  %v1838 = vsel %vm107, %v1832, %v1833
  %v1839 = vsel %vm1836, %v1826, %v1838
  %v1840 = vsel %vm107, %v1833, %v1834
  %v1841 = vsel %vm1836, %v1828, %v1840
  %1845 = vst [vmem:[#allocation2 + $0x180] sm:$0x33] %v1837
  %1846 = vst [vmem:[#allocation2 + $0x188] sm:$0x33] %v1839
  %1847 = vst.msk [vmem:[#allocation2 + $0x190] sm:$0x33] %vm69, %v1841
  %v1848 = vld [vmem:[%s0] sm:$0xff]
  %v1849 = vld [vmem:[%s0 + $0x8] sm:$0x3f]
  %v1852 = vcombine.low %v1848, %v1848
  %v1854 = vunpack.c.l.s4 1983009808
  %v1855 = vunpack.c.0.s8 %v1854
  %v1856 = vlaneseq
  %v1857 = vshrl.u32 %v1856, 7
  %v1858 = vsub.s32 %v1855, %v1857
  %v1859 = vrot.slane %v1852, %v1858
  %v1861 = vunpack.c.l.s4 1983009808
  %v1862 = vunpack.c.0.s8 %v1861
  %v1863 = vlaneseq
  %v1864 = vshrl.u32 %v1863, 7
  %v1865 = vsub.s32 %v1862, %v1864
  %v1866 = vrot.slane %v1848, %v1865
  %v1867 = vcombine.low %v1849, %v1849
  %v1869 = vunpack.c.l.s4 1983009808
  %v1870 = vunpack.c.0.s8 %v1869
  %v1871 = vlaneseq
  %v1872 = vshrl.u32 %v1871, 7
  %v1873 = vsub.s32 %v1870, %v1872
  %v1874 = vrot.slane %v1867, %v1873
  %v1876 = vunpack.c.l.s4 1983009808
  %v1877 = vunpack.c.0.s8 %v1876
  %v1878 = vlaneseq
  %v1879 = vshrl.u32 %v1878, 7
  %v1880 = vsub.s32 %v1877, %v1879
  %v1881 = vrot.slane %v1849, %v1880
  %1882 = vrot.lane.b32.xlu0 %v1859, 29
  %v1883 = vpop.permute.xlu0 %1882
  %1884 = vrot.lane.b32.xlu0 %v1866, 29
  %v1885 = vpop.permute.xlu0 %1884
  %1886 = vrot.lane.b32.xlu0 %v1874, 29
  %v1887 = vpop.permute.xlu0 %1886
  %1888 = vrot.lane.b32.xlu0 %v1881, 29
  %v1889 = vpop.permute.xlu0 %1888
  %v1890 = vrot.slane %v1883, 4
  %v1891 = vrot.slane %v1885, 4
  %v1892 = vrot.slane %v1887, 4
  %v1893 = vrot.slane %v1889, 4
  %v1894 = vsel %vm107, %v1890, %v1891
  %vm1895 = vcmask 236544
  %v1896 = vsel %vm1895, %v1883, %v1894
  %v1897 = vsel %vm107, %v1891, %v1892
  %v1898 = vsel %vm1895, %v1885, %v1897
  %v1899 = vsel %vm107, %v1892, %v1893
  %v1900 = vsel %vm1895, %v1887, %v1899
  %1904 = vst [vmem:[#allocation2 + $0x180] sm:$0xcc] %v1896
  %1905 = vst [vmem:[#allocation2 + $0x188] sm:$0xcc] %v1898
  %1906 = vst.msk [vmem:[#allocation2 + $0x190] sm:$0xcc] %vm121, %v1900
  %v1907 = vld [vmem:[%s0] sm:$0xff]
  %v1908 = vld [vmem:[%s0 + $0x8] sm:$0x3f]
  %v1911 = vcombine.high %v1907, %v1907
  %v1913 = vunpack.c.l.s4 1983009808
  %v1914 = vunpack.c.0.s8 %v1913
  %v1915 = vlaneseq
  %v1916 = vshrl.u32 %v1915, 7
  %v1917 = vsub.s32 %v1914, %v1916
  %v1918 = vrot.slane %v1907, %v1917
  %v1920 = vunpack.c.l.s4 1983009808
  %v1921 = vunpack.c.0.s8 %v1920
  %v1922 = vlaneseq
  %v1923 = vshrl.u32 %v1922, 7
  %v1924 = vsub.s32 %v1921, %v1923
  %v1925 = vrot.slane %v1911, %v1924
  %v1926 = vcombine.high %v1908, %v1908
  %v1928 = vunpack.c.l.s4 1983009808
  %v1929 = vunpack.c.0.s8 %v1928
  %v1930 = vlaneseq
  %v1931 = vshrl.u32 %v1930, 7
  %v1932 = vsub.s32 %v1929, %v1931
  %v1933 = vrot.slane %v1908, %v1932
  %v1935 = vunpack.c.l.s4 1983009808
  %v1936 = vunpack.c.0.s8 %v1935
  %v1937 = vlaneseq
  %v1938 = vshrl.u32 %v1937, 7
  %v1939 = vsub.s32 %v1936, %v1938
  %v1940 = vrot.slane %v1926, %v1939
  %1941 = vrot.lane.b32.xlu0 %v1918, 28
  %v1942 = vpop.permute.xlu0 %1941
  %1943 = vrot.lane.b32.xlu0 %v1925, 28
  %v1944 = vpop.permute.xlu0 %1943
  %1945 = vrot.lane.b32.xlu0 %v1933, 28
  %v1946 = vpop.permute.xlu0 %1945
  %1947 = vrot.lane.b32.xlu0 %v1940, 28
  %v1948 = vpop.permute.xlu0 %1947
  %v1949 = vrot.slane %v1942, 4
  %v1950 = vrot.slane %v1944, 4
  %v1951 = vrot.slane %v1946, 4
  %v1952 = vrot.slane %v1948, 4
  %v1953 = vsel %vm107, %v1949, %v1950
  %vm1954 = vcmask 228352
  %v1955 = vsel %vm1954, %v1942, %v1953
  %v1956 = vsel %vm107, %v1950, %v1951
  %v1957 = vsel %vm1954, %v1944, %v1956
  %v1958 = vsel %vm107, %v1951, %v1952
  %v1959 = vsel %vm1954, %v1946, %v1958
  %1963 = vst [vmem:[#allocation2 + $0x198] sm:$0x33] %v1955
  %1964 = vst [vmem:[#allocation2 + $0x1a0] sm:$0x33] %v1957
  %1965 = vst.msk [vmem:[#allocation2 + $0x1a8] sm:$0x33] %vm69, %v1959
  %v1966 = vld [vmem:[%s0] sm:$0xff]
  %v1967 = vld [vmem:[%s0 + $0x8] sm:$0x3f]
  %v1970 = vcombine.low %v1966, %v1966
  %v1972 = vunpack.c.l.s4 1983009808
  %v1973 = vunpack.c.0.s8 %v1972
  %v1974 = vlaneseq
  %v1975 = vshrl.u32 %v1974, 7
  %v1976 = vsub.s32 %v1973, %v1975
  %v1977 = vrot.slane %v1970, %v1976
  %v1979 = vunpack.c.l.s4 1983009808
  %v1980 = vunpack.c.0.s8 %v1979
  %v1981 = vlaneseq
  %v1982 = vshrl.u32 %v1981, 7
  %v1983 = vsub.s32 %v1980, %v1982
  %v1984 = vrot.slane %v1966, %v1983
  %v1985 = vcombine.low %v1967, %v1967
  %v1987 = vunpack.c.l.s4 1983009808
  %v1988 = vunpack.c.0.s8 %v1987
  %v1989 = vlaneseq
  %v1990 = vshrl.u32 %v1989, 7
  %v1991 = vsub.s32 %v1988, %v1990
  %v1992 = vrot.slane %v1985, %v1991
  %v1994 = vunpack.c.l.s4 1983009808
  %v1995 = vunpack.c.0.s8 %v1994
  %v1996 = vlaneseq
  %v1997 = vshrl.u32 %v1996, 7
  %v1998 = vsub.s32 %v1995, %v1997
  %v1999 = vrot.slane %v1967, %v1998
  %2000 = vrot.lane.b32.xlu0 %v1977, 27
  %v2001 = vpop.permute.xlu0 %2000
  %2002 = vrot.lane.b32.xlu0 %v1984, 27
  %v2003 = vpop.permute.xlu0 %2002
  %2004 = vrot.lane.b32.xlu0 %v1992, 27
  %v2005 = vpop.permute.xlu0 %2004
  %2006 = vrot.lane.b32.xlu0 %v1999, 27
  %v2007 = vpop.permute.xlu0 %2006
  %v2008 = vrot.slane %v2001, 4
  %v2009 = vrot.slane %v2003, 4
  %v2010 = vrot.slane %v2005, 4
  %v2011 = vrot.slane %v2007, 4
  %v2012 = vsel %vm107, %v2008, %v2009
  %vm2013 = vcmask 220160
  %v2014 = vsel %vm2013, %v2001, %v2012
  %v2015 = vsel %vm107, %v2009, %v2010
  %v2016 = vsel %vm2013, %v2003, %v2015
  %v2017 = vsel %vm107, %v2010, %v2011
  %v2018 = vsel %vm2013, %v2005, %v2017
  %2022 = vst [vmem:[#allocation2 + $0x198] sm:$0xcc] %v2014
  %2023 = vst [vmem:[#allocation2 + $0x1a0] sm:$0xcc] %v2016
  %2024 = vst.msk [vmem:[#allocation2 + $0x1a8] sm:$0xcc] %vm121, %v2018
  %v2025 = vld [vmem:[%s0] sm:$0xff]
  %v2026 = vld [vmem:[%s0 + $0x8] sm:$0x3f]
  %v2029 = vcombine.high %v2025, %v2025
  %v2031 = vunpack.c.l.s4 1983009808
  %v2032 = vunpack.c.0.s8 %v2031
  %v2033 = vlaneseq
  %v2034 = vshrl.u32 %v2033, 7
  %v2035 = vsub.s32 %v2032, %v2034
  %v2036 = vrot.slane %v2025, %v2035
  %v2038 = vunpack.c.l.s4 1983009808
  %v2039 = vunpack.c.0.s8 %v2038
  %v2040 = vlaneseq
  %v2041 = vshrl.u32 %v2040, 7
  %v2042 = vsub.s32 %v2039, %v2041
  %v2043 = vrot.slane %v2029, %v2042
  %v2044 = vcombine.high %v2026, %v2026
  %v2046 = vunpack.c.l.s4 1983009808
  %v2047 = vunpack.c.0.s8 %v2046
  %v2048 = vlaneseq
  %v2049 = vshrl.u32 %v2048, 7
  %v2050 = vsub.s32 %v2047, %v2049
  %v2051 = vrot.slane %v2026, %v2050
  %v2053 = vunpack.c.l.s4 1983009808
  %v2054 = vunpack.c.0.s8 %v2053
  %v2055 = vlaneseq
  %v2056 = vshrl.u32 %v2055, 7
  %v2057 = vsub.s32 %v2054, %v2056
  %v2058 = vrot.slane %v2044, %v2057
  %2059 = vrot.lane.b32.xlu0 %v2036, 26
  %v2060 = vpop.permute.xlu0 %2059
  %2061 = vrot.lane.b32.xlu0 %v2043, 26
  %v2062 = vpop.permute.xlu0 %2061
  %2063 = vrot.lane.b32.xlu0 %v2051, 26
  %v2064 = vpop.permute.xlu0 %2063
  %2065 = vrot.lane.b32.xlu0 %v2058, 26
  %v2066 = vpop.permute.xlu0 %2065
  %v2067 = vrot.slane %v2060, 4
  %v2068 = vrot.slane %v2062, 4
  %v2069 = vrot.slane %v2064, 4
  %v2070 = vrot.slane %v2066, 4
  %v2071 = vsel %vm107, %v2067, %v2068
  %vm2072 = vcmask 211968
  %v2073 = vsel %vm2072, %v2060, %v2071
  %v2074 = vsel %vm107, %v2068, %v2069
  %v2075 = vsel %vm2072, %v2062, %v2074
  %v2076 = vsel %vm107, %v2069, %v2070
  %v2077 = vsel %vm2072, %v2064, %v2076
  %2081 = vst [vmem:[#allocation2 + $0x1b0] sm:$0x33] %v2073
  %2082 = vst [vmem:[#allocation2 + $0x1b8] sm:$0x33] %v2075
  %2083 = vst.msk [vmem:[#allocation2 + $0x1c0] sm:$0x33] %vm69, %v2077
  %v2084 = vld [vmem:[%s0] sm:$0xff]
  %v2085 = vld [vmem:[%s0 + $0x8] sm:$0x3f]
  %v2088 = vcombine.low %v2084, %v2084
  %v2090 = vunpack.c.l.s4 1983009808
  %v2091 = vunpack.c.0.s8 %v2090
  %v2092 = vlaneseq
  %v2093 = vshrl.u32 %v2092, 7
  %v2094 = vsub.s32 %v2091, %v2093
  %v2095 = vrot.slane %v2088, %v2094
  %v2097 = vunpack.c.l.s4 1983009808
  %v2098 = vunpack.c.0.s8 %v2097
  %v2099 = vlaneseq
  %v2100 = vshrl.u32 %v2099, 7
  %v2101 = vsub.s32 %v2098, %v2100
  %v2102 = vrot.slane %v2084, %v2101
  %v2103 = vcombine.low %v2085, %v2085
  %v2105 = vunpack.c.l.s4 1983009808
  %v2106 = vunpack.c.0.s8 %v2105
  %v2107 = vlaneseq
  %v2108 = vshrl.u32 %v2107, 7
  %v2109 = vsub.s32 %v2106, %v2108
  %v2110 = vrot.slane %v2103, %v2109
  %v2112 = vunpack.c.l.s4 1983009808
  %v2113 = vunpack.c.0.s8 %v2112
  %v2114 = vlaneseq
  %v2115 = vshrl.u32 %v2114, 7
  %v2116 = vsub.s32 %v2113, %v2115
  %v2117 = vrot.slane %v2085, %v2116
  %2118 = vrot.lane.b32.xlu0 %v2095, 25
  %v2119 = vpop.permute.xlu0 %2118
  %2120 = vrot.lane.b32.xlu0 %v2102, 25
  %v2121 = vpop.permute.xlu0 %2120
  %2122 = vrot.lane.b32.xlu0 %v2110, 25
  %v2123 = vpop.permute.xlu0 %2122
  %2124 = vrot.lane.b32.xlu0 %v2117, 25
  %v2125 = vpop.permute.xlu0 %2124
  %v2126 = vrot.slane %v2119, 4
  %v2127 = vrot.slane %v2121, 4
  %v2128 = vrot.slane %v2123, 4
  %v2129 = vrot.slane %v2125, 4
  %v2130 = vsel %vm107, %v2126, %v2127
  %vm2131 = vcmask 203776
  %v2132 = vsel %vm2131, %v2119, %v2130
  %v2133 = vsel %vm107, %v2127, %v2128
  %v2134 = vsel %vm2131, %v2121, %v2133
  %v2135 = vsel %vm107, %v2128, %v2129
  %v2136 = vsel %vm2131, %v2123, %v2135
  %2140 = vst [vmem:[#allocation2 + $0x1b0] sm:$0xcc] %v2132
  %2141 = vst [vmem:[#allocation2 + $0x1b8] sm:$0xcc] %v2134
  %2142 = vst.msk [vmem:[#allocation2 + $0x1c0] sm:$0xcc] %vm121, %v2136
  %v2143 = vld [vmem:[%s0] sm:$0xff]
  %v2144 = vld [vmem:[%s0 + $0x8] sm:$0x3f]
  %v2147 = vcombine.high %v2143, %v2143
  %v2149 = vunpack.c.l.s4 1983009808
  %v2150 = vunpack.c.0.s8 %v2149
  %v2151 = vlaneseq
  %v2152 = vshrl.u32 %v2151, 7
  %v2153 = vsub.s32 %v2150, %v2152
  %v2154 = vrot.slane %v2143, %v2153
  %v2156 = vunpack.c.l.s4 1983009808
  %v2157 = vunpack.c.0.s8 %v2156
  %v2158 = vlaneseq
  %v2159 = vshrl.u32 %v2158, 7
  %v2160 = vsub.s32 %v2157, %v2159
  %v2161 = vrot.slane %v2147, %v2160
  %v2162 = vcombine.high %v2144, %v2144
  %v2164 = vunpack.c.l.s4 1983009808
  %v2165 = vunpack.c.0.s8 %v2164
  %v2166 = vlaneseq
  %v2167 = vshrl.u32 %v2166, 7
  %v2168 = vsub.s32 %v2165, %v2167
  %v2169 = vrot.slane %v2144, %v2168
  %v2171 = vunpack.c.l.s4 1983009808
  %v2172 = vunpack.c.0.s8 %v2171
  %v2173 = vlaneseq
  %v2174 = vshrl.u32 %v2173, 7
  %v2175 = vsub.s32 %v2172, %v2174
  %v2176 = vrot.slane %v2162, %v2175
  %2177 = vrot.lane.b32.xlu0 %v2154, 24
  %v2178 = vpop.permute.xlu0 %2177
  %2179 = vrot.lane.b32.xlu0 %v2161, 24
  %v2180 = vpop.permute.xlu0 %2179
  %2181 = vrot.lane.b32.xlu0 %v2169, 24
  %v2182 = vpop.permute.xlu0 %2181
  %2183 = vrot.lane.b32.xlu0 %v2176, 24
  %v2184 = vpop.permute.xlu0 %2183
  %v2185 = vrot.slane %v2178, 4
  %v2186 = vrot.slane %v2180, 4
  %v2187 = vrot.slane %v2182, 4
  %v2188 = vrot.slane %v2184, 4
  %v2189 = vsel %vm107, %v2185, %v2186
  %vm2190 = vcmask 195584
  %v2191 = vsel %vm2190, %v2178, %v2189
  %v2192 = vsel %vm107, %v2186, %v2187
  %v2193 = vsel %vm2190, %v2180, %v2192
  %v2194 = vsel %vm107, %v2187, %v2188
  %v2195 = vsel %vm2190, %v2182, %v2194
  %2199 = vst [vmem:[#allocation2 + $0x1c8] sm:$0x33] %v2191
  %2200 = vst [vmem:[#allocation2 + $0x1d0] sm:$0x33] %v2193
  %2201 = vst.msk [vmem:[#allocation2 + $0x1d8] sm:$0x33] %vm69, %v2195
  %v2202 = vld [vmem:[%s0] sm:$0xff]
  %v2203 = vld [vmem:[%s0 + $0x8] sm:$0x3f]
  %v2206 = vcombine.low %v2202, %v2202
  %v2208 = vunpack.c.l.s4 1983009808
  %v2209 = vunpack.c.0.s8 %v2208
  %v2210 = vlaneseq
  %v2211 = vshrl.u32 %v2210, 7
  %v2212 = vsub.s32 %v2209, %v2211
  %v2213 = vrot.slane %v2206, %v2212
  %v2215 = vunpack.c.l.s4 1983009808
  %v2216 = vunpack.c.0.s8 %v2215
  %v2217 = vlaneseq
  %v2218 = vshrl.u32 %v2217, 7
  %v2219 = vsub.s32 %v2216, %v2218
  %v2220 = vrot.slane %v2202, %v2219
  %v2221 = vcombine.low %v2203, %v2203
  %v2223 = vunpack.c.l.s4 1983009808
  %v2224 = vunpack.c.0.s8 %v2223
  %v2225 = vlaneseq
  %v2226 = vshrl.u32 %v2225, 7
  %v2227 = vsub.s32 %v2224, %v2226
  %v2228 = vrot.slane %v2221, %v2227
  %v2230 = vunpack.c.l.s4 1983009808
  %v2231 = vunpack.c.0.s8 %v2230
  %v2232 = vlaneseq
  %v2233 = vshrl.u32 %v2232, 7
  %v2234 = vsub.s32 %v2231, %v2233
  %v2235 = vrot.slane %v2203, %v2234
  %2236 = vrot.lane.b32.xlu0 %v2213, 23
  %v2237 = vpop.permute.xlu0 %2236
  %2238 = vrot.lane.b32.xlu0 %v2220, 23
  %v2239 = vpop.permute.xlu0 %2238
  %2240 = vrot.lane.b32.xlu0 %v2228, 23
  %v2241 = vpop.permute.xlu0 %2240
  %2242 = vrot.lane.b32.xlu0 %v2235, 23
  %v2243 = vpop.permute.xlu0 %2242
  %v2244 = vrot.slane %v2237, 4
  %v2245 = vrot.slane %v2239, 4
  %v2246 = vrot.slane %v2241, 4
  %v2247 = vrot.slane %v2243, 4
  %v2248 = vsel %vm107, %v2244, %v2245
  %vm2249 = vcmask 187392
  %v2250 = vsel %vm2249, %v2237, %v2248
  %v2251 = vsel %vm107, %v2245, %v2246
  %v2252 = vsel %vm2249, %v2239, %v2251
  %v2253 = vsel %vm107, %v2246, %v2247
  %v2254 = vsel %vm2249, %v2241, %v2253
  %2258 = vst [vmem:[#allocation2 + $0x1c8] sm:$0xcc] %v2250
  %2259 = vst [vmem:[#allocation2 + $0x1d0] sm:$0xcc] %v2252
  %2260 = vst.msk [vmem:[#allocation2 + $0x1d8] sm:$0xcc] %vm121, %v2254
  %v2261 = vld [vmem:[%s0] sm:$0xff]
  %v2262 = vld [vmem:[%s0 + $0x8] sm:$0x3f]
  %v2265 = vcombine.high %v2261, %v2261
  %v2267 = vunpack.c.l.s4 1983009808
  %v2268 = vunpack.c.0.s8 %v2267
  %v2269 = vlaneseq
  %v2270 = vshrl.u32 %v2269, 7
  %v2271 = vsub.s32 %v2268, %v2270
  %v2272 = vrot.slane %v2261, %v2271
  %v2274 = vunpack.c.l.s4 1983009808
  %v2275 = vunpack.c.0.s8 %v2274
  %v2276 = vlaneseq
  %v2277 = vshrl.u32 %v2276, 7
  %v2278 = vsub.s32 %v2275, %v2277
  %v2279 = vrot.slane %v2265, %v2278
  %v2280 = vcombine.high %v2262, %v2262
  %v2282 = vunpack.c.l.s4 1983009808
  %v2283 = vunpack.c.0.s8 %v2282
  %v2284 = vlaneseq
  %v2285 = vshrl.u32 %v2284, 7
  %v2286 = vsub.s32 %v2283, %v2285
  %v2287 = vrot.slane %v2262, %v2286
  %v2289 = vunpack.c.l.s4 1983009808
  %v2290 = vunpack.c.0.s8 %v2289
  %v2291 = vlaneseq
  %v2292 = vshrl.u32 %v2291, 7
  %v2293 = vsub.s32 %v2290, %v2292
  %v2294 = vrot.slane %v2280, %v2293
  %2295 = vrot.lane.b32.xlu0 %v2272, 22
  %v2296 = vpop.permute.xlu0 %2295
  %2297 = vrot.lane.b32.xlu0 %v2279, 22
  %v2298 = vpop.permute.xlu0 %2297
  %2299 = vrot.lane.b32.xlu0 %v2287, 22
  %v2300 = vpop.permute.xlu0 %2299
  %2301 = vrot.lane.b32.xlu0 %v2294, 22
  %v2302 = vpop.permute.xlu0 %2301
  %v2303 = vrot.slane %v2296, 4
  %v2304 = vrot.slane %v2298, 4
  %v2305 = vrot.slane %v2300, 4
  %v2306 = vrot.slane %v2302, 4
  %v2307 = vsel %vm107, %v2303, %v2304
  %vm2308 = vcmask 179200
  %v2309 = vsel %vm2308, %v2296, %v2307
  %v2310 = vsel %vm107, %v2304, %v2305
  %v2311 = vsel %vm2308, %v2298, %v2310
  %v2312 = vsel %vm107, %v2305, %v2306
  %v2313 = vsel %vm2308, %v2300, %v2312
  %2317 = vst [vmem:[#allocation2 + $0x1e0] sm:$0x33] %v2309
  %2318 = vst [vmem:[#allocation2 + $0x1e8] sm:$0x33] %v2311
  %2319 = vst.msk [vmem:[#allocation2 + $0x1f0] sm:$0x33] %vm69, %v2313
  %v2320 = vld [vmem:[%s0] sm:$0xff]
  %v2321 = vld [vmem:[%s0 + $0x8] sm:$0x3f]
  %v2324 = vcombine.low %v2320, %v2320
  %v2326 = vunpack.c.l.s4 1983009808
  %v2327 = vunpack.c.0.s8 %v2326
  %v2328 = vlaneseq
  %v2329 = vshrl.u32 %v2328, 7
  %v2330 = vsub.s32 %v2327, %v2329
  %v2331 = vrot.slane %v2324, %v2330
  %v2333 = vunpack.c.l.s4 1983009808
  %v2334 = vunpack.c.0.s8 %v2333
  %v2335 = vlaneseq
  %v2336 = vshrl.u32 %v2335, 7
  %v2337 = vsub.s32 %v2334, %v2336
  %v2338 = vrot.slane %v2320, %v2337
  %v2339 = vcombine.low %v2321, %v2321
  %v2341 = vunpack.c.l.s4 1983009808
  %v2342 = vunpack.c.0.s8 %v2341
  %v2343 = vlaneseq
  %v2344 = vshrl.u32 %v2343, 7
  %v2345 = vsub.s32 %v2342, %v2344
  %v2346 = vrot.slane %v2339, %v2345
  %v2348 = vunpack.c.l.s4 1983009808
  %v2349 = vunpack.c.0.s8 %v2348
  %v2350 = vlaneseq
  %v2351 = vshrl.u32 %v2350, 7
  %v2352 = vsub.s32 %v2349, %v2351
  %v2353 = vrot.slane %v2321, %v2352
  %2354 = vrot.lane.b32.xlu0 %v2331, 21
  %v2355 = vpop.permute.xlu0 %2354
  %2356 = vrot.lane.b32.xlu0 %v2338, 21
  %v2357 = vpop.permute.xlu0 %2356
  %2358 = vrot.lane.b32.xlu0 %v2346, 21
  %v2359 = vpop.permute.xlu0 %2358
  %2360 = vrot.lane.b32.xlu0 %v2353, 21
  %v2361 = vpop.permute.xlu0 %2360
  %v2362 = vrot.slane %v2355, 4
  %v2363 = vrot.slane %v2357, 4
  %v2364 = vrot.slane %v2359, 4
  %v2365 = vrot.slane %v2361, 4
  %v2366 = vsel %vm107, %v2362, %v2363
  %vm2367 = vcmask 171008
  %v2368 = vsel %vm2367, %v2355, %v2366
  %v2369 = vsel %vm107, %v2363, %v2364
  %v2370 = vsel %vm2367, %v2357, %v2369
  %v2371 = vsel %vm107, %v2364, %v2365
  %v2372 = vsel %vm2367, %v2359, %v2371
  %2376 = vst [vmem:[#allocation2 + $0x1e0] sm:$0xcc] %v2368
  %2377 = vst [vmem:[#allocation2 + $0x1e8] sm:$0xcc] %v2370
  %2378 = vst.msk [vmem:[#allocation2 + $0x1f0] sm:$0xcc] %vm121, %v2372
  %v2379 = vld [vmem:[%s0] sm:$0xff]
  %v2380 = vld [vmem:[%s0 + $0x8] sm:$0x3f]
  %v2383 = vcombine.high %v2379, %v2379
  %v2385 = vunpack.c.l.s4 1983009808
  %v2386 = vunpack.c.0.s8 %v2385
  %v2387 = vlaneseq
  %v2388 = vshrl.u32 %v2387, 7
  %v2389 = vsub.s32 %v2386, %v2388
  %v2390 = vrot.slane %v2379, %v2389
  %v2392 = vunpack.c.l.s4 1983009808
  %v2393 = vunpack.c.0.s8 %v2392
  %v2394 = vlaneseq
  %v2395 = vshrl.u32 %v2394, 7
  %v2396 = vsub.s32 %v2393, %v2395
  %v2397 = vrot.slane %v2383, %v2396
  %v2398 = vcombine.high %v2380, %v2380
  %v2400 = vunpack.c.l.s4 1983009808
  %v2401 = vunpack.c.0.s8 %v2400
  %v2402 = vlaneseq
  %v2403 = vshrl.u32 %v2402, 7
  %v2404 = vsub.s32 %v2401, %v2403
  %v2405 = vrot.slane %v2380, %v2404
  %v2407 = vunpack.c.l.s4 1983009808
  %v2408 = vunpack.c.0.s8 %v2407
  %v2409 = vlaneseq
  %v2410 = vshrl.u32 %v2409, 7
  %v2411 = vsub.s32 %v2408, %v2410
  %v2412 = vrot.slane %v2398, %v2411
  %2413 = vrot.lane.b32.xlu0 %v2390, 20
  %v2414 = vpop.permute.xlu0 %2413
  %2415 = vrot.lane.b32.xlu0 %v2397, 20
  %v2416 = vpop.permute.xlu0 %2415
  %2417 = vrot.lane.b32.xlu0 %v2405, 20
  %v2418 = vpop.permute.xlu0 %2417
  %2419 = vrot.lane.b32.xlu0 %v2412, 20
  %v2420 = vpop.permute.xlu0 %2419
  %v2421 = vrot.slane %v2414, 4
  %v2422 = vrot.slane %v2416, 4
  %v2423 = vrot.slane %v2418, 4
  %v2424 = vrot.slane %v2420, 4
  %v2425 = vsel %vm107, %v2421, %v2422
  %vm2426 = vcmask 162816
  %v2427 = vsel %vm2426, %v2414, %v2425
  %v2428 = vsel %vm107, %v2422, %v2423
  %v2429 = vsel %vm2426, %v2416, %v2428
  %v2430 = vsel %vm107, %v2423, %v2424
  %v2431 = vsel %vm2426, %v2418, %v2430
  %2435 = vst [vmem:[#allocation2 + $0x1f8] sm:$0x33] %v2427
  %2436 = vst [vmem:[#allocation2 + $0x200] sm:$0x33] %v2429
  %2437 = vst.msk [vmem:[#allocation2 + $0x208] sm:$0x33] %vm69, %v2431
  %v2438 = vld [vmem:[%s0] sm:$0xff]
  %v2439 = vld [vmem:[%s0 + $0x8] sm:$0x3f]
  %v2442 = vcombine.low %v2438, %v2438
  %v2444 = vunpack.c.l.s4 1983009808
  %v2445 = vunpack.c.0.s8 %v2444
  %v2446 = vlaneseq
  %v2447 = vshrl.u32 %v2446, 7
  %v2448 = vsub.s32 %v2445, %v2447
  %v2449 = vrot.slane %v2442, %v2448
  %v2451 = vunpack.c.l.s4 1983009808
  %v2452 = vunpack.c.0.s8 %v2451
  %v2453 = vlaneseq
  %v2454 = vshrl.u32 %v2453, 7
  %v2455 = vsub.s32 %v2452, %v2454
  %v2456 = vrot.slane %v2438, %v2455
  %v2457 = vcombine.low %v2439, %v2439
  %v2459 = vunpack.c.l.s4 1983009808
  %v2460 = vunpack.c.0.s8 %v2459
  %v2461 = vlaneseq
  %v2462 = vshrl.u32 %v2461, 7
  %v2463 = vsub.s32 %v2460, %v2462
  %v2464 = vrot.slane %v2457, %v2463
  %v2466 = vunpack.c.l.s4 1983009808
  %v2467 = vunpack.c.0.s8 %v2466
  %v2468 = vlaneseq
  %v2469 = vshrl.u32 %v2468, 7
  %v2470 = vsub.s32 %v2467, %v2469
  %v2471 = vrot.slane %v2439, %v2470
  %2472 = vrot.lane.b32.xlu0 %v2449, 19
  %v2473 = vpop.permute.xlu0 %2472
  %2474 = vrot.lane.b32.xlu0 %v2456, 19
  %v2475 = vpop.permute.xlu0 %2474
  %2476 = vrot.lane.b32.xlu0 %v2464, 19
  %v2477 = vpop.permute.xlu0 %2476
  %2478 = vrot.lane.b32.xlu0 %v2471, 19
  %v2479 = vpop.permute.xlu0 %2478
  %v2480 = vrot.slane %v2473, 4
  %v2481 = vrot.slane %v2475, 4
  %v2482 = vrot.slane %v2477, 4
  %v2483 = vrot.slane %v2479, 4
  %v2484 = vsel %vm107, %v2480, %v2481
  %vm2485 = vcmask 154624
  %v2486 = vsel %vm2485, %v2473, %v2484
  %v2487 = vsel %vm107, %v2481, %v2482
  %v2488 = vsel %vm2485, %v2475, %v2487
  %v2489 = vsel %vm107, %v2482, %v2483
  %v2490 = vsel %vm2485, %v2477, %v2489
  %2494 = vst [vmem:[#allocation2 + $0x1f8] sm:$0xcc] %v2486
  %2495 = vst [vmem:[#allocation2 + $0x200] sm:$0xcc] %v2488
  %2496 = vst.msk [vmem:[#allocation2 + $0x208] sm:$0xcc] %vm121, %v2490
  %v2497 = vld [vmem:[%s0 + $0x2] sm:$0xff]
  %v2498 = vld [vmem:[%s0 + $0xa] sm:$0xf]
  %v2501 = vcombine.high %v2497, %v2497
  %v2503 = vunpack.c.l.s4 1983009808
  %v2504 = vunpack.c.0.s8 %v2503
  %v2505 = vlaneseq
  %v2506 = vshrl.u32 %v2505, 7
  %v2507 = vsub.s32 %v2504, %v2506
  %v2508 = vrot.slane %v2497, %v2507
  %v2510 = vunpack.c.l.s4 1983009808
  %v2511 = vunpack.c.0.s8 %v2510
  %v2512 = vlaneseq
  %v2513 = vshrl.u32 %v2512, 7
  %v2514 = vsub.s32 %v2511, %v2513
  %v2515 = vrot.slane %v2501, %v2514
  %v2517 = vunpack.c.l.s4 1983009808
  %v2518 = vunpack.c.0.s8 %v2517
  %v2519 = vlaneseq
  %v2520 = vshrl.u32 %v2519, 7
  %v2521 = vsub.s32 %v2518, %v2520
  %v2522 = vrot.slane %v2498, %v2521
  %2523 = vrot.lane.b32.xlu0 %v2508, 124
  %v2524 = vpop.permute.xlu0 %2523
  %2525 = vrot.lane.b32.xlu0 %v2515, 124
  %v2526 = vpop.permute.xlu0 %2525
  %2527 = vrot.lane.b32.xlu0 %v2522, 124
  %v2528 = vpop.permute.xlu0 %2527
  %v2529 = vrot.slane %v2524, 4
  %v2530 = vrot.slane %v2526, 4
  %v2531 = vrot.slane %v2528, 4
  %v2532 = vsel %vm107, %v2529, %v2530
  %v2533 = vsel %vm254, %v2524, %v2532
  %v2534 = vsel %vm107, %v2530, %v2531
  %v2535 = vsel %vm254, %v2526, %v2534
  %v2536 = vsel %vm254, %v2528, %v2531
  %2540 = vst [vmem:[#allocation2 + $0x210] sm:$0x33] %v2533
  %2541 = vst [vmem:[#allocation2 + $0x218] sm:$0x33] %v2535
  %2542 = vst.msk [vmem:[#allocation2 + $0x220] sm:$0x33] %vm69, %v2536
  %v2543 = vld [vmem:[%s0 + $0x2] sm:$0xff]
  %v2544 = vld [vmem:[%s0 + $0xa] sm:$0xf]
  %v2547 = vcombine.low %v2543, %v2543
  %v2549 = vunpack.c.l.s4 1983009808
  %v2550 = vunpack.c.0.s8 %v2549
  %v2551 = vlaneseq
  %v2552 = vshrl.u32 %v2551, 7
  %v2553 = vsub.s32 %v2550, %v2552
  %v2554 = vrot.slane %v2547, %v2553
  %v2556 = vunpack.c.l.s4 1983009808
  %v2557 = vunpack.c.0.s8 %v2556
  %v2558 = vlaneseq
  %v2559 = vshrl.u32 %v2558, 7
  %v2560 = vsub.s32 %v2557, %v2559
  %v2561 = vrot.slane %v2543, %v2560
  %v2562 = vcombine.low %v2544, %v2544
  %v2564 = vunpack.c.l.s4 1983009808
  %v2565 = vunpack.c.0.s8 %v2564
  %v2566 = vlaneseq
  %v2567 = vshrl.u32 %v2566, 7
  %v2568 = vsub.s32 %v2565, %v2567
  %v2569 = vrot.slane %v2562, %v2568
  %2570 = vrot.lane.b32.xlu0 %v2554, 123
  %v2571 = vpop.permute.xlu0 %2570
  %2572 = vrot.lane.b32.xlu0 %v2561, 123
  %v2573 = vpop.permute.xlu0 %2572
  %2574 = vrot.lane.b32.xlu0 %v2569, 123
  %v2575 = vpop.permute.xlu0 %2574
  %v2576 = vrot.slane %v2571, 4
  %v2577 = vrot.slane %v2573, 4
  %v2578 = vrot.slane %v2575, 4
  %v2579 = vsel %vm107, %v2576, %v2577
  %v2580 = vsel %vm302, %v2571, %v2579
  %v2581 = vsel %vm107, %v2577, %v2578
  %v2582 = vsel %vm302, %v2573, %v2581
  %v2583 = vsel %vm302, %v2575, %v2578
  %2587 = vst [vmem:[#allocation2 + $0x210] sm:$0xcc] %v2580
  %2588 = vst [vmem:[#allocation2 + $0x218] sm:$0xcc] %v2582
  %2589 = vst.msk [vmem:[#allocation2 + $0x220] sm:$0xcc] %vm121, %v2583
  %v2590 = vld [vmem:[%s0 + $0x2] sm:$0xff]
  %v2591 = vld [vmem:[%s0 + $0xa] sm:$0xf]
  %v2594 = vcombine.high %v2590, %v2590
  %v2596 = vunpack.c.l.s4 1983009808
  %v2597 = vunpack.c.0.s8 %v2596
  %v2598 = vlaneseq
  %v2599 = vshrl.u32 %v2598, 7
  %v2600 = vsub.s32 %v2597, %v2599
  %v2601 = vrot.slane %v2590, %v2600
  %v2603 = vunpack.c.l.s4 1983009808
  %v2604 = vunpack.c.0.s8 %v2603
  %v2605 = vlaneseq
  %v2606 = vshrl.u32 %v2605, 7
  %v2607 = vsub.s32 %v2604, %v2606
  %v2608 = vrot.slane %v2594, %v2607
  %v2610 = vunpack.c.l.s4 1983009808
  %v2611 = vunpack.c.0.s8 %v2610
  %v2612 = vlaneseq
  %v2613 = vshrl.u32 %v2612, 7
  %v2614 = vsub.s32 %v2611, %v2613
  %v2615 = vrot.slane %v2591, %v2614
  %2616 = vrot.lane.b32.xlu0 %v2601, 122
  %v2617 = vpop.permute.xlu0 %2616
  %2618 = vrot.lane.b32.xlu0 %v2608, 122
  %v2619 = vpop.permute.xlu0 %2618
  %2620 = vrot.lane.b32.xlu0 %v2615, 122
  %v2621 = vpop.permute.xlu0 %2620
  %v2622 = vrot.slane %v2617, 4
  %v2623 = vrot.slane %v2619, 4
  %v2624 = vrot.slane %v2621, 4
  %v2625 = vsel %vm107, %v2622, %v2623
  %v2626 = vsel %vm349, %v2617, %v2625
  %v2627 = vsel %vm107, %v2623, %v2624
  %v2628 = vsel %vm349, %v2619, %v2627
  %v2629 = vsel %vm349, %v2621, %v2624
  %2633 = vst [vmem:[#allocation2 + $0x228] sm:$0x33] %v2626
  %2634 = vst [vmem:[#allocation2 + $0x230] sm:$0x33] %v2628
  %2635 = vst.msk [vmem:[#allocation2 + $0x238] sm:$0x33] %vm69, %v2629
  %v2636 = vld [vmem:[%s0 + $0x2] sm:$0xff]
  %v2637 = vld [vmem:[%s0 + $0xa] sm:$0xf]
  %v2640 = vcombine.low %v2636, %v2636
  %v2642 = vunpack.c.l.s4 1983009808
  %v2643 = vunpack.c.0.s8 %v2642
  %v2644 = vlaneseq
  %v2645 = vshrl.u32 %v2644, 7
  %v2646 = vsub.s32 %v2643, %v2645
  %v2647 = vrot.slane %v2640, %v2646
  %v2649 = vunpack.c.l.s4 1983009808
  %v2650 = vunpack.c.0.s8 %v2649
  %v2651 = vlaneseq
  %v2652 = vshrl.u32 %v2651, 7
  %v2653 = vsub.s32 %v2650, %v2652
  %v2654 = vrot.slane %v2636, %v2653
  %v2655 = vcombine.low %v2637, %v2637
  %v2657 = vunpack.c.l.s4 1983009808
  %v2658 = vunpack.c.0.s8 %v2657
  %v2659 = vlaneseq
  %v2660 = vshrl.u32 %v2659, 7
  %v2661 = vsub.s32 %v2658, %v2660
  %v2662 = vrot.slane %v2655, %v2661
  %2663 = vrot.lane.b32.xlu0 %v2647, 121
  %v2664 = vpop.permute.xlu0 %2663
  %2665 = vrot.lane.b32.xlu0 %v2654, 121
  %v2666 = vpop.permute.xlu0 %2665
  %2667 = vrot.lane.b32.xlu0 %v2662, 121
  %v2668 = vpop.permute.xlu0 %2667
  %v2669 = vrot.slane %v2664, 4
  %v2670 = vrot.slane %v2666, 4
  %v2671 = vrot.slane %v2668, 4
  %v2672 = vsel %vm107, %v2669, %v2670
  %v2673 = vsel %vm397, %v2664, %v2672
  %v2674 = vsel %vm107, %v2670, %v2671
  %v2675 = vsel %vm397, %v2666, %v2674
  %v2676 = vsel %vm397, %v2668, %v2671
  %2680 = vst [vmem:[#allocation2 + $0x228] sm:$0xcc] %v2673
  %2681 = vst [vmem:[#allocation2 + $0x230] sm:$0xcc] %v2675
  %2682 = vst.msk [vmem:[#allocation2 + $0x238] sm:$0xcc] %vm121, %v2676
  %v2683 = vld [vmem:[%s0 + $0x2] sm:$0xff]
  %v2684 = vld [vmem:[%s0 + $0xa] sm:$0xf]
  %v2687 = vcombine.high %v2683, %v2683
  %v2689 = vunpack.c.l.s4 1983009808
  %v2690 = vunpack.c.0.s8 %v2689
  %v2691 = vlaneseq
  %v2692 = vshrl.u32 %v2691, 7
  %v2693 = vsub.s32 %v2690, %v2692
  %v2694 = vrot.slane %v2683, %v2693
  %v2696 = vunpack.c.l.s4 1983009808
  %v2697 = vunpack.c.0.s8 %v2696
  %v2698 = vlaneseq
  %v2699 = vshrl.u32 %v2698, 7
  %v2700 = vsub.s32 %v2697, %v2699
  %v2701 = vrot.slane %v2687, %v2700
  %v2703 = vunpack.c.l.s4 1983009808
  %v2704 = vunpack.c.0.s8 %v2703
  %v2705 = vlaneseq
  %v2706 = vshrl.u32 %v2705, 7
  %v2707 = vsub.s32 %v2704, %v2706
  %v2708 = vrot.slane %v2684, %v2707
  %2709 = vrot.lane.b32.xlu0 %v2694, 120
  %v2710 = vpop.permute.xlu0 %2709
  %2711 = vrot.lane.b32.xlu0 %v2701, 120
  %v2712 = vpop.permute.xlu0 %2711
  %2713 = vrot.lane.b32.xlu0 %v2708, 120
  %v2714 = vpop.permute.xlu0 %2713
  %v2715 = vrot.slane %v2710, 4
  %v2716 = vrot.slane %v2712, 4
  %v2717 = vrot.slane %v2714, 4
  %v2718 = vsel %vm107, %v2715, %v2716
  %v2719 = vsel %vm444, %v2710, %v2718
  %v2720 = vsel %vm107, %v2716, %v2717
  %v2721 = vsel %vm444, %v2712, %v2720
  %v2722 = vsel %vm444, %v2714, %v2717
  %2726 = vst [vmem:[#allocation2 + $0x240] sm:$0x33] %v2719
  %2727 = vst [vmem:[#allocation2 + $0x248] sm:$0x33] %v2721
  %2728 = vst.msk [vmem:[#allocation2 + $0x250] sm:$0x33] %vm69, %v2722
  %v2729 = vld [vmem:[%s0 + $0x2] sm:$0xff]
  %v2730 = vld [vmem:[%s0 + $0xa] sm:$0xf]
  %v2733 = vcombine.low %v2729, %v2729
  %v2735 = vunpack.c.l.s4 1983009808
  %v2736 = vunpack.c.0.s8 %v2735
  %v2737 = vlaneseq
  %v2738 = vshrl.u32 %v2737, 7
  %v2739 = vsub.s32 %v2736, %v2738
  %v2740 = vrot.slane %v2733, %v2739
  %v2742 = vunpack.c.l.s4 1983009808
  %v2743 = vunpack.c.0.s8 %v2742
  %v2744 = vlaneseq
  %v2745 = vshrl.u32 %v2744, 7
  %v2746 = vsub.s32 %v2743, %v2745
  %v2747 = vrot.slane %v2729, %v2746
  %v2748 = vcombine.low %v2730, %v2730
  %v2750 = vunpack.c.l.s4 1983009808
  %v2751 = vunpack.c.0.s8 %v2750
  %v2752 = vlaneseq
  %v2753 = vshrl.u32 %v2752, 7
  %v2754 = vsub.s32 %v2751, %v2753
  %v2755 = vrot.slane %v2748, %v2754
  %2756 = vrot.lane.b32.xlu0 %v2740, 119
  %v2757 = vpop.permute.xlu0 %2756
  %2758 = vrot.lane.b32.xlu0 %v2747, 119
  %v2759 = vpop.permute.xlu0 %2758
  %2760 = vrot.lane.b32.xlu0 %v2755, 119
  %v2761 = vpop.permute.xlu0 %2760
  %v2762 = vrot.slane %v2757, 4
  %v2763 = vrot.slane %v2759, 4
  %v2764 = vrot.slane %v2761, 4
  %v2765 = vsel %vm107, %v2762, %v2763
  %v2766 = vsel %vm492, %v2757, %v2765
  %v2767 = vsel %vm107, %v2763, %v2764
  %v2768 = vsel %vm492, %v2759, %v2767
  %v2769 = vsel %vm492, %v2761, %v2764
  %2773 = vst [vmem:[#allocation2 + $0x240] sm:$0xcc] %v2766
  %2774 = vst [vmem:[#allocation2 + $0x248] sm:$0xcc] %v2768
  %2775 = vst.msk [vmem:[#allocation2 + $0x250] sm:$0xcc] %vm121, %v2769
  %v2776 = vld [vmem:[%s0 + $0x2] sm:$0xff]
  %v2777 = vld [vmem:[%s0 + $0xa] sm:$0xf]
  %v2780 = vcombine.high %v2776, %v2776
  %v2782 = vunpack.c.l.s4 1983009808
  %v2783 = vunpack.c.0.s8 %v2782
  %v2784 = vlaneseq
  %v2785 = vshrl.u32 %v2784, 7
  %v2786 = vsub.s32 %v2783, %v2785
  %v2787 = vrot.slane %v2776, %v2786
  %v2789 = vunpack.c.l.s4 1983009808
  %v2790 = vunpack.c.0.s8 %v2789
  %v2791 = vlaneseq
  %v2792 = vshrl.u32 %v2791, 7
  %v2793 = vsub.s32 %v2790, %v2792
  %v2794 = vrot.slane %v2780, %v2793
  %v2796 = vunpack.c.l.s4 1983009808
  %v2797 = vunpack.c.0.s8 %v2796
  %v2798 = vlaneseq
  %v2799 = vshrl.u32 %v2798, 7
  %v2800 = vsub.s32 %v2797, %v2799
  %v2801 = vrot.slane %v2777, %v2800
  %2802 = vrot.lane.b32.xlu0 %v2787, 118
  %v2803 = vpop.permute.xlu0 %2802
  %2804 = vrot.lane.b32.xlu0 %v2794, 118
  %v2805 = vpop.permute.xlu0 %2804
  %2806 = vrot.lane.b32.xlu0 %v2801, 118
  %v2807 = vpop.permute.xlu0 %2806
  %v2808 = vrot.slane %v2803, 4
  %v2809 = vrot.slane %v2805, 4
  %v2810 = vrot.slane %v2807, 4
  %v2811 = vsel %vm107, %v2808, %v2809
  %v2812 = vsel %vm539, %v2803, %v2811
  %v2813 = vsel %vm107, %v2809, %v2810
  %v2814 = vsel %vm539, %v2805, %v2813
  %v2815 = vsel %vm539, %v2807, %v2810
  %2819 = vst [vmem:[#allocation2 + $0x258] sm:$0x33] %v2812
  %2820 = vst [vmem:[#allocation2 + $0x260] sm:$0x33] %v2814
  %2821 = vst.msk [vmem:[#allocation2 + $0x268] sm:$0x33] %vm69, %v2815
  %v2822 = vld [vmem:[%s0 + $0x2] sm:$0xff]
  %v2823 = vld [vmem:[%s0 + $0xa] sm:$0xf]
  %v2826 = vcombine.low %v2822, %v2822
  %v2828 = vunpack.c.l.s4 1983009808
  %v2829 = vunpack.c.0.s8 %v2828
  %v2830 = vlaneseq
  %v2831 = vshrl.u32 %v2830, 7
  %v2832 = vsub.s32 %v2829, %v2831
  %v2833 = vrot.slane %v2826, %v2832
  %v2835 = vunpack.c.l.s4 1983009808
  %v2836 = vunpack.c.0.s8 %v2835
  %v2837 = vlaneseq
  %v2838 = vshrl.u32 %v2837, 7
  %v2839 = vsub.s32 %v2836, %v2838
  %v2840 = vrot.slane %v2822, %v2839
  %v2841 = vcombine.low %v2823, %v2823
  %v2843 = vunpack.c.l.s4 1983009808
  %v2844 = vunpack.c.0.s8 %v2843
  %v2845 = vlaneseq
  %v2846 = vshrl.u32 %v2845, 7
  %v2847 = vsub.s32 %v2844, %v2846
  %v2848 = vrot.slane %v2841, %v2847
  %2849 = vrot.lane.b32.xlu0 %v2833, 117
  %v2850 = vpop.permute.xlu0 %2849
  %2851 = vrot.lane.b32.xlu0 %v2840, 117
  %v2852 = vpop.permute.xlu0 %2851
  %2853 = vrot.lane.b32.xlu0 %v2848, 117
  %v2854 = vpop.permute.xlu0 %2853
  %v2855 = vrot.slane %v2850, 4
  %v2856 = vrot.slane %v2852, 4
  %v2857 = vrot.slane %v2854, 4
  %v2858 = vsel %vm107, %v2855, %v2856
  %vm2859 = vcmask 957440
  %v2860 = vsel %vm2859, %v2850, %v2858
  %v2861 = vsel %vm107, %v2856, %v2857
  %v2862 = vsel %vm2859, %v2852, %v2861
  %v2863 = vsel %vm2859, %v2854, %v2857
  %2867 = vst [vmem:[#allocation2 + $0x258] sm:$0xcc] %v2860
  %2868 = vst [vmem:[#allocation2 + $0x260] sm:$0xcc] %v2862
  %2869 = vst.msk [vmem:[#allocation2 + $0x268] sm:$0xcc] %vm121, %v2863
  %v2870 = vld [vmem:[%s0 + $0x2] sm:$0xff]
  %v2871 = vld [vmem:[%s0 + $0xa] sm:$0xf]
  %v2874 = vcombine.high %v2870, %v2870
  %v2876 = vunpack.c.l.s4 1983009808
  %v2877 = vunpack.c.0.s8 %v2876
  %v2878 = vlaneseq
  %v2879 = vshrl.u32 %v2878, 7
  %v2880 = vsub.s32 %v2877, %v2879
  %v2881 = vrot.slane %v2870, %v2880
  %v2883 = vunpack.c.l.s4 1983009808
  %v2884 = vunpack.c.0.s8 %v2883
  %v2885 = vlaneseq
  %v2886 = vshrl.u32 %v2885, 7
  %v2887 = vsub.s32 %v2884, %v2886
  %v2888 = vrot.slane %v2874, %v2887
  %v2890 = vunpack.c.l.s4 1983009808
  %v2891 = vunpack.c.0.s8 %v2890
  %v2892 = vlaneseq
  %v2893 = vshrl.u32 %v2892, 7
  %v2894 = vsub.s32 %v2891, %v2893
  %v2895 = vrot.slane %v2871, %v2894
  %2896 = vrot.lane.b32.xlu0 %v2881, 116
  %v2897 = vpop.permute.xlu0 %2896
  %2898 = vrot.lane.b32.xlu0 %v2888, 116
  %v2899 = vpop.permute.xlu0 %2898
  %2900 = vrot.lane.b32.xlu0 %v2895, 116
  %v2901 = vpop.permute.xlu0 %2900
  %v2902 = vrot.slane %v2897, 4
  %v2903 = vrot.slane %v2899, 4
  %v2904 = vrot.slane %v2901, 4
  %v2905 = vsel %vm107, %v2902, %v2903
  %vm2906 = vcmask 949248
  %v2907 = vsel %vm2906, %v2897, %v2905
  %v2908 = vsel %vm107, %v2903, %v2904
  %v2909 = vsel %vm2906, %v2899, %v2908
  %v2910 = vsel %vm2906, %v2901, %v2904
  %2914 = vst [vmem:[#allocation2 + $0x270] sm:$0x33] %v2907
  %2915 = vst [vmem:[#allocation2 + $0x278] sm:$0x33] %v2909
  %2916 = vst.msk [vmem:[#allocation2 + $0x280] sm:$0x33] %vm69, %v2910
  %v2917 = vld [vmem:[%s0 + $0x2] sm:$0xff]
  %v2918 = vld [vmem:[%s0 + $0xa] sm:$0xf]
  %v2921 = vcombine.low %v2917, %v2917
  %v2923 = vunpack.c.l.s4 1983009808
  %v2924 = vunpack.c.0.s8 %v2923
  %v2925 = vlaneseq
  %v2926 = vshrl.u32 %v2925, 7
  %v2927 = vsub.s32 %v2924, %v2926
  %v2928 = vrot.slane %v2921, %v2927
  %v2930 = vunpack.c.l.s4 1983009808
  %v2931 = vunpack.c.0.s8 %v2930
  %v2932 = vlaneseq
  %v2933 = vshrl.u32 %v2932, 7
  %v2934 = vsub.s32 %v2931, %v2933
  %v2935 = vrot.slane %v2917, %v2934
  %v2936 = vcombine.low %v2918, %v2918
  %v2938 = vunpack.c.l.s4 1983009808
  %v2939 = vunpack.c.0.s8 %v2938
  %v2940 = vlaneseq
  %v2941 = vshrl.u32 %v2940, 7
  %v2942 = vsub.s32 %v2939, %v2941
  %v2943 = vrot.slane %v2936, %v2942
  %2944 = vrot.lane.b32.xlu0 %v2928, 115
  %v2945 = vpop.permute.xlu0 %2944
  %2946 = vrot.lane.b32.xlu0 %v2935, 115
  %v2947 = vpop.permute.xlu0 %2946
  %2948 = vrot.lane.b32.xlu0 %v2943, 115
  %v2949 = vpop.permute.xlu0 %2948
  %v2950 = vrot.slane %v2945, 4
  %v2951 = vrot.slane %v2947, 4
  %v2952 = vrot.slane %v2949, 4
  %v2953 = vsel %vm107, %v2950, %v2951
  %vm2954 = vcmask 941056
  %v2955 = vsel %vm2954, %v2945, %v2953
  %v2956 = vsel %vm107, %v2951, %v2952
  %v2957 = vsel %vm2954, %v2947, %v2956
  %v2958 = vsel %vm2954, %v2949, %v2952
  %2962 = vst [vmem:[#allocation2 + $0x270] sm:$0xcc] %v2955
  %2963 = vst [vmem:[#allocation2 + $0x278] sm:$0xcc] %v2957
  %2964 = vst.msk [vmem:[#allocation2 + $0x280] sm:$0xcc] %vm121, %v2958
  %v2965 = vld [vmem:[%s0 + $0x2] sm:$0xff]
  %v2966 = vld [vmem:[%s0 + $0xa] sm:$0xf]
  %v2969 = vcombine.high %v2965, %v2965
  %v2971 = vunpack.c.l.s4 1983009808
  %v2972 = vunpack.c.0.s8 %v2971
  %v2973 = vlaneseq
  %v2974 = vshrl.u32 %v2973, 7
  %v2975 = vsub.s32 %v2972, %v2974
  %v2976 = vrot.slane %v2965, %v2975
  %v2978 = vunpack.c.l.s4 1983009808
  %v2979 = vunpack.c.0.s8 %v2978
  %v2980 = vlaneseq
  %v2981 = vshrl.u32 %v2980, 7
  %v2982 = vsub.s32 %v2979, %v2981
  %v2983 = vrot.slane %v2969, %v2982
  %v2985 = vunpack.c.l.s4 1983009808
  %v2986 = vunpack.c.0.s8 %v2985
  %v2987 = vlaneseq
  %v2988 = vshrl.u32 %v2987, 7
  %v2989 = vsub.s32 %v2986, %v2988
  %v2990 = vrot.slane %v2966, %v2989
  %2991 = vrot.lane.b32.xlu0 %v2976, 114
  %v2992 = vpop.permute.xlu0 %2991
  %2993 = vrot.lane.b32.xlu0 %v2983, 114
  %v2994 = vpop.permute.xlu0 %2993
  %2995 = vrot.lane.b32.xlu0 %v2990, 114
  %v2996 = vpop.permute.xlu0 %2995
  %v2997 = vrot.slane %v2992, 4
  %v2998 = vrot.slane %v2994, 4
  %v2999 = vrot.slane %v2996, 4
  %v3000 = vsel %vm107, %v2997, %v2998
  %vm3001 = vcmask 932864
  %v3002 = vsel %vm3001, %v2992, %v3000
  %v3003 = vsel %vm107, %v2998, %v2999
  %v3004 = vsel %vm3001, %v2994, %v3003
  %v3005 = vsel %vm3001, %v2996, %v2999
  %3009 = vst [vmem:[#allocation2 + $0x288] sm:$0x33] %v3002
  %3010 = vst [vmem:[#allocation2 + $0x290] sm:$0x33] %v3004
  %3011 = vst.msk [vmem:[#allocation2 + $0x298] sm:$0x33] %vm69, %v3005
  %v3012 = vld [vmem:[%s0 + $0x2] sm:$0xff]
  %v3013 = vld [vmem:[%s0 + $0xa] sm:$0x3f]
  %v3016 = vcombine.low %v3012, %v3012
  %v3018 = vunpack.c.l.s4 1983009808
  %v3019 = vunpack.c.0.s8 %v3018
  %v3020 = vlaneseq
  %v3021 = vshrl.u32 %v3020, 7
  %v3022 = vsub.s32 %v3019, %v3021
  %v3023 = vrot.slane %v3016, %v3022
  %v3025 = vunpack.c.l.s4 1983009808
  %v3026 = vunpack.c.0.s8 %v3025
  %v3027 = vlaneseq
  %v3028 = vshrl.u32 %v3027, 7
  %v3029 = vsub.s32 %v3026, %v3028
  %v3030 = vrot.slane %v3012, %v3029
  %v3031 = vcombine.low %v3013, %v3013
  %v3033 = vunpack.c.l.s4 1983009808
  %v3034 = vunpack.c.0.s8 %v3033
  %v3035 = vlaneseq
  %v3036 = vshrl.u32 %v3035, 7
  %v3037 = vsub.s32 %v3034, %v3036
  %v3038 = vrot.slane %v3031, %v3037
  %v3040 = vunpack.c.l.s4 1983009808
  %v3041 = vunpack.c.0.s8 %v3040
  %v3042 = vlaneseq
  %v3043 = vshrl.u32 %v3042, 7
  %v3044 = vsub.s32 %v3041, %v3043
  %v3045 = vrot.slane %v3013, %v3044
  %3046 = vrot.lane.b32.xlu0 %v3023, 91
  %v3047 = vpop.permute.xlu0 %3046
  %3048 = vrot.lane.b32.xlu0 %v3030, 91
  %v3049 = vpop.permute.xlu0 %3048
  %3050 = vrot.lane.b32.xlu0 %v3038, 91
  %v3051 = vpop.permute.xlu0 %3050
  %3052 = vrot.lane.b32.xlu0 %v3045, 91
  %v3053 = vpop.permute.xlu0 %3052
  %v3054 = vrot.slane %v3047, 4
  %v3055 = vrot.slane %v3049, 4
  %v3056 = vrot.slane %v3051, 4
  %v3057 = vrot.slane %v3053, 4
  %v3058 = vsel %vm107, %v3054, %v3055
  %v3059 = vsel %vm833, %v3047, %v3058
  %v3060 = vsel %vm107, %v3055, %v3056
  %v3061 = vsel %vm833, %v3049, %v3060
  %v3062 = vsel %vm107, %v3056, %v3057
  %v3063 = vsel %vm833, %v3051, %v3062
  %3067 = vst [vmem:[#allocation2 + $0x288] sm:$0xcc] %v3059
  %3068 = vst [vmem:[#allocation2 + $0x290] sm:$0xcc] %v3061
  %3069 = vst.msk [vmem:[#allocation2 + $0x298] sm:$0xcc] %vm121, %v3063
  %v3070 = vld [vmem:[%s0 + $0x2] sm:$0xff]
  %v3071 = vld [vmem:[%s0 + $0xa] sm:$0x3f]
  %v3074 = vcombine.high %v3070, %v3070
  %v3076 = vunpack.c.l.s4 1983009808
  %v3077 = vunpack.c.0.s8 %v3076
  %v3078 = vlaneseq
  %v3079 = vshrl.u32 %v3078, 7
  %v3080 = vsub.s32 %v3077, %v3079
  %v3081 = vrot.slane %v3070, %v3080
  %v3083 = vunpack.c.l.s4 1983009808
  %v3084 = vunpack.c.0.s8 %v3083
  %v3085 = vlaneseq
  %v3086 = vshrl.u32 %v3085, 7
  %v3087 = vsub.s32 %v3084, %v3086
  %v3088 = vrot.slane %v3074, %v3087
  %v3089 = vcombine.high %v3071, %v3071
  %v3091 = vunpack.c.l.s4 1983009808
  %v3092 = vunpack.c.0.s8 %v3091
  %v3093 = vlaneseq
  %v3094 = vshrl.u32 %v3093, 7
  %v3095 = vsub.s32 %v3092, %v3094
  %v3096 = vrot.slane %v3071, %v3095
  %v3098 = vunpack.c.l.s4 1983009808
  %v3099 = vunpack.c.0.s8 %v3098
  %v3100 = vlaneseq
  %v3101 = vshrl.u32 %v3100, 7
  %v3102 = vsub.s32 %v3099, %v3101
  %v3103 = vrot.slane %v3089, %v3102
  %3104 = vrot.lane.b32.xlu0 %v3081, 90
  %v3105 = vpop.permute.xlu0 %3104
  %3106 = vrot.lane.b32.xlu0 %v3088, 90
  %v3107 = vpop.permute.xlu0 %3106
  %3108 = vrot.lane.b32.xlu0 %v3096, 90
  %v3109 = vpop.permute.xlu0 %3108
  %3110 = vrot.lane.b32.xlu0 %v3103, 90
  %v3111 = vpop.permute.xlu0 %3110
  %v3112 = vrot.slane %v3105, 4
  %v3113 = vrot.slane %v3107, 4
  %v3114 = vrot.slane %v3109, 4
  %v3115 = vrot.slane %v3111, 4
  %v3116 = vsel %vm107, %v3112, %v3113
  %v3117 = vsel %vm892, %v3105, %v3116
  %v3118 = vsel %vm107, %v3113, %v3114
  %v3119 = vsel %vm892, %v3107, %v3118
  %v3120 = vsel %vm107, %v3114, %v3115
  %v3121 = vsel %vm892, %v3109, %v3120
  %3125 = vst [vmem:[#allocation2 + $0x2a0] sm:$0x33] %v3117
  %3126 = vst [vmem:[#allocation2 + $0x2a8] sm:$0x33] %v3119
  %3127 = vst.msk [vmem:[#allocation2 + $0x2b0] sm:$0x33] %vm69, %v3121
  %v3128 = vld [vmem:[%s0 + $0x2] sm:$0xff]
  %v3129 = vld [vmem:[%s0 + $0xa] sm:$0x3f]
  %v3132 = vcombine.low %v3128, %v3128
  %v3134 = vunpack.c.l.s4 1983009808
  %v3135 = vunpack.c.0.s8 %v3134
  %v3136 = vlaneseq
  %v3137 = vshrl.u32 %v3136, 7
  %v3138 = vsub.s32 %v3135, %v3137
  %v3139 = vrot.slane %v3132, %v3138
  %v3141 = vunpack.c.l.s4 1983009808
  %v3142 = vunpack.c.0.s8 %v3141
  %v3143 = vlaneseq
  %v3144 = vshrl.u32 %v3143, 7
  %v3145 = vsub.s32 %v3142, %v3144
  %v3146 = vrot.slane %v3128, %v3145
  %v3147 = vcombine.low %v3129, %v3129
  %v3149 = vunpack.c.l.s4 1983009808
  %v3150 = vunpack.c.0.s8 %v3149
  %v3151 = vlaneseq
  %v3152 = vshrl.u32 %v3151, 7
  %v3153 = vsub.s32 %v3150, %v3152
  %v3154 = vrot.slane %v3147, %v3153
  %v3156 = vunpack.c.l.s4 1983009808
  %v3157 = vunpack.c.0.s8 %v3156
  %v3158 = vlaneseq
  %v3159 = vshrl.u32 %v3158, 7
  %v3160 = vsub.s32 %v3157, %v3159
  %v3161 = vrot.slane %v3129, %v3160
  %3162 = vrot.lane.b32.xlu0 %v3139, 89
  %v3163 = vpop.permute.xlu0 %3162
  %3164 = vrot.lane.b32.xlu0 %v3146, 89
  %v3165 = vpop.permute.xlu0 %3164
  %3166 = vrot.lane.b32.xlu0 %v3154, 89
  %v3167 = vpop.permute.xlu0 %3166
  %3168 = vrot.lane.b32.xlu0 %v3161, 89
  %v3169 = vpop.permute.xlu0 %3168
  %v3170 = vrot.slane %v3163, 4
  %v3171 = vrot.slane %v3165, 4
  %v3172 = vrot.slane %v3167, 4
  %v3173 = vrot.slane %v3169, 4
  %v3174 = vsel %vm107, %v3170, %v3171
  %v3175 = vsel %vm951, %v3163, %v3174
  %v3176 = vsel %vm107, %v3171, %v3172
  %v3177 = vsel %vm951, %v3165, %v3176
  %v3178 = vsel %vm107, %v3172, %v3173
  %v3179 = vsel %vm951, %v3167, %v3178
  %3183 = vst [vmem:[#allocation2 + $0x2a0] sm:$0xcc] %v3175
  %3184 = vst [vmem:[#allocation2 + $0x2a8] sm:$0xcc] %v3177
  %3185 = vst.msk [vmem:[#allocation2 + $0x2b0] sm:$0xcc] %vm121, %v3179
  %v3186 = vld [vmem:[%s0 + $0x2] sm:$0xff]
  %v3187 = vld [vmem:[%s0 + $0xa] sm:$0x3f]
  %v3190 = vcombine.high %v3186, %v3186
  %v3192 = vunpack.c.l.s4 1983009808
  %v3193 = vunpack.c.0.s8 %v3192
  %v3194 = vlaneseq
  %v3195 = vshrl.u32 %v3194, 7
  %v3196 = vsub.s32 %v3193, %v3195
  %v3197 = vrot.slane %v3186, %v3196
  %v3199 = vunpack.c.l.s4 1983009808
  %v3200 = vunpack.c.0.s8 %v3199
  %v3201 = vlaneseq
  %v3202 = vshrl.u32 %v3201, 7
  %v3203 = vsub.s32 %v3200, %v3202
  %v3204 = vrot.slane %v3190, %v3203
  %v3205 = vcombine.high %v3187, %v3187
  %v3207 = vunpack.c.l.s4 1983009808
  %v3208 = vunpack.c.0.s8 %v3207
  %v3209 = vlaneseq
  %v3210 = vshrl.u32 %v3209, 7
  %v3211 = vsub.s32 %v3208, %v3210
  %v3212 = vrot.slane %v3187, %v3211
  %v3214 = vunpack.c.l.s4 1983009808
  %v3215 = vunpack.c.0.s8 %v3214
  %v3216 = vlaneseq
  %v3217 = vshrl.u32 %v3216, 7
  %v3218 = vsub.s32 %v3215, %v3217
  %v3219 = vrot.slane %v3205, %v3218
  %3220 = vrot.lane.b32.xlu0 %v3197, 88
  %v3221 = vpop.permute.xlu0 %3220
  %3222 = vrot.lane.b32.xlu0 %v3204, 88
  %v3223 = vpop.permute.xlu0 %3222
  %3224 = vrot.lane.b32.xlu0 %v3212, 88
  %v3225 = vpop.permute.xlu0 %3224
  %3226 = vrot.lane.b32.xlu0 %v3219, 88
  %v3227 = vpop.permute.xlu0 %3226
  %v3228 = vrot.slane %v3221, 4
  %v3229 = vrot.slane %v3223, 4
  %v3230 = vrot.slane %v3225, 4
  %v3231 = vrot.slane %v3227, 4
  %v3232 = vsel %vm107, %v3228, %v3229
  %v3233 = vsel %vm1010, %v3221, %v3232
  %v3234 = vsel %vm107, %v3229, %v3230
  %v3235 = vsel %vm1010, %v3223, %v3234
  %v3236 = vsel %vm107, %v3230, %v3231
  %v3237 = vsel %vm1010, %v3225, %v3236
  %3241 = vst [vmem:[#allocation2 + $0x2b8] sm:$0x33] %v3233
  %3242 = vst [vmem:[#allocation2 + $0x2c0] sm:$0x33] %v3235
  %3243 = vst.msk [vmem:[#allocation2 + $0x2c8] sm:$0x33] %vm69, %v3237
  %v3244 = vld [vmem:[%s0 + $0x2] sm:$0xff]
  %v3245 = vld [vmem:[%s0 + $0xa] sm:$0x3f]
  %v3248 = vcombine.low %v3244, %v3244
  %v3250 = vunpack.c.l.s4 1983009808
  %v3251 = vunpack.c.0.s8 %v3250
  %v3252 = vlaneseq
  %v3253 = vshrl.u32 %v3252, 7
  %v3254 = vsub.s32 %v3251, %v3253
  %v3255 = vrot.slane %v3248, %v3254
  %v3257 = vunpack.c.l.s4 1983009808
  %v3258 = vunpack.c.0.s8 %v3257
  %v3259 = vlaneseq
  %v3260 = vshrl.u32 %v3259, 7
  %v3261 = vsub.s32 %v3258, %v3260
  %v3262 = vrot.slane %v3244, %v3261
  %v3263 = vcombine.low %v3245, %v3245
  %v3265 = vunpack.c.l.s4 1983009808
  %v3266 = vunpack.c.0.s8 %v3265
  %v3267 = vlaneseq
  %v3268 = vshrl.u32 %v3267, 7
  %v3269 = vsub.s32 %v3266, %v3268
  %v3270 = vrot.slane %v3263, %v3269
  %v3272 = vunpack.c.l.s4 1983009808
  %v3273 = vunpack.c.0.s8 %v3272
  %v3274 = vlaneseq
  %v3275 = vshrl.u32 %v3274, 7
  %v3276 = vsub.s32 %v3273, %v3275
  %v3277 = vrot.slane %v3245, %v3276
  %3278 = vrot.lane.b32.xlu0 %v3255, 87
  %v3279 = vpop.permute.xlu0 %3278
  %3280 = vrot.lane.b32.xlu0 %v3262, 87
  %v3281 = vpop.permute.xlu0 %3280
  %3282 = vrot.lane.b32.xlu0 %v3270, 87
  %v3283 = vpop.permute.xlu0 %3282
  %3284 = vrot.lane.b32.xlu0 %v3277, 87
  %v3285 = vpop.permute.xlu0 %3284
  %v3286 = vrot.slane %v3279, 4
  %v3287 = vrot.slane %v3281, 4
  %v3288 = vrot.slane %v3283, 4
  %v3289 = vrot.slane %v3285, 4
  %v3290 = vsel %vm107, %v3286, %v3287
  %v3291 = vsel %vm1069, %v3279, %v3290
  %v3292 = vsel %vm107, %v3287, %v3288
  %v3293 = vsel %vm1069, %v3281, %v3292
  %v3294 = vsel %vm107, %v3288, %v3289
  %v3295 = vsel %vm1069, %v3283, %v3294
  %3299 = vst [vmem:[#allocation2 + $0x2b8] sm:$0xcc] %v3291
  %3300 = vst [vmem:[#allocation2 + $0x2c0] sm:$0xcc] %v3293
  %3301 = vst.msk [vmem:[#allocation2 + $0x2c8] sm:$0xcc] %vm121, %v3295
  %v3302 = vld [vmem:[%s0 + $0x2] sm:$0xff]
  %v3303 = vld [vmem:[%s0 + $0xa] sm:$0x3f]
  %v3306 = vcombine.high %v3302, %v3302
  %v3308 = vunpack.c.l.s4 1983009808
  %v3309 = vunpack.c.0.s8 %v3308
  %v3310 = vlaneseq
  %v3311 = vshrl.u32 %v3310, 7
  %v3312 = vsub.s32 %v3309, %v3311
  %v3313 = vrot.slane %v3302, %v3312
  %v3315 = vunpack.c.l.s4 1983009808
  %v3316 = vunpack.c.0.s8 %v3315
  %v3317 = vlaneseq
  %v3318 = vshrl.u32 %v3317, 7
  %v3319 = vsub.s32 %v3316, %v3318
  %v3320 = vrot.slane %v3306, %v3319
  %v3321 = vcombine.high %v3303, %v3303
  %v3323 = vunpack.c.l.s4 1983009808
  %v3324 = vunpack.c.0.s8 %v3323
  %v3325 = vlaneseq
  %v3326 = vshrl.u32 %v3325, 7
  %v3327 = vsub.s32 %v3324, %v3326
  %v3328 = vrot.slane %v3303, %v3327
  %v3330 = vunpack.c.l.s4 1983009808
  %v3331 = vunpack.c.0.s8 %v3330
  %v3332 = vlaneseq
  %v3333 = vshrl.u32 %v3332, 7
  %v3334 = vsub.s32 %v3331, %v3333
  %v3335 = vrot.slane %v3321, %v3334
  %3336 = vrot.lane.b32.xlu0 %v3313, 86
  %v3337 = vpop.permute.xlu0 %3336
  %3338 = vrot.lane.b32.xlu0 %v3320, 86
  %v3339 = vpop.permute.xlu0 %3338
  %3340 = vrot.lane.b32.xlu0 %v3328, 86
  %v3341 = vpop.permute.xlu0 %3340
  %3342 = vrot.lane.b32.xlu0 %v3335, 86
  %v3343 = vpop.permute.xlu0 %3342
  %v3344 = vrot.slane %v3337, 4
  %v3345 = vrot.slane %v3339, 4
  %v3346 = vrot.slane %v3341, 4
  %v3347 = vrot.slane %v3343, 4
  %v3348 = vsel %vm107, %v3344, %v3345
  %v3349 = vsel %vm1128, %v3337, %v3348
  %v3350 = vsel %vm107, %v3345, %v3346
  %v3351 = vsel %vm1128, %v3339, %v3350
  %v3352 = vsel %vm107, %v3346, %v3347
  %v3353 = vsel %vm1128, %v3341, %v3352
  %3357 = vst [vmem:[#allocation2 + $0x2d0] sm:$0x33] %v3349
  %3358 = vst [vmem:[#allocation2 + $0x2d8] sm:$0x33] %v3351
  %3359 = vst.msk [vmem:[#allocation2 + $0x2e0] sm:$0x33] %vm69, %v3353
  %v3360 = vld [vmem:[%s0 + $0x2] sm:$0xff]
  %v3361 = vld [vmem:[%s0 + $0xa] sm:$0x3f]
  %v3364 = vcombine.low %v3360, %v3360
  %v3366 = vunpack.c.l.s4 1983009808
  %v3367 = vunpack.c.0.s8 %v3366
  %v3368 = vlaneseq
  %v3369 = vshrl.u32 %v3368, 7
  %v3370 = vsub.s32 %v3367, %v3369
  %v3371 = vrot.slane %v3364, %v3370
  %v3373 = vunpack.c.l.s4 1983009808
  %v3374 = vunpack.c.0.s8 %v3373
  %v3375 = vlaneseq
  %v3376 = vshrl.u32 %v3375, 7
  %v3377 = vsub.s32 %v3374, %v3376
  %v3378 = vrot.slane %v3360, %v3377
  %v3379 = vcombine.low %v3361, %v3361
  %v3381 = vunpack.c.l.s4 1983009808
  %v3382 = vunpack.c.0.s8 %v3381
  %v3383 = vlaneseq
  %v3384 = vshrl.u32 %v3383, 7
  %v3385 = vsub.s32 %v3382, %v3384
  %v3386 = vrot.slane %v3379, %v3385
  %v3388 = vunpack.c.l.s4 1983009808
  %v3389 = vunpack.c.0.s8 %v3388
  %v3390 = vlaneseq
  %v3391 = vshrl.u32 %v3390, 7
  %v3392 = vsub.s32 %v3389, %v3391
  %v3393 = vrot.slane %v3361, %v3392
  %3394 = vrot.lane.b32.xlu0 %v3371, 85
  %v3395 = vpop.permute.xlu0 %3394
  %3396 = vrot.lane.b32.xlu0 %v3378, 85
  %v3397 = vpop.permute.xlu0 %3396
  %3398 = vrot.lane.b32.xlu0 %v3386, 85
  %v3399 = vpop.permute.xlu0 %3398
  %3400 = vrot.lane.b32.xlu0 %v3393, 85
  %v3401 = vpop.permute.xlu0 %3400
  %v3402 = vrot.slane %v3395, 4
  %v3403 = vrot.slane %v3397, 4
  %v3404 = vrot.slane %v3399, 4
  %v3405 = vrot.slane %v3401, 4
  %v3406 = vsel %vm107, %v3402, %v3403
  %v3407 = vsel %vm1187, %v3395, %v3406
  %v3408 = vsel %vm107, %v3403, %v3404
  %v3409 = vsel %vm1187, %v3397, %v3408
  %v3410 = vsel %vm107, %v3404, %v3405
  %v3411 = vsel %vm1187, %v3399, %v3410
  %3415 = vst [vmem:[#allocation2 + $0x2d0] sm:$0xcc] %v3407
  %3416 = vst [vmem:[#allocation2 + $0x2d8] sm:$0xcc] %v3409
  %3417 = vst.msk [vmem:[#allocation2 + $0x2e0] sm:$0xcc] %vm121, %v3411
  %v3418 = vld [vmem:[%s0 + $0x2] sm:$0xff]
  %v3419 = vld [vmem:[%s0 + $0xa] sm:$0x3f]
  %v3422 = vcombine.high %v3418, %v3418
  %v3424 = vunpack.c.l.s4 1983009808
  %v3425 = vunpack.c.0.s8 %v3424
  %v3426 = vlaneseq
  %v3427 = vshrl.u32 %v3426, 7
  %v3428 = vsub.s32 %v3425, %v3427
  %v3429 = vrot.slane %v3418, %v3428
  %v3431 = vunpack.c.l.s4 1983009808
  %v3432 = vunpack.c.0.s8 %v3431
  %v3433 = vlaneseq
  %v3434 = vshrl.u32 %v3433, 7
  %v3435 = vsub.s32 %v3432, %v3434
  %v3436 = vrot.slane %v3422, %v3435
  %v3437 = vcombine.high %v3419, %v3419
  %v3439 = vunpack.c.l.s4 1983009808
  %v3440 = vunpack.c.0.s8 %v3439
  %v3441 = vlaneseq
  %v3442 = vshrl.u32 %v3441, 7
  %v3443 = vsub.s32 %v3440, %v3442
  %v3444 = vrot.slane %v3419, %v3443
  %v3446 = vunpack.c.l.s4 1983009808
  %v3447 = vunpack.c.0.s8 %v3446
  %v3448 = vlaneseq
  %v3449 = vshrl.u32 %v3448, 7
  %v3450 = vsub.s32 %v3447, %v3449
  %v3451 = vrot.slane %v3437, %v3450
  %3452 = vrot.lane.b32.xlu0 %v3429, 84
  %v3453 = vpop.permute.xlu0 %3452
  %3454 = vrot.lane.b32.xlu0 %v3436, 84
  %v3455 = vpop.permute.xlu0 %3454
  %3456 = vrot.lane.b32.xlu0 %v3444, 84
  %v3457 = vpop.permute.xlu0 %3456
  %3458 = vrot.lane.b32.xlu0 %v3451, 84
  %v3459 = vpop.permute.xlu0 %3458
  %v3460 = vrot.slane %v3453, 4
  %v3461 = vrot.slane %v3455, 4
  %v3462 = vrot.slane %v3457, 4
  %v3463 = vrot.slane %v3459, 4
  %v3464 = vsel %vm107, %v3460, %v3461
  %vm3465 = vcmask 687104
  %v3466 = vsel %vm3465, %v3453, %v3464
  %v3467 = vsel %vm107, %v3461, %v3462
  %v3468 = vsel %vm3465, %v3455, %v3467
  %v3469 = vsel %vm107, %v3462, %v3463
  %v3470 = vsel %vm3465, %v3457, %v3469
  %3474 = vst [vmem:[#allocation2 + $0x2e8] sm:$0x33] %v3466
  %3475 = vst [vmem:[#allocation2 + $0x2f0] sm:$0x33] %v3468
  %3476 = vst.msk [vmem:[#allocation2 + $0x2f8] sm:$0x33] %vm69, %v3470
  %v3477 = vld [vmem:[%s0 + $0x2] sm:$0xff]
  %v3478 = vld [vmem:[%s0 + $0xa] sm:$0x3f]
  %v3481 = vcombine.low %v3477, %v3477
  %v3483 = vunpack.c.l.s4 1983009808
  %v3484 = vunpack.c.0.s8 %v3483
  %v3485 = vlaneseq
  %v3486 = vshrl.u32 %v3485, 7
  %v3487 = vsub.s32 %v3484, %v3486
  %v3488 = vrot.slane %v3481, %v3487
  %v3490 = vunpack.c.l.s4 1983009808
  %v3491 = vunpack.c.0.s8 %v3490
  %v3492 = vlaneseq
  %v3493 = vshrl.u32 %v3492, 7
  %v3494 = vsub.s32 %v3491, %v3493
  %v3495 = vrot.slane %v3477, %v3494
  %v3496 = vcombine.low %v3478, %v3478
  %v3498 = vunpack.c.l.s4 1983009808
  %v3499 = vunpack.c.0.s8 %v3498
  %v3500 = vlaneseq
  %v3501 = vshrl.u32 %v3500, 7
  %v3502 = vsub.s32 %v3499, %v3501
  %v3503 = vrot.slane %v3496, %v3502
  %v3505 = vunpack.c.l.s4 1983009808
  %v3506 = vunpack.c.0.s8 %v3505
  %v3507 = vlaneseq
  %v3508 = vshrl.u32 %v3507, 7
  %v3509 = vsub.s32 %v3506, %v3508
  %v3510 = vrot.slane %v3478, %v3509
  %3511 = vrot.lane.b32.xlu0 %v3488, 83
  %v3512 = vpop.permute.xlu0 %3511
  %3513 = vrot.lane.b32.xlu0 %v3495, 83
  %v3514 = vpop.permute.xlu0 %3513
  %3515 = vrot.lane.b32.xlu0 %v3503, 83
  %v3516 = vpop.permute.xlu0 %3515
  %3517 = vrot.lane.b32.xlu0 %v3510, 83
  %v3518 = vpop.permute.xlu0 %3517
  %v3519 = vrot.slane %v3512, 4
  %v3520 = vrot.slane %v3514, 4
  %v3521 = vrot.slane %v3516, 4
  %v3522 = vrot.slane %v3518, 4
  %v3523 = vsel %vm107, %v3519, %v3520
  %vm3524 = vcmask 678912
  %v3525 = vsel %vm3524, %v3512, %v3523
  %v3526 = vsel %vm107, %v3520, %v3521
  %v3527 = vsel %vm3524, %v3514, %v3526
  %v3528 = vsel %vm107, %v3521, %v3522
  %v3529 = vsel %vm3524, %v3516, %v3528
  %3533 = vst [vmem:[#allocation2 + $0x2e8] sm:$0xcc] %v3525
  %3534 = vst [vmem:[#allocation2 + $0x2f0] sm:$0xcc] %v3527
  %3535 = vst.msk [vmem:[#allocation2 + $0x2f8] sm:$0xcc] %vm121, %v3529
  %v3536 = vld [vmem:[%s0 + $0x2] sm:$0xff]
  %v3537 = vld [vmem:[%s0 + $0xa] sm:$0x3f]
  %v3540 = vcombine.high %v3536, %v3536
  %v3542 = vunpack.c.l.s4 1983009808
  %v3543 = vunpack.c.0.s8 %v3542
  %v3544 = vlaneseq
  %v3545 = vshrl.u32 %v3544, 7
  %v3546 = vsub.s32 %v3543, %v3545
  %v3547 = vrot.slane %v3536, %v3546
  %v3549 = vunpack.c.l.s4 1983009808
  %v3550 = vunpack.c.0.s8 %v3549
  %v3551 = vlaneseq
  %v3552 = vshrl.u32 %v3551, 7
  %v3553 = vsub.s32 %v3550, %v3552
  %v3554 = vrot.slane %v3540, %v3553
  %v3555 = vcombine.high %v3537, %v3537
  %v3557 = vunpack.c.l.s4 1983009808
  %v3558 = vunpack.c.0.s8 %v3557
  %v3559 = vlaneseq
  %v3560 = vshrl.u32 %v3559, 7
  %v3561 = vsub.s32 %v3558, %v3560
  %v3562 = vrot.slane %v3537, %v3561
  %v3564 = vunpack.c.l.s4 1983009808
  %v3565 = vunpack.c.0.s8 %v3564
  %v3566 = vlaneseq
  %v3567 = vshrl.u32 %v3566, 7
  %v3568 = vsub.s32 %v3565, %v3567
  %v3569 = vrot.slane %v3555, %v3568
  %3570 = vrot.lane.b32.xlu0 %v3547, 82
  %v3571 = vpop.permute.xlu0 %3570
  %3572 = vrot.lane.b32.xlu0 %v3554, 82
  %v3573 = vpop.permute.xlu0 %3572
  %3574 = vrot.lane.b32.xlu0 %v3562, 82
  %v3575 = vpop.permute.xlu0 %3574
  %3576 = vrot.lane.b32.xlu0 %v3569, 82
  %v3577 = vpop.permute.xlu0 %3576
  %v3578 = vrot.slane %v3571, 4
  %v3579 = vrot.slane %v3573, 4
  %v3580 = vrot.slane %v3575, 4
  %v3581 = vrot.slane %v3577, 4
  %v3582 = vsel %vm107, %v3578, %v3579
  %vm3583 = vcmask 670720
  %v3584 = vsel %vm3583, %v3571, %v3582
  %v3585 = vsel %vm107, %v3579, %v3580
  %v3586 = vsel %vm3583, %v3573, %v3585
  %v3587 = vsel %vm107, %v3580, %v3581
  %v3588 = vsel %vm3583, %v3575, %v3587
  %3592 = vst [vmem:[#allocation2 + $0x300] sm:$0x33] %v3584
  %3593 = vst [vmem:[#allocation2 + $0x308] sm:$0x33] %v3586
  %3594 = vst.msk [vmem:[#allocation2 + $0x310] sm:$0x33] %vm69, %v3588
  %v3595 = vld [vmem:[%s0 + $0x2] sm:$0xff]
  %v3596 = vld [vmem:[%s0 + $0xa] sm:$0x3f]
  %v3599 = vcombine.low %v3595, %v3595
  %v3601 = vunpack.c.l.s4 1983009808
  %v3602 = vunpack.c.0.s8 %v3601
  %v3603 = vlaneseq
  %v3604 = vshrl.u32 %v3603, 7
  %v3605 = vsub.s32 %v3602, %v3604
  %v3606 = vrot.slane %v3599, %v3605
  %v3608 = vunpack.c.l.s4 1983009808
  %v3609 = vunpack.c.0.s8 %v3608
  %v3610 = vlaneseq
  %v3611 = vshrl.u32 %v3610, 7
  %v3612 = vsub.s32 %v3609, %v3611
  %v3613 = vrot.slane %v3595, %v3612
  %v3614 = vcombine.low %v3596, %v3596
  %v3616 = vunpack.c.l.s4 1983009808
  %v3617 = vunpack.c.0.s8 %v3616
  %v3618 = vlaneseq
  %v3619 = vshrl.u32 %v3618, 7
  %v3620 = vsub.s32 %v3617, %v3619
  %v3621 = vrot.slane %v3614, %v3620
  %v3623 = vunpack.c.l.s4 1983009808
  %v3624 = vunpack.c.0.s8 %v3623
  %v3625 = vlaneseq
  %v3626 = vshrl.u32 %v3625, 7
  %v3627 = vsub.s32 %v3624, %v3626
  %v3628 = vrot.slane %v3596, %v3627
  %3629 = vrot.lane.b32.xlu0 %v3606, 81
  %v3630 = vpop.permute.xlu0 %3629
  %3631 = vrot.lane.b32.xlu0 %v3613, 81
  %v3632 = vpop.permute.xlu0 %3631
  %3633 = vrot.lane.b32.xlu0 %v3621, 81
  %v3634 = vpop.permute.xlu0 %3633
  %3635 = vrot.lane.b32.xlu0 %v3628, 81
  %v3636 = vpop.permute.xlu0 %3635
  %v3637 = vrot.slane %v3630, 4
  %v3638 = vrot.slane %v3632, 4
  %v3639 = vrot.slane %v3634, 4
  %v3640 = vrot.slane %v3636, 4
  %v3641 = vsel %vm107, %v3637, %v3638
  %vm3642 = vcmask 662528
  %v3643 = vsel %vm3642, %v3630, %v3641
  %v3644 = vsel %vm107, %v3638, %v3639
  %v3645 = vsel %vm3642, %v3632, %v3644
  %v3646 = vsel %vm107, %v3639, %v3640
  %v3647 = vsel %vm3642, %v3634, %v3646
  %3651 = vst [vmem:[#allocation2 + $0x300] sm:$0xcc] %v3643
  %3652 = vst [vmem:[#allocation2 + $0x308] sm:$0xcc] %v3645
  %3653 = vst.msk [vmem:[#allocation2 + $0x310] sm:$0xcc] %vm121, %v3647
  %v3654 = vld [vmem:[%s0 + $0x2] sm:$0xff]
  %v3655 = vld [vmem:[%s0 + $0xa] sm:$0x3f]
  %v3658 = vcombine.high %v3654, %v3654
  %v3660 = vunpack.c.l.s4 1983009808
  %v3661 = vunpack.c.0.s8 %v3660
  %v3662 = vlaneseq
  %v3663 = vshrl.u32 %v3662, 7
  %v3664 = vsub.s32 %v3661, %v3663
  %v3665 = vrot.slane %v3654, %v3664
  %v3667 = vunpack.c.l.s4 1983009808
  %v3668 = vunpack.c.0.s8 %v3667
  %v3669 = vlaneseq
  %v3670 = vshrl.u32 %v3669, 7
  %v3671 = vsub.s32 %v3668, %v3670
  %v3672 = vrot.slane %v3658, %v3671
  %v3673 = vcombine.high %v3655, %v3655
  %v3675 = vunpack.c.l.s4 1983009808
  %v3676 = vunpack.c.0.s8 %v3675
  %v3677 = vlaneseq
  %v3678 = vshrl.u32 %v3677, 7
  %v3679 = vsub.s32 %v3676, %v3678
  %v3680 = vrot.slane %v3655, %v3679
  %v3682 = vunpack.c.l.s4 1983009808
  %v3683 = vunpack.c.0.s8 %v3682
  %v3684 = vlaneseq
  %v3685 = vshrl.u32 %v3684, 7
  %v3686 = vsub.s32 %v3683, %v3685
  %v3687 = vrot.slane %v3673, %v3686
  %3688 = vrot.lane.b32.xlu0 %v3665, 58
  %v3689 = vpop.permute.xlu0 %3688
  %3690 = vrot.lane.b32.xlu0 %v3672, 58
  %v3691 = vpop.permute.xlu0 %3690
  %3692 = vrot.lane.b32.xlu0 %v3680, 58
  %v3693 = vpop.permute.xlu0 %3692
  %3694 = vrot.lane.b32.xlu0 %v3687, 58
  %v3695 = vpop.permute.xlu0 %3694
  %v3696 = vrot.slane %v3689, 4
  %v3697 = vrot.slane %v3691, 4
  %v3698 = vrot.slane %v3693, 4
  %v3699 = vrot.slane %v3695, 4
  %v3700 = vsel %vm107, %v3696, %v3697
  %v3701 = vsel %vm1482, %v3689, %v3700
  %v3702 = vsel %vm107, %v3697, %v3698
  %v3703 = vsel %vm1482, %v3691, %v3702
  %v3704 = vsel %vm107, %v3698, %v3699
  %v3705 = vsel %vm1482, %v3693, %v3704
  %3709 = vst [vmem:[#allocation2 + $0x318] sm:$0x33] %v3701
  %3710 = vst [vmem:[#allocation2 + $0x320] sm:$0x33] %v3703
  %3711 = vst.msk [vmem:[#allocation2 + $0x328] sm:$0x33] %vm69, %v3705
  %v3712 = vld [vmem:[%s0 + $0x2] sm:$0xff]
  %v3713 = vld [vmem:[%s0 + $0xa] sm:$0x3f]
  %v3716 = vcombine.low %v3712, %v3712
  %v3718 = vunpack.c.l.s4 1983009808
  %v3719 = vunpack.c.0.s8 %v3718
  %v3720 = vlaneseq
  %v3721 = vshrl.u32 %v3720, 7
  %v3722 = vsub.s32 %v3719, %v3721
  %v3723 = vrot.slane %v3716, %v3722
  %v3725 = vunpack.c.l.s4 1983009808
  %v3726 = vunpack.c.0.s8 %v3725
  %v3727 = vlaneseq
  %v3728 = vshrl.u32 %v3727, 7
  %v3729 = vsub.s32 %v3726, %v3728
  %v3730 = vrot.slane %v3712, %v3729
  %v3731 = vcombine.low %v3713, %v3713
  %v3733 = vunpack.c.l.s4 1983009808
  %v3734 = vunpack.c.0.s8 %v3733
  %v3735 = vlaneseq
  %v3736 = vshrl.u32 %v3735, 7
  %v3737 = vsub.s32 %v3734, %v3736
  %v3738 = vrot.slane %v3731, %v3737
  %v3740 = vunpack.c.l.s4 1983009808
  %v3741 = vunpack.c.0.s8 %v3740
  %v3742 = vlaneseq
  %v3743 = vshrl.u32 %v3742, 7
  %v3744 = vsub.s32 %v3741, %v3743
  %v3745 = vrot.slane %v3713, %v3744
  %3746 = vrot.lane.b32.xlu0 %v3723, 57
  %v3747 = vpop.permute.xlu0 %3746
  %3748 = vrot.lane.b32.xlu0 %v3730, 57
  %v3749 = vpop.permute.xlu0 %3748
  %3750 = vrot.lane.b32.xlu0 %v3738, 57
  %v3751 = vpop.permute.xlu0 %3750
  %3752 = vrot.lane.b32.xlu0 %v3745, 57
  %v3753 = vpop.permute.xlu0 %3752
  %v3754 = vrot.slane %v3747, 4
  %v3755 = vrot.slane %v3749, 4
  %v3756 = vrot.slane %v3751, 4
  %v3757 = vrot.slane %v3753, 4
  %v3758 = vsel %vm107, %v3754, %v3755
  %v3759 = vsel %vm1541, %v3747, %v3758
  %v3760 = vsel %vm107, %v3755, %v3756
  %v3761 = vsel %vm1541, %v3749, %v3760
  %v3762 = vsel %vm107, %v3756, %v3757
  %v3763 = vsel %vm1541, %v3751, %v3762
  %3767 = vst [vmem:[#allocation2 + $0x318] sm:$0xcc] %v3759
  %3768 = vst [vmem:[#allocation2 + $0x320] sm:$0xcc] %v3761
  %3769 = vst.msk [vmem:[#allocation2 + $0x328] sm:$0xcc] %vm121, %v3763
  %v3770 = vld [vmem:[%s0 + $0x2] sm:$0xff]
  %v3771 = vld [vmem:[%s0 + $0xa] sm:$0x3f]
  %v3774 = vcombine.high %v3770, %v3770
  %v3776 = vunpack.c.l.s4 1983009808
  %v3777 = vunpack.c.0.s8 %v3776
  %v3778 = vlaneseq
  %v3779 = vshrl.u32 %v3778, 7
  %v3780 = vsub.s32 %v3777, %v3779
  %v3781 = vrot.slane %v3770, %v3780
  %v3783 = vunpack.c.l.s4 1983009808
  %v3784 = vunpack.c.0.s8 %v3783
  %v3785 = vlaneseq
  %v3786 = vshrl.u32 %v3785, 7
  %v3787 = vsub.s32 %v3784, %v3786
  %v3788 = vrot.slane %v3774, %v3787
  %v3789 = vcombine.high %v3771, %v3771
  %v3791 = vunpack.c.l.s4 1983009808
  %v3792 = vunpack.c.0.s8 %v3791
  %v3793 = vlaneseq
  %v3794 = vshrl.u32 %v3793, 7
  %v3795 = vsub.s32 %v3792, %v3794
  %v3796 = vrot.slane %v3771, %v3795
  %v3798 = vunpack.c.l.s4 1983009808
  %v3799 = vunpack.c.0.s8 %v3798
  %v3800 = vlaneseq
  %v3801 = vshrl.u32 %v3800, 7
  %v3802 = vsub.s32 %v3799, %v3801
  %v3803 = vrot.slane %v3789, %v3802
  %3804 = vrot.lane.b32.xlu0 %v3781, 56
  %v3805 = vpop.permute.xlu0 %3804
  %3806 = vrot.lane.b32.xlu0 %v3788, 56
  %v3807 = vpop.permute.xlu0 %3806
  %3808 = vrot.lane.b32.xlu0 %v3796, 56
  %v3809 = vpop.permute.xlu0 %3808
  %3810 = vrot.lane.b32.xlu0 %v3803, 56
  %v3811 = vpop.permute.xlu0 %3810
  %v3812 = vrot.slane %v3805, 4
  %v3813 = vrot.slane %v3807, 4
  %v3814 = vrot.slane %v3809, 4
  %v3815 = vrot.slane %v3811, 4
  %v3816 = vsel %vm107, %v3812, %v3813
  %v3817 = vsel %vm1600, %v3805, %v3816
  %v3818 = vsel %vm107, %v3813, %v3814
  %v3819 = vsel %vm1600, %v3807, %v3818
  %v3820 = vsel %vm107, %v3814, %v3815
  %v3821 = vsel %vm1600, %v3809, %v3820
  %3825 = vst [vmem:[#allocation2 + $0x330] sm:$0x33] %v3817
  %3826 = vst [vmem:[#allocation2 + $0x338] sm:$0x33] %v3819
  %3827 = vst.msk [vmem:[#allocation2 + $0x340] sm:$0x33] %vm69, %v3821
  %v3828 = vld [vmem:[%s0 + $0x2] sm:$0xff]
  %v3829 = vld [vmem:[%s0 + $0xa] sm:$0x3f]
  %v3832 = vcombine.low %v3828, %v3828
  %v3834 = vunpack.c.l.s4 1983009808
  %v3835 = vunpack.c.0.s8 %v3834
  %v3836 = vlaneseq
  %v3837 = vshrl.u32 %v3836, 7
  %v3838 = vsub.s32 %v3835, %v3837
  %v3839 = vrot.slane %v3832, %v3838
  %v3841 = vunpack.c.l.s4 1983009808
  %v3842 = vunpack.c.0.s8 %v3841
  %v3843 = vlaneseq
  %v3844 = vshrl.u32 %v3843, 7
  %v3845 = vsub.s32 %v3842, %v3844
  %v3846 = vrot.slane %v3828, %v3845
  %v3847 = vcombine.low %v3829, %v3829
  %v3849 = vunpack.c.l.s4 1983009808
  %v3850 = vunpack.c.0.s8 %v3849
  %v3851 = vlaneseq
  %v3852 = vshrl.u32 %v3851, 7
  %v3853 = vsub.s32 %v3850, %v3852
  %v3854 = vrot.slane %v3847, %v3853
  %v3856 = vunpack.c.l.s4 1983009808
  %v3857 = vunpack.c.0.s8 %v3856
  %v3858 = vlaneseq
  %v3859 = vshrl.u32 %v3858, 7
  %v3860 = vsub.s32 %v3857, %v3859
  %v3861 = vrot.slane %v3829, %v3860
  %3862 = vrot.lane.b32.xlu0 %v3839, 55
  %v3863 = vpop.permute.xlu0 %3862
  %3864 = vrot.lane.b32.xlu0 %v3846, 55
  %v3865 = vpop.permute.xlu0 %3864
  %3866 = vrot.lane.b32.xlu0 %v3854, 55
  %v3867 = vpop.permute.xlu0 %3866
  %3868 = vrot.lane.b32.xlu0 %v3861, 55
  %v3869 = vpop.permute.xlu0 %3868
  %v3870 = vrot.slane %v3863, 4
  %v3871 = vrot.slane %v3865, 4
  %v3872 = vrot.slane %v3867, 4
  %v3873 = vrot.slane %v3869, 4
  %v3874 = vsel %vm107, %v3870, %v3871
  %v3875 = vsel %vm1659, %v3863, %v3874
  %v3876 = vsel %vm107, %v3871, %v3872
  %v3877 = vsel %vm1659, %v3865, %v3876
  %v3878 = vsel %vm107, %v3872, %v3873
  %v3879 = vsel %vm1659, %v3867, %v3878
  %3883 = vst [vmem:[#allocation2 + $0x330] sm:$0xcc] %v3875
  %3884 = vst [vmem:[#allocation2 + $0x338] sm:$0xcc] %v3877
  %3885 = vst.msk [vmem:[#allocation2 + $0x340] sm:$0xcc] %vm121, %v3879
  %v3886 = vld [vmem:[%s0 + $0x2] sm:$0xff]
  %v3887 = vld [vmem:[%s0 + $0xa] sm:$0x3f]
  %v3890 = vcombine.high %v3886, %v3886
  %v3892 = vunpack.c.l.s4 1983009808
  %v3893 = vunpack.c.0.s8 %v3892
  %v3894 = vlaneseq
  %v3895 = vshrl.u32 %v3894, 7
  %v3896 = vsub.s32 %v3893, %v3895
  %v3897 = vrot.slane %v3886, %v3896
  %v3899 = vunpack.c.l.s4 1983009808
  %v3900 = vunpack.c.0.s8 %v3899
  %v3901 = vlaneseq
  %v3902 = vshrl.u32 %v3901, 7
  %v3903 = vsub.s32 %v3900, %v3902
  %v3904 = vrot.slane %v3890, %v3903
  %v3905 = vcombine.high %v3887, %v3887
  %v3907 = vunpack.c.l.s4 1983009808
  %v3908 = vunpack.c.0.s8 %v3907
  %v3909 = vlaneseq
  %v3910 = vshrl.u32 %v3909, 7
  %v3911 = vsub.s32 %v3908, %v3910
  %v3912 = vrot.slane %v3887, %v3911
  %v3914 = vunpack.c.l.s4 1983009808
  %v3915 = vunpack.c.0.s8 %v3914
  %v3916 = vlaneseq
  %v3917 = vshrl.u32 %v3916, 7
  %v3918 = vsub.s32 %v3915, %v3917
  %v3919 = vrot.slane %v3905, %v3918
  %3920 = vrot.lane.b32.xlu0 %v3897, 54
  %v3921 = vpop.permute.xlu0 %3920
  %3922 = vrot.lane.b32.xlu0 %v3904, 54
  %v3923 = vpop.permute.xlu0 %3922
  %3924 = vrot.lane.b32.xlu0 %v3912, 54
  %v3925 = vpop.permute.xlu0 %3924
  %3926 = vrot.lane.b32.xlu0 %v3919, 54
  %v3927 = vpop.permute.xlu0 %3926
  %v3928 = vrot.slane %v3921, 4
  %v3929 = vrot.slane %v3923, 4
  %v3930 = vrot.slane %v3925, 4
  %v3931 = vrot.slane %v3927, 4
  %v3932 = vsel %vm107, %v3928, %v3929
  %v3933 = vsel %vm1718, %v3921, %v3932
  %v3934 = vsel %vm107, %v3929, %v3930
  %v3935 = vsel %vm1718, %v3923, %v3934
  %v3936 = vsel %vm107, %v3930, %v3931
  %v3937 = vsel %vm1718, %v3925, %v3936
  %3941 = vst [vmem:[#allocation2 + $0x348] sm:$0x33] %v3933
  %3942 = vst [vmem:[#allocation2 + $0x350] sm:$0x33] %v3935
  %3943 = vst.msk [vmem:[#allocation2 + $0x358] sm:$0x33] %vm69, %v3937
  %v3944 = vld [vmem:[%s0 + $0x2] sm:$0xff]
  %v3945 = vld [vmem:[%s0 + $0xa] sm:$0x3f]
  %v3948 = vcombine.low %v3944, %v3944
  %v3950 = vunpack.c.l.s4 1983009808
  %v3951 = vunpack.c.0.s8 %v3950
  %v3952 = vlaneseq
  %v3953 = vshrl.u32 %v3952, 7
  %v3954 = vsub.s32 %v3951, %v3953
  %v3955 = vrot.slane %v3948, %v3954
  %v3957 = vunpack.c.l.s4 1983009808
  %v3958 = vunpack.c.0.s8 %v3957
  %v3959 = vlaneseq
  %v3960 = vshrl.u32 %v3959, 7
  %v3961 = vsub.s32 %v3958, %v3960
  %v3962 = vrot.slane %v3944, %v3961
  %v3963 = vcombine.low %v3945, %v3945
  %v3965 = vunpack.c.l.s4 1983009808
  %v3966 = vunpack.c.0.s8 %v3965
  %v3967 = vlaneseq
  %v3968 = vshrl.u32 %v3967, 7
  %v3969 = vsub.s32 %v3966, %v3968
  %v3970 = vrot.slane %v3963, %v3969
  %v3972 = vunpack.c.l.s4 1983009808
  %v3973 = vunpack.c.0.s8 %v3972
  %v3974 = vlaneseq
  %v3975 = vshrl.u32 %v3974, 7
  %v3976 = vsub.s32 %v3973, %v3975
  %v3977 = vrot.slane %v3945, %v3976
  %3978 = vrot.lane.b32.xlu0 %v3955, 53
  %v3979 = vpop.permute.xlu0 %3978
  %3980 = vrot.lane.b32.xlu0 %v3962, 53
  %v3981 = vpop.permute.xlu0 %3980
  %3982 = vrot.lane.b32.xlu0 %v3970, 53
  %v3983 = vpop.permute.xlu0 %3982
  %3984 = vrot.lane.b32.xlu0 %v3977, 53
  %v3985 = vpop.permute.xlu0 %3984
  %v3986 = vrot.slane %v3979, 4
  %v3987 = vrot.slane %v3981, 4
  %v3988 = vrot.slane %v3983, 4
  %v3989 = vrot.slane %v3985, 4
  %v3990 = vsel %vm107, %v3986, %v3987
  %v3991 = vsel %vm1777, %v3979, %v3990
  %v3992 = vsel %vm107, %v3987, %v3988
  %v3993 = vsel %vm1777, %v3981, %v3992
  %v3994 = vsel %vm107, %v3988, %v3989
  %v3995 = vsel %vm1777, %v3983, %v3994
  %3999 = vst [vmem:[#allocation2 + $0x348] sm:$0xcc] %v3991
  %4000 = vst [vmem:[#allocation2 + $0x350] sm:$0xcc] %v3993
  %4001 = vst.msk [vmem:[#allocation2 + $0x358] sm:$0xcc] %vm121, %v3995
  %v4002 = vld [vmem:[%s0 + $0x2] sm:$0xff]
  %v4003 = vld [vmem:[%s0 + $0xa] sm:$0x3f]
  %v4006 = vcombine.high %v4002, %v4002
  %v4008 = vunpack.c.l.s4 1983009808
  %v4009 = vunpack.c.0.s8 %v4008
  %v4010 = vlaneseq
  %v4011 = vshrl.u32 %v4010, 7
  %v4012 = vsub.s32 %v4009, %v4011
  %v4013 = vrot.slane %v4002, %v4012
  %v4015 = vunpack.c.l.s4 1983009808
  %v4016 = vunpack.c.0.s8 %v4015
  %v4017 = vlaneseq
  %v4018 = vshrl.u32 %v4017, 7
  %v4019 = vsub.s32 %v4016, %v4018
  %v4020 = vrot.slane %v4006, %v4019
  %v4021 = vcombine.high %v4003, %v4003
  %v4023 = vunpack.c.l.s4 1983009808
  %v4024 = vunpack.c.0.s8 %v4023
  %v4025 = vlaneseq
  %v4026 = vshrl.u32 %v4025, 7
  %v4027 = vsub.s32 %v4024, %v4026
  %v4028 = vrot.slane %v4003, %v4027
  %v4030 = vunpack.c.l.s4 1983009808
  %v4031 = vunpack.c.0.s8 %v4030
  %v4032 = vlaneseq
  %v4033 = vshrl.u32 %v4032, 7
  %v4034 = vsub.s32 %v4031, %v4033
  %v4035 = vrot.slane %v4021, %v4034
  %4036 = vrot.lane.b32.xlu0 %v4013, 52
  %v4037 = vpop.permute.xlu0 %4036
  %4038 = vrot.lane.b32.xlu0 %v4020, 52
  %v4039 = vpop.permute.xlu0 %4038
  %4040 = vrot.lane.b32.xlu0 %v4028, 52
  %v4041 = vpop.permute.xlu0 %4040
  %4042 = vrot.lane.b32.xlu0 %v4035, 52
  %v4043 = vpop.permute.xlu0 %4042
  %v4044 = vrot.slane %v4037, 4
  %v4045 = vrot.slane %v4039, 4
  %v4046 = vrot.slane %v4041, 4
  %v4047 = vrot.slane %v4043, 4
  %v4048 = vsel %vm107, %v4044, %v4045
  %v4049 = vsel %vm1836, %v4037, %v4048
  %v4050 = vsel %vm107, %v4045, %v4046
  %v4051 = vsel %vm1836, %v4039, %v4050
  %v4052 = vsel %vm107, %v4046, %v4047
  %v4053 = vsel %vm1836, %v4041, %v4052
  %4057 = vst [vmem:[#allocation2 + $0x360] sm:$0x33] %v4049
  %4058 = vst [vmem:[#allocation2 + $0x368] sm:$0x33] %v4051
  %4059 = vst.msk [vmem:[#allocation2 + $0x370] sm:$0x33] %vm69, %v4053
  %v4060 = vld [vmem:[%s0 + $0x2] sm:$0xff]
  %v4061 = vld [vmem:[%s0 + $0xa] sm:$0x3f]
  %v4064 = vcombine.low %v4060, %v4060
  %v4066 = vunpack.c.l.s4 1983009808
  %v4067 = vunpack.c.0.s8 %v4066
  %v4068 = vlaneseq
  %v4069 = vshrl.u32 %v4068, 7
  %v4070 = vsub.s32 %v4067, %v4069
  %v4071 = vrot.slane %v4064, %v4070
  %v4073 = vunpack.c.l.s4 1983009808
  %v4074 = vunpack.c.0.s8 %v4073
  %v4075 = vlaneseq
  %v4076 = vshrl.u32 %v4075, 7
  %v4077 = vsub.s32 %v4074, %v4076
  %v4078 = vrot.slane %v4060, %v4077
  %v4079 = vcombine.low %v4061, %v4061
  %v4081 = vunpack.c.l.s4 1983009808
  %v4082 = vunpack.c.0.s8 %v4081
  %v4083 = vlaneseq
  %v4084 = vshrl.u32 %v4083, 7
  %v4085 = vsub.s32 %v4082, %v4084
  %v4086 = vrot.slane %v4079, %v4085
  %v4088 = vunpack.c.l.s4 1983009808
  %v4089 = vunpack.c.0.s8 %v4088
  %v4090 = vlaneseq
  %v4091 = vshrl.u32 %v4090, 7
  %v4092 = vsub.s32 %v4089, %v4091
  %v4093 = vrot.slane %v4061, %v4092
  %4094 = vrot.lane.b32.xlu0 %v4071, 51
  %v4095 = vpop.permute.xlu0 %4094
  %4096 = vrot.lane.b32.xlu0 %v4078, 51
  %v4097 = vpop.permute.xlu0 %4096
  %4098 = vrot.lane.b32.xlu0 %v4086, 51
  %v4099 = vpop.permute.xlu0 %4098
  %4100 = vrot.lane.b32.xlu0 %v4093, 51
  %v4101 = vpop.permute.xlu0 %4100
  %v4102 = vrot.slane %v4095, 4
  %v4103 = vrot.slane %v4097, 4
  %v4104 = vrot.slane %v4099, 4
  %v4105 = vrot.slane %v4101, 4
  %v4106 = vsel %vm107, %v4102, %v4103
  %vm4107 = vcmask 416768
  %v4108 = vsel %vm4107, %v4095, %v4106
  %v4109 = vsel %vm107, %v4103, %v4104
  %v4110 = vsel %vm4107, %v4097, %v4109
  %v4111 = vsel %vm107, %v4104, %v4105
  %v4112 = vsel %vm4107, %v4099, %v4111
  %4116 = vst [vmem:[#allocation2 + $0x360] sm:$0xcc] %v4108
  %4117 = vst [vmem:[#allocation2 + $0x368] sm:$0xcc] %v4110
  %4118 = vst.msk [vmem:[#allocation2 + $0x370] sm:$0xcc] %vm121, %v4112
  %v4119 = vld [vmem:[%s0 + $0x2] sm:$0xff]
  %v4120 = vld [vmem:[%s0 + $0xa] sm:$0x3f]
  %v4123 = vcombine.high %v4119, %v4119
  %v4125 = vunpack.c.l.s4 1983009808
  %v4126 = vunpack.c.0.s8 %v4125
  %v4127 = vlaneseq
  %v4128 = vshrl.u32 %v4127, 7
  %v4129 = vsub.s32 %v4126, %v4128
  %v4130 = vrot.slane %v4119, %v4129
  %v4132 = vunpack.c.l.s4 1983009808
  %v4133 = vunpack.c.0.s8 %v4132
  %v4134 = vlaneseq
  %v4135 = vshrl.u32 %v4134, 7
  %v4136 = vsub.s32 %v4133, %v4135
  %v4137 = vrot.slane %v4123, %v4136
  %v4138 = vcombine.high %v4120, %v4120
  %v4140 = vunpack.c.l.s4 1983009808
  %v4141 = vunpack.c.0.s8 %v4140
  %v4142 = vlaneseq
  %v4143 = vshrl.u32 %v4142, 7
  %v4144 = vsub.s32 %v4141, %v4143
  %v4145 = vrot.slane %v4120, %v4144
  %v4147 = vunpack.c.l.s4 1983009808
  %v4148 = vunpack.c.0.s8 %v4147
  %v4149 = vlaneseq
  %v4150 = vshrl.u32 %v4149, 7
  %v4151 = vsub.s32 %v4148, %v4150
  %v4152 = vrot.slane %v4138, %v4151
  %4153 = vrot.lane.b32.xlu0 %v4130, 50
  %v4154 = vpop.permute.xlu0 %4153
  %4155 = vrot.lane.b32.xlu0 %v4137, 50
  %v4156 = vpop.permute.xlu0 %4155
  %4157 = vrot.lane.b32.xlu0 %v4145, 50
  %v4158 = vpop.permute.xlu0 %4157
  %4159 = vrot.lane.b32.xlu0 %v4152, 50
  %v4160 = vpop.permute.xlu0 %4159
  %v4161 = vrot.slane %v4154, 4
  %v4162 = vrot.slane %v4156, 4
  %v4163 = vrot.slane %v4158, 4
  %v4164 = vrot.slane %v4160, 4
  %v4165 = vsel %vm107, %v4161, %v4162
  %vm4166 = vcmask 408576
  %v4167 = vsel %vm4166, %v4154, %v4165
  %v4168 = vsel %vm107, %v4162, %v4163
  %v4169 = vsel %vm4166, %v4156, %v4168
  %v4170 = vsel %vm107, %v4163, %v4164
  %v4171 = vsel %vm4166, %v4158, %v4170
  %4175 = vst [vmem:[#allocation2 + $0x378] sm:$0x33] %v4167
  %4176 = vst [vmem:[#allocation2 + $0x380] sm:$0x33] %v4169
  %4177 = vst.msk [vmem:[#allocation2 + $0x388] sm:$0x33] %vm69, %v4171
  %v4178 = vld [vmem:[%s0 + $0x2] sm:$0xff]
  %v4179 = vld [vmem:[%s0 + $0xa] sm:$0x3f]
  %v4182 = vcombine.low %v4178, %v4178
  %v4184 = vunpack.c.l.s4 1983009808
  %v4185 = vunpack.c.0.s8 %v4184
  %v4186 = vlaneseq
  %v4187 = vshrl.u32 %v4186, 7
  %v4188 = vsub.s32 %v4185, %v4187
  %v4189 = vrot.slane %v4182, %v4188
  %v4191 = vunpack.c.l.s4 1983009808
  %v4192 = vunpack.c.0.s8 %v4191
  %v4193 = vlaneseq
  %v4194 = vshrl.u32 %v4193, 7
  %v4195 = vsub.s32 %v4192, %v4194
  %v4196 = vrot.slane %v4178, %v4195
  %v4197 = vcombine.low %v4179, %v4179
  %v4199 = vunpack.c.l.s4 1983009808
  %v4200 = vunpack.c.0.s8 %v4199
  %v4201 = vlaneseq
  %v4202 = vshrl.u32 %v4201, 7
  %v4203 = vsub.s32 %v4200, %v4202
  %v4204 = vrot.slane %v4197, %v4203
  %v4206 = vunpack.c.l.s4 1983009808
  %v4207 = vunpack.c.0.s8 %v4206
  %v4208 = vlaneseq
  %v4209 = vshrl.u32 %v4208, 7
  %v4210 = vsub.s32 %v4207, %v4209
  %v4211 = vrot.slane %v4179, %v4210
  %4212 = vrot.lane.b32.xlu0 %v4189, 49
  %v4213 = vpop.permute.xlu0 %4212
  %4214 = vrot.lane.b32.xlu0 %v4196, 49
  %v4215 = vpop.permute.xlu0 %4214
  %4216 = vrot.lane.b32.xlu0 %v4204, 49
  %v4217 = vpop.permute.xlu0 %4216
  %4218 = vrot.lane.b32.xlu0 %v4211, 49
  %v4219 = vpop.permute.xlu0 %4218
  %v4220 = vrot.slane %v4213, 4
  %v4221 = vrot.slane %v4215, 4
  %v4222 = vrot.slane %v4217, 4
  %v4223 = vrot.slane %v4219, 4
  %v4224 = vsel %vm107, %v4220, %v4221
  %vm4225 = vcmask 400384
  %v4226 = vsel %vm4225, %v4213, %v4224
  %v4227 = vsel %vm107, %v4221, %v4222
  %v4228 = vsel %vm4225, %v4215, %v4227
  %v4229 = vsel %vm107, %v4222, %v4223
  %v4230 = vsel %vm4225, %v4217, %v4229
  %4234 = vst [vmem:[#allocation2 + $0x378] sm:$0xcc] %v4226
  %4235 = vst [vmem:[#allocation2 + $0x380] sm:$0xcc] %v4228
  %4236 = vst.msk [vmem:[#allocation2 + $0x388] sm:$0xcc] %vm121, %v4230
  %v4237 = vld [vmem:[%s0 + $0x2] sm:$0xff]
  %v4238 = vld [vmem:[%s0 + $0xa] sm:$0x3f]
  %v4241 = vcombine.high %v4237, %v4237
  %v4243 = vunpack.c.l.s4 1983009808
  %v4244 = vunpack.c.0.s8 %v4243
  %v4245 = vlaneseq
  %v4246 = vshrl.u32 %v4245, 7
  %v4247 = vsub.s32 %v4244, %v4246
  %v4248 = vrot.slane %v4237, %v4247
  %v4250 = vunpack.c.l.s4 1983009808
  %v4251 = vunpack.c.0.s8 %v4250
  %v4252 = vlaneseq
  %v4253 = vshrl.u32 %v4252, 7
  %v4254 = vsub.s32 %v4251, %v4253
  %v4255 = vrot.slane %v4241, %v4254
  %v4256 = vcombine.high %v4238, %v4238
  %v4258 = vunpack.c.l.s4 1983009808
  %v4259 = vunpack.c.0.s8 %v4258
  %v4260 = vlaneseq
  %v4261 = vshrl.u32 %v4260, 7
  %v4262 = vsub.s32 %v4259, %v4261
  %v4263 = vrot.slane %v4238, %v4262
  %v4265 = vunpack.c.l.s4 1983009808
  %v4266 = vunpack.c.0.s8 %v4265
  %v4267 = vlaneseq
  %v4268 = vshrl.u32 %v4267, 7
  %v4269 = vsub.s32 %v4266, %v4268
  %v4270 = vrot.slane %v4256, %v4269
  %4271 = vrot.lane.b32.xlu0 %v4248, 48
  %v4272 = vpop.permute.xlu0 %4271
  %4273 = vrot.lane.b32.xlu0 %v4255, 48
  %v4274 = vpop.permute.xlu0 %4273
  %4275 = vrot.lane.b32.xlu0 %v4263, 48
  %v4276 = vpop.permute.xlu0 %4275
  %4277 = vrot.lane.b32.xlu0 %v4270, 48
  %v4278 = vpop.permute.xlu0 %4277
  %v4279 = vrot.slane %v4272, 4
  %v4280 = vrot.slane %v4274, 4
  %v4281 = vrot.slane %v4276, 4
  %v4282 = vrot.slane %v4278, 4
  %v4283 = vsel %vm107, %v4279, %v4280
  %vm4284 = vcmask 392192
  %v4285 = vsel %vm4284, %v4272, %v4283
  %v4286 = vsel %vm107, %v4280, %v4281
  %v4287 = vsel %vm4284, %v4274, %v4286
  %v4288 = vsel %vm107, %v4281, %v4282
  %v4289 = vsel %vm4284, %v4276, %v4288
  %4293 = vst [vmem:[#allocation2 + $0x390] sm:$0x33] %v4285
  %4294 = vst [vmem:[#allocation2 + $0x398] sm:$0x33] %v4287
  %4295 = vst.msk [vmem:[#allocation2 + $0x3a0] sm:$0x33] %vm69, %v4289
  %v4296 = vld [vmem:[%s0 + $0x2] sm:$0xff]
  %v4297 = vld [vmem:[%s0 + $0xa] sm:$0x3f]
  %v4300 = vcombine.low %v4296, %v4296
  %v4302 = vunpack.c.l.s4 1983009808
  %v4303 = vunpack.c.0.s8 %v4302
  %v4304 = vlaneseq
  %v4305 = vshrl.u32 %v4304, 7
  %v4306 = vsub.s32 %v4303, %v4305
  %v4307 = vrot.slane %v4300, %v4306
  %v4309 = vunpack.c.l.s4 1983009808
  %v4310 = vunpack.c.0.s8 %v4309
  %v4311 = vlaneseq
  %v4312 = vshrl.u32 %v4311, 7
  %v4313 = vsub.s32 %v4310, %v4312
  %v4314 = vrot.slane %v4296, %v4313
  %v4315 = vcombine.low %v4297, %v4297
  %v4317 = vunpack.c.l.s4 1983009808
  %v4318 = vunpack.c.0.s8 %v4317
  %v4319 = vlaneseq
  %v4320 = vshrl.u32 %v4319, 7
  %v4321 = vsub.s32 %v4318, %v4320
  %v4322 = vrot.slane %v4315, %v4321
  %v4324 = vunpack.c.l.s4 1983009808
  %v4325 = vunpack.c.0.s8 %v4324
  %v4326 = vlaneseq
  %v4327 = vshrl.u32 %v4326, 7
  %v4328 = vsub.s32 %v4325, %v4327
  %v4329 = vrot.slane %v4297, %v4328
  %4330 = vrot.lane.b32.xlu0 %v4307, 25
  %v4331 = vpop.permute.xlu0 %4330
  %4332 = vrot.lane.b32.xlu0 %v4314, 25
  %v4333 = vpop.permute.xlu0 %4332
  %4334 = vrot.lane.b32.xlu0 %v4322, 25
  %v4335 = vpop.permute.xlu0 %4334
  %4336 = vrot.lane.b32.xlu0 %v4329, 25
  %v4337 = vpop.permute.xlu0 %4336
  %v4338 = vrot.slane %v4331, 4
  %v4339 = vrot.slane %v4333, 4
  %v4340 = vrot.slane %v4335, 4
  %v4341 = vrot.slane %v4337, 4
  %v4342 = vsel %vm107, %v4338, %v4339
  %v4343 = vsel %vm2131, %v4331, %v4342
  %v4344 = vsel %vm107, %v4339, %v4340
  %v4345 = vsel %vm2131, %v4333, %v4344
  %v4346 = vsel %vm107, %v4340, %v4341
  %v4347 = vsel %vm2131, %v4335, %v4346
  %4351 = vst [vmem:[#allocation2 + $0x390] sm:$0xcc] %v4343
  %4352 = vst [vmem:[#allocation2 + $0x398] sm:$0xcc] %v4345
  %4353 = vst.msk [vmem:[#allocation2 + $0x3a0] sm:$0xcc] %vm121, %v4347
  %v4354 = vld [vmem:[%s0 + $0x2] sm:$0xff]
  %v4355 = vld [vmem:[%s0 + $0xa] sm:$0x3f]
  %v4358 = vcombine.high %v4354, %v4354
  %v4360 = vunpack.c.l.s4 1983009808
  %v4361 = vunpack.c.0.s8 %v4360
  %v4362 = vlaneseq
  %v4363 = vshrl.u32 %v4362, 7
  %v4364 = vsub.s32 %v4361, %v4363
  %v4365 = vrot.slane %v4354, %v4364
  %v4367 = vunpack.c.l.s4 1983009808
  %v4368 = vunpack.c.0.s8 %v4367
  %v4369 = vlaneseq
  %v4370 = vshrl.u32 %v4369, 7
  %v4371 = vsub.s32 %v4368, %v4370
  %v4372 = vrot.slane %v4358, %v4371
  %v4373 = vcombine.high %v4355, %v4355
  %v4375 = vunpack.c.l.s4 1983009808
  %v4376 = vunpack.c.0.s8 %v4375
  %v4377 = vlaneseq
  %v4378 = vshrl.u32 %v4377, 7
  %v4379 = vsub.s32 %v4376, %v4378
  %v4380 = vrot.slane %v4355, %v4379
  %v4382 = vunpack.c.l.s4 1983009808
  %v4383 = vunpack.c.0.s8 %v4382
  %v4384 = vlaneseq
  %v4385 = vshrl.u32 %v4384, 7
  %v4386 = vsub.s32 %v4383, %v4385
  %v4387 = vrot.slane %v4373, %v4386
  %4388 = vrot.lane.b32.xlu0 %v4365, 24
  %v4389 = vpop.permute.xlu0 %4388
  %4390 = vrot.lane.b32.xlu0 %v4372, 24
  %v4391 = vpop.permute.xlu0 %4390
  %4392 = vrot.lane.b32.xlu0 %v4380, 24
  %v4393 = vpop.permute.xlu0 %4392
  %4394 = vrot.lane.b32.xlu0 %v4387, 24
  %v4395 = vpop.permute.xlu0 %4394
  %v4396 = vrot.slane %v4389, 4
  %v4397 = vrot.slane %v4391, 4
  %v4398 = vrot.slane %v4393, 4
  %v4399 = vrot.slane %v4395, 4
  %v4400 = vsel %vm107, %v4396, %v4397
  %v4401 = vsel %vm2190, %v4389, %v4400
  %v4402 = vsel %vm107, %v4397, %v4398
  %v4403 = vsel %vm2190, %v4391, %v4402
  %v4404 = vsel %vm107, %v4398, %v4399
  %v4405 = vsel %vm2190, %v4393, %v4404
  %4409 = vst [vmem:[#allocation2 + $0x3a8] sm:$0x33] %v4401
  %4410 = vst [vmem:[#allocation2 + $0x3b0] sm:$0x33] %v4403
  %4411 = vst.msk [vmem:[#allocation2 + $0x3b8] sm:$0x33] %vm69, %v4405
  %v4412 = vld [vmem:[%s0 + $0x2] sm:$0xff]
  %v4413 = vld [vmem:[%s0 + $0xa] sm:$0x3f]
  %v4416 = vcombine.low %v4412, %v4412
  %v4418 = vunpack.c.l.s4 1983009808
  %v4419 = vunpack.c.0.s8 %v4418
  %v4420 = vlaneseq
  %v4421 = vshrl.u32 %v4420, 7
  %v4422 = vsub.s32 %v4419, %v4421
  %v4423 = vrot.slane %v4416, %v4422
  %v4425 = vunpack.c.l.s4 1983009808
  %v4426 = vunpack.c.0.s8 %v4425
  %v4427 = vlaneseq
  %v4428 = vshrl.u32 %v4427, 7
  %v4429 = vsub.s32 %v4426, %v4428
  %v4430 = vrot.slane %v4412, %v4429
  %v4431 = vcombine.low %v4413, %v4413
  %v4433 = vunpack.c.l.s4 1983009808
  %v4434 = vunpack.c.0.s8 %v4433
  %v4435 = vlaneseq
  %v4436 = vshrl.u32 %v4435, 7
  %v4437 = vsub.s32 %v4434, %v4436
  %v4438 = vrot.slane %v4431, %v4437
  %v4440 = vunpack.c.l.s4 1983009808
  %v4441 = vunpack.c.0.s8 %v4440
  %v4442 = vlaneseq
  %v4443 = vshrl.u32 %v4442, 7
  %v4444 = vsub.s32 %v4441, %v4443
  %v4445 = vrot.slane %v4413, %v4444
  %4446 = vrot.lane.b32.xlu0 %v4423, 23
  %v4447 = vpop.permute.xlu0 %4446
  %4448 = vrot.lane.b32.xlu0 %v4430, 23
  %v4449 = vpop.permute.xlu0 %4448
  %4450 = vrot.lane.b32.xlu0 %v4438, 23
  %v4451 = vpop.permute.xlu0 %4450
  %4452 = vrot.lane.b32.xlu0 %v4445, 23
  %v4453 = vpop.permute.xlu0 %4452
  %v4454 = vrot.slane %v4447, 4
  %v4455 = vrot.slane %v4449, 4
  %v4456 = vrot.slane %v4451, 4
  %v4457 = vrot.slane %v4453, 4
  %v4458 = vsel %vm107, %v4454, %v4455
  %v4459 = vsel %vm2249, %v4447, %v4458
  %v4460 = vsel %vm107, %v4455, %v4456
  %v4461 = vsel %vm2249, %v4449, %v4460
  %v4462 = vsel %vm107, %v4456, %v4457
  %v4463 = vsel %vm2249, %v4451, %v4462
  %4467 = vst [vmem:[#allocation2 + $0x3a8] sm:$0xcc] %v4459
  %4468 = vst [vmem:[#allocation2 + $0x3b0] sm:$0xcc] %v4461
  %4469 = vst.msk [vmem:[#allocation2 + $0x3b8] sm:$0xcc] %vm121, %v4463
  %v4470 = vld [vmem:[%s0 + $0x2] sm:$0xff]
  %v4471 = vld [vmem:[%s0 + $0xa] sm:$0x3f]
  %v4474 = vcombine.high %v4470, %v4470
  %v4476 = vunpack.c.l.s4 1983009808
  %v4477 = vunpack.c.0.s8 %v4476
  %v4478 = vlaneseq
  %v4479 = vshrl.u32 %v4478, 7
  %v4480 = vsub.s32 %v4477, %v4479
  %v4481 = vrot.slane %v4470, %v4480
  %v4483 = vunpack.c.l.s4 1983009808
  %v4484 = vunpack.c.0.s8 %v4483
  %v4485 = vlaneseq
  %v4486 = vshrl.u32 %v4485, 7
  %v4487 = vsub.s32 %v4484, %v4486
  %v4488 = vrot.slane %v4474, %v4487
  %v4489 = vcombine.high %v4471, %v4471
  %v4491 = vunpack.c.l.s4 1983009808
  %v4492 = vunpack.c.0.s8 %v4491
  %v4493 = vlaneseq
  %v4494 = vshrl.u32 %v4493, 7
  %v4495 = vsub.s32 %v4492, %v4494
  %v4496 = vrot.slane %v4471, %v4495
  %v4498 = vunpack.c.l.s4 1983009808
  %v4499 = vunpack.c.0.s8 %v4498
  %v4500 = vlaneseq
  %v4501 = vshrl.u32 %v4500, 7
  %v4502 = vsub.s32 %v4499, %v4501
  %v4503 = vrot.slane %v4489, %v4502
  %4504 = vrot.lane.b32.xlu0 %v4481, 22
  %v4505 = vpop.permute.xlu0 %4504
  %4506 = vrot.lane.b32.xlu0 %v4488, 22
  %v4507 = vpop.permute.xlu0 %4506
  %4508 = vrot.lane.b32.xlu0 %v4496, 22
  %v4509 = vpop.permute.xlu0 %4508
  %4510 = vrot.lane.b32.xlu0 %v4503, 22
  %v4511 = vpop.permute.xlu0 %4510
  %v4512 = vrot.slane %v4505, 4
  %v4513 = vrot.slane %v4507, 4
  %v4514 = vrot.slane %v4509, 4
  %v4515 = vrot.slane %v4511, 4
  %v4516 = vsel %vm107, %v4512, %v4513
  %v4517 = vsel %vm2308, %v4505, %v4516
  %v4518 = vsel %vm107, %v4513, %v4514
  %v4519 = vsel %vm2308, %v4507, %v4518
  %v4520 = vsel %vm107, %v4514, %v4515
  %v4521 = vsel %vm2308, %v4509, %v4520
  %4525 = vst [vmem:[#allocation2 + $0x3c0] sm:$0x33] %v4517
  %4526 = vst [vmem:[#allocation2 + $0x3c8] sm:$0x33] %v4519
  %4527 = vst.msk [vmem:[#allocation2 + $0x3d0] sm:$0x33] %vm69, %v4521
  %v4528 = vld [vmem:[%s0 + $0x2] sm:$0xff]
  %v4529 = vld [vmem:[%s0 + $0xa] sm:$0x3f]
  %v4532 = vcombine.low %v4528, %v4528
  %v4534 = vunpack.c.l.s4 1983009808
  %v4535 = vunpack.c.0.s8 %v4534
  %v4536 = vlaneseq
  %v4537 = vshrl.u32 %v4536, 7
  %v4538 = vsub.s32 %v4535, %v4537
  %v4539 = vrot.slane %v4532, %v4538
  %v4541 = vunpack.c.l.s4 1983009808
  %v4542 = vunpack.c.0.s8 %v4541
  %v4543 = vlaneseq
  %v4544 = vshrl.u32 %v4543, 7
  %v4545 = vsub.s32 %v4542, %v4544
  %v4546 = vrot.slane %v4528, %v4545
  %v4547 = vcombine.low %v4529, %v4529
  %v4549 = vunpack.c.l.s4 1983009808
  %v4550 = vunpack.c.0.s8 %v4549
  %v4551 = vlaneseq
  %v4552 = vshrl.u32 %v4551, 7
  %v4553 = vsub.s32 %v4550, %v4552
  %v4554 = vrot.slane %v4547, %v4553
  %v4556 = vunpack.c.l.s4 1983009808
  %v4557 = vunpack.c.0.s8 %v4556
  %v4558 = vlaneseq
  %v4559 = vshrl.u32 %v4558, 7
  %v4560 = vsub.s32 %v4557, %v4559
  %v4561 = vrot.slane %v4529, %v4560
  %4562 = vrot.lane.b32.xlu0 %v4539, 21
  %v4563 = vpop.permute.xlu0 %4562
  %4564 = vrot.lane.b32.xlu0 %v4546, 21
  %v4565 = vpop.permute.xlu0 %4564
  %4566 = vrot.lane.b32.xlu0 %v4554, 21
  %v4567 = vpop.permute.xlu0 %4566
  %4568 = vrot.lane.b32.xlu0 %v4561, 21
  %v4569 = vpop.permute.xlu0 %4568
  %v4570 = vrot.slane %v4563, 4
  %v4571 = vrot.slane %v4565, 4
  %v4572 = vrot.slane %v4567, 4
  %v4573 = vrot.slane %v4569, 4
  %v4574 = vsel %vm107, %v4570, %v4571
  %v4575 = vsel %vm2367, %v4563, %v4574
  %v4576 = vsel %vm107, %v4571, %v4572
  %v4577 = vsel %vm2367, %v4565, %v4576
  %v4578 = vsel %vm107, %v4572, %v4573
  %v4579 = vsel %vm2367, %v4567, %v4578
  %4583 = vst [vmem:[#allocation2 + $0x3c0] sm:$0xcc] %v4575
  %4584 = vst [vmem:[#allocation2 + $0x3c8] sm:$0xcc] %v4577
  %4585 = vst.msk [vmem:[#allocation2 + $0x3d0] sm:$0xcc] %vm121, %v4579
  %v4586 = vld [vmem:[%s0 + $0x2] sm:$0xff]
  %v4587 = vld [vmem:[%s0 + $0xa] sm:$0x3f]
  %v4590 = vcombine.high %v4586, %v4586
  %v4592 = vunpack.c.l.s4 1983009808
  %v4593 = vunpack.c.0.s8 %v4592
  %v4594 = vlaneseq
  %v4595 = vshrl.u32 %v4594, 7
  %v4596 = vsub.s32 %v4593, %v4595
  %v4597 = vrot.slane %v4586, %v4596
  %v4599 = vunpack.c.l.s4 1983009808
  %v4600 = vunpack.c.0.s8 %v4599
  %v4601 = vlaneseq
  %v4602 = vshrl.u32 %v4601, 7
  %v4603 = vsub.s32 %v4600, %v4602
  %v4604 = vrot.slane %v4590, %v4603
  %v4605 = vcombine.high %v4587, %v4587
  %v4607 = vunpack.c.l.s4 1983009808
  %v4608 = vunpack.c.0.s8 %v4607
  %v4609 = vlaneseq
  %v4610 = vshrl.u32 %v4609, 7
  %v4611 = vsub.s32 %v4608, %v4610
  %v4612 = vrot.slane %v4587, %v4611
  %v4614 = vunpack.c.l.s4 1983009808
  %v4615 = vunpack.c.0.s8 %v4614
  %v4616 = vlaneseq
  %v4617 = vshrl.u32 %v4616, 7
  %v4618 = vsub.s32 %v4615, %v4617
  %v4619 = vrot.slane %v4605, %v4618
  %4620 = vrot.lane.b32.xlu0 %v4597, 20
  %v4621 = vpop.permute.xlu0 %4620
  %4622 = vrot.lane.b32.xlu0 %v4604, 20
  %v4623 = vpop.permute.xlu0 %4622
  %4624 = vrot.lane.b32.xlu0 %v4612, 20
  %v4625 = vpop.permute.xlu0 %4624
  %4626 = vrot.lane.b32.xlu0 %v4619, 20
  %v4627 = vpop.permute.xlu0 %4626
  %v4628 = vrot.slane %v4621, 4
  %v4629 = vrot.slane %v4623, 4
  %v4630 = vrot.slane %v4625, 4
  %v4631 = vrot.slane %v4627, 4
  %v4632 = vsel %vm107, %v4628, %v4629
  %v4633 = vsel %vm2426, %v4621, %v4632
  %v4634 = vsel %vm107, %v4629, %v4630
  %v4635 = vsel %vm2426, %v4623, %v4634
  %v4636 = vsel %vm107, %v4630, %v4631
  %v4637 = vsel %vm2426, %v4625, %v4636
  %4641 = vst [vmem:[#allocation2 + $0x3d8] sm:$0x33] %v4633
  %4642 = vst [vmem:[#allocation2 + $0x3e0] sm:$0x33] %v4635
  %4643 = vst.msk [vmem:[#allocation2 + $0x3e8] sm:$0x33] %vm69, %v4637
  %v4644 = vld [vmem:[%s0 + $0x2] sm:$0xff]
  %v4645 = vld [vmem:[%s0 + $0xa] sm:$0x3f]
  %v4648 = vcombine.low %v4644, %v4644
  %v4650 = vunpack.c.l.s4 1983009808
  %v4651 = vunpack.c.0.s8 %v4650
  %v4652 = vlaneseq
  %v4653 = vshrl.u32 %v4652, 7
  %v4654 = vsub.s32 %v4651, %v4653
  %v4655 = vrot.slane %v4648, %v4654
  %v4657 = vunpack.c.l.s4 1983009808
  %v4658 = vunpack.c.0.s8 %v4657
  %v4659 = vlaneseq
  %v4660 = vshrl.u32 %v4659, 7
  %v4661 = vsub.s32 %v4658, %v4660
  %v4662 = vrot.slane %v4644, %v4661
  %v4663 = vcombine.low %v4645, %v4645
  %v4665 = vunpack.c.l.s4 1983009808
  %v4666 = vunpack.c.0.s8 %v4665
  %v4667 = vlaneseq
  %v4668 = vshrl.u32 %v4667, 7
  %v4669 = vsub.s32 %v4666, %v4668
  %v4670 = vrot.slane %v4663, %v4669
  %v4672 = vunpack.c.l.s4 1983009808
  %v4673 = vunpack.c.0.s8 %v4672
  %v4674 = vlaneseq
  %v4675 = vshrl.u32 %v4674, 7
  %v4676 = vsub.s32 %v4673, %v4675
  %v4677 = vrot.slane %v4645, %v4676
  %4678 = vrot.lane.b32.xlu0 %v4655, 19
  %v4679 = vpop.permute.xlu0 %4678
  %4680 = vrot.lane.b32.xlu0 %v4662, 19
  %v4681 = vpop.permute.xlu0 %4680
  %4682 = vrot.lane.b32.xlu0 %v4670, 19
  %v4683 = vpop.permute.xlu0 %4682
  %4684 = vrot.lane.b32.xlu0 %v4677, 19
  %v4685 = vpop.permute.xlu0 %4684
  %v4686 = vrot.slane %v4679, 4
  %v4687 = vrot.slane %v4681, 4
  %v4688 = vrot.slane %v4683, 4
  %v4689 = vrot.slane %v4685, 4
  %v4690 = vsel %vm107, %v4686, %v4687
  %v4691 = vsel %vm2485, %v4679, %v4690
  %v4692 = vsel %vm107, %v4687, %v4688
  %v4693 = vsel %vm2485, %v4681, %v4692
  %v4694 = vsel %vm107, %v4688, %v4689
  %v4695 = vsel %vm2485, %v4683, %v4694
  %4699 = vst [vmem:[#allocation2 + $0x3d8] sm:$0xcc] %v4691
  %4700 = vst [vmem:[#allocation2 + $0x3e0] sm:$0xcc] %v4693
  %4701 = vst.msk [vmem:[#allocation2 + $0x3e8] sm:$0xcc] %vm121, %v4695
  %v4702 = vld [vmem:[%s0 + $0x2] sm:$0xff]
  %v4703 = vld [vmem:[%s0 + $0xa] sm:$0x3f]
  %v4706 = vcombine.high %v4702, %v4702
  %v4708 = vunpack.c.l.s4 1983009808
  %v4709 = vunpack.c.0.s8 %v4708
  %v4710 = vlaneseq
  %v4711 = vshrl.u32 %v4710, 7
  %v4712 = vsub.s32 %v4709, %v4711
  %v4713 = vrot.slane %v4702, %v4712
  %v4715 = vunpack.c.l.s4 1983009808
  %v4716 = vunpack.c.0.s8 %v4715
  %v4717 = vlaneseq
  %v4718 = vshrl.u32 %v4717, 7
  %v4719 = vsub.s32 %v4716, %v4718
  %v4720 = vrot.slane %v4706, %v4719
  %v4721 = vcombine.high %v4703, %v4703
  %v4723 = vunpack.c.l.s4 1983009808
  %v4724 = vunpack.c.0.s8 %v4723
  %v4725 = vlaneseq
  %v4726 = vshrl.u32 %v4725, 7
  %v4727 = vsub.s32 %v4724, %v4726
  %v4728 = vrot.slane %v4703, %v4727
  %v4730 = vunpack.c.l.s4 1983009808
  %v4731 = vunpack.c.0.s8 %v4730
  %v4732 = vlaneseq
  %v4733 = vshrl.u32 %v4732, 7
  %v4734 = vsub.s32 %v4731, %v4733
  %v4735 = vrot.slane %v4721, %v4734
  %4736 = vrot.lane.b32.xlu0 %v4713, 18
  %v4737 = vpop.permute.xlu0 %4736
  %4738 = vrot.lane.b32.xlu0 %v4720, 18
  %v4739 = vpop.permute.xlu0 %4738
  %4740 = vrot.lane.b32.xlu0 %v4728, 18
  %v4741 = vpop.permute.xlu0 %4740
  %4742 = vrot.lane.b32.xlu0 %v4735, 18
  %v4743 = vpop.permute.xlu0 %4742
  %v4744 = vrot.slane %v4737, 4
  %v4745 = vrot.slane %v4739, 4
  %v4746 = vrot.slane %v4741, 4
  %v4747 = vrot.slane %v4743, 4
  %v4748 = vsel %vm107, %v4744, %v4745
  %vm4749 = vcmask 146432
  %v4750 = vsel %vm4749, %v4737, %v4748
  %v4751 = vsel %vm107, %v4745, %v4746
  %v4752 = vsel %vm4749, %v4739, %v4751
  %v4753 = vsel %vm107, %v4746, %v4747
  %v4754 = vsel %vm4749, %v4741, %v4753
  %4758 = vst [vmem:[#allocation2 + $0x3f0] sm:$0x33] %v4750
  %4759 = vst [vmem:[#allocation2 + $0x3f8] sm:$0x33] %v4752
  %4760 = vst.msk [vmem:[#allocation2 + $0x400] sm:$0x33] %vm69, %v4754
  %v4761 = vld [vmem:[%s0 + $0x2] sm:$0xff]
  %v4762 = vld [vmem:[%s0 + $0xa] sm:$0x3f]
  %v4765 = vcombine.low %v4761, %v4761
  %v4767 = vunpack.c.l.s4 1983009808
  %v4768 = vunpack.c.0.s8 %v4767
  %v4769 = vlaneseq
  %v4770 = vshrl.u32 %v4769, 7
  %v4771 = vsub.s32 %v4768, %v4770
  %v4772 = vrot.slane %v4765, %v4771
  %v4774 = vunpack.c.l.s4 1983009808
  %v4775 = vunpack.c.0.s8 %v4774
  %v4776 = vlaneseq
  %v4777 = vshrl.u32 %v4776, 7
  %v4778 = vsub.s32 %v4775, %v4777
  %v4779 = vrot.slane %v4761, %v4778
  %v4780 = vcombine.low %v4762, %v4762
  %v4782 = vunpack.c.l.s4 1983009808
  %v4783 = vunpack.c.0.s8 %v4782
  %v4784 = vlaneseq
  %v4785 = vshrl.u32 %v4784, 7
  %v4786 = vsub.s32 %v4783, %v4785
  %v4787 = vrot.slane %v4780, %v4786
  %v4789 = vunpack.c.l.s4 1983009808
  %v4790 = vunpack.c.0.s8 %v4789
  %v4791 = vlaneseq
  %v4792 = vshrl.u32 %v4791, 7
  %v4793 = vsub.s32 %v4790, %v4792
  %v4794 = vrot.slane %v4762, %v4793
  %4795 = vrot.lane.b32.xlu0 %v4772, 17
  %v4796 = vpop.permute.xlu0 %4795
  %4797 = vrot.lane.b32.xlu0 %v4779, 17
  %v4798 = vpop.permute.xlu0 %4797
  %4799 = vrot.lane.b32.xlu0 %v4787, 17
  %v4800 = vpop.permute.xlu0 %4799
  %4801 = vrot.lane.b32.xlu0 %v4794, 17
  %v4802 = vpop.permute.xlu0 %4801
  %v4803 = vrot.slane %v4796, 4
  %v4804 = vrot.slane %v4798, 4
  %v4805 = vrot.slane %v4800, 4
  %v4806 = vrot.slane %v4802, 4
  %v4807 = vsel %vm107, %v4803, %v4804
  %vm4808 = vcmask 138240
  %v4809 = vsel %vm4808, %v4796, %v4807
  %v4810 = vsel %vm107, %v4804, %v4805
  %v4811 = vsel %vm4808, %v4798, %v4810
  %v4812 = vsel %vm107, %v4805, %v4806
  %v4813 = vsel %vm4808, %v4800, %v4812
  %4817 = vst [vmem:[#allocation2 + $0x3f0] sm:$0xcc] %v4809
  %4818 = vst [vmem:[#allocation2 + $0x3f8] sm:$0xcc] %v4811
  %4819 = vst.msk [vmem:[#allocation2 + $0x400] sm:$0xcc] %vm121, %v4813
  %v4820 = vld [vmem:[%s0 + $0x2] sm:$0xff]
  %v4821 = vld [vmem:[%s0 + $0xa] sm:$0x3f]
  %v4824 = vcombine.high %v4820, %v4820
  %v4826 = vunpack.c.l.s4 1983009808
  %v4827 = vunpack.c.0.s8 %v4826
  %v4828 = vlaneseq
  %v4829 = vshrl.u32 %v4828, 7
  %v4830 = vsub.s32 %v4827, %v4829
  %v4831 = vrot.slane %v4820, %v4830
  %v4833 = vunpack.c.l.s4 1983009808
  %v4834 = vunpack.c.0.s8 %v4833
  %v4835 = vlaneseq
  %v4836 = vshrl.u32 %v4835, 7
  %v4837 = vsub.s32 %v4834, %v4836
  %v4838 = vrot.slane %v4824, %v4837
  %v4839 = vcombine.high %v4821, %v4821
  %v4841 = vunpack.c.l.s4 1983009808
  %v4842 = vunpack.c.0.s8 %v4841
  %v4843 = vlaneseq
  %v4844 = vshrl.u32 %v4843, 7
  %v4845 = vsub.s32 %v4842, %v4844
  %v4846 = vrot.slane %v4821, %v4845
  %v4848 = vunpack.c.l.s4 1983009808
  %v4849 = vunpack.c.0.s8 %v4848
  %v4850 = vlaneseq
  %v4851 = vshrl.u32 %v4850, 7
  %v4852 = vsub.s32 %v4849, %v4851
  %v4853 = vrot.slane %v4839, %v4852
  %4854 = vrot.lane.b32.xlu0 %v4831, 16
  %v4855 = vpop.permute.xlu0 %4854
  %4856 = vrot.lane.b32.xlu0 %v4838, 16
  %v4857 = vpop.permute.xlu0 %4856
  %4858 = vrot.lane.b32.xlu0 %v4846, 16
  %v4859 = vpop.permute.xlu0 %4858
  %4860 = vrot.lane.b32.xlu0 %v4853, 16
  %v4861 = vpop.permute.xlu0 %4860
  %v4862 = vrot.slane %v4855, 4
  %v4863 = vrot.slane %v4857, 4
  %v4864 = vrot.slane %v4859, 4
  %v4865 = vrot.slane %v4861, 4
  %v4866 = vsel %vm107, %v4862, %v4863
  %vm4867 = vcmask 130048
  %v4868 = vsel %vm4867, %v4855, %v4866
  %v4869 = vsel %vm107, %v4863, %v4864
  %v4870 = vsel %vm4867, %v4857, %v4869
  %v4871 = vsel %vm107, %v4864, %v4865
  %v4872 = vsel %vm4867, %v4859, %v4871
  %4876 = vst [vmem:[#allocation2 + $0x408] sm:$0x33] %v4868
  %4877 = vst [vmem:[#allocation2 + $0x410] sm:$0x33] %v4870
  %4878 = vst.msk [vmem:[#allocation2 + $0x418] sm:$0x33] %vm69, %v4872
  %v4879 = vld [vmem:[%s0 + $0x2] sm:$0xff]
  %v4880 = vld [vmem:[%s0 + $0xa] sm:$0x3f]
  %v4883 = vcombine.low %v4879, %v4879
  %v4885 = vunpack.c.l.s4 1983009808
  %v4886 = vunpack.c.0.s8 %v4885
  %v4887 = vlaneseq
  %v4888 = vshrl.u32 %v4887, 7
  %v4889 = vsub.s32 %v4886, %v4888
  %v4890 = vrot.slane %v4883, %v4889
  %v4892 = vunpack.c.l.s4 1983009808
  %v4893 = vunpack.c.0.s8 %v4892
  %v4894 = vlaneseq
  %v4895 = vshrl.u32 %v4894, 7
  %v4896 = vsub.s32 %v4893, %v4895
  %v4897 = vrot.slane %v4879, %v4896
  %v4898 = vcombine.low %v4880, %v4880
  %v4900 = vunpack.c.l.s4 1983009808
  %v4901 = vunpack.c.0.s8 %v4900
  %v4902 = vlaneseq
  %v4903 = vshrl.u32 %v4902, 7
  %v4904 = vsub.s32 %v4901, %v4903
  %v4905 = vrot.slane %v4898, %v4904
  %v4907 = vunpack.c.l.s4 1983009808
  %v4908 = vunpack.c.0.s8 %v4907
  %v4909 = vlaneseq
  %v4910 = vshrl.u32 %v4909, 7
  %v4911 = vsub.s32 %v4908, %v4910
  %v4912 = vrot.slane %v4880, %v4911
  %4913 = vrot.lane.b32.xlu0 %v4890, 15
  %v4914 = vpop.permute.xlu0 %4913
  %4915 = vrot.lane.b32.xlu0 %v4897, 15
  %v4916 = vpop.permute.xlu0 %4915
  %4917 = vrot.lane.b32.xlu0 %v4905, 15
  %v4918 = vpop.permute.xlu0 %4917
  %4919 = vrot.lane.b32.xlu0 %v4912, 15
  %v4920 = vpop.permute.xlu0 %4919
  %v4921 = vrot.slane %v4914, 4
  %v4922 = vrot.slane %v4916, 4
  %v4923 = vrot.slane %v4918, 4
  %v4924 = vrot.slane %v4920, 4
  %v4925 = vsel %vm107, %v4921, %v4922
  %vm4926 = vcmask 121856
  %v4927 = vsel %vm4926, %v4914, %v4925
  %v4928 = vsel %vm107, %v4922, %v4923
  %v4929 = vsel %vm4926, %v4916, %v4928
  %v4930 = vsel %vm107, %v4923, %v4924
  %v4931 = vsel %vm4926, %v4918, %v4930
  %4935 = vst [vmem:[#allocation2 + $0x408] sm:$0xcc] %v4927
  %4936 = vst [vmem:[#allocation2 + $0x410] sm:$0xcc] %v4929
  %4937 = vst.msk [vmem:[#allocation2 + $0x418] sm:$0xcc] %vm121, %v4931
  %v4938 = vld [vmem:[%s0 + $0x4] sm:$0xff]
  %v4939 = vld [vmem:[%s0 + $0xc] sm:$0xf]
  %v4942 = vcombine.high %v4938, %v4938
  %v4944 = vunpack.c.l.s4 1983009808
  %v4945 = vunpack.c.0.s8 %v4944
  %v4946 = vlaneseq
  %v4947 = vshrl.u32 %v4946, 7
  %v4948 = vsub.s32 %v4945, %v4947
  %v4949 = vrot.slane %v4938, %v4948
  %v4951 = vunpack.c.l.s4 1983009808
  %v4952 = vunpack.c.0.s8 %v4951
  %v4953 = vlaneseq
  %v4954 = vshrl.u32 %v4953, 7
  %v4955 = vsub.s32 %v4952, %v4954
  %v4956 = vrot.slane %v4942, %v4955
  %v4958 = vunpack.c.l.s4 1983009808
  %v4959 = vunpack.c.0.s8 %v4958
  %v4960 = vlaneseq
  %v4961 = vshrl.u32 %v4960, 7
  %v4962 = vsub.s32 %v4959, %v4961
  %v4963 = vrot.slane %v4939, %v4962
  %4964 = vrot.lane.b32.xlu0 %v4949, 120
  %v4965 = vpop.permute.xlu0 %4964
  %4966 = vrot.lane.b32.xlu0 %v4956, 120
  %v4967 = vpop.permute.xlu0 %4966
  %4968 = vrot.lane.b32.xlu0 %v4963, 120
  %v4969 = vpop.permute.xlu0 %4968
  %v4970 = vrot.slane %v4965, 4
  %v4971 = vrot.slane %v4967, 4
  %v4972 = vrot.slane %v4969, 4
  %v4973 = vsel %vm107, %v4970, %v4971
  %v4974 = vsel %vm444, %v4965, %v4973
  %v4975 = vsel %vm107, %v4971, %v4972
  %v4976 = vsel %vm444, %v4967, %v4975
  %v4977 = vsel %vm444, %v4969, %v4972
  %4981 = vst [vmem:[#allocation2 + $0x420] sm:$0x33] %v4974
  %4982 = vst [vmem:[#allocation2 + $0x428] sm:$0x33] %v4976
  %4983 = vst.msk [vmem:[#allocation2 + $0x430] sm:$0x33] %vm69, %v4977
  %v4984 = vld [vmem:[%s0 + $0x4] sm:$0xff]
  %v4985 = vld [vmem:[%s0 + $0xc] sm:$0xf]
  %v4988 = vcombine.low %v4984, %v4984
  %v4990 = vunpack.c.l.s4 1983009808
  %v4991 = vunpack.c.0.s8 %v4990
  %v4992 = vlaneseq
  %v4993 = vshrl.u32 %v4992, 7
  %v4994 = vsub.s32 %v4991, %v4993
  %v4995 = vrot.slane %v4988, %v4994
  %v4997 = vunpack.c.l.s4 1983009808
  %v4998 = vunpack.c.0.s8 %v4997
  %v4999 = vlaneseq
  %v5000 = vshrl.u32 %v4999, 7
  %v5001 = vsub.s32 %v4998, %v5000
  %v5002 = vrot.slane %v4984, %v5001
  %v5003 = vcombine.low %v4985, %v4985
  %v5005 = vunpack.c.l.s4 1983009808
  %v5006 = vunpack.c.0.s8 %v5005
  %v5007 = vlaneseq
  %v5008 = vshrl.u32 %v5007, 7
  %v5009 = vsub.s32 %v5006, %v5008
  %v5010 = vrot.slane %v5003, %v5009
  %5011 = vrot.lane.b32.xlu0 %v4995, 119
  %v5012 = vpop.permute.xlu0 %5011
  %5013 = vrot.lane.b32.xlu0 %v5002, 119
  %v5014 = vpop.permute.xlu0 %5013
  %5015 = vrot.lane.b32.xlu0 %v5010, 119
  %v5016 = vpop.permute.xlu0 %5015
  %v5017 = vrot.slane %v5012, 4
  %v5018 = vrot.slane %v5014, 4
  %v5019 = vrot.slane %v5016, 4
  %v5020 = vsel %vm107, %v5017, %v5018
  %v5021 = vsel %vm492, %v5012, %v5020
  %v5022 = vsel %vm107, %v5018, %v5019
  %v5023 = vsel %vm492, %v5014, %v5022
  %v5024 = vsel %vm492, %v5016, %v5019
  %5028 = vst [vmem:[#allocation2 + $0x420] sm:$0xcc] %v5021
  %5029 = vst [vmem:[#allocation2 + $0x428] sm:$0xcc] %v5023
  %5030 = vst.msk [vmem:[#allocation2 + $0x430] sm:$0xcc] %vm121, %v5024
  %v5031 = vld [vmem:[%s0 + $0x4] sm:$0xff]
  %v5032 = vld [vmem:[%s0 + $0xc] sm:$0xf]
  %v5035 = vcombine.high %v5031, %v5031
  %v5037 = vunpack.c.l.s4 1983009808
  %v5038 = vunpack.c.0.s8 %v5037
  %v5039 = vlaneseq
  %v5040 = vshrl.u32 %v5039, 7
  %v5041 = vsub.s32 %v5038, %v5040
  %v5042 = vrot.slane %v5031, %v5041
  %v5044 = vunpack.c.l.s4 1983009808
  %v5045 = vunpack.c.0.s8 %v5044
  %v5046 = vlaneseq
  %v5047 = vshrl.u32 %v5046, 7
  %v5048 = vsub.s32 %v5045, %v5047
  %v5049 = vrot.slane %v5035, %v5048
  %v5051 = vunpack.c.l.s4 1983009808
  %v5052 = vunpack.c.0.s8 %v5051
  %v5053 = vlaneseq
  %v5054 = vshrl.u32 %v5053, 7
  %v5055 = vsub.s32 %v5052, %v5054
  %v5056 = vrot.slane %v5032, %v5055
  %5057 = vrot.lane.b32.xlu0 %v5042, 118
  %v5058 = vpop.permute.xlu0 %5057
  %5059 = vrot.lane.b32.xlu0 %v5049, 118
  %v5060 = vpop.permute.xlu0 %5059
  %5061 = vrot.lane.b32.xlu0 %v5056, 118
  %v5062 = vpop.permute.xlu0 %5061
  %v5063 = vrot.slane %v5058, 4
  %v5064 = vrot.slane %v5060, 4
  %v5065 = vrot.slane %v5062, 4
  %v5066 = vsel %vm107, %v5063, %v5064
  %v5067 = vsel %vm539, %v5058, %v5066
  %v5068 = vsel %vm107, %v5064, %v5065
  %v5069 = vsel %vm539, %v5060, %v5068
  %v5070 = vsel %vm539, %v5062, %v5065
  %5074 = vst [vmem:[#allocation2 + $0x438] sm:$0x33] %v5067
  %5075 = vst [vmem:[#allocation2 + $0x440] sm:$0x33] %v5069
  %5076 = vst.msk [vmem:[#allocation2 + $0x448] sm:$0x33] %vm69, %v5070
  %v5077 = vld [vmem:[%s0 + $0x4] sm:$0xff]
  %v5078 = vld [vmem:[%s0 + $0xc] sm:$0xf]
  %v5081 = vcombine.low %v5077, %v5077
  %v5083 = vunpack.c.l.s4 1983009808
  %v5084 = vunpack.c.0.s8 %v5083
  %v5085 = vlaneseq
  %v5086 = vshrl.u32 %v5085, 7
  %v5087 = vsub.s32 %v5084, %v5086
  %v5088 = vrot.slane %v5081, %v5087
  %v5090 = vunpack.c.l.s4 1983009808
  %v5091 = vunpack.c.0.s8 %v5090
  %v5092 = vlaneseq
  %v5093 = vshrl.u32 %v5092, 7
  %v5094 = vsub.s32 %v5091, %v5093
  %v5095 = vrot.slane %v5077, %v5094
  %v5096 = vcombine.low %v5078, %v5078
  %v5098 = vunpack.c.l.s4 1983009808
  %v5099 = vunpack.c.0.s8 %v5098
  %v5100 = vlaneseq
  %v5101 = vshrl.u32 %v5100, 7
  %v5102 = vsub.s32 %v5099, %v5101
  %v5103 = vrot.slane %v5096, %v5102
  %5104 = vrot.lane.b32.xlu0 %v5088, 117
  %v5105 = vpop.permute.xlu0 %5104
  %5106 = vrot.lane.b32.xlu0 %v5095, 117
  %v5107 = vpop.permute.xlu0 %5106
  %5108 = vrot.lane.b32.xlu0 %v5103, 117
  %v5109 = vpop.permute.xlu0 %5108
  %v5110 = vrot.slane %v5105, 4
  %v5111 = vrot.slane %v5107, 4
  %v5112 = vrot.slane %v5109, 4
  %v5113 = vsel %vm107, %v5110, %v5111
  %v5114 = vsel %vm2859, %v5105, %v5113
  %v5115 = vsel %vm107, %v5111, %v5112
  %v5116 = vsel %vm2859, %v5107, %v5115
  %v5117 = vsel %vm2859, %v5109, %v5112
  %5121 = vst [vmem:[#allocation2 + $0x438] sm:$0xcc] %v5114
  %5122 = vst [vmem:[#allocation2 + $0x440] sm:$0xcc] %v5116
  %5123 = vst.msk [vmem:[#allocation2 + $0x448] sm:$0xcc] %vm121, %v5117
  %v5124 = vld [vmem:[%s0 + $0x4] sm:$0xff]
  %v5125 = vld [vmem:[%s0 + $0xc] sm:$0xf]
  %v5128 = vcombine.high %v5124, %v5124
  %v5130 = vunpack.c.l.s4 1983009808
  %v5131 = vunpack.c.0.s8 %v5130
  %v5132 = vlaneseq
  %v5133 = vshrl.u32 %v5132, 7
  %v5134 = vsub.s32 %v5131, %v5133
  %v5135 = vrot.slane %v5124, %v5134
  %v5137 = vunpack.c.l.s4 1983009808
  %v5138 = vunpack.c.0.s8 %v5137
  %v5139 = vlaneseq
  %v5140 = vshrl.u32 %v5139, 7
  %v5141 = vsub.s32 %v5138, %v5140
  %v5142 = vrot.slane %v5128, %v5141
  %v5144 = vunpack.c.l.s4 1983009808
  %v5145 = vunpack.c.0.s8 %v5144
  %v5146 = vlaneseq
  %v5147 = vshrl.u32 %v5146, 7
  %v5148 = vsub.s32 %v5145, %v5147
  %v5149 = vrot.slane %v5125, %v5148
  %5150 = vrot.lane.b32.xlu0 %v5135, 116
  %v5151 = vpop.permute.xlu0 %5150
  %5152 = vrot.lane.b32.xlu0 %v5142, 116
  %v5153 = vpop.permute.xlu0 %5152
  %5154 = vrot.lane.b32.xlu0 %v5149, 116
  %v5155 = vpop.permute.xlu0 %5154
  %v5156 = vrot.slane %v5151, 4
  %v5157 = vrot.slane %v5153, 4
  %v5158 = vrot.slane %v5155, 4
  %v5159 = vsel %vm107, %v5156, %v5157
  %v5160 = vsel %vm2906, %v5151, %v5159
  %v5161 = vsel %vm107, %v5157, %v5158
  %v5162 = vsel %vm2906, %v5153, %v5161
  %v5163 = vsel %vm2906, %v5155, %v5158
  %5167 = vst [vmem:[#allocation2 + $0x450] sm:$0x33] %v5160
  %5168 = vst [vmem:[#allocation2 + $0x458] sm:$0x33] %v5162
  %5169 = vst.msk [vmem:[#allocation2 + $0x460] sm:$0x33] %vm69, %v5163
  %v5170 = vld [vmem:[%s0 + $0x4] sm:$0xff]
  %v5171 = vld [vmem:[%s0 + $0xc] sm:$0xf]
  %v5174 = vcombine.low %v5170, %v5170
  %v5176 = vunpack.c.l.s4 1983009808
  %v5177 = vunpack.c.0.s8 %v5176
  %v5178 = vlaneseq
  %v5179 = vshrl.u32 %v5178, 7
  %v5180 = vsub.s32 %v5177, %v5179
  %v5181 = vrot.slane %v5174, %v5180
  %v5183 = vunpack.c.l.s4 1983009808
  %v5184 = vunpack.c.0.s8 %v5183
  %v5185 = vlaneseq
  %v5186 = vshrl.u32 %v5185, 7
  %v5187 = vsub.s32 %v5184, %v5186
  %v5188 = vrot.slane %v5170, %v5187
  %v5189 = vcombine.low %v5171, %v5171
  %v5191 = vunpack.c.l.s4 1983009808
  %v5192 = vunpack.c.0.s8 %v5191
  %v5193 = vlaneseq
  %v5194 = vshrl.u32 %v5193, 7
  %v5195 = vsub.s32 %v5192, %v5194
  %v5196 = vrot.slane %v5189, %v5195
  %5197 = vrot.lane.b32.xlu0 %v5181, 115
  %v5198 = vpop.permute.xlu0 %5197
  %5199 = vrot.lane.b32.xlu0 %v5188, 115
  %v5200 = vpop.permute.xlu0 %5199
  %5201 = vrot.lane.b32.xlu0 %v5196, 115
  %v5202 = vpop.permute.xlu0 %5201
  %v5203 = vrot.slane %v5198, 4
  %v5204 = vrot.slane %v5200, 4
  %v5205 = vrot.slane %v5202, 4
  %v5206 = vsel %vm107, %v5203, %v5204
  %v5207 = vsel %vm2954, %v5198, %v5206
  %v5208 = vsel %vm107, %v5204, %v5205
  %v5209 = vsel %vm2954, %v5200, %v5208
  %v5210 = vsel %vm2954, %v5202, %v5205
  %5214 = vst [vmem:[#allocation2 + $0x450] sm:$0xcc] %v5207
  %5215 = vst [vmem:[#allocation2 + $0x458] sm:$0xcc] %v5209
  %5216 = vst.msk [vmem:[#allocation2 + $0x460] sm:$0xcc] %vm121, %v5210
  %v5217 = vld [vmem:[%s0 + $0x4] sm:$0xff]
  %v5218 = vld [vmem:[%s0 + $0xc] sm:$0xf]
  %v5221 = vcombine.high %v5217, %v5217
  %v5223 = vunpack.c.l.s4 1983009808
  %v5224 = vunpack.c.0.s8 %v5223
  %v5225 = vlaneseq
  %v5226 = vshrl.u32 %v5225, 7
  %v5227 = vsub.s32 %v5224, %v5226
  %v5228 = vrot.slane %v5217, %v5227
  %v5230 = vunpack.c.l.s4 1983009808
  %v5231 = vunpack.c.0.s8 %v5230
  %v5232 = vlaneseq
  %v5233 = vshrl.u32 %v5232, 7
  %v5234 = vsub.s32 %v5231, %v5233
  %v5235 = vrot.slane %v5221, %v5234
  %v5237 = vunpack.c.l.s4 1983009808
  %v5238 = vunpack.c.0.s8 %v5237
  %v5239 = vlaneseq
  %v5240 = vshrl.u32 %v5239, 7
  %v5241 = vsub.s32 %v5238, %v5240
  %v5242 = vrot.slane %v5218, %v5241
  %5243 = vrot.lane.b32.xlu0 %v5228, 114
  %v5244 = vpop.permute.xlu0 %5243
  %5245 = vrot.lane.b32.xlu0 %v5235, 114
  %v5246 = vpop.permute.xlu0 %5245
  %5247 = vrot.lane.b32.xlu0 %v5242, 114
  %v5248 = vpop.permute.xlu0 %5247
  %v5249 = vrot.slane %v5244, 4
  %v5250 = vrot.slane %v5246, 4
  %v5251 = vrot.slane %v5248, 4
  %v5252 = vsel %vm107, %v5249, %v5250
  %v5253 = vsel %vm3001, %v5244, %v5252
  %v5254 = vsel %vm107, %v5250, %v5251
  %v5255 = vsel %vm3001, %v5246, %v5254
  %v5256 = vsel %vm3001, %v5248, %v5251
  %5260 = vst [vmem:[#allocation2 + $0x468] sm:$0x33] %v5253
  %5261 = vst [vmem:[#allocation2 + $0x470] sm:$0x33] %v5255
  %5262 = vst.msk [vmem:[#allocation2 + $0x478] sm:$0x33] %vm69, %v5256
  %v5263 = vld [vmem:[%s0 + $0x4] sm:$0xff]
  %v5264 = vld [vmem:[%s0 + $0xc] sm:$0xf]
  %v5267 = vcombine.low %v5263, %v5263
  %v5269 = vunpack.c.l.s4 1983009808
  %v5270 = vunpack.c.0.s8 %v5269
  %v5271 = vlaneseq
  %v5272 = vshrl.u32 %v5271, 7
  %v5273 = vsub.s32 %v5270, %v5272
  %v5274 = vrot.slane %v5267, %v5273
  %v5276 = vunpack.c.l.s4 1983009808
  %v5277 = vunpack.c.0.s8 %v5276
  %v5278 = vlaneseq
  %v5279 = vshrl.u32 %v5278, 7
  %v5280 = vsub.s32 %v5277, %v5279
  %v5281 = vrot.slane %v5263, %v5280
  %v5282 = vcombine.low %v5264, %v5264
  %v5284 = vunpack.c.l.s4 1983009808
  %v5285 = vunpack.c.0.s8 %v5284
  %v5286 = vlaneseq
  %v5287 = vshrl.u32 %v5286, 7
  %v5288 = vsub.s32 %v5285, %v5287
  %v5289 = vrot.slane %v5282, %v5288
  %5290 = vrot.lane.b32.xlu0 %v5274, 113
  %v5291 = vpop.permute.xlu0 %5290
  %5292 = vrot.lane.b32.xlu0 %v5281, 113
  %v5293 = vpop.permute.xlu0 %5292
  %5294 = vrot.lane.b32.xlu0 %v5289, 113
  %v5295 = vpop.permute.xlu0 %5294
  %v5296 = vrot.slane %v5291, 4
  %v5297 = vrot.slane %v5293, 4
  %v5298 = vrot.slane %v5295, 4
  %v5299 = vsel %vm107, %v5296, %v5297
  %vm5300 = vcmask 924672
  %v5301 = vsel %vm5300, %v5291, %v5299
  %v5302 = vsel %vm107, %v5297, %v5298
  %v5303 = vsel %vm5300, %v5293, %v5302
  %v5304 = vsel %vm5300, %v5295, %v5298
  %5308 = vst [vmem:[#allocation2 + $0x468] sm:$0xcc] %v5301
  %5309 = vst [vmem:[#allocation2 + $0x470] sm:$0xcc] %v5303
  %5310 = vst.msk [vmem:[#allocation2 + $0x478] sm:$0xcc] %vm121, %v5304
  %v5311 = vld [vmem:[%s0 + $0x4] sm:$0xff]
  %v5312 = vld [vmem:[%s0 + $0xc] sm:$0xf]
  %v5315 = vcombine.high %v5311, %v5311
  %v5317 = vunpack.c.l.s4 1983009808
  %v5318 = vunpack.c.0.s8 %v5317
  %v5319 = vlaneseq
  %v5320 = vshrl.u32 %v5319, 7
  %v5321 = vsub.s32 %v5318, %v5320
  %v5322 = vrot.slane %v5311, %v5321
  %v5324 = vunpack.c.l.s4 1983009808
  %v5325 = vunpack.c.0.s8 %v5324
  %v5326 = vlaneseq
  %v5327 = vshrl.u32 %v5326, 7
  %v5328 = vsub.s32 %v5325, %v5327
  %v5329 = vrot.slane %v5315, %v5328
  %v5331 = vunpack.c.l.s4 1983009808
  %v5332 = vunpack.c.0.s8 %v5331
  %v5333 = vlaneseq
  %v5334 = vshrl.u32 %v5333, 7
  %v5335 = vsub.s32 %v5332, %v5334
  %v5336 = vrot.slane %v5312, %v5335
  %5337 = vrot.lane.b32.xlu0 %v5322, 112
  %v5338 = vpop.permute.xlu0 %5337
  %5339 = vrot.lane.b32.xlu0 %v5329, 112
  %v5340 = vpop.permute.xlu0 %5339
  %5341 = vrot.lane.b32.xlu0 %v5336, 112
  %v5342 = vpop.permute.xlu0 %5341
  %v5343 = vrot.slane %v5338, 4
  %v5344 = vrot.slane %v5340, 4
  %v5345 = vrot.slane %v5342, 4
  %v5346 = vsel %vm107, %v5343, %v5344
  %vm5347 = vcmask 916480
  %v5348 = vsel %vm5347, %v5338, %v5346
  %v5349 = vsel %vm107, %v5344, %v5345
  %v5350 = vsel %vm5347, %v5340, %v5349
  %v5351 = vsel %vm5347, %v5342, %v5345
  %5355 = vst [vmem:[#allocation2 + $0x480] sm:$0x33] %v5348
  %5356 = vst [vmem:[#allocation2 + $0x488] sm:$0x33] %v5350
  %5357 = vst.msk [vmem:[#allocation2 + $0x490] sm:$0x33] %vm69, %v5351
  %v5358 = vld [vmem:[%s0 + $0x4] sm:$0xff]
  %v5359 = vld [vmem:[%s0 + $0xc] sm:$0xf]
  %v5362 = vcombine.low %v5358, %v5358
  %v5364 = vunpack.c.l.s4 1983009808
  %v5365 = vunpack.c.0.s8 %v5364
  %v5366 = vlaneseq
  %v5367 = vshrl.u32 %v5366, 7
  %v5368 = vsub.s32 %v5365, %v5367
  %v5369 = vrot.slane %v5362, %v5368
  %v5371 = vunpack.c.l.s4 1983009808
  %v5372 = vunpack.c.0.s8 %v5371
  %v5373 = vlaneseq
  %v5374 = vshrl.u32 %v5373, 7
  %v5375 = vsub.s32 %v5372, %v5374
  %v5376 = vrot.slane %v5358, %v5375
  %v5377 = vcombine.low %v5359, %v5359
  %v5379 = vunpack.c.l.s4 1983009808
  %v5380 = vunpack.c.0.s8 %v5379
  %v5381 = vlaneseq
  %v5382 = vshrl.u32 %v5381, 7
  %v5383 = vsub.s32 %v5380, %v5382
  %v5384 = vrot.slane %v5377, %v5383
  %5385 = vrot.lane.b32.xlu0 %v5369, 111
  %v5386 = vpop.permute.xlu0 %5385
  %5387 = vrot.lane.b32.xlu0 %v5376, 111
  %v5388 = vpop.permute.xlu0 %5387
  %5389 = vrot.lane.b32.xlu0 %v5384, 111
  %v5390 = vpop.permute.xlu0 %5389
  %v5391 = vrot.slane %v5386, 4
  %v5392 = vrot.slane %v5388, 4
  %v5393 = vrot.slane %v5390, 4
  %v5394 = vsel %vm107, %v5391, %v5392
  %vm5395 = vcmask 908288
  %v5396 = vsel %vm5395, %v5386, %v5394
  %v5397 = vsel %vm107, %v5392, %v5393
  %v5398 = vsel %vm5395, %v5388, %v5397
  %v5399 = vsel %vm5395, %v5390, %v5393
  %5403 = vst [vmem:[#allocation2 + $0x480] sm:$0xcc] %v5396
  %5404 = vst [vmem:[#allocation2 + $0x488] sm:$0xcc] %v5398
  %5405 = vst.msk [vmem:[#allocation2 + $0x490] sm:$0xcc] %vm121, %v5399
  %v5406 = vld [vmem:[%s0 + $0x4] sm:$0xff]
  %v5407 = vld [vmem:[%s0 + $0xc] sm:$0xf]
  %v5410 = vcombine.high %v5406, %v5406
  %v5412 = vunpack.c.l.s4 1983009808
  %v5413 = vunpack.c.0.s8 %v5412
  %v5414 = vlaneseq
  %v5415 = vshrl.u32 %v5414, 7
  %v5416 = vsub.s32 %v5413, %v5415
  %v5417 = vrot.slane %v5406, %v5416
  %v5419 = vunpack.c.l.s4 1983009808
  %v5420 = vunpack.c.0.s8 %v5419
  %v5421 = vlaneseq
  %v5422 = vshrl.u32 %v5421, 7
  %v5423 = vsub.s32 %v5420, %v5422
  %v5424 = vrot.slane %v5410, %v5423
  %v5426 = vunpack.c.l.s4 1983009808
  %v5427 = vunpack.c.0.s8 %v5426
  %v5428 = vlaneseq
  %v5429 = vshrl.u32 %v5428, 7
  %v5430 = vsub.s32 %v5427, %v5429
  %v5431 = vrot.slane %v5407, %v5430
  %5432 = vrot.lane.b32.xlu0 %v5417, 110
  %v5433 = vpop.permute.xlu0 %5432
  %5434 = vrot.lane.b32.xlu0 %v5424, 110
  %v5435 = vpop.permute.xlu0 %5434
  %5436 = vrot.lane.b32.xlu0 %v5431, 110
  %v5437 = vpop.permute.xlu0 %5436
  %v5438 = vrot.slane %v5433, 4
  %v5439 = vrot.slane %v5435, 4
  %v5440 = vrot.slane %v5437, 4
  %v5441 = vsel %vm107, %v5438, %v5439
  %vm5442 = vcmask 900096
  %v5443 = vsel %vm5442, %v5433, %v5441
  %v5444 = vsel %vm107, %v5439, %v5440
  %v5445 = vsel %vm5442, %v5435, %v5444
  %v5446 = vsel %vm5442, %v5437, %v5440
  %5450 = vst [vmem:[#allocation2 + $0x498] sm:$0x33] %v5443
  %5451 = vst [vmem:[#allocation2 + $0x4a0] sm:$0x33] %v5445
  %5452 = vst.msk [vmem:[#allocation2 + $0x4a8] sm:$0x33] %vm69, %v5446
  %v5453 = vld [vmem:[%s0 + $0x4] sm:$0xff]
  %v5454 = vld [vmem:[%s0 + $0xc] sm:$0x3f]
  %v5457 = vcombine.low %v5453, %v5453
  %v5459 = vunpack.c.l.s4 1983009808
  %v5460 = vunpack.c.0.s8 %v5459
  %v5461 = vlaneseq
  %v5462 = vshrl.u32 %v5461, 7
  %v5463 = vsub.s32 %v5460, %v5462
  %v5464 = vrot.slane %v5457, %v5463
  %v5466 = vunpack.c.l.s4 1983009808
  %v5467 = vunpack.c.0.s8 %v5466
  %v5468 = vlaneseq
  %v5469 = vshrl.u32 %v5468, 7
  %v5470 = vsub.s32 %v5467, %v5469
  %v5471 = vrot.slane %v5453, %v5470
  %v5472 = vcombine.low %v5454, %v5454
  %v5474 = vunpack.c.l.s4 1983009808
  %v5475 = vunpack.c.0.s8 %v5474
  %v5476 = vlaneseq
  %v5477 = vshrl.u32 %v5476, 7
  %v5478 = vsub.s32 %v5475, %v5477
  %v5479 = vrot.slane %v5472, %v5478
  %v5481 = vunpack.c.l.s4 1983009808
  %v5482 = vunpack.c.0.s8 %v5481
  %v5483 = vlaneseq
  %v5484 = vshrl.u32 %v5483, 7
  %v5485 = vsub.s32 %v5482, %v5484
  %v5486 = vrot.slane %v5454, %v5485
  %5487 = vrot.lane.b32.xlu0 %v5464, 87
  %v5488 = vpop.permute.xlu0 %5487
  %5489 = vrot.lane.b32.xlu0 %v5471, 87
  %v5490 = vpop.permute.xlu0 %5489
  %5491 = vrot.lane.b32.xlu0 %v5479, 87
  %v5492 = vpop.permute.xlu0 %5491
  %5493 = vrot.lane.b32.xlu0 %v5486, 87
  %v5494 = vpop.permute.xlu0 %5493
  %v5495 = vrot.slane %v5488, 4
  %v5496 = vrot.slane %v5490, 4
  %v5497 = vrot.slane %v5492, 4
  %v5498 = vrot.slane %v5494, 4
  %v5499 = vsel %vm107, %v5495, %v5496
  %v5500 = vsel %vm1069, %v5488, %v5499
  %v5501 = vsel %vm107, %v5496, %v5497
  %v5502 = vsel %vm1069, %v5490, %v5501
  %v5503 = vsel %vm107, %v5497, %v5498
  %v5504 = vsel %vm1069, %v5492, %v5503
  %5508 = vst [vmem:[#allocation2 + $0x498] sm:$0xcc] %v5500
  %5509 = vst [vmem:[#allocation2 + $0x4a0] sm:$0xcc] %v5502
  %5510 = vst.msk [vmem:[#allocation2 + $0x4a8] sm:$0xcc] %vm121, %v5504
  %v5511 = vld [vmem:[%s0 + $0x4] sm:$0xff]
  %v5512 = vld [vmem:[%s0 + $0xc] sm:$0x3f]
  %v5515 = vcombine.high %v5511, %v5511
  %v5517 = vunpack.c.l.s4 1983009808
  %v5518 = vunpack.c.0.s8 %v5517
  %v5519 = vlaneseq
  %v5520 = vshrl.u32 %v5519, 7
  %v5521 = vsub.s32 %v5518, %v5520
  %v5522 = vrot.slane %v5511, %v5521
  %v5524 = vunpack.c.l.s4 1983009808
  %v5525 = vunpack.c.0.s8 %v5524
  %v5526 = vlaneseq
  %v5527 = vshrl.u32 %v5526, 7
  %v5528 = vsub.s32 %v5525, %v5527
  %v5529 = vrot.slane %v5515, %v5528
  %v5530 = vcombine.high %v5512, %v5512
  %v5532 = vunpack.c.l.s4 1983009808
  %v5533 = vunpack.c.0.s8 %v5532
  %v5534 = vlaneseq
  %v5535 = vshrl.u32 %v5534, 7
  %v5536 = vsub.s32 %v5533, %v5535
  %v5537 = vrot.slane %v5512, %v5536
  %v5539 = vunpack.c.l.s4 1983009808
  %v5540 = vunpack.c.0.s8 %v5539
  %v5541 = vlaneseq
  %v5542 = vshrl.u32 %v5541, 7
  %v5543 = vsub.s32 %v5540, %v5542
  %v5544 = vrot.slane %v5530, %v5543
  %5545 = vrot.lane.b32.xlu0 %v5522, 86
  %v5546 = vpop.permute.xlu0 %5545
  %5547 = vrot.lane.b32.xlu0 %v5529, 86
  %v5548 = vpop.permute.xlu0 %5547
  %5549 = vrot.lane.b32.xlu0 %v5537, 86
  %v5550 = vpop.permute.xlu0 %5549
  %5551 = vrot.lane.b32.xlu0 %v5544, 86
  %v5552 = vpop.permute.xlu0 %5551
  %v5553 = vrot.slane %v5546, 4
  %v5554 = vrot.slane %v5548, 4
  %v5555 = vrot.slane %v5550, 4
  %v5556 = vrot.slane %v5552, 4
  %v5557 = vsel %vm107, %v5553, %v5554
  %v5558 = vsel %vm1128, %v5546, %v5557
  %v5559 = vsel %vm107, %v5554, %v5555
  %v5560 = vsel %vm1128, %v5548, %v5559
  %v5561 = vsel %vm107, %v5555, %v5556
  %v5562 = vsel %vm1128, %v5550, %v5561
  %5566 = vst [vmem:[#allocation2 + $0x4b0] sm:$0x33] %v5558
  %5567 = vst [vmem:[#allocation2 + $0x4b8] sm:$0x33] %v5560
  %5568 = vst.msk [vmem:[#allocation2 + $0x4c0] sm:$0x33] %vm69, %v5562
  %v5569 = vld [vmem:[%s0 + $0x4] sm:$0xff]
  %v5570 = vld [vmem:[%s0 + $0xc] sm:$0x3f]
  %v5573 = vcombine.low %v5569, %v5569
  %v5575 = vunpack.c.l.s4 1983009808
  %v5576 = vunpack.c.0.s8 %v5575
  %v5577 = vlaneseq
  %v5578 = vshrl.u32 %v5577, 7
  %v5579 = vsub.s32 %v5576, %v5578
  %v5580 = vrot.slane %v5573, %v5579
  %v5582 = vunpack.c.l.s4 1983009808
  %v5583 = vunpack.c.0.s8 %v5582
  %v5584 = vlaneseq
  %v5585 = vshrl.u32 %v5584, 7
  %v5586 = vsub.s32 %v5583, %v5585
  %v5587 = vrot.slane %v5569, %v5586
  %v5588 = vcombine.low %v5570, %v5570
  %v5590 = vunpack.c.l.s4 1983009808
  %v5591 = vunpack.c.0.s8 %v5590
  %v5592 = vlaneseq
  %v5593 = vshrl.u32 %v5592, 7
  %v5594 = vsub.s32 %v5591, %v5593
  %v5595 = vrot.slane %v5588, %v5594
  %v5597 = vunpack.c.l.s4 1983009808
  %v5598 = vunpack.c.0.s8 %v5597
  %v5599 = vlaneseq
  %v5600 = vshrl.u32 %v5599, 7
  %v5601 = vsub.s32 %v5598, %v5600
  %v5602 = vrot.slane %v5570, %v5601
  %5603 = vrot.lane.b32.xlu0 %v5580, 85
  %v5604 = vpop.permute.xlu0 %5603
  %5605 = vrot.lane.b32.xlu0 %v5587, 85
  %v5606 = vpop.permute.xlu0 %5605
  %5607 = vrot.lane.b32.xlu0 %v5595, 85
  %v5608 = vpop.permute.xlu0 %5607
  %5609 = vrot.lane.b32.xlu0 %v5602, 85
  %v5610 = vpop.permute.xlu0 %5609
  %v5611 = vrot.slane %v5604, 4
  %v5612 = vrot.slane %v5606, 4
  %v5613 = vrot.slane %v5608, 4
  %v5614 = vrot.slane %v5610, 4
  %v5615 = vsel %vm107, %v5611, %v5612
  %v5616 = vsel %vm1187, %v5604, %v5615
  %v5617 = vsel %vm107, %v5612, %v5613
  %v5618 = vsel %vm1187, %v5606, %v5617
  %v5619 = vsel %vm107, %v5613, %v5614
  %v5620 = vsel %vm1187, %v5608, %v5619
  %5624 = vst [vmem:[#allocation2 + $0x4b0] sm:$0xcc] %v5616
  %5625 = vst [vmem:[#allocation2 + $0x4b8] sm:$0xcc] %v5618
  %5626 = vst.msk [vmem:[#allocation2 + $0x4c0] sm:$0xcc] %vm121, %v5620
  %v5627 = vld [vmem:[%s0 + $0x4] sm:$0xff]
  %v5628 = vld [vmem:[%s0 + $0xc] sm:$0x3f]
  %v5631 = vcombine.high %v5627, %v5627
  %v5633 = vunpack.c.l.s4 1983009808
  %v5634 = vunpack.c.0.s8 %v5633
  %v5635 = vlaneseq
  %v5636 = vshrl.u32 %v5635, 7
  %v5637 = vsub.s32 %v5634, %v5636
  %v5638 = vrot.slane %v5627, %v5637
  %v5640 = vunpack.c.l.s4 1983009808
  %v5641 = vunpack.c.0.s8 %v5640
  %v5642 = vlaneseq
  %v5643 = vshrl.u32 %v5642, 7
  %v5644 = vsub.s32 %v5641, %v5643
  %v5645 = vrot.slane %v5631, %v5644
  %v5646 = vcombine.high %v5628, %v5628
  %v5648 = vunpack.c.l.s4 1983009808
  %v5649 = vunpack.c.0.s8 %v5648
  %v5650 = vlaneseq
  %v5651 = vshrl.u32 %v5650, 7
  %v5652 = vsub.s32 %v5649, %v5651
  %v5653 = vrot.slane %v5628, %v5652
  %v5655 = vunpack.c.l.s4 1983009808
  %v5656 = vunpack.c.0.s8 %v5655
  %v5657 = vlaneseq
  %v5658 = vshrl.u32 %v5657, 7
  %v5659 = vsub.s32 %v5656, %v5658
  %v5660 = vrot.slane %v5646, %v5659
  %5661 = vrot.lane.b32.xlu0 %v5638, 84
  %v5662 = vpop.permute.xlu0 %5661
  %5663 = vrot.lane.b32.xlu0 %v5645, 84
  %v5664 = vpop.permute.xlu0 %5663
  %5665 = vrot.lane.b32.xlu0 %v5653, 84
  %v5666 = vpop.permute.xlu0 %5665
  %5667 = vrot.lane.b32.xlu0 %v5660, 84
  %v5668 = vpop.permute.xlu0 %5667
  %v5669 = vrot.slane %v5662, 4
  %v5670 = vrot.slane %v5664, 4
  %v5671 = vrot.slane %v5666, 4
  %v5672 = vrot.slane %v5668, 4
  %v5673 = vsel %vm107, %v5669, %v5670
  %v5674 = vsel %vm3465, %v5662, %v5673
  %v5675 = vsel %vm107, %v5670, %v5671
  %v5676 = vsel %vm3465, %v5664, %v5675
  %v5677 = vsel %vm107, %v5671, %v5672
  %v5678 = vsel %vm3465, %v5666, %v5677
  %5682 = vst [vmem:[#allocation2 + $0x4c8] sm:$0x33] %v5674
  %5683 = vst [vmem:[#allocation2 + $0x4d0] sm:$0x33] %v5676
  %5684 = vst.msk [vmem:[#allocation2 + $0x4d8] sm:$0x33] %vm69, %v5678
  %v5685 = vld [vmem:[%s0 + $0x4] sm:$0xff]
  %v5686 = vld [vmem:[%s0 + $0xc] sm:$0x3f]
  %v5689 = vcombine.low %v5685, %v5685
  %v5691 = vunpack.c.l.s4 1983009808
  %v5692 = vunpack.c.0.s8 %v5691
  %v5693 = vlaneseq
  %v5694 = vshrl.u32 %v5693, 7
  %v5695 = vsub.s32 %v5692, %v5694
  %v5696 = vrot.slane %v5689, %v5695
  %v5698 = vunpack.c.l.s4 1983009808
  %v5699 = vunpack.c.0.s8 %v5698
  %v5700 = vlaneseq
  %v5701 = vshrl.u32 %v5700, 7
  %v5702 = vsub.s32 %v5699, %v5701
  %v5703 = vrot.slane %v5685, %v5702
  %v5704 = vcombine.low %v5686, %v5686
  %v5706 = vunpack.c.l.s4 1983009808
  %v5707 = vunpack.c.0.s8 %v5706
  %v5708 = vlaneseq
  %v5709 = vshrl.u32 %v5708, 7
  %v5710 = vsub.s32 %v5707, %v5709
  %v5711 = vrot.slane %v5704, %v5710
  %v5713 = vunpack.c.l.s4 1983009808
  %v5714 = vunpack.c.0.s8 %v5713
  %v5715 = vlaneseq
  %v5716 = vshrl.u32 %v5715, 7
  %v5717 = vsub.s32 %v5714, %v5716
  %v5718 = vrot.slane %v5686, %v5717
  %5719 = vrot.lane.b32.xlu0 %v5696, 83
  %v5720 = vpop.permute.xlu0 %5719
  %5721 = vrot.lane.b32.xlu0 %v5703, 83
  %v5722 = vpop.permute.xlu0 %5721
  %5723 = vrot.lane.b32.xlu0 %v5711, 83
  %v5724 = vpop.permute.xlu0 %5723
  %5725 = vrot.lane.b32.xlu0 %v5718, 83
  %v5726 = vpop.permute.xlu0 %5725
  %v5727 = vrot.slane %v5720, 4
  %v5728 = vrot.slane %v5722, 4
  %v5729 = vrot.slane %v5724, 4
  %v5730 = vrot.slane %v5726, 4
  %v5731 = vsel %vm107, %v5727, %v5728
  %v5732 = vsel %vm3524, %v5720, %v5731
  %v5733 = vsel %vm107, %v5728, %v5729
  %v5734 = vsel %vm3524, %v5722, %v5733
  %v5735 = vsel %vm107, %v5729, %v5730
  %v5736 = vsel %vm3524, %v5724, %v5735
  %5740 = vst [vmem:[#allocation2 + $0x4c8] sm:$0xcc] %v5732
  %5741 = vst [vmem:[#allocation2 + $0x4d0] sm:$0xcc] %v5734
  %5742 = vst.msk [vmem:[#allocation2 + $0x4d8] sm:$0xcc] %vm121, %v5736
  %v5743 = vld [vmem:[%s0 + $0x4] sm:$0xff]
  %v5744 = vld [vmem:[%s0 + $0xc] sm:$0x3f]
  %v5747 = vcombine.high %v5743, %v5743
  %v5749 = vunpack.c.l.s4 1983009808
  %v5750 = vunpack.c.0.s8 %v5749
  %v5751 = vlaneseq
  %v5752 = vshrl.u32 %v5751, 7
  %v5753 = vsub.s32 %v5750, %v5752
  %v5754 = vrot.slane %v5743, %v5753
  %v5756 = vunpack.c.l.s4 1983009808
  %v5757 = vunpack.c.0.s8 %v5756
  %v5758 = vlaneseq
  %v5759 = vshrl.u32 %v5758, 7
  %v5760 = vsub.s32 %v5757, %v5759
  %v5761 = vrot.slane %v5747, %v5760
  %v5762 = vcombine.high %v5744, %v5744
  %v5764 = vunpack.c.l.s4 1983009808
  %v5765 = vunpack.c.0.s8 %v5764
  %v5766 = vlaneseq
  %v5767 = vshrl.u32 %v5766, 7
  %v5768 = vsub.s32 %v5765, %v5767
  %v5769 = vrot.slane %v5744, %v5768
  %v5771 = vunpack.c.l.s4 1983009808
  %v5772 = vunpack.c.0.s8 %v5771
  %v5773 = vlaneseq
  %v5774 = vshrl.u32 %v5773, 7
  %v5775 = vsub.s32 %v5772, %v5774
  %v5776 = vrot.slane %v5762, %v5775
  %5777 = vrot.lane.b32.xlu0 %v5754, 82
  %v5778 = vpop.permute.xlu0 %5777
  %5779 = vrot.lane.b32.xlu0 %v5761, 82
  %v5780 = vpop.permute.xlu0 %5779
  %5781 = vrot.lane.b32.xlu0 %v5769, 82
  %v5782 = vpop.permute.xlu0 %5781
  %5783 = vrot.lane.b32.xlu0 %v5776, 82
  %v5784 = vpop.permute.xlu0 %5783
  %v5785 = vrot.slane %v5778, 4
  %v5786 = vrot.slane %v5780, 4
  %v5787 = vrot.slane %v5782, 4
  %v5788 = vrot.slane %v5784, 4
  %v5789 = vsel %vm107, %v5785, %v5786
  %v5790 = vsel %vm3583, %v5778, %v5789
  %v5791 = vsel %vm107, %v5786, %v5787
  %v5792 = vsel %vm3583, %v5780, %v5791
  %v5793 = vsel %vm107, %v5787, %v5788
  %v5794 = vsel %vm3583, %v5782, %v5793
  %5798 = vst [vmem:[#allocation2 + $0x4e0] sm:$0x33] %v5790
  %5799 = vst [vmem:[#allocation2 + $0x4e8] sm:$0x33] %v5792
  %5800 = vst.msk [vmem:[#allocation2 + $0x4f0] sm:$0x33] %vm69, %v5794
  %v5801 = vld [vmem:[%s0 + $0x4] sm:$0xff]
  %v5802 = vld [vmem:[%s0 + $0xc] sm:$0x3f]
  %v5805 = vcombine.low %v5801, %v5801
  %v5807 = vunpack.c.l.s4 1983009808
  %v5808 = vunpack.c.0.s8 %v5807
  %v5809 = vlaneseq
  %v5810 = vshrl.u32 %v5809, 7
  %v5811 = vsub.s32 %v5808, %v5810
  %v5812 = vrot.slane %v5805, %v5811
  %v5814 = vunpack.c.l.s4 1983009808
  %v5815 = vunpack.c.0.s8 %v5814
  %v5816 = vlaneseq
  %v5817 = vshrl.u32 %v5816, 7
  %v5818 = vsub.s32 %v5815, %v5817
  %v5819 = vrot.slane %v5801, %v5818
  %v5820 = vcombine.low %v5802, %v5802
  %v5822 = vunpack.c.l.s4 1983009808
  %v5823 = vunpack.c.0.s8 %v5822
  %v5824 = vlaneseq
  %v5825 = vshrl.u32 %v5824, 7
  %v5826 = vsub.s32 %v5823, %v5825
  %v5827 = vrot.slane %v5820, %v5826
  %v5829 = vunpack.c.l.s4 1983009808
  %v5830 = vunpack.c.0.s8 %v5829
  %v5831 = vlaneseq
  %v5832 = vshrl.u32 %v5831, 7
  %v5833 = vsub.s32 %v5830, %v5832
  %v5834 = vrot.slane %v5802, %v5833
  %5835 = vrot.lane.b32.xlu0 %v5812, 81
  %v5836 = vpop.permute.xlu0 %5835
  %5837 = vrot.lane.b32.xlu0 %v5819, 81
  %v5838 = vpop.permute.xlu0 %5837
  %5839 = vrot.lane.b32.xlu0 %v5827, 81
  %v5840 = vpop.permute.xlu0 %5839
  %5841 = vrot.lane.b32.xlu0 %v5834, 81
  %v5842 = vpop.permute.xlu0 %5841
  %v5843 = vrot.slane %v5836, 4
  %v5844 = vrot.slane %v5838, 4
  %v5845 = vrot.slane %v5840, 4
  %v5846 = vrot.slane %v5842, 4
  %v5847 = vsel %vm107, %v5843, %v5844
  %v5848 = vsel %vm3642, %v5836, %v5847
  %v5849 = vsel %vm107, %v5844, %v5845
  %v5850 = vsel %vm3642, %v5838, %v5849
  %v5851 = vsel %vm107, %v5845, %v5846
  %v5852 = vsel %vm3642, %v5840, %v5851
  %5856 = vst [vmem:[#allocation2 + $0x4e0] sm:$0xcc] %v5848
  %5857 = vst [vmem:[#allocation2 + $0x4e8] sm:$0xcc] %v5850
  %5858 = vst.msk [vmem:[#allocation2 + $0x4f0] sm:$0xcc] %vm121, %v5852
  %v5859 = vld [vmem:[%s0 + $0x4] sm:$0xff]
  %v5860 = vld [vmem:[%s0 + $0xc] sm:$0x3f]
  %v5863 = vcombine.high %v5859, %v5859
  %v5865 = vunpack.c.l.s4 1983009808
  %v5866 = vunpack.c.0.s8 %v5865
  %v5867 = vlaneseq
  %v5868 = vshrl.u32 %v5867, 7
  %v5869 = vsub.s32 %v5866, %v5868
  %v5870 = vrot.slane %v5859, %v5869
  %v5872 = vunpack.c.l.s4 1983009808
  %v5873 = vunpack.c.0.s8 %v5872
  %v5874 = vlaneseq
  %v5875 = vshrl.u32 %v5874, 7
  %v5876 = vsub.s32 %v5873, %v5875
  %v5877 = vrot.slane %v5863, %v5876
  %v5878 = vcombine.high %v5860, %v5860
  %v5880 = vunpack.c.l.s4 1983009808
  %v5881 = vunpack.c.0.s8 %v5880
  %v5882 = vlaneseq
  %v5883 = vshrl.u32 %v5882, 7
  %v5884 = vsub.s32 %v5881, %v5883
  %v5885 = vrot.slane %v5860, %v5884
  %v5887 = vunpack.c.l.s4 1983009808
  %v5888 = vunpack.c.0.s8 %v5887
  %v5889 = vlaneseq
  %v5890 = vshrl.u32 %v5889, 7
  %v5891 = vsub.s32 %v5888, %v5890
  %v5892 = vrot.slane %v5878, %v5891
  %5893 = vrot.lane.b32.xlu0 %v5870, 80
  %v5894 = vpop.permute.xlu0 %5893
  %5895 = vrot.lane.b32.xlu0 %v5877, 80
  %v5896 = vpop.permute.xlu0 %5895
  %5897 = vrot.lane.b32.xlu0 %v5885, 80
  %v5898 = vpop.permute.xlu0 %5897
  %5899 = vrot.lane.b32.xlu0 %v5892, 80
  %v5900 = vpop.permute.xlu0 %5899
  %v5901 = vrot.slane %v5894, 4
  %v5902 = vrot.slane %v5896, 4
  %v5903 = vrot.slane %v5898, 4
  %v5904 = vrot.slane %v5900, 4
  %v5905 = vsel %vm107, %v5901, %v5902
  %vm5906 = vcmask 654336
  %v5907 = vsel %vm5906, %v5894, %v5905
  %v5908 = vsel %vm107, %v5902, %v5903
  %v5909 = vsel %vm5906, %v5896, %v5908
  %v5910 = vsel %vm107, %v5903, %v5904
  %v5911 = vsel %vm5906, %v5898, %v5910
  %5915 = vst [vmem:[#allocation2 + $0x4f8] sm:$0x33] %v5907
  %5916 = vst [vmem:[#allocation2 + $0x500] sm:$0x33] %v5909
  %5917 = vst.msk [vmem:[#allocation2 + $0x508] sm:$0x33] %vm69, %v5911
  %v5918 = vld [vmem:[%s0 + $0x4] sm:$0xff]
  %v5919 = vld [vmem:[%s0 + $0xc] sm:$0x3f]
  %v5922 = vcombine.low %v5918, %v5918
  %v5924 = vunpack.c.l.s4 1983009808
  %v5925 = vunpack.c.0.s8 %v5924
  %v5926 = vlaneseq
  %v5927 = vshrl.u32 %v5926, 7
  %v5928 = vsub.s32 %v5925, %v5927
  %v5929 = vrot.slane %v5922, %v5928
  %v5931 = vunpack.c.l.s4 1983009808
  %v5932 = vunpack.c.0.s8 %v5931
  %v5933 = vlaneseq
  %v5934 = vshrl.u32 %v5933, 7
  %v5935 = vsub.s32 %v5932, %v5934
  %v5936 = vrot.slane %v5918, %v5935
  %v5937 = vcombine.low %v5919, %v5919
  %v5939 = vunpack.c.l.s4 1983009808
  %v5940 = vunpack.c.0.s8 %v5939
  %v5941 = vlaneseq
  %v5942 = vshrl.u32 %v5941, 7
  %v5943 = vsub.s32 %v5940, %v5942
  %v5944 = vrot.slane %v5937, %v5943
  %v5946 = vunpack.c.l.s4 1983009808
  %v5947 = vunpack.c.0.s8 %v5946
  %v5948 = vlaneseq
  %v5949 = vshrl.u32 %v5948, 7
  %v5950 = vsub.s32 %v5947, %v5949
  %v5951 = vrot.slane %v5919, %v5950
  %5952 = vrot.lane.b32.xlu0 %v5929, 79
  %v5953 = vpop.permute.xlu0 %5952
  %5954 = vrot.lane.b32.xlu0 %v5936, 79
  %v5955 = vpop.permute.xlu0 %5954
  %5956 = vrot.lane.b32.xlu0 %v5944, 79
  %v5957 = vpop.permute.xlu0 %5956
  %5958 = vrot.lane.b32.xlu0 %v5951, 79
  %v5959 = vpop.permute.xlu0 %5958
  %v5960 = vrot.slane %v5953, 4
  %v5961 = vrot.slane %v5955, 4
  %v5962 = vrot.slane %v5957, 4
  %v5963 = vrot.slane %v5959, 4
  %v5964 = vsel %vm107, %v5960, %v5961
  %vm5965 = vcmask 646144
  %v5966 = vsel %vm5965, %v5953, %v5964
  %v5967 = vsel %vm107, %v5961, %v5962
  %v5968 = vsel %vm5965, %v5955, %v5967
  %v5969 = vsel %vm107, %v5962, %v5963
  %v5970 = vsel %vm5965, %v5957, %v5969
  %5974 = vst [vmem:[#allocation2 + $0x4f8] sm:$0xcc] %v5966
  %5975 = vst [vmem:[#allocation2 + $0x500] sm:$0xcc] %v5968
  %5976 = vst.msk [vmem:[#allocation2 + $0x508] sm:$0xcc] %vm121, %v5970
  %v5977 = vld [vmem:[%s0 + $0x4] sm:$0xff]
  %v5978 = vld [vmem:[%s0 + $0xc] sm:$0x3f]
  %v5981 = vcombine.high %v5977, %v5977
  %v5983 = vunpack.c.l.s4 1983009808
  %v5984 = vunpack.c.0.s8 %v5983
  %v5985 = vlaneseq
  %v5986 = vshrl.u32 %v5985, 7
  %v5987 = vsub.s32 %v5984, %v5986
  %v5988 = vrot.slane %v5977, %v5987
  %v5990 = vunpack.c.l.s4 1983009808
  %v5991 = vunpack.c.0.s8 %v5990
  %v5992 = vlaneseq
  %v5993 = vshrl.u32 %v5992, 7
  %v5994 = vsub.s32 %v5991, %v5993
  %v5995 = vrot.slane %v5981, %v5994
  %v5996 = vcombine.high %v5978, %v5978
  %v5998 = vunpack.c.l.s4 1983009808
  %v5999 = vunpack.c.0.s8 %v5998
  %v6000 = vlaneseq
  %v6001 = vshrl.u32 %v6000, 7
  %v6002 = vsub.s32 %v5999, %v6001
  %v6003 = vrot.slane %v5978, %v6002
  %v6005 = vunpack.c.l.s4 1983009808
  %v6006 = vunpack.c.0.s8 %v6005
  %v6007 = vlaneseq
  %v6008 = vshrl.u32 %v6007, 7
  %v6009 = vsub.s32 %v6006, %v6008
  %v6010 = vrot.slane %v5996, %v6009
  %6011 = vrot.lane.b32.xlu0 %v5988, 78
  %v6012 = vpop.permute.xlu0 %6011
  %6013 = vrot.lane.b32.xlu0 %v5995, 78
  %v6014 = vpop.permute.xlu0 %6013
  %6015 = vrot.lane.b32.xlu0 %v6003, 78
  %v6016 = vpop.permute.xlu0 %6015
  %6017 = vrot.lane.b32.xlu0 %v6010, 78
  %v6018 = vpop.permute.xlu0 %6017
  %v6019 = vrot.slane %v6012, 4
  %v6020 = vrot.slane %v6014, 4
  %v6021 = vrot.slane %v6016, 4
  %v6022 = vrot.slane %v6018, 4
  %v6023 = vsel %vm107, %v6019, %v6020
  %vm6024 = vcmask 637952
  %v6025 = vsel %vm6024, %v6012, %v6023
  %v6026 = vsel %vm107, %v6020, %v6021
  %v6027 = vsel %vm6024, %v6014, %v6026
  %v6028 = vsel %vm107, %v6021, %v6022
  %v6029 = vsel %vm6024, %v6016, %v6028
  %6033 = vst [vmem:[#allocation2 + $0x510] sm:$0x33] %v6025
  %6034 = vst [vmem:[#allocation2 + $0x518] sm:$0x33] %v6027
  %6035 = vst.msk [vmem:[#allocation2 + $0x520] sm:$0x33] %vm69, %v6029
  %v6036 = vld [vmem:[%s0 + $0x4] sm:$0xff]
  %v6037 = vld [vmem:[%s0 + $0xc] sm:$0x3f]
  %v6040 = vcombine.low %v6036, %v6036
  %v6042 = vunpack.c.l.s4 1983009808
  %v6043 = vunpack.c.0.s8 %v6042
  %v6044 = vlaneseq
  %v6045 = vshrl.u32 %v6044, 7
  %v6046 = vsub.s32 %v6043, %v6045
  %v6047 = vrot.slane %v6040, %v6046
  %v6049 = vunpack.c.l.s4 1983009808
  %v6050 = vunpack.c.0.s8 %v6049
  %v6051 = vlaneseq
  %v6052 = vshrl.u32 %v6051, 7
  %v6053 = vsub.s32 %v6050, %v6052
  %v6054 = vrot.slane %v6036, %v6053
  %v6055 = vcombine.low %v6037, %v6037
  %v6057 = vunpack.c.l.s4 1983009808
  %v6058 = vunpack.c.0.s8 %v6057
  %v6059 = vlaneseq
  %v6060 = vshrl.u32 %v6059, 7
  %v6061 = vsub.s32 %v6058, %v6060
  %v6062 = vrot.slane %v6055, %v6061
  %v6064 = vunpack.c.l.s4 1983009808
  %v6065 = vunpack.c.0.s8 %v6064
  %v6066 = vlaneseq
  %v6067 = vshrl.u32 %v6066, 7
  %v6068 = vsub.s32 %v6065, %v6067
  %v6069 = vrot.slane %v6037, %v6068
  %6070 = vrot.lane.b32.xlu0 %v6047, 77
  %v6071 = vpop.permute.xlu0 %6070
  %6072 = vrot.lane.b32.xlu0 %v6054, 77
  %v6073 = vpop.permute.xlu0 %6072
  %6074 = vrot.lane.b32.xlu0 %v6062, 77
  %v6075 = vpop.permute.xlu0 %6074
  %6076 = vrot.lane.b32.xlu0 %v6069, 77
  %v6077 = vpop.permute.xlu0 %6076
  %v6078 = vrot.slane %v6071, 4
  %v6079 = vrot.slane %v6073, 4
  %v6080 = vrot.slane %v6075, 4
  %v6081 = vrot.slane %v6077, 4
  %v6082 = vsel %vm107, %v6078, %v6079
  %vm6083 = vcmask 629760
  %v6084 = vsel %vm6083, %v6071, %v6082
  %v6085 = vsel %vm107, %v6079, %v6080
  %v6086 = vsel %vm6083, %v6073, %v6085
  %v6087 = vsel %vm107, %v6080, %v6081
  %v6088 = vsel %vm6083, %v6075, %v6087
  %6092 = vst [vmem:[#allocation2 + $0x510] sm:$0xcc] %v6084
  %6093 = vst [vmem:[#allocation2 + $0x518] sm:$0xcc] %v6086
  %6094 = vst.msk [vmem:[#allocation2 + $0x520] sm:$0xcc] %vm121, %v6088
  %v6095 = vld [vmem:[%s0 + $0x4] sm:$0xff]
  %v6096 = vld [vmem:[%s0 + $0xc] sm:$0x3f]
  %v6099 = vcombine.high %v6095, %v6095
  %v6101 = vunpack.c.l.s4 1983009808
  %v6102 = vunpack.c.0.s8 %v6101
  %v6103 = vlaneseq
  %v6104 = vshrl.u32 %v6103, 7
  %v6105 = vsub.s32 %v6102, %v6104
  %v6106 = vrot.slane %v6095, %v6105
  %v6108 = vunpack.c.l.s4 1983009808
  %v6109 = vunpack.c.0.s8 %v6108
  %v6110 = vlaneseq
  %v6111 = vshrl.u32 %v6110, 7
  %v6112 = vsub.s32 %v6109, %v6111
  %v6113 = vrot.slane %v6099, %v6112
  %v6114 = vcombine.high %v6096, %v6096
  %v6116 = vunpack.c.l.s4 1983009808
  %v6117 = vunpack.c.0.s8 %v6116
  %v6118 = vlaneseq
  %v6119 = vshrl.u32 %v6118, 7
  %v6120 = vsub.s32 %v6117, %v6119
  %v6121 = vrot.slane %v6096, %v6120
  %v6123 = vunpack.c.l.s4 1983009808
  %v6124 = vunpack.c.0.s8 %v6123
  %v6125 = vlaneseq
  %v6126 = vshrl.u32 %v6125, 7
  %v6127 = vsub.s32 %v6124, %v6126
  %v6128 = vrot.slane %v6114, %v6127
  %6129 = vrot.lane.b32.xlu0 %v6106, 54
  %v6130 = vpop.permute.xlu0 %6129
  %6131 = vrot.lane.b32.xlu0 %v6113, 54
  %v6132 = vpop.permute.xlu0 %6131
  %6133 = vrot.lane.b32.xlu0 %v6121, 54
  %v6134 = vpop.permute.xlu0 %6133
  %6135 = vrot.lane.b32.xlu0 %v6128, 54
  %v6136 = vpop.permute.xlu0 %6135
  %v6137 = vrot.slane %v6130, 4
  %v6138 = vrot.slane %v6132, 4
  %v6139 = vrot.slane %v6134, 4
  %v6140 = vrot.slane %v6136, 4
  %v6141 = vsel %vm107, %v6137, %v6138
  %v6142 = vsel %vm1718, %v6130, %v6141
  %v6143 = vsel %vm107, %v6138, %v6139
  %v6144 = vsel %vm1718, %v6132, %v6143
  %v6145 = vsel %vm107, %v6139, %v6140
  %v6146 = vsel %vm1718, %v6134, %v6145
  %6150 = vst [vmem:[#allocation2 + $0x528] sm:$0x33] %v6142
  %6151 = vst [vmem:[#allocation2 + $0x530] sm:$0x33] %v6144
  %6152 = vst.msk [vmem:[#allocation2 + $0x538] sm:$0x33] %vm69, %v6146
  %v6153 = vld [vmem:[%s0 + $0x4] sm:$0xff]
  %v6154 = vld [vmem:[%s0 + $0xc] sm:$0x3f]
  %v6157 = vcombine.low %v6153, %v6153
  %v6159 = vunpack.c.l.s4 1983009808
  %v6160 = vunpack.c.0.s8 %v6159
  %v6161 = vlaneseq
  %v6162 = vshrl.u32 %v6161, 7
  %v6163 = vsub.s32 %v6160, %v6162
  %v6164 = vrot.slane %v6157, %v6163
  %v6166 = vunpack.c.l.s4 1983009808
  %v6167 = vunpack.c.0.s8 %v6166
  %v6168 = vlaneseq
  %v6169 = vshrl.u32 %v6168, 7
  %v6170 = vsub.s32 %v6167, %v6169
  %v6171 = vrot.slane %v6153, %v6170
  %v6172 = vcombine.low %v6154, %v6154
  %v6174 = vunpack.c.l.s4 1983009808
  %v6175 = vunpack.c.0.s8 %v6174
  %v6176 = vlaneseq
  %v6177 = vshrl.u32 %v6176, 7
  %v6178 = vsub.s32 %v6175, %v6177
  %v6179 = vrot.slane %v6172, %v6178
  %v6181 = vunpack.c.l.s4 1983009808
  %v6182 = vunpack.c.0.s8 %v6181
  %v6183 = vlaneseq
  %v6184 = vshrl.u32 %v6183, 7
  %v6185 = vsub.s32 %v6182, %v6184
  %v6186 = vrot.slane %v6154, %v6185
  %6187 = vrot.lane.b32.xlu0 %v6164, 53
  %v6188 = vpop.permute.xlu0 %6187
  %6189 = vrot.lane.b32.xlu0 %v6171, 53
  %v6190 = vpop.permute.xlu0 %6189
  %6191 = vrot.lane.b32.xlu0 %v6179, 53
  %v6192 = vpop.permute.xlu0 %6191
  %6193 = vrot.lane.b32.xlu0 %v6186, 53
  %v6194 = vpop.permute.xlu0 %6193
  %v6195 = vrot.slane %v6188, 4
  %v6196 = vrot.slane %v6190, 4
  %v6197 = vrot.slane %v6192, 4
  %v6198 = vrot.slane %v6194, 4
  %v6199 = vsel %vm107, %v6195, %v6196
  %v6200 = vsel %vm1777, %v6188, %v6199
  %v6201 = vsel %vm107, %v6196, %v6197
  %v6202 = vsel %vm1777, %v6190, %v6201
  %v6203 = vsel %vm107, %v6197, %v6198
  %v6204 = vsel %vm1777, %v6192, %v6203
  %6208 = vst [vmem:[#allocation2 + $0x528] sm:$0xcc] %v6200
  %6209 = vst [vmem:[#allocation2 + $0x530] sm:$0xcc] %v6202
  %6210 = vst.msk [vmem:[#allocation2 + $0x538] sm:$0xcc] %vm121, %v6204
  %v6211 = vld [vmem:[%s0 + $0x4] sm:$0xff]
  %v6212 = vld [vmem:[%s0 + $0xc] sm:$0x3f]
  %v6215 = vcombine.high %v6211, %v6211
  %v6217 = vunpack.c.l.s4 1983009808
  %v6218 = vunpack.c.0.s8 %v6217
  %v6219 = vlaneseq
  %v6220 = vshrl.u32 %v6219, 7
  %v6221 = vsub.s32 %v6218, %v6220
  %v6222 = vrot.slane %v6211, %v6221
  %v6224 = vunpack.c.l.s4 1983009808
  %v6225 = vunpack.c.0.s8 %v6224
  %v6226 = vlaneseq
  %v6227 = vshrl.u32 %v6226, 7
  %v6228 = vsub.s32 %v6225, %v6227
  %v6229 = vrot.slane %v6215, %v6228
  %v6230 = vcombine.high %v6212, %v6212
  %v6232 = vunpack.c.l.s4 1983009808
  %v6233 = vunpack.c.0.s8 %v6232
  %v6234 = vlaneseq
  %v6235 = vshrl.u32 %v6234, 7
  %v6236 = vsub.s32 %v6233, %v6235
  %v6237 = vrot.slane %v6212, %v6236
  %v6239 = vunpack.c.l.s4 1983009808
  %v6240 = vunpack.c.0.s8 %v6239
  %v6241 = vlaneseq
  %v6242 = vshrl.u32 %v6241, 7
  %v6243 = vsub.s32 %v6240, %v6242
  %v6244 = vrot.slane %v6230, %v6243
  %6245 = vrot.lane.b32.xlu0 %v6222, 52
  %v6246 = vpop.permute.xlu0 %6245
  %6247 = vrot.lane.b32.xlu0 %v6229, 52
  %v6248 = vpop.permute.xlu0 %6247
  %6249 = vrot.lane.b32.xlu0 %v6237, 52
  %v6250 = vpop.permute.xlu0 %6249
  %6251 = vrot.lane.b32.xlu0 %v6244, 52
  %v6252 = vpop.permute.xlu0 %6251
  %v6253 = vrot.slane %v6246, 4
  %v6254 = vrot.slane %v6248, 4
  %v6255 = vrot.slane %v6250, 4
  %v6256 = vrot.slane %v6252, 4
  %v6257 = vsel %vm107, %v6253, %v6254
  %v6258 = vsel %vm1836, %v6246, %v6257
  %v6259 = vsel %vm107, %v6254, %v6255
  %v6260 = vsel %vm1836, %v6248, %v6259
  %v6261 = vsel %vm107, %v6255, %v6256
  %v6262 = vsel %vm1836, %v6250, %v6261
  %6266 = vst [vmem:[#allocation2 + $0x540] sm:$0x33] %v6258
  %6267 = vst [vmem:[#allocation2 + $0x548] sm:$0x33] %v6260
  %6268 = vst.msk [vmem:[#allocation2 + $0x550] sm:$0x33] %vm69, %v6262
  %v6269 = vld [vmem:[%s0 + $0x4] sm:$0xff]
  %v6270 = vld [vmem:[%s0 + $0xc] sm:$0x3f]
  %v6273 = vcombine.low %v6269, %v6269
  %v6275 = vunpack.c.l.s4 1983009808
  %v6276 = vunpack.c.0.s8 %v6275
  %v6277 = vlaneseq
  %v6278 = vshrl.u32 %v6277, 7
  %v6279 = vsub.s32 %v6276, %v6278
  %v6280 = vrot.slane %v6273, %v6279
  %v6282 = vunpack.c.l.s4 1983009808
  %v6283 = vunpack.c.0.s8 %v6282
  %v6284 = vlaneseq
  %v6285 = vshrl.u32 %v6284, 7
  %v6286 = vsub.s32 %v6283, %v6285
  %v6287 = vrot.slane %v6269, %v6286
  %v6288 = vcombine.low %v6270, %v6270
  %v6290 = vunpack.c.l.s4 1983009808
  %v6291 = vunpack.c.0.s8 %v6290
  %v6292 = vlaneseq
  %v6293 = vshrl.u32 %v6292, 7
  %v6294 = vsub.s32 %v6291, %v6293
  %v6295 = vrot.slane %v6288, %v6294
  %v6297 = vunpack.c.l.s4 1983009808
  %v6298 = vunpack.c.0.s8 %v6297
  %v6299 = vlaneseq
  %v6300 = vshrl.u32 %v6299, 7
  %v6301 = vsub.s32 %v6298, %v6300
  %v6302 = vrot.slane %v6270, %v6301
  %6303 = vrot.lane.b32.xlu0 %v6280, 51
  %v6304 = vpop.permute.xlu0 %6303
  %6305 = vrot.lane.b32.xlu0 %v6287, 51
  %v6306 = vpop.permute.xlu0 %6305
  %6307 = vrot.lane.b32.xlu0 %v6295, 51
  %v6308 = vpop.permute.xlu0 %6307
  %6309 = vrot.lane.b32.xlu0 %v6302, 51
  %v6310 = vpop.permute.xlu0 %6309
  %v6311 = vrot.slane %v6304, 4
  %v6312 = vrot.slane %v6306, 4
  %v6313 = vrot.slane %v6308, 4
  %v6314 = vrot.slane %v6310, 4
  %v6315 = vsel %vm107, %v6311, %v6312
  %v6316 = vsel %vm4107, %v6304, %v6315
  %v6317 = vsel %vm107, %v6312, %v6313
  %v6318 = vsel %vm4107, %v6306, %v6317
  %v6319 = vsel %vm107, %v6313, %v6314
  %v6320 = vsel %vm4107, %v6308, %v6319
  %6324 = vst [vmem:[#allocation2 + $0x540] sm:$0xcc] %v6316
  %6325 = vst [vmem:[#allocation2 + $0x548] sm:$0xcc] %v6318
  %6326 = vst.msk [vmem:[#allocation2 + $0x550] sm:$0xcc] %vm121, %v6320
  %v6327 = vld [vmem:[%s0 + $0x4] sm:$0xff]
  %v6328 = vld [vmem:[%s0 + $0xc] sm:$0x3f]
  %v6331 = vcombine.high %v6327, %v6327
  %v6333 = vunpack.c.l.s4 1983009808
  %v6334 = vunpack.c.0.s8 %v6333
  %v6335 = vlaneseq
  %v6336 = vshrl.u32 %v6335, 7
  %v6337 = vsub.s32 %v6334, %v6336
  %v6338 = vrot.slane %v6327, %v6337
  %v6340 = vunpack.c.l.s4 1983009808
  %v6341 = vunpack.c.0.s8 %v6340
  %v6342 = vlaneseq
  %v6343 = vshrl.u32 %v6342, 7
  %v6344 = vsub.s32 %v6341, %v6343
  %v6345 = vrot.slane %v6331, %v6344
  %v6346 = vcombine.high %v6328, %v6328
  %v6348 = vunpack.c.l.s4 1983009808
  %v6349 = vunpack.c.0.s8 %v6348
  %v6350 = vlaneseq
  %v6351 = vshrl.u32 %v6350, 7
  %v6352 = vsub.s32 %v6349, %v6351
  %v6353 = vrot.slane %v6328, %v6352
  %v6355 = vunpack.c.l.s4 1983009808
  %v6356 = vunpack.c.0.s8 %v6355
  %v6357 = vlaneseq
  %v6358 = vshrl.u32 %v6357, 7
  %v6359 = vsub.s32 %v6356, %v6358
  %v6360 = vrot.slane %v6346, %v6359
  %6361 = vrot.lane.b32.xlu0 %v6338, 50
  %v6362 = vpop.permute.xlu0 %6361
  %6363 = vrot.lane.b32.xlu0 %v6345, 50
  %v6364 = vpop.permute.xlu0 %6363
  %6365 = vrot.lane.b32.xlu0 %v6353, 50
  %v6366 = vpop.permute.xlu0 %6365
  %6367 = vrot.lane.b32.xlu0 %v6360, 50
  %v6368 = vpop.permute.xlu0 %6367
  %v6369 = vrot.slane %v6362, 4
  %v6370 = vrot.slane %v6364, 4
  %v6371 = vrot.slane %v6366, 4
  %v6372 = vrot.slane %v6368, 4
  %v6373 = vsel %vm107, %v6369, %v6370
  %v6374 = vsel %vm4166, %v6362, %v6373
  %v6375 = vsel %vm107, %v6370, %v6371
  %v6376 = vsel %vm4166, %v6364, %v6375
  %v6377 = vsel %vm107, %v6371, %v6372
  %v6378 = vsel %vm4166, %v6366, %v6377
  %6382 = vst [vmem:[#allocation2 + $0x558] sm:$0x33] %v6374
  %6383 = vst [vmem:[#allocation2 + $0x560] sm:$0x33] %v6376
  %6384 = vst.msk [vmem:[#allocation2 + $0x568] sm:$0x33] %vm69, %v6378
  %v6385 = vld [vmem:[%s0 + $0x4] sm:$0xff]
  %v6386 = vld [vmem:[%s0 + $0xc] sm:$0x3f]
  %v6389 = vcombine.low %v6385, %v6385
  %v6391 = vunpack.c.l.s4 1983009808
  %v6392 = vunpack.c.0.s8 %v6391
  %v6393 = vlaneseq
  %v6394 = vshrl.u32 %v6393, 7
  %v6395 = vsub.s32 %v6392, %v6394
  %v6396 = vrot.slane %v6389, %v6395
  %v6398 = vunpack.c.l.s4 1983009808
  %v6399 = vunpack.c.0.s8 %v6398
  %v6400 = vlaneseq
  %v6401 = vshrl.u32 %v6400, 7
  %v6402 = vsub.s32 %v6399, %v6401
  %v6403 = vrot.slane %v6385, %v6402
  %v6404 = vcombine.low %v6386, %v6386
  %v6406 = vunpack.c.l.s4 1983009808
  %v6407 = vunpack.c.0.s8 %v6406
  %v6408 = vlaneseq
  %v6409 = vshrl.u32 %v6408, 7
  %v6410 = vsub.s32 %v6407, %v6409
  %v6411 = vrot.slane %v6404, %v6410
  %v6413 = vunpack.c.l.s4 1983009808
  %v6414 = vunpack.c.0.s8 %v6413
  %v6415 = vlaneseq
  %v6416 = vshrl.u32 %v6415, 7
  %v6417 = vsub.s32 %v6414, %v6416
  %v6418 = vrot.slane %v6386, %v6417
  %6419 = vrot.lane.b32.xlu0 %v6396, 49
  %v6420 = vpop.permute.xlu0 %6419
  %6421 = vrot.lane.b32.xlu0 %v6403, 49
  %v6422 = vpop.permute.xlu0 %6421
  %6423 = vrot.lane.b32.xlu0 %v6411, 49
  %v6424 = vpop.permute.xlu0 %6423
  %6425 = vrot.lane.b32.xlu0 %v6418, 49
  %v6426 = vpop.permute.xlu0 %6425
  %v6427 = vrot.slane %v6420, 4
  %v6428 = vrot.slane %v6422, 4
  %v6429 = vrot.slane %v6424, 4
  %v6430 = vrot.slane %v6426, 4
  %v6431 = vsel %vm107, %v6427, %v6428
  %v6432 = vsel %vm4225, %v6420, %v6431
  %v6433 = vsel %vm107, %v6428, %v6429
  %v6434 = vsel %vm4225, %v6422, %v6433
  %v6435 = vsel %vm107, %v6429, %v6430
  %v6436 = vsel %vm4225, %v6424, %v6435
  %6440 = vst [vmem:[#allocation2 + $0x558] sm:$0xcc] %v6432
  %6441 = vst [vmem:[#allocation2 + $0x560] sm:$0xcc] %v6434
  %6442 = vst.msk [vmem:[#allocation2 + $0x568] sm:$0xcc] %vm121, %v6436
  %v6443 = vld [vmem:[%s0 + $0x4] sm:$0xff]
  %v6444 = vld [vmem:[%s0 + $0xc] sm:$0x3f]
  %v6447 = vcombine.high %v6443, %v6443
  %v6449 = vunpack.c.l.s4 1983009808
  %v6450 = vunpack.c.0.s8 %v6449
  %v6451 = vlaneseq
  %v6452 = vshrl.u32 %v6451, 7
  %v6453 = vsub.s32 %v6450, %v6452
  %v6454 = vrot.slane %v6443, %v6453
  %v6456 = vunpack.c.l.s4 1983009808
  %v6457 = vunpack.c.0.s8 %v6456
  %v6458 = vlaneseq
  %v6459 = vshrl.u32 %v6458, 7
  %v6460 = vsub.s32 %v6457, %v6459
  %v6461 = vrot.slane %v6447, %v6460
  %v6462 = vcombine.high %v6444, %v6444
  %v6464 = vunpack.c.l.s4 1983009808
  %v6465 = vunpack.c.0.s8 %v6464
  %v6466 = vlaneseq
  %v6467 = vshrl.u32 %v6466, 7
  %v6468 = vsub.s32 %v6465, %v6467
  %v6469 = vrot.slane %v6444, %v6468
  %v6471 = vunpack.c.l.s4 1983009808
  %v6472 = vunpack.c.0.s8 %v6471
  %v6473 = vlaneseq
  %v6474 = vshrl.u32 %v6473, 7
  %v6475 = vsub.s32 %v6472, %v6474
  %v6476 = vrot.slane %v6462, %v6475
  %6477 = vrot.lane.b32.xlu0 %v6454, 48
  %v6478 = vpop.permute.xlu0 %6477
  %6479 = vrot.lane.b32.xlu0 %v6461, 48
  %v6480 = vpop.permute.xlu0 %6479
  %6481 = vrot.lane.b32.xlu0 %v6469, 48
  %v6482 = vpop.permute.xlu0 %6481
  %6483 = vrot.lane.b32.xlu0 %v6476, 48
  %v6484 = vpop.permute.xlu0 %6483
  %v6485 = vrot.slane %v6478, 4
  %v6486 = vrot.slane %v6480, 4
  %v6487 = vrot.slane %v6482, 4
  %v6488 = vrot.slane %v6484, 4
  %v6489 = vsel %vm107, %v6485, %v6486
  %v6490 = vsel %vm4284, %v6478, %v6489
  %v6491 = vsel %vm107, %v6486, %v6487
  %v6492 = vsel %vm4284, %v6480, %v6491
  %v6493 = vsel %vm107, %v6487, %v6488
  %v6494 = vsel %vm4284, %v6482, %v6493
  %6498 = vst [vmem:[#allocation2 + $0x570] sm:$0x33] %v6490
  %6499 = vst [vmem:[#allocation2 + $0x578] sm:$0x33] %v6492
  %6500 = vst.msk [vmem:[#allocation2 + $0x580] sm:$0x33] %vm69, %v6494
  %v6501 = vld [vmem:[%s0 + $0x4] sm:$0xff]
  %v6502 = vld [vmem:[%s0 + $0xc] sm:$0x3f]
  %v6505 = vcombine.low %v6501, %v6501
  %v6507 = vunpack.c.l.s4 1983009808
  %v6508 = vunpack.c.0.s8 %v6507
  %v6509 = vlaneseq
  %v6510 = vshrl.u32 %v6509, 7
  %v6511 = vsub.s32 %v6508, %v6510
  %v6512 = vrot.slane %v6505, %v6511
  %v6514 = vunpack.c.l.s4 1983009808
  %v6515 = vunpack.c.0.s8 %v6514
  %v6516 = vlaneseq
  %v6517 = vshrl.u32 %v6516, 7
  %v6518 = vsub.s32 %v6515, %v6517
  %v6519 = vrot.slane %v6501, %v6518
  %v6520 = vcombine.low %v6502, %v6502
  %v6522 = vunpack.c.l.s4 1983009808
  %v6523 = vunpack.c.0.s8 %v6522
  %v6524 = vlaneseq
  %v6525 = vshrl.u32 %v6524, 7
  %v6526 = vsub.s32 %v6523, %v6525
  %v6527 = vrot.slane %v6520, %v6526
  %v6529 = vunpack.c.l.s4 1983009808
  %v6530 = vunpack.c.0.s8 %v6529
  %v6531 = vlaneseq
  %v6532 = vshrl.u32 %v6531, 7
  %v6533 = vsub.s32 %v6530, %v6532
  %v6534 = vrot.slane %v6502, %v6533
  %6535 = vrot.lane.b32.xlu0 %v6512, 47
  %v6536 = vpop.permute.xlu0 %6535
  %6537 = vrot.lane.b32.xlu0 %v6519, 47
  %v6538 = vpop.permute.xlu0 %6537
  %6539 = vrot.lane.b32.xlu0 %v6527, 47
  %v6540 = vpop.permute.xlu0 %6539
  %6541 = vrot.lane.b32.xlu0 %v6534, 47
  %v6542 = vpop.permute.xlu0 %6541
  %v6543 = vrot.slane %v6536, 4
  %v6544 = vrot.slane %v6538, 4
  %v6545 = vrot.slane %v6540, 4
  %v6546 = vrot.slane %v6542, 4
  %v6547 = vsel %vm107, %v6543, %v6544
  %vm6548 = vcmask 384000
  %v6549 = vsel %vm6548, %v6536, %v6547
  %v6550 = vsel %vm107, %v6544, %v6545
  %v6551 = vsel %vm6548, %v6538, %v6550
  %v6552 = vsel %vm107, %v6545, %v6546
  %v6553 = vsel %vm6548, %v6540, %v6552
  %6557 = vst [vmem:[#allocation2 + $0x570] sm:$0xcc] %v6549
  %6558 = vst [vmem:[#allocation2 + $0x578] sm:$0xcc] %v6551
  %6559 = vst.msk [vmem:[#allocation2 + $0x580] sm:$0xcc] %vm121, %v6553
  %v6560 = vld [vmem:[%s0 + $0x4] sm:$0xff]
  %v6561 = vld [vmem:[%s0 + $0xc] sm:$0x3f]
  %v6564 = vcombine.high %v6560, %v6560
  %v6566 = vunpack.c.l.s4 1983009808
  %v6567 = vunpack.c.0.s8 %v6566
  %v6568 = vlaneseq
  %v6569 = vshrl.u32 %v6568, 7
  %v6570 = vsub.s32 %v6567, %v6569
  %v6571 = vrot.slane %v6560, %v6570
  %v6573 = vunpack.c.l.s4 1983009808
  %v6574 = vunpack.c.0.s8 %v6573
  %v6575 = vlaneseq
  %v6576 = vshrl.u32 %v6575, 7
  %v6577 = vsub.s32 %v6574, %v6576
  %v6578 = vrot.slane %v6564, %v6577
  %v6579 = vcombine.high %v6561, %v6561
  %v6581 = vunpack.c.l.s4 1983009808
  %v6582 = vunpack.c.0.s8 %v6581
  %v6583 = vlaneseq
  %v6584 = vshrl.u32 %v6583, 7
  %v6585 = vsub.s32 %v6582, %v6584
  %v6586 = vrot.slane %v6561, %v6585
  %v6588 = vunpack.c.l.s4 1983009808
  %v6589 = vunpack.c.0.s8 %v6588
  %v6590 = vlaneseq
  %v6591 = vshrl.u32 %v6590, 7
  %v6592 = vsub.s32 %v6589, %v6591
  %v6593 = vrot.slane %v6579, %v6592
  %6594 = vrot.lane.b32.xlu0 %v6571, 46
  %v6595 = vpop.permute.xlu0 %6594
  %6596 = vrot.lane.b32.xlu0 %v6578, 46
  %v6597 = vpop.permute.xlu0 %6596
  %6598 = vrot.lane.b32.xlu0 %v6586, 46
  %v6599 = vpop.permute.xlu0 %6598
  %6600 = vrot.lane.b32.xlu0 %v6593, 46
  %v6601 = vpop.permute.xlu0 %6600
  %v6602 = vrot.slane %v6595, 4
  %v6603 = vrot.slane %v6597, 4
  %v6604 = vrot.slane %v6599, 4
  %v6605 = vrot.slane %v6601, 4
  %v6606 = vsel %vm107, %v6602, %v6603
  %vm6607 = vcmask 375808
  %v6608 = vsel %vm6607, %v6595, %v6606
  %v6609 = vsel %vm107, %v6603, %v6604
  %v6610 = vsel %vm6607, %v6597, %v6609
  %v6611 = vsel %vm107, %v6604, %v6605
  %v6612 = vsel %vm6607, %v6599, %v6611
  %6616 = vst [vmem:[#allocation2 + $0x588] sm:$0x33] %v6608
  %6617 = vst [vmem:[#allocation2 + $0x590] sm:$0x33] %v6610
  %6618 = vst.msk [vmem:[#allocation2 + $0x598] sm:$0x33] %vm69, %v6612
  %v6619 = vld [vmem:[%s0 + $0x4] sm:$0xff]
  %v6620 = vld [vmem:[%s0 + $0xc] sm:$0x3f]
  %v6623 = vcombine.low %v6619, %v6619
  %v6625 = vunpack.c.l.s4 1983009808
  %v6626 = vunpack.c.0.s8 %v6625
  %v6627 = vlaneseq
  %v6628 = vshrl.u32 %v6627, 7
  %v6629 = vsub.s32 %v6626, %v6628
  %v6630 = vrot.slane %v6623, %v6629
  %v6632 = vunpack.c.l.s4 1983009808
  %v6633 = vunpack.c.0.s8 %v6632
  %v6634 = vlaneseq
  %v6635 = vshrl.u32 %v6634, 7
  %v6636 = vsub.s32 %v6633, %v6635
  %v6637 = vrot.slane %v6619, %v6636
  %v6638 = vcombine.low %v6620, %v6620
  %v6640 = vunpack.c.l.s4 1983009808
  %v6641 = vunpack.c.0.s8 %v6640
  %v6642 = vlaneseq
  %v6643 = vshrl.u32 %v6642, 7
  %v6644 = vsub.s32 %v6641, %v6643
  %v6645 = vrot.slane %v6638, %v6644
  %v6647 = vunpack.c.l.s4 1983009808
  %v6648 = vunpack.c.0.s8 %v6647
  %v6649 = vlaneseq
  %v6650 = vshrl.u32 %v6649, 7
  %v6651 = vsub.s32 %v6648, %v6650
  %v6652 = vrot.slane %v6620, %v6651
  %6653 = vrot.lane.b32.xlu0 %v6630, 45
  %v6654 = vpop.permute.xlu0 %6653
  %6655 = vrot.lane.b32.xlu0 %v6637, 45
  %v6656 = vpop.permute.xlu0 %6655
  %6657 = vrot.lane.b32.xlu0 %v6645, 45
  %v6658 = vpop.permute.xlu0 %6657
  %6659 = vrot.lane.b32.xlu0 %v6652, 45
  %v6660 = vpop.permute.xlu0 %6659
  %v6661 = vrot.slane %v6654, 4
  %v6662 = vrot.slane %v6656, 4
  %v6663 = vrot.slane %v6658, 4
  %v6664 = vrot.slane %v6660, 4
  %v6665 = vsel %vm107, %v6661, %v6662
  %vm6666 = vcmask 367616
  %v6667 = vsel %vm6666, %v6654, %v6665
  %v6668 = vsel %vm107, %v6662, %v6663
  %v6669 = vsel %vm6666, %v6656, %v6668
  %v6670 = vsel %vm107, %v6663, %v6664
  %v6671 = vsel %vm6666, %v6658, %v6670
  %6675 = vst [vmem:[#allocation2 + $0x588] sm:$0xcc] %v6667
  %6676 = vst [vmem:[#allocation2 + $0x590] sm:$0xcc] %v6669
  %6677 = vst.msk [vmem:[#allocation2 + $0x598] sm:$0xcc] %vm121, %v6671
  %v6678 = vld [vmem:[%s0 + $0x4] sm:$0xff]
  %v6679 = vld [vmem:[%s0 + $0xc] sm:$0x3f]
  %v6682 = vcombine.high %v6678, %v6678
  %v6684 = vunpack.c.l.s4 1983009808
  %v6685 = vunpack.c.0.s8 %v6684
  %v6686 = vlaneseq
  %v6687 = vshrl.u32 %v6686, 7
  %v6688 = vsub.s32 %v6685, %v6687
  %v6689 = vrot.slane %v6678, %v6688
  %v6691 = vunpack.c.l.s4 1983009808
  %v6692 = vunpack.c.0.s8 %v6691
  %v6693 = vlaneseq
  %v6694 = vshrl.u32 %v6693, 7
  %v6695 = vsub.s32 %v6692, %v6694
  %v6696 = vrot.slane %v6682, %v6695
  %v6697 = vcombine.high %v6679, %v6679
  %v6699 = vunpack.c.l.s4 1983009808
  %v6700 = vunpack.c.0.s8 %v6699
  %v6701 = vlaneseq
  %v6702 = vshrl.u32 %v6701, 7
  %v6703 = vsub.s32 %v6700, %v6702
  %v6704 = vrot.slane %v6679, %v6703
  %v6706 = vunpack.c.l.s4 1983009808
  %v6707 = vunpack.c.0.s8 %v6706
  %v6708 = vlaneseq
  %v6709 = vshrl.u32 %v6708, 7
  %v6710 = vsub.s32 %v6707, %v6709
  %v6711 = vrot.slane %v6697, %v6710
  %6712 = vrot.lane.b32.xlu0 %v6689, 44
  %v6713 = vpop.permute.xlu0 %6712
  %6714 = vrot.lane.b32.xlu0 %v6696, 44
  %v6715 = vpop.permute.xlu0 %6714
  %6716 = vrot.lane.b32.xlu0 %v6704, 44
  %v6717 = vpop.permute.xlu0 %6716
  %6718 = vrot.lane.b32.xlu0 %v6711, 44
  %v6719 = vpop.permute.xlu0 %6718
  %v6720 = vrot.slane %v6713, 4
  %v6721 = vrot.slane %v6715, 4
  %v6722 = vrot.slane %v6717, 4
  %v6723 = vrot.slane %v6719, 4
  %v6724 = vsel %vm107, %v6720, %v6721
  %vm6725 = vcmask 359424
  %v6726 = vsel %vm6725, %v6713, %v6724
  %v6727 = vsel %vm107, %v6721, %v6722
  %v6728 = vsel %vm6725, %v6715, %v6727
  %v6729 = vsel %vm107, %v6722, %v6723
  %v6730 = vsel %vm6725, %v6717, %v6729
  %6734 = vst [vmem:[#allocation2 + $0x5a0] sm:$0x33] %v6726
  %6735 = vst [vmem:[#allocation2 + $0x5a8] sm:$0x33] %v6728
  %6736 = vst.msk [vmem:[#allocation2 + $0x5b0] sm:$0x33] %vm69, %v6730
  %v6737 = vld [vmem:[%s1] sm:$0xff]
  %v6738 = vld [vmem:[%s1 + $0x8] sm:$0xff]
  %v6739 = vld [vmem:[%s1 + $0x10] sm:$0xff]
  %v6740 = vld [vmem:[%s1 + $0x18] sm:$0xff]
  %v6741 = vld [vmem:[#allocation2] sm:$0xff]
  %v6742 = vld [vmem:[#allocation2 + $0x8] sm:$0xff]
  %v6743 = vld [vmem:[#allocation2 + $0x10] sm:$0xff]
  %v6744 = vld [vmem:[#allocation2 + $0x18] sm:$0xff]
  %v6745 = vld [vmem:[#allocation2 + $0x20] sm:$0xff]
  %v6746 = vld [vmem:[#allocation2 + $0x28] sm:$0xff]
  %v6747 = vld [vmem:[#allocation2 + $0x30] sm:$0xff]
  %v6748 = vld [vmem:[#allocation2 + $0x38] sm:$0xff]
  %v6749 = vld [vmem:[#allocation2 + $0x40] sm:$0xff]
  %v6750 = vld [vmem:[#allocation2 + $0x48] sm:$0xff]
  %v6751 = vld [vmem:[#allocation2 + $0x50] sm:$0xff]
  %v6752 = vld [vmem:[#allocation2 + $0x58] sm:$0xff]
  %v6753 = vld [vmem:[#allocation2 + $0x60] sm:$0xff]
  %v6754 = vld [vmem:[#allocation2 + $0x68] sm:$0xff]
  %v6755 = vld [vmem:[#allocation2 + $0x70] sm:$0xff]
  %v6756 = vld [vmem:[#allocation2 + $0x78] sm:$0xff]
  %v6757 = vld [vmem:[#allocation2 + $0x80] sm:$0xff]
  %v6758 = vld [vmem:[#allocation2 + $0x88] sm:$0xff]
  %v6759 = vld [vmem:[#allocation2 + $0x90] sm:$0xff]
  %v6760 = vld [vmem:[#allocation2 + $0x98] sm:$0xff]
  %v6761 = vld [vmem:[#allocation2 + $0xa0] sm:$0xff]
  %v6762 = vld [vmem:[#allocation2 + $0xa8] sm:$0xff]
  %v6763 = vld [vmem:[#allocation2 + $0xb0] sm:$0xff]
  %v6764 = vld [vmem:[#allocation2 + $0xb8] sm:$0xff]
  %v6765 = vld [vmem:[#allocation2 + $0xc0] sm:$0xff]
  %v6766 = vld [vmem:[#allocation2 + $0xc8] sm:$0xff]
  %v6767 = vld [vmem:[#allocation2 + $0xd0] sm:$0xff]
  %v6768 = vld [vmem:[#allocation2 + $0xd8] sm:$0xff]
  %v6769 = vld [vmem:[#allocation2 + $0xe0] sm:$0xff]
  %v6770 = vld [vmem:[#allocation2 + $0xe8] sm:$0xff]
  %v6771 = vld [vmem:[#allocation2 + $0xf0] sm:$0xff]
  %v6772 = vld [vmem:[#allocation2 + $0xf8] sm:$0xff]
  %v6773 = vld [vmem:[#allocation2 + $0x100] sm:$0xff]
  %v6774 = vld [vmem:[#allocation2 + $0x108] sm:$0xff]
  %v6775 = vld [vmem:[#allocation2 + $0x110] sm:$0xff]
  %v6776 = vld [vmem:[#allocation2 + $0x118] sm:$0xff]
  %v6777 = vld [vmem:[#allocation2 + $0x120] sm:$0xff]
  %v6778 = vld [vmem:[#allocation2 + $0x128] sm:$0xff]
  %v6779 = vld [vmem:[#allocation2 + $0x130] sm:$0xff]
  %v6780 = vld [vmem:[#allocation2 + $0x138] sm:$0xff]
  %v6781 = vld [vmem:[#allocation2 + $0x140] sm:$0xff]
  %v6782 = vld [vmem:[#allocation2 + $0x148] sm:$0xff]
  %v6783 = vld [vmem:[#allocation2 + $0x150] sm:$0xff]
  %v6784 = vld [vmem:[#allocation2 + $0x158] sm:$0xff]
  %v6785 = vld [vmem:[#allocation2 + $0x160] sm:$0xff]
  %v6786 = vld [vmem:[#allocation2 + $0x168] sm:$0xff]
  %v6787 = vld [vmem:[#allocation2 + $0x170] sm:$0xff]
  %v6788 = vld [vmem:[#allocation2 + $0x178] sm:$0xff]
  %v6789 = vld [vmem:[#allocation2 + $0x180] sm:$0xff]
  %v6790 = vld [vmem:[#allocation2 + $0x188] sm:$0xff]
  %v6791 = vld [vmem:[#allocation2 + $0x190] sm:$0xff]
  %v6792 = vld [vmem:[#allocation2 + $0x198] sm:$0xff]
  %v6793 = vld [vmem:[#allocation2 + $0x1a0] sm:$0xff]
  %v6794 = vld [vmem:[#allocation2 + $0x1a8] sm:$0xff]
  %v6795 = vld [vmem:[#allocation2 + $0x1b0] sm:$0xff]
  %v6796 = vld [vmem:[#allocation2 + $0x1b8] sm:$0xff]
  %v6797 = vld [vmem:[#allocation2 + $0x1c0] sm:$0xff]
  %v6798 = vld [vmem:[#allocation2 + $0x1c8] sm:$0xff]
  %v6799 = vld [vmem:[#allocation2 + $0x1d0] sm:$0xff]
  %v6800 = vld [vmem:[#allocation2 + $0x1d8] sm:$0xff]
  %v6801 = vld [vmem:[#allocation2 + $0x1e0] sm:$0xff]
  %v6802 = vld [vmem:[#allocation2 + $0x1e8] sm:$0xff]
  %v6803 = vld [vmem:[#allocation2 + $0x1f0] sm:$0xff]
  %v6804 = vld [vmem:[#allocation2 + $0x1f8] sm:$0xff]
  %v6805 = vld [vmem:[#allocation2 + $0x200] sm:$0xff]
  %v6806 = vld [vmem:[#allocation2 + $0x208] sm:$0xff]
  %v6807 = vld [vmem:[#allocation2 + $0x210] sm:$0xff]
  %v6808 = vld [vmem:[#allocation2 + $0x218] sm:$0xff]
  %v6809 = vld [vmem:[#allocation2 + $0x220] sm:$0xff]
  %v6810 = vld [vmem:[#allocation2 + $0x228] sm:$0xff]
  %v6811 = vld [vmem:[#allocation2 + $0x230] sm:$0xff]
  %v6812 = vld [vmem:[#allocation2 + $0x238] sm:$0xff]
  %v6813 = vld [vmem:[#allocation2 + $0x240] sm:$0xff]
  %v6814 = vld [vmem:[#allocation2 + $0x248] sm:$0xff]
  %v6815 = vld [vmem:[#allocation2 + $0x250] sm:$0xff]
  %v6816 = vld [vmem:[#allocation2 + $0x258] sm:$0xff]
  %v6817 = vld [vmem:[#allocation2 + $0x260] sm:$0xff]
  %v6818 = vld [vmem:[#allocation2 + $0x268] sm:$0xff]
  %v6819 = vld [vmem:[#allocation2 + $0x270] sm:$0xff]
  %v6820 = vld [vmem:[#allocation2 + $0x278] sm:$0xff]
  %v6821 = vld [vmem:[#allocation2 + $0x280] sm:$0xff]
  %v6822 = vld [vmem:[#allocation2 + $0x288] sm:$0xff]
  %v6823 = vld [vmem:[#allocation2 + $0x290] sm:$0xff]
  %v6824 = vld [vmem:[#allocation2 + $0x298] sm:$0xff]
  %v6825 = vld [vmem:[#allocation2 + $0x2a0] sm:$0xff]
  %v6826 = vld [vmem:[#allocation2 + $0x2a8] sm:$0xff]
  %v6827 = vld [vmem:[#allocation2 + $0x2b0] sm:$0xff]
  %v6828 = vld [vmem:[#allocation2 + $0x2b8] sm:$0xff]
  %v6829 = vld [vmem:[#allocation2 + $0x2c0] sm:$0xff]
  %v6830 = vld [vmem:[#allocation2 + $0x2c8] sm:$0xff]
  %v6831 = vld [vmem:[#allocation2 + $0x2d0] sm:$0xff]
  %v6832 = vld [vmem:[#allocation2 + $0x2d8] sm:$0xff]
  %v6833 = vld [vmem:[#allocation2 + $0x2e0] sm:$0xff]
  %v6834 = vld [vmem:[#allocation2 + $0x2e8] sm:$0xff]
  %v6835 = vld [vmem:[#allocation2 + $0x2f0] sm:$0xff]
  %v6836 = vld [vmem:[#allocation2 + $0x2f8] sm:$0xff]
  %v6837 = vld [vmem:[#allocation2 + $0x300] sm:$0xff]
  %v6838 = vld [vmem:[#allocation2 + $0x308] sm:$0xff]
  %v6839 = vld [vmem:[#allocation2 + $0x310] sm:$0xff]
  %v6840 = vld [vmem:[#allocation2 + $0x318] sm:$0xff]
  %v6841 = vld [vmem:[#allocation2 + $0x320] sm:$0xff]
  %v6842 = vld [vmem:[#allocation2 + $0x328] sm:$0xff]
  %v6843 = vld [vmem:[#allocation2 + $0x330] sm:$0xff]
  %v6844 = vld [vmem:[#allocation2 + $0x338] sm:$0xff]
  %v6845 = vld [vmem:[#allocation2 + $0x340] sm:$0xff]
  %v6846 = vld [vmem:[#allocation2 + $0x348] sm:$0xff]
  %v6847 = vld [vmem:[#allocation2 + $0x350] sm:$0xff]
  %v6848 = vld [vmem:[#allocation2 + $0x358] sm:$0xff]
  %v6849 = vld [vmem:[#allocation2 + $0x360] sm:$0xff]
  %v6850 = vld [vmem:[#allocation2 + $0x368] sm:$0xff]
  %v6851 = vld [vmem:[#allocation2 + $0x370] sm:$0xff]
  %v6852 = vld [vmem:[#allocation2 + $0x378] sm:$0xff]
  %v6853 = vld [vmem:[#allocation2 + $0x380] sm:$0xff]
  %v6854 = vld [vmem:[#allocation2 + $0x388] sm:$0xff]
  %v6855 = vld [vmem:[#allocation2 + $0x390] sm:$0xff]
  %v6856 = vld [vmem:[#allocation2 + $0x398] sm:$0xff]
  %v6857 = vld [vmem:[#allocation2 + $0x3a0] sm:$0xff]
  %v6858 = vld [vmem:[#allocation2 + $0x3a8] sm:$0xff]
  %v6859 = vld [vmem:[#allocation2 + $0x3b0] sm:$0xff]
  %v6860 = vld [vmem:[#allocation2 + $0x3b8] sm:$0xff]
  %v6861 = vld [vmem:[#allocation2 + $0x3c0] sm:$0xff]
  %v6862 = vld [vmem:[#allocation2 + $0x3c8] sm:$0xff]
  %v6863 = vld [vmem:[#allocation2 + $0x3d0] sm:$0xff]
  %v6864 = vld [vmem:[#allocation2 + $0x3d8] sm:$0xff]
  %v6865 = vld [vmem:[#allocation2 + $0x3e0] sm:$0xff]
  %v6866 = vld [vmem:[#allocation2 + $0x3e8] sm:$0xff]
  %v6867 = vld [vmem:[#allocation2 + $0x3f0] sm:$0xff]
  %v6868 = vld [vmem:[#allocation2 + $0x3f8] sm:$0xff]
  %v6869 = vld [vmem:[#allocation2 + $0x400] sm:$0xff]
  %v6870 = vld [vmem:[#allocation2 + $0x408] sm:$0xff]
  %v6871 = vld [vmem:[#allocation2 + $0x410] sm:$0xff]
  %v6872 = vld [vmem:[#allocation2 + $0x418] sm:$0xff]
  %v6873 = vld [vmem:[#allocation2 + $0x420] sm:$0xff]
  %v6874 = vld [vmem:[#allocation2 + $0x428] sm:$0xff]
  %v6875 = vld [vmem:[#allocation2 + $0x430] sm:$0xff]
  %v6876 = vld [vmem:[#allocation2 + $0x438] sm:$0xff]
  %v6877 = vld [vmem:[#allocation2 + $0x440] sm:$0xff]
  %v6878 = vld [vmem:[#allocation2 + $0x448] sm:$0xff]
  %v6879 = vld [vmem:[#allocation2 + $0x450] sm:$0xff]
  %v6880 = vld [vmem:[#allocation2 + $0x458] sm:$0xff]
  %v6881 = vld [vmem:[#allocation2 + $0x460] sm:$0xff]
  %v6882 = vld [vmem:[#allocation2 + $0x468] sm:$0xff]
  %v6883 = vld [vmem:[#allocation2 + $0x470] sm:$0xff]
  %v6884 = vld [vmem:[#allocation2 + $0x478] sm:$0xff]
  %v6885 = vld [vmem:[#allocation2 + $0x480] sm:$0xff]
  %v6886 = vld [vmem:[#allocation2 + $0x488] sm:$0xff]
  %v6887 = vld [vmem:[#allocation2 + $0x490] sm:$0xff]
  %v6888 = vld [vmem:[#allocation2 + $0x498] sm:$0xff]
  %v6889 = vld [vmem:[#allocation2 + $0x4a0] sm:$0xff]
  %v6890 = vld [vmem:[#allocation2 + $0x4a8] sm:$0xff]
  %v6891 = vld [vmem:[#allocation2 + $0x4b0] sm:$0xff]
  %v6892 = vld [vmem:[#allocation2 + $0x4b8] sm:$0xff]
  %v6893 = vld [vmem:[#allocation2 + $0x4c0] sm:$0xff]
  %v6894 = vld [vmem:[#allocation2 + $0x4c8] sm:$0xff]
  %v6895 = vld [vmem:[#allocation2 + $0x4d0] sm:$0xff]
  %v6896 = vld [vmem:[#allocation2 + $0x4d8] sm:$0xff]
  %v6897 = vld [vmem:[#allocation2 + $0x4e0] sm:$0xff]
  %v6898 = vld [vmem:[#allocation2 + $0x4e8] sm:$0xff]
  %v6899 = vld [vmem:[#allocation2 + $0x4f0] sm:$0xff]
  %v6900 = vld [vmem:[#allocation2 + $0x4f8] sm:$0xff]
  %v6901 = vld [vmem:[#allocation2 + $0x500] sm:$0xff]
  %v6902 = vld [vmem:[#allocation2 + $0x508] sm:$0xff]
  %v6903 = vld [vmem:[#allocation2 + $0x510] sm:$0xff]
  %v6904 = vld [vmem:[#allocation2 + $0x518] sm:$0xff]
  %v6905 = vld [vmem:[#allocation2 + $0x520] sm:$0xff]
  %v6906 = vld [vmem:[#allocation2 + $0x528] sm:$0xff]
  %v6907 = vld [vmem:[#allocation2 + $0x530] sm:$0xff]
  %v6908 = vld [vmem:[#allocation2 + $0x538] sm:$0xff]
  %v6909 = vld [vmem:[#allocation2 + $0x540] sm:$0xff]
  %v6910 = vld [vmem:[#allocation2 + $0x548] sm:$0xff]
  %v6911 = vld [vmem:[#allocation2 + $0x550] sm:$0xff]
  %v6912 = vld [vmem:[#allocation2 + $0x558] sm:$0xff]
  %v6913 = vld [vmem:[#allocation2 + $0x560] sm:$0xff]
  %v6914 = vld [vmem:[#allocation2 + $0x568] sm:$0xff]
  %v6915 = vld [vmem:[#allocation2 + $0x570] sm:$0xff]
  %v6916 = vld [vmem:[#allocation2 + $0x578] sm:$0xff]
  %v6917 = vld [vmem:[#allocation2 + $0x580] sm:$0xff]
  %v6918 = vld [vmem:[#allocation2 + $0x588] sm:$0xff]
  %v6919 = vld [vmem:[#allocation2 + $0x590] sm:$0xff]
  %v6920 = vld [vmem:[#allocation2 + $0x598] sm:$0xff]
  %v6921 = vld [vmem:[#allocation2 + $0x5a0] sm:$0x33]
  %v6922 = vld [vmem:[#allocation2 + $0x5a8] sm:$0x33]
  %v6923 = vld [vmem:[#allocation2 + $0x5b0] sm:$0x33]
  %v6924 = vld [vmem:[%s2] sm:$0xff]
  %v6925 = vld [vmem:[%s2 + $0x8] sm:$0xff]
  %6927 = vset.pattern.permute.xlu0 0
  %6928 = vperm.xlu0 %6927, %v6924
  %v6929 = vpop.permute.xlu0 %6928
  %6932 = vset.pattern.permute.xlu0 0
  %6933 = vperm.xlu0 %6932, %v6925
  %v6934 = vpop.permute.xlu0 %6933
  %v6940 = vunpack.c.l.b16 %v6737
  %v6941 = vunpack.c.h.b16 %v6737
  %v6942 = vunpack.c.l.b16 %v6738
  %v6943 = vunpack.c.h.b16 %v6738
  %v6944 = vunpack.c.l.b16 %v6739
  %v6945 = vunpack.c.h.b16 %v6739
  %v6946 = vunpack.c.l.b16 %v6740
  %v6947 = vunpack.c.h.b16 %v6740
  %v6948 = vpack.c.b16 %v6944, %v6940
  %v6949 = vpack.c.b16 %v6945, %v6941
  %v6950 = vpack.c.b16 %v6946, %v6942
  %v6951 = vpack.c.b16 %v6947, %v6943
  %v7138 = vunpack.c.l.b16 %v6741
  %v7139 = vunpack.c.h.b16 %v6741
  %v7140 = vunpack.c.l.b16 %v6742
  %v7141 = vunpack.c.h.b16 %v6742
  %v7142 = vunpack.c.l.b16 %v6743
  %v7143 = vunpack.c.h.b16 %v6743
  %v7144 = vunpack.c.l.b16 %v6744
  %v7145 = vunpack.c.h.b16 %v6744
  %v7146 = vunpack.c.l.b16 %v6745
  %v7147 = vunpack.c.h.b16 %v6745
  %v7148 = vunpack.c.l.b16 %v6746
  %v7149 = vunpack.c.h.b16 %v6746
  %v7150 = vunpack.c.l.b16 %v6747
  %v7151 = vunpack.c.h.b16 %v6747
  %v7152 = vunpack.c.l.b16 %v6748
  %v7153 = vunpack.c.h.b16 %v6748
  %v7154 = vunpack.c.l.b16 %v6749
  %v7155 = vunpack.c.h.b16 %v6749
  %v7156 = vunpack.c.l.b16 %v6750
  %v7157 = vunpack.c.h.b16 %v6750
  %v7158 = vunpack.c.l.b16 %v6751
  %v7159 = vunpack.c.h.b16 %v6751
  %v7160 = vunpack.c.l.b16 %v6752
  %v7161 = vunpack.c.h.b16 %v6752
  %v7162 = vunpack.c.l.b16 %v6753
  %v7163 = vunpack.c.h.b16 %v6753
  %v7164 = vunpack.c.l.b16 %v6754
  %v7165 = vunpack.c.h.b16 %v6754
  %v7166 = vunpack.c.l.b16 %v6755
  %v7167 = vunpack.c.h.b16 %v6755
  %v7168 = vunpack.c.l.b16 %v6756
  %v7169 = vunpack.c.h.b16 %v6756
  %v7170 = vunpack.c.l.b16 %v6757
  %v7171 = vunpack.c.h.b16 %v6757
  %v7172 = vunpack.c.l.b16 %v6758
  %v7173 = vunpack.c.h.b16 %v6758
  %v7174 = vunpack.c.l.b16 %v6759
  %v7175 = vunpack.c.h.b16 %v6759
  %v7176 = vunpack.c.l.b16 %v6760
  %v7177 = vunpack.c.h.b16 %v6760
  %v7178 = vunpack.c.l.b16 %v6761
  %v7179 = vunpack.c.h.b16 %v6761
  %v7180 = vunpack.c.l.b16 %v6762
  %v7181 = vunpack.c.h.b16 %v6762
  %v7182 = vunpack.c.l.b16 %v6763
  %v7183 = vunpack.c.h.b16 %v6763
  %v7184 = vunpack.c.l.b16 %v6764
  %v7185 = vunpack.c.h.b16 %v6764
  %v7186 = vunpack.c.l.b16 %v6765
  %v7187 = vunpack.c.h.b16 %v6765
  %v7188 = vunpack.c.l.b16 %v6766
  %v7189 = vunpack.c.h.b16 %v6766
  %v7190 = vunpack.c.l.b16 %v6767
  %v7191 = vunpack.c.h.b16 %v6767
  %v7192 = vunpack.c.l.b16 %v6768
  %v7193 = vunpack.c.h.b16 %v6768
  %v7194 = vunpack.c.l.b16 %v6769
  %v7195 = vunpack.c.h.b16 %v6769
  %v7196 = vunpack.c.l.b16 %v6770
  %v7197 = vunpack.c.h.b16 %v6770
  %v7198 = vunpack.c.l.b16 %v6771
  %v7199 = vunpack.c.h.b16 %v6771
  %v7200 = vunpack.c.l.b16 %v6772
  %v7201 = vunpack.c.h.b16 %v6772
  %v7202 = vunpack.c.l.b16 %v6773
  %v7203 = vunpack.c.h.b16 %v6773
  %v7204 = vunpack.c.l.b16 %v6774
  %v7205 = vunpack.c.h.b16 %v6774
  %v7206 = vunpack.c.l.b16 %v6775
  %v7207 = vunpack.c.h.b16 %v6775
  %v7208 = vunpack.c.l.b16 %v6776
  %v7209 = vunpack.c.h.b16 %v6776
  %v7210 = vunpack.c.l.b16 %v6777
  %v7211 = vunpack.c.h.b16 %v6777
  %v7212 = vunpack.c.l.b16 %v6778
  %v7213 = vunpack.c.h.b16 %v6778
  %v7214 = vunpack.c.l.b16 %v6779
  %v7215 = vunpack.c.h.b16 %v6779
  %v7216 = vunpack.c.l.b16 %v6780
  %v7217 = vunpack.c.h.b16 %v6780
  %v7218 = vunpack.c.l.b16 %v6781
  %v7219 = vunpack.c.h.b16 %v6781
  %v7220 = vunpack.c.l.b16 %v6782
  %v7221 = vunpack.c.h.b16 %v6782
  %v7222 = vunpack.c.l.b16 %v6783
  %v7223 = vunpack.c.h.b16 %v6783
  %v7224 = vunpack.c.l.b16 %v6784
  %v7225 = vunpack.c.h.b16 %v6784
  %v7226 = vunpack.c.l.b16 %v6785
  %v7227 = vunpack.c.h.b16 %v6785
  %v7228 = vunpack.c.l.b16 %v6786
  %v7229 = vunpack.c.h.b16 %v6786
  %v7230 = vunpack.c.l.b16 %v6787
  %v7231 = vunpack.c.h.b16 %v6787
  %v7232 = vunpack.c.l.b16 %v6788
  %v7233 = vunpack.c.h.b16 %v6788
  %v7234 = vunpack.c.l.b16 %v6789
  %v7235 = vunpack.c.h.b16 %v6789
  %v7236 = vunpack.c.l.b16 %v6790
  %v7237 = vunpack.c.h.b16 %v6790
  %v7238 = vunpack.c.l.b16 %v6791
  %v7239 = vunpack.c.h.b16 %v6791
  %v7240 = vunpack.c.l.b16 %v6792
  %v7241 = vunpack.c.h.b16 %v6792
  %v7242 = vunpack.c.l.b16 %v6793
  %v7243 = vunpack.c.h.b16 %v6793
  %v7244 = vunpack.c.l.b16 %v6794
  %v7245 = vunpack.c.h.b16 %v6794
  %v7246 = vunpack.c.l.b16 %v6795
  %v7247 = vunpack.c.h.b16 %v6795
  %v7248 = vunpack.c.l.b16 %v6796
  %v7249 = vunpack.c.h.b16 %v6796
  %v7250 = vunpack.c.l.b16 %v6797
  %v7251 = vunpack.c.h.b16 %v6797
  %v7252 = vunpack.c.l.b16 %v6798
  %v7253 = vunpack.c.h.b16 %v6798
  %v7254 = vunpack.c.l.b16 %v6799
  %v7255 = vunpack.c.h.b16 %v6799
  %v7256 = vunpack.c.l.b16 %v6800
  %v7257 = vunpack.c.h.b16 %v6800
  %v7258 = vunpack.c.l.b16 %v6801
  %v7259 = vunpack.c.h.b16 %v6801
  %v7260 = vunpack.c.l.b16 %v6802
  %v7261 = vunpack.c.h.b16 %v6802
  %v7262 = vunpack.c.l.b16 %v6803
  %v7263 = vunpack.c.h.b16 %v6803
  %v7264 = vunpack.c.l.b16 %v6804
  %v7265 = vunpack.c.h.b16 %v6804
  %v7266 = vunpack.c.l.b16 %v6805
  %v7267 = vunpack.c.h.b16 %v6805
  %v7268 = vunpack.c.l.b16 %v6806
  %v7269 = vunpack.c.h.b16 %v6806
  %v7270 = vunpack.c.l.b16 %v6807
  %v7271 = vunpack.c.h.b16 %v6807
  %v7272 = vunpack.c.l.b16 %v6808
  %v7273 = vunpack.c.h.b16 %v6808
  %v7274 = vunpack.c.l.b16 %v6809
  %v7275 = vunpack.c.h.b16 %v6809
  %v7276 = vunpack.c.l.b16 %v6810
  %v7277 = vunpack.c.h.b16 %v6810
  %v7278 = vunpack.c.l.b16 %v6811
  %v7279 = vunpack.c.h.b16 %v6811
  %v7280 = vunpack.c.l.b16 %v6812
  %v7281 = vunpack.c.h.b16 %v6812
  %v7282 = vunpack.c.l.b16 %v6813
  %v7283 = vunpack.c.h.b16 %v6813
  %v7284 = vunpack.c.l.b16 %v6814
  %v7285 = vunpack.c.h.b16 %v6814
  %v7286 = vunpack.c.l.b16 %v6815
  %v7287 = vunpack.c.h.b16 %v6815
  %v7288 = vunpack.c.l.b16 %v6816
  %v7289 = vunpack.c.h.b16 %v6816
  %v7290 = vunpack.c.l.b16 %v6817
  %v7291 = vunpack.c.h.b16 %v6817
  %v7292 = vunpack.c.l.b16 %v6818
  %v7293 = vunpack.c.h.b16 %v6818
  %v7294 = vunpack.c.l.b16 %v6819
  %v7295 = vunpack.c.h.b16 %v6819
  %v7296 = vunpack.c.l.b16 %v6820
  %v7297 = vunpack.c.h.b16 %v6820
  %v7298 = vunpack.c.l.b16 %v6821
  %v7299 = vunpack.c.h.b16 %v6821
  %v7300 = vunpack.c.l.b16 %v6822
  %v7301 = vunpack.c.h.b16 %v6822
  %v7302 = vunpack.c.l.b16 %v6823
  %v7303 = vunpack.c.h.b16 %v6823
  %v7304 = vunpack.c.l.b16 %v6824
  %v7305 = vunpack.c.h.b16 %v6824
  %v7306 = vunpack.c.l.b16 %v6825
  %v7307 = vunpack.c.h.b16 %v6825
  %v7308 = vunpack.c.l.b16 %v6826
  %v7309 = vunpack.c.h.b16 %v6826
  %v7310 = vunpack.c.l.b16 %v6827
  %v7311 = vunpack.c.h.b16 %v6827
  %v7312 = vunpack.c.l.b16 %v6828
  %v7313 = vunpack.c.h.b16 %v6828
  %v7314 = vunpack.c.l.b16 %v6829
  %v7315 = vunpack.c.h.b16 %v6829
  %v7316 = vunpack.c.l.b16 %v6830
  %v7317 = vunpack.c.h.b16 %v6830
  %v7318 = vunpack.c.l.b16 %v6831
  %v7319 = vunpack.c.h.b16 %v6831
  %v7320 = vunpack.c.l.b16 %v6832
  %v7321 = vunpack.c.h.b16 %v6832
  %v7322 = vunpack.c.l.b16 %v6833
  %v7323 = vunpack.c.h.b16 %v6833
  %v7324 = vunpack.c.l.b16 %v6834
  %v7325 = vunpack.c.h.b16 %v6834
  %v7326 = vunpack.c.l.b16 %v6835
  %v7327 = vunpack.c.h.b16 %v6835
  %v7328 = vunpack.c.l.b16 %v6836
  %v7329 = vunpack.c.h.b16 %v6836
  %v7330 = vunpack.c.l.b16 %v6837
  %v7331 = vunpack.c.h.b16 %v6837
  %v7332 = vunpack.c.l.b16 %v6838
  %v7333 = vunpack.c.h.b16 %v6838
  %v7334 = vunpack.c.l.b16 %v6839
  %v7335 = vunpack.c.h.b16 %v6839
  %v7336 = vunpack.c.l.b16 %v6840
  %v7337 = vunpack.c.h.b16 %v6840
  %v7338 = vunpack.c.l.b16 %v6841
  %v7339 = vunpack.c.h.b16 %v6841
  %v7340 = vunpack.c.l.b16 %v6842
  %v7341 = vunpack.c.h.b16 %v6842
  %v7342 = vunpack.c.l.b16 %v6843
  %v7343 = vunpack.c.h.b16 %v6843
  %v7344 = vunpack.c.l.b16 %v6844
  %v7345 = vunpack.c.h.b16 %v6844
  %v7346 = vunpack.c.l.b16 %v6845
  %v7347 = vunpack.c.h.b16 %v6845
  %v7348 = vunpack.c.l.b16 %v6846
  %v7349 = vunpack.c.h.b16 %v6846
  %v7350 = vunpack.c.l.b16 %v6847
  %v7351 = vunpack.c.h.b16 %v6847
  %v7352 = vunpack.c.l.b16 %v6848
  %v7353 = vunpack.c.h.b16 %v6848
  %v7354 = vunpack.c.l.b16 %v6849
  %v7355 = vunpack.c.h.b16 %v6849
  %v7356 = vunpack.c.l.b16 %v6850
  %v7357 = vunpack.c.h.b16 %v6850
  %v7358 = vunpack.c.l.b16 %v6851
  %v7359 = vunpack.c.h.b16 %v6851
  %v7360 = vunpack.c.l.b16 %v6852
  %v7361 = vunpack.c.h.b16 %v6852
  %v7362 = vunpack.c.l.b16 %v6853
  %v7363 = vunpack.c.h.b16 %v6853
  %v7364 = vunpack.c.l.b16 %v6854
  %v7365 = vunpack.c.h.b16 %v6854
  %v7366 = vunpack.c.l.b16 %v6855
  %v7367 = vunpack.c.h.b16 %v6855
  %v7368 = vunpack.c.l.b16 %v6856
  %v7369 = vunpack.c.h.b16 %v6856
  %v7370 = vunpack.c.l.b16 %v6857
  %v7371 = vunpack.c.h.b16 %v6857
  %v7372 = vunpack.c.l.b16 %v6858
  %v7373 = vunpack.c.h.b16 %v6858
  %v7374 = vunpack.c.l.b16 %v6859
  %v7375 = vunpack.c.h.b16 %v6859
  %v7376 = vunpack.c.l.b16 %v6860
  %v7377 = vunpack.c.h.b16 %v6860
  %v7378 = vunpack.c.l.b16 %v6861
  %v7379 = vunpack.c.h.b16 %v6861
  %v7380 = vunpack.c.l.b16 %v6862
  %v7381 = vunpack.c.h.b16 %v6862
  %v7382 = vunpack.c.l.b16 %v6863
  %v7383 = vunpack.c.h.b16 %v6863
  %v7384 = vunpack.c.l.b16 %v6864
  %v7385 = vunpack.c.h.b16 %v6864
  %v7386 = vunpack.c.l.b16 %v6865
  %v7387 = vunpack.c.h.b16 %v6865
  %v7388 = vunpack.c.l.b16 %v6866
  %v7389 = vunpack.c.h.b16 %v6866
  %v7390 = vunpack.c.l.b16 %v6867
  %v7391 = vunpack.c.h.b16 %v6867
  %v7392 = vunpack.c.l.b16 %v6868
  %v7393 = vunpack.c.h.b16 %v6868
  %v7394 = vunpack.c.l.b16 %v6869
  %v7395 = vunpack.c.h.b16 %v6869
  %v7396 = vunpack.c.l.b16 %v6870
  %v7397 = vunpack.c.h.b16 %v6870
  %v7398 = vunpack.c.l.b16 %v6871
  %v7399 = vunpack.c.h.b16 %v6871
  %v7400 = vunpack.c.l.b16 %v6872
  %v7401 = vunpack.c.h.b16 %v6872
  %v7402 = vunpack.c.l.b16 %v6873
  %v7403 = vunpack.c.h.b16 %v6873
  %v7404 = vunpack.c.l.b16 %v6874
  %v7405 = vunpack.c.h.b16 %v6874
  %v7406 = vunpack.c.l.b16 %v6875
  %v7407 = vunpack.c.h.b16 %v6875
  %v7408 = vunpack.c.l.b16 %v6876
  %v7409 = vunpack.c.h.b16 %v6876
  %v7410 = vunpack.c.l.b16 %v6877
  %v7411 = vunpack.c.h.b16 %v6877
  %v7412 = vunpack.c.l.b16 %v6878
  %v7413 = vunpack.c.h.b16 %v6878
  %v7414 = vunpack.c.l.b16 %v6879
  %v7415 = vunpack.c.h.b16 %v6879
  %v7416 = vunpack.c.l.b16 %v6880
  %v7417 = vunpack.c.h.b16 %v6880
  %v7418 = vunpack.c.l.b16 %v6881
  %v7419 = vunpack.c.h.b16 %v6881
  %v7420 = vunpack.c.l.b16 %v6882
  %v7421 = vunpack.c.h.b16 %v6882
  %v7422 = vunpack.c.l.b16 %v6883
  %v7423 = vunpack.c.h.b16 %v6883
  %v7424 = vunpack.c.l.b16 %v6884
  %v7425 = vunpack.c.h.b16 %v6884
  %v7426 = vunpack.c.l.b16 %v6885
  %v7427 = vunpack.c.h.b16 %v6885
  %v7428 = vunpack.c.l.b16 %v6886
  %v7429 = vunpack.c.h.b16 %v6886
  %v7430 = vunpack.c.l.b16 %v6887
  %v7431 = vunpack.c.h.b16 %v6887
  %v7432 = vunpack.c.l.b16 %v6888
  %v7433 = vunpack.c.h.b16 %v6888
  %v7434 = vunpack.c.l.b16 %v6889
  %v7435 = vunpack.c.h.b16 %v6889
  %v7436 = vunpack.c.l.b16 %v6890
  %v7437 = vunpack.c.h.b16 %v6890
  %v7438 = vunpack.c.l.b16 %v6891
  %v7439 = vunpack.c.h.b16 %v6891
  %v7440 = vunpack.c.l.b16 %v6892
  %v7441 = vunpack.c.h.b16 %v6892
  %v7442 = vunpack.c.l.b16 %v6893
  %v7443 = vunpack.c.h.b16 %v6893
  %v7444 = vunpack.c.l.b16 %v6894
  %v7445 = vunpack.c.h.b16 %v6894
  %v7446 = vunpack.c.l.b16 %v6895
  %v7447 = vunpack.c.h.b16 %v6895
  %v7448 = vunpack.c.l.b16 %v6896
  %v7449 = vunpack.c.h.b16 %v6896
  %v7450 = vunpack.c.l.b16 %v6897
  %v7451 = vunpack.c.h.b16 %v6897
  %v7452 = vunpack.c.l.b16 %v6898
  %v7453 = vunpack.c.h.b16 %v6898
  %v7454 = vunpack.c.l.b16 %v6899
  %v7455 = vunpack.c.h.b16 %v6899
  %v7456 = vunpack.c.l.b16 %v6900
  %v7457 = vunpack.c.h.b16 %v6900
  %v7458 = vunpack.c.l.b16 %v6901
  %v7459 = vunpack.c.h.b16 %v6901
  %v7460 = vunpack.c.l.b16 %v6902
  %v7461 = vunpack.c.h.b16 %v6902
  %v7462 = vunpack.c.l.b16 %v6903
  %v7463 = vunpack.c.h.b16 %v6903
  %v7464 = vunpack.c.l.b16 %v6904
  %v7465 = vunpack.c.h.b16 %v6904
  %v7466 = vunpack.c.l.b16 %v6905
  %v7467 = vunpack.c.h.b16 %v6905
  %v7468 = vunpack.c.l.b16 %v6906
  %v7469 = vunpack.c.h.b16 %v6906
  %v7470 = vunpack.c.l.b16 %v6907
  %v7471 = vunpack.c.h.b16 %v6907
  %v7472 = vunpack.c.l.b16 %v6908
  %v7473 = vunpack.c.h.b16 %v6908
  %v7474 = vunpack.c.l.b16 %v6909
  %v7475 = vunpack.c.h.b16 %v6909
  %v7476 = vunpack.c.l.b16 %v6910
  %v7477 = vunpack.c.h.b16 %v6910
  %v7478 = vunpack.c.l.b16 %v6911
  %v7479 = vunpack.c.h.b16 %v6911
  %v7480 = vunpack.c.l.b16 %v6912
  %v7481 = vunpack.c.h.b16 %v6912
  %v7482 = vunpack.c.l.b16 %v6913
  %v7483 = vunpack.c.h.b16 %v6913
  %v7484 = vunpack.c.l.b16 %v6914
  %v7485 = vunpack.c.h.b16 %v6914
  %v7486 = vunpack.c.l.b16 %v6915
  %v7487 = vunpack.c.h.b16 %v6915
  %v7488 = vunpack.c.l.b16 %v6916
  %v7489 = vunpack.c.h.b16 %v6916
  %v7490 = vunpack.c.l.b16 %v6917
  %v7491 = vunpack.c.h.b16 %v6917
  %v7492 = vunpack.c.l.b16 %v6918
  %v7493 = vunpack.c.h.b16 %v6918
  %v7494 = vunpack.c.l.b16 %v6919
  %v7495 = vunpack.c.h.b16 %v6919
  %v7496 = vunpack.c.l.b16 %v6920
  %v7497 = vunpack.c.h.b16 %v6920
  %v7498 = vunpack.c.l.b16 %v6921
  %v7499 = vunpack.c.h.b16 %v6921
  %v7500 = vunpack.c.l.b16 %v6922
  %v7501 = vunpack.c.h.b16 %v6922
  %v7502 = vunpack.c.l.b16 %v6923
  %v7503 = vunpack.c.h.b16 %v6923
  %v7504 = vpack.c.b16 %v7144, %v7138
  %v7505 = vpack.c.b16 %v7145, %v7139
  %v7506 = vpack.c.b16 %v7146, %v7140
  %v7507 = vpack.c.b16 %v7147, %v7141
  %v7508 = vpack.c.b16 %v7148, %v7142
  %v7509 = vpack.c.b16 %v7149, %v7143
  %v7510 = vpack.c.b16 %v7156, %v7150
  %v7511 = vpack.c.b16 %v7157, %v7151
  %v7512 = vpack.c.b16 %v7158, %v7152
  %v7513 = vpack.c.b16 %v7159, %v7153
  %v7514 = vpack.c.b16 %v7160, %v7154
  %v7515 = vpack.c.b16 %v7161, %v7155
  %v7516 = vpack.c.b16 %v7168, %v7162
  %v7517 = vpack.c.b16 %v7169, %v7163
  %v7518 = vpack.c.b16 %v7170, %v7164
  %v7519 = vpack.c.b16 %v7171, %v7165
  %v7520 = vpack.c.b16 %v7172, %v7166
  %v7521 = vpack.c.b16 %v7173, %v7167
  %v7522 = vpack.c.b16 %v7180, %v7174
  %v7523 = vpack.c.b16 %v7181, %v7175
  %v7524 = vpack.c.b16 %v7182, %v7176
  %v7525 = vpack.c.b16 %v7183, %v7177
  %v7526 = vpack.c.b16 %v7184, %v7178
  %v7527 = vpack.c.b16 %v7185, %v7179
  %v7528 = vpack.c.b16 %v7192, %v7186
  %v7529 = vpack.c.b16 %v7193, %v7187
  %v7530 = vpack.c.b16 %v7194, %v7188
  %v7531 = vpack.c.b16 %v7195, %v7189
  %v7532 = vpack.c.b16 %v7196, %v7190
  %v7533 = vpack.c.b16 %v7197, %v7191
  %v7534 = vpack.c.b16 %v7204, %v7198
  %v7535 = vpack.c.b16 %v7205, %v7199
  %v7536 = vpack.c.b16 %v7206, %v7200
  %v7537 = vpack.c.b16 %v7207, %v7201
  %v7538 = vpack.c.b16 %v7208, %v7202
  %v7539 = vpack.c.b16 %v7209, %v7203
  %v7540 = vpack.c.b16 %v7216, %v7210
  %v7541 = vpack.c.b16 %v7217, %v7211
  %v7542 = vpack.c.b16 %v7218, %v7212
  %v7543 = vpack.c.b16 %v7219, %v7213
  %v7544 = vpack.c.b16 %v7220, %v7214
  %v7545 = vpack.c.b16 %v7221, %v7215
  %v7546 = vpack.c.b16 %v7228, %v7222
  %v7547 = vpack.c.b16 %v7229, %v7223
  %v7548 = vpack.c.b16 %v7230, %v7224
  %v7549 = vpack.c.b16 %v7231, %v7225
  %v7550 = vpack.c.b16 %v7232, %v7226
  %v7551 = vpack.c.b16 %v7233, %v7227
  %v7552 = vpack.c.b16 %v7240, %v7234
  %v7553 = vpack.c.b16 %v7241, %v7235
  %v7554 = vpack.c.b16 %v7242, %v7236
  %v7555 = vpack.c.b16 %v7243, %v7237
  %v7556 = vpack.c.b16 %v7244, %v7238
  %v7557 = vpack.c.b16 %v7245, %v7239
  %v7558 = vpack.c.b16 %v7252, %v7246
  %v7559 = vpack.c.b16 %v7253, %v7247
  %v7560 = vpack.c.b16 %v7254, %v7248
  %v7561 = vpack.c.b16 %v7255, %v7249
  %v7562 = vpack.c.b16 %v7256, %v7250
  %v7563 = vpack.c.b16 %v7257, %v7251
  %v7564 = vpack.c.b16 %v7264, %v7258
  %v7565 = vpack.c.b16 %v7265, %v7259
  %v7566 = vpack.c.b16 %v7266, %v7260
  %v7567 = vpack.c.b16 %v7267, %v7261
  %v7568 = vpack.c.b16 %v7268, %v7262
  %v7569 = vpack.c.b16 %v7269, %v7263
  %v7570 = vpack.c.b16 %v7276, %v7270
  %v7571 = vpack.c.b16 %v7277, %v7271
  %v7572 = vpack.c.b16 %v7278, %v7272
  %v7573 = vpack.c.b16 %v7279, %v7273
  %v7574 = vpack.c.b16 %v7280, %v7274
  %v7575 = vpack.c.b16 %v7281, %v7275
  %v7576 = vpack.c.b16 %v7288, %v7282
  %v7577 = vpack.c.b16 %v7289, %v7283
  %v7578 = vpack.c.b16 %v7290, %v7284
  %v7579 = vpack.c.b16 %v7291, %v7285
  %v7580 = vpack.c.b16 %v7292, %v7286
  %v7581 = vpack.c.b16 %v7293, %v7287
  %v7582 = vpack.c.b16 %v7300, %v7294
  %v7583 = vpack.c.b16 %v7301, %v7295
  %v7584 = vpack.c.b16 %v7302, %v7296
  %v7585 = vpack.c.b16 %v7303, %v7297
  %v7586 = vpack.c.b16 %v7304, %v7298
  %v7587 = vpack.c.b16 %v7305, %v7299
  %v7588 = vpack.c.b16 %v7312, %v7306
  %v7589 = vpack.c.b16 %v7313, %v7307
  %v7590 = vpack.c.b16 %v7314, %v7308
  %v7591 = vpack.c.b16 %v7315, %v7309
  %v7592 = vpack.c.b16 %v7316, %v7310
  %v7593 = vpack.c.b16 %v7317, %v7311
  %v7594 = vpack.c.b16 %v7324, %v7318
  %v7595 = vpack.c.b16 %v7325, %v7319
  %v7596 = vpack.c.b16 %v7326, %v7320
  %v7597 = vpack.c.b16 %v7327, %v7321
  %v7598 = vpack.c.b16 %v7328, %v7322
  %v7599 = vpack.c.b16 %v7329, %v7323
  %v7600 = vpack.c.b16 %v7336, %v7330
  %v7601 = vpack.c.b16 %v7337, %v7331
  %v7602 = vpack.c.b16 %v7338, %v7332
  %v7603 = vpack.c.b16 %v7339, %v7333
  %v7604 = vpack.c.b16 %v7340, %v7334
  %v7605 = vpack.c.b16 %v7341, %v7335
  %v7606 = vpack.c.b16 %v7348, %v7342
  %v7607 = vpack.c.b16 %v7349, %v7343
  %v7608 = vpack.c.b16 %v7350, %v7344
  %v7609 = vpack.c.b16 %v7351, %v7345
  %v7610 = vpack.c.b16 %v7352, %v7346
  %v7611 = vpack.c.b16 %v7353, %v7347
  %v7612 = vpack.c.b16 %v7360, %v7354
  %v7613 = vpack.c.b16 %v7361, %v7355
  %v7614 = vpack.c.b16 %v7362, %v7356
  %v7615 = vpack.c.b16 %v7363, %v7357
  %v7616 = vpack.c.b16 %v7364, %v7358
  %v7617 = vpack.c.b16 %v7365, %v7359
  %v7618 = vpack.c.b16 %v7372, %v7366
  %v7619 = vpack.c.b16 %v7373, %v7367
  %v7620 = vpack.c.b16 %v7374, %v7368
  %v7621 = vpack.c.b16 %v7375, %v7369
  %v7622 = vpack.c.b16 %v7376, %v7370
  %v7623 = vpack.c.b16 %v7377, %v7371
  %v7624 = vpack.c.b16 %v7384, %v7378
  %v7625 = vpack.c.b16 %v7385, %v7379
  %v7626 = vpack.c.b16 %v7386, %v7380
  %v7627 = vpack.c.b16 %v7387, %v7381
  %v7628 = vpack.c.b16 %v7388, %v7382
  %v7629 = vpack.c.b16 %v7389, %v7383
  %v7630 = vpack.c.b16 %v7396, %v7390
  %v7631 = vpack.c.b16 %v7397, %v7391
  %v7632 = vpack.c.b16 %v7398, %v7392
  %v7633 = vpack.c.b16 %v7399, %v7393
  %v7634 = vpack.c.b16 %v7400, %v7394
  %v7635 = vpack.c.b16 %v7401, %v7395
  %v7636 = vpack.c.b16 %v7408, %v7402
  %v7637 = vpack.c.b16 %v7409, %v7403
  %v7638 = vpack.c.b16 %v7410, %v7404
  %v7639 = vpack.c.b16 %v7411, %v7405
  %v7640 = vpack.c.b16 %v7412, %v7406
  %v7641 = vpack.c.b16 %v7413, %v7407
  %v7642 = vpack.c.b16 %v7420, %v7414
  %v7643 = vpack.c.b16 %v7421, %v7415
  %v7644 = vpack.c.b16 %v7422, %v7416
  %v7645 = vpack.c.b16 %v7423, %v7417
  %v7646 = vpack.c.b16 %v7424, %v7418
  %v7647 = vpack.c.b16 %v7425, %v7419
  %v7648 = vpack.c.b16 %v7432, %v7426
  %v7649 = vpack.c.b16 %v7433, %v7427
  %v7650 = vpack.c.b16 %v7434, %v7428
  %v7651 = vpack.c.b16 %v7435, %v7429
  %v7652 = vpack.c.b16 %v7436, %v7430
  %v7653 = vpack.c.b16 %v7437, %v7431
  %v7654 = vpack.c.b16 %v7444, %v7438
  %v7655 = vpack.c.b16 %v7445, %v7439
  %v7656 = vpack.c.b16 %v7446, %v7440
  %v7657 = vpack.c.b16 %v7447, %v7441
  %v7658 = vpack.c.b16 %v7448, %v7442
  %v7659 = vpack.c.b16 %v7449, %v7443
  %v7660 = vpack.c.b16 %v7456, %v7450
  %v7661 = vpack.c.b16 %v7457, %v7451
  %v7662 = vpack.c.b16 %v7458, %v7452
  %v7663 = vpack.c.b16 %v7459, %v7453
  %v7664 = vpack.c.b16 %v7460, %v7454
  %v7665 = vpack.c.b16 %v7461, %v7455
  %v7666 = vpack.c.b16 %v7468, %v7462
  %v7667 = vpack.c.b16 %v7469, %v7463
  %v7668 = vpack.c.b16 %v7470, %v7464
  %v7669 = vpack.c.b16 %v7471, %v7465
  %v7670 = vpack.c.b16 %v7472, %v7466
  %v7671 = vpack.c.b16 %v7473, %v7467
  %v7672 = vpack.c.b16 %v7480, %v7474
  %v7673 = vpack.c.b16 %v7481, %v7475
  %v7674 = vpack.c.b16 %v7482, %v7476
  %v7675 = vpack.c.b16 %v7483, %v7477
  %v7676 = vpack.c.b16 %v7484, %v7478
  %v7677 = vpack.c.b16 %v7485, %v7479
  %v7678 = vpack.c.b16 %v7492, %v7486
  %v7679 = vpack.c.b16 %v7493, %v7487
  %v7680 = vpack.c.b16 %v7494, %v7488
  %v7681 = vpack.c.b16 %v7495, %v7489
  %v7682 = vpack.c.b16 %v7496, %v7490
  %v7683 = vpack.c.b16 %v7497, %v7491
  %v7684 = vpack.c.b16 %v7498, %v7498
  %v7685 = vpack.c.b16 %v7499, %v7499
  %v7686 = vpack.c.b16 %v7500, %v7500
  %v7687 = vpack.c.b16 %v7501, %v7501
  %v7688 = vpack.c.b16 %v7502, %v7502
  %v7689 = vpack.c.b16 %v7503, %v7503
  %vm7870 = vcmask 818176
  %v7872 = vsel %vm7870, %v6951, 0
  %v7875 = vsel %vm67, %v7684, 0
  %v7878 = vsel %vm67, %v7685, 0
  %v7881 = vsel %vm67, %v7686, 0
  %v7884 = vsel %vm67, %v7687, 0
  %v7887 = vsel %vm67, %v7688, 0
  %v7890 = vsel %vm67, %v7689, 0
  %7892 = vmatprep.subr.bf16.mxu0 %v7505
  %7893 = vmatpush1.bf16.msra.mxu0 %v7504
  %7894 = vmatprep.subr.bf16.mxu0 %v7511
  %7895 = vmatpush1.bf16.msra.mxu0 %v7510
  %7896 = vmatprep.subr.bf16.mxu0 %v7517
  %7897 = vmatpush1.bf16.msra.mxu0 %v7516
  %7898 = vmatprep.subr.bf16.mxu0 %v7523
  %7899 = vmatpush1.bf16.msra.mxu0 %v7522
  %7900 = vmatprep.subr.bf16.mxu0 %v7529
  %7901 = vmatpush1.bf16.msra.mxu0 %v7528
  %7902 = vmatprep.subr.bf16.mxu0 %v7535
  %7903 = vmatpush1.bf16.msra.mxu0 %v7534
  %7904 = vmatprep.subr.bf16.mxu0 %v7541
  %7905 = vmatpush1.bf16.msra.mxu0 %v7540
  %7906 = vmatprep.subr.bf16.mxu0 %v7547
  %7907 = vmatpush1.bf16.msra.mxu0 %v7546
  %7908 = vmatprep.subr.bf16.mxu0 %v7553
  %7909 = vmatpush1.bf16.msra.mxu0 %v7552
  %7910 = vmatprep.subr.bf16.mxu0 %v7559
  %7911 = vmatpush1.bf16.msra.mxu0 %v7558
  %7912 = vmatprep.subr.bf16.mxu0 %v7565
  %7913 = vmatpush1.bf16.msra.mxu0 %v7564
  %7914 = vmatprep.subr.bf16.mxu0 %v7571
  %7915 = vmatpush1.bf16.msra.mxu0 %v7570
  %7916 = vmatprep.subr.bf16.mxu0 %v7577
  %7917 = vmatpush1.bf16.msra.mxu0 %v7576
  %7918 = vmatprep.subr.bf16.mxu0 %v7583
  %7919 = vmatpush1.bf16.msra.mxu0 %v7582
  %7920 = vmatprep.subr.bf16.mxu0 %v7589
  %7921 = vmatpush1.bf16.msra.mxu0 %v7588
  %7922 = vmatprep.subr.bf16.mxu0 %v7595
  %7923 = vmatpush1.bf16.msra.mxu0 %v7594
  %7924 = vmatprep.mubr.bf16.mxu0 %v6949
  %7925 = vmatmul.mubr.bf16.gmra.mrb[0].mxu0 %v6948
  %v7926 = vpop.f32.mrb[0].mxu0
  %v7927 = vadd.f32 %v6929, %v7926
  %v7928 = vpop.f32.mrb[0].mxu0
  %v7929 = vadd.f32 %v6929, %v7928
  %v7930 = vpop.f32.mrb[0].mxu0
  %v7931 = vadd.f32 %v6934, %v7930
  %v7932 = vpop.f32.mrb[0].mxu0
  %v7933 = vadd.f32 %v6934, %v7932
  %7934 = vdwg.mxu0
  %7935 = vmatprep.subr.bf16.mxu0 %v7601
  %7936 = vmatpush1.bf16.msra.mxu0 %v7600
  %7937 = vmatprep.subr.bf16.mxu0 %v7607
  %7938 = vmatpush1.bf16.msra.mxu0 %v7606
  %7939 = vmatprep.subr.bf16.mxu0 %v7613
  %7940 = vmatpush1.bf16.msra.mxu0 %v7612
  %7941 = vmatprep.subr.bf16.mxu0 %v7619
  %7942 = vmatpush1.bf16.msra.mxu0 %v7618
  %7943 = vmatprep.subr.bf16.mxu0 %v7625
  %7944 = vmatpush1.bf16.msra.mxu0 %v7624
  %7945 = vmatprep.subr.bf16.mxu0 %v7631
  %7946 = vmatpush1.bf16.msra.mxu0 %v7630
  %7947 = vmatprep.subr.bf16.mxu0 %v7637
  %7948 = vmatpush1.bf16.msra.mxu0 %v7636
  %7949 = vmatprep.subr.bf16.mxu0 %v7643
  %7950 = vmatpush1.bf16.msra.mxu0 %v7642
  %7951 = vmatprep.subr.bf16.mxu0 %v7649
  %7952 = vmatpush1.bf16.msra.mxu0 %v7648
  %7953 = vmatprep.subr.bf16.mxu0 %v7655
  %7954 = vmatpush1.bf16.msra.mxu0 %v7654
  %7955 = vmatprep.subr.bf16.mxu0 %v7661
  %7956 = vmatpush1.bf16.msra.mxu0 %v7660
  %7957 = vmatprep.subr.bf16.mxu0 %v7667
  %7958 = vmatpush1.bf16.msra.mxu0 %v7666
  %7959 = vmatprep.subr.bf16.mxu0 %v7673
  %7960 = vmatpush1.bf16.msra.mxu0 %v7672
  %7961 = vmatprep.subr.bf16.mxu0 %v7679
  %7962 = vmatpush1.bf16.msra.mxu0 %v7678
  %7963 = vmatprep.subr.bf16.mxu0 %v7878
  %7964 = vmatpush1.bf16.msra.mxu0 %v7875
  %7965 = vmatprep.subr.bf16.mxu0 0
  %7966 = vmatpush1.bf16.msra.mxu0 0
  %7967 = vmatprep.mubr.bf16.mxu0 %v7872
  %7968 = vmatmul.mubr.bf16.gmra.mrb[0].mxu0 %v6950
  %v7969 = vpop.f32.mrb[0].mxu0
  %v7970 = vadd.f32 %v7927, %v7969
  %v7971 = vpop.f32.mrb[0].mxu0
  %v7972 = vadd.f32 %v7929, %v7971
  %v7973 = vpop.f32.mrb[0].mxu0
  %v7974 = vadd.f32 %v7931, %v7973
  %v7975 = vpop.f32.mrb[0].mxu0
  %v7976 = vadd.f32 %v7933, %v7975
  %7977 = vdwg.mxu0
  %7978 = vmatprep.subr.bf16.mxu0 %v7507
  %7979 = vmatpush1.bf16.msra.mxu0 %v7506
  %7980 = vmatprep.subr.bf16.mxu0 %v7513
  %7981 = vmatpush1.bf16.msra.mxu0 %v7512
  %7982 = vmatprep.subr.bf16.mxu0 %v7519
  %7983 = vmatpush1.bf16.msra.mxu0 %v7518
  %7984 = vmatprep.subr.bf16.mxu0 %v7525
  %7985 = vmatpush1.bf16.msra.mxu0 %v7524
  %7986 = vmatprep.subr.bf16.mxu0 %v7531
  %7987 = vmatpush1.bf16.msra.mxu0 %v7530
  %7988 = vmatprep.subr.bf16.mxu0 %v7537
  %7989 = vmatpush1.bf16.msra.mxu0 %v7536
  %7990 = vmatprep.subr.bf16.mxu0 %v7543
  %7991 = vmatpush1.bf16.msra.mxu0 %v7542
  %7992 = vmatprep.subr.bf16.mxu0 %v7549
  %7993 = vmatpush1.bf16.msra.mxu0 %v7548
  %7994 = vmatprep.subr.bf16.mxu0 %v7555
  %7995 = vmatpush1.bf16.msra.mxu0 %v7554
  %7996 = vmatprep.subr.bf16.mxu0 %v7561
  %7997 = vmatpush1.bf16.msra.mxu0 %v7560
  %7998 = vmatprep.subr.bf16.mxu0 %v7567
  %7999 = vmatpush1.bf16.msra.mxu0 %v7566
  %8000 = vmatprep.subr.bf16.mxu0 %v7573
  %8001 = vmatpush1.bf16.msra.mxu0 %v7572
  %8002 = vmatprep.subr.bf16.mxu0 %v7579
  %8003 = vmatpush1.bf16.msra.mxu0 %v7578
  %8004 = vmatprep.subr.bf16.mxu0 %v7585
  %8005 = vmatpush1.bf16.msra.mxu0 %v7584
  %8006 = vmatprep.subr.bf16.mxu0 %v7591
  %8007 = vmatpush1.bf16.msra.mxu0 %v7590
  %8008 = vmatprep.subr.bf16.mxu0 %v7597
  %8009 = vmatpush1.bf16.msra.mxu0 %v7596
  %8010 = vmatprep.mubr.bf16.mxu0 %v6949
  %8011 = vmatmul.mubr.bf16.gmra.mrb[0].mxu0 %v6948
  %v8012 = vpop.f32.mrb[0].mxu0
  %v8013 = vadd.f32 %v6929, %v8012
  %v8014 = vpop.f32.mrb[0].mxu0
  %v8015 = vadd.f32 %v6929, %v8014
  %v8016 = vpop.f32.mrb[0].mxu0
  %v8017 = vadd.f32 %v6934, %v8016
  %v8018 = vpop.f32.mrb[0].mxu0
  %v8019 = vadd.f32 %v6934, %v8018
  %8020 = vdwg.mxu0
  %8021 = vmatprep.subr.bf16.mxu0 %v7603
  %8022 = vmatpush1.bf16.msra.mxu0 %v7602
  %8023 = vmatprep.subr.bf16.mxu0 %v7609
  %8024 = vmatpush1.bf16.msra.mxu0 %v7608
  %8025 = vmatprep.subr.bf16.mxu0 %v7615
  %8026 = vmatpush1.bf16.msra.mxu0 %v7614
  %8027 = vmatprep.subr.bf16.mxu0 %v7621
  %8028 = vmatpush1.bf16.msra.mxu0 %v7620
  %8029 = vmatprep.subr.bf16.mxu0 %v7627
  %8030 = vmatpush1.bf16.msra.mxu0 %v7626
  %8031 = vmatprep.subr.bf16.mxu0 %v7633
  %8032 = vmatpush1.bf16.msra.mxu0 %v7632
  %8033 = vmatprep.subr.bf16.mxu0 %v7639
  %8034 = vmatpush1.bf16.msra.mxu0 %v7638
  %8035 = vmatprep.subr.bf16.mxu0 %v7645
  %8036 = vmatpush1.bf16.msra.mxu0 %v7644
  %8037 = vmatprep.subr.bf16.mxu0 %v7651
  %8038 = vmatpush1.bf16.msra.mxu0 %v7650
  %8039 = vmatprep.subr.bf16.mxu0 %v7657
  %8040 = vmatpush1.bf16.msra.mxu0 %v7656
  %8041 = vmatprep.subr.bf16.mxu0 %v7663
  %8042 = vmatpush1.bf16.msra.mxu0 %v7662
  %8043 = vmatprep.subr.bf16.mxu0 %v7669
  %8044 = vmatpush1.bf16.msra.mxu0 %v7668
  %8045 = vmatprep.subr.bf16.mxu0 %v7675
  %8046 = vmatpush1.bf16.msra.mxu0 %v7674
  %8047 = vmatprep.subr.bf16.mxu0 %v7681
  %8048 = vmatpush1.bf16.msra.mxu0 %v7680
  %8049 = vmatprep.subr.bf16.mxu0 %v7884
  %8050 = vmatpush1.bf16.msra.mxu0 %v7881
  %8051 = vmatprep.subr.bf16.mxu0 0
  %8052 = vmatpush1.bf16.msra.mxu0 0
  %8053 = vmatprep.mubr.bf16.mxu0 %v7872
  %8054 = vmatmul.mubr.bf16.gmra.mrb[0].mxu0 %v6950
  %v8055 = vpop.f32.mrb[0].mxu0
  %v8056 = vadd.f32 %v8013, %v8055
  %v8057 = vpop.f32.mrb[0].mxu0
  %v8058 = vadd.f32 %v8015, %v8057
  %v8059 = vpop.f32.mrb[0].mxu0
  %v8060 = vadd.f32 %v8017, %v8059
  %v8061 = vpop.f32.mrb[0].mxu0
  %v8062 = vadd.f32 %v8019, %v8061
  %8063 = vdwg.mxu0
  %8064 = vmatprep.subr.bf16.mxu0 %v7509
  %8065 = vmatpush1.bf16.msra.mxu0 %v7508
  %8066 = vmatprep.subr.bf16.mxu0 %v7515
  %8067 = vmatpush1.bf16.msra.mxu0 %v7514
  %8068 = vmatprep.subr.bf16.mxu0 %v7521
  %8069 = vmatpush1.bf16.msra.mxu0 %v7520
  %8070 = vmatprep.subr.bf16.mxu0 %v7527
  %8071 = vmatpush1.bf16.msra.mxu0 %v7526
  %8072 = vmatprep.subr.bf16.mxu0 %v7533
  %8073 = vmatpush1.bf16.msra.mxu0 %v7532
  %8074 = vmatprep.subr.bf16.mxu0 %v7539
  %8075 = vmatpush1.bf16.msra.mxu0 %v7538
  %8076 = vmatprep.subr.bf16.mxu0 %v7545
  %8077 = vmatpush1.bf16.msra.mxu0 %v7544
  %8078 = vmatprep.subr.bf16.mxu0 %v7551
  %8079 = vmatpush1.bf16.msra.mxu0 %v7550
  %8080 = vmatprep.subr.bf16.mxu0 %v7557
  %8081 = vmatpush1.bf16.msra.mxu0 %v7556
  %8082 = vmatprep.subr.bf16.mxu0 %v7563
  %8083 = vmatpush1.bf16.msra.mxu0 %v7562
  %8084 = vmatprep.subr.bf16.mxu0 %v7569
  %8085 = vmatpush1.bf16.msra.mxu0 %v7568
  %8086 = vmatprep.subr.bf16.mxu0 %v7575
  %8087 = vmatpush1.bf16.msra.mxu0 %v7574
  %8088 = vmatprep.subr.bf16.mxu0 %v7581
  %8089 = vmatpush1.bf16.msra.mxu0 %v7580
  %8090 = vmatprep.subr.bf16.mxu0 %v7587
  %8091 = vmatpush1.bf16.msra.mxu0 %v7586
  %8092 = vmatprep.subr.bf16.mxu0 %v7593
  %8093 = vmatpush1.bf16.msra.mxu0 %v7592
  %8094 = vmatprep.subr.bf16.mxu0 %v7599
  %8095 = vmatpush1.bf16.msra.mxu0 %v7598
  %8096 = vmatprep.mubr.bf16.mxu0 %v6949
  %8097 = vmatmul.mubr.bf16.gmra.mrb[0].mxu0 %v6948
  %v8098 = vpop.f32.mrb[0].mxu0
  %v8099 = vadd.f32 %v6929, %v8098
  %v8100 = vpop.f32.mrb[0].mxu0
  %v8101 = vadd.f32 %v6929, %v8100
  %v8102 = vpop.f32.mrb[0].mxu0
  %v8103 = vadd.f32 %v6934, %v8102
  %v8104 = vpop.f32.mrb[0].mxu0
  %v8105 = vadd.f32 %v6934, %v8104
  %8106 = vdwg.mxu0
  %8107 = vmatprep.subr.bf16.mxu0 %v7605
  %8108 = vmatpush1.bf16.msra.mxu0 %v7604
  %8109 = vmatprep.subr.bf16.mxu0 %v7611
  %8110 = vmatpush1.bf16.msra.mxu0 %v7610
  %8111 = vmatprep.subr.bf16.mxu0 %v7617
  %8112 = vmatpush1.bf16.msra.mxu0 %v7616
  %8113 = vmatprep.subr.bf16.mxu0 %v7623
  %8114 = vmatpush1.bf16.msra.mxu0 %v7622
  %8115 = vmatprep.subr.bf16.mxu0 %v7629
  %8116 = vmatpush1.bf16.msra.mxu0 %v7628
  %8117 = vmatprep.subr.bf16.mxu0 %v7635
  %8118 = vmatpush1.bf16.msra.mxu0 %v7634
  %8119 = vmatprep.subr.bf16.mxu0 %v7641
  %8120 = vmatpush1.bf16.msra.mxu0 %v7640
  %8121 = vmatprep.subr.bf16.mxu0 %v7647
  %8122 = vmatpush1.bf16.msra.mxu0 %v7646
  %8123 = vmatprep.subr.bf16.mxu0 %v7653
  %8124 = vmatpush1.bf16.msra.mxu0 %v7652
  %8125 = vmatprep.subr.bf16.mxu0 %v7659
  %8126 = vmatpush1.bf16.msra.mxu0 %v7658
  %8127 = vmatprep.subr.bf16.mxu0 %v7665
  %8128 = vmatpush1.bf16.msra.mxu0 %v7664
  %8129 = vmatprep.subr.bf16.mxu0 %v7671
  %8130 = vmatpush1.bf16.msra.mxu0 %v7670
  %8131 = vmatprep.subr.bf16.mxu0 %v7677
  %8132 = vmatpush1.bf16.msra.mxu0 %v7676
  %8133 = vmatprep.subr.bf16.mxu0 %v7683
  %8134 = vmatpush1.bf16.msra.mxu0 %v7682
  %8135 = vmatprep.subr.bf16.mxu0 %v7890
  %8136 = vmatpush1.bf16.msra.mxu0 %v7887
  %8137 = vmatprep.subr.bf16.mxu0 0
  %8138 = vmatpush1.bf16.msra.mxu0 0
  %8139 = vmatprep.mubr.bf16.mxu0 %v7872
  %8140 = vmatmul.mubr.bf16.gmra.mrb[0].mxu0 %v6950
  %v8141 = vpop.f32.mrb[0].mxu0
  %v8142 = vadd.f32 %v8099, %v8141
  %v8143 = vpop.f32.mrb[0].mxu0
  %v8144 = vadd.f32 %v8101, %v8143
  %v8145 = vpop.f32.mrb[0].mxu0
  %v8146 = vadd.f32 %v8103, %v8145
  %v8147 = vpop.f32.mrb[0].mxu0
  %v8148 = vadd.f32 %v8105, %v8147
  %8149 = vdwg.mxu0
  %v8150 = vmax.f32 %v7970, 0.0
  %v8151 = vmax.f32 %v7972, 0.0
  %v8152 = vmax.f32 %v8056, 0.0
  %v8153 = vmax.f32 %v8058, 0.0
  %v8154 = vmax.f32 %v8142, 0.0
  %v8155 = vmax.f32 %v8144, 0.0
  %v8156 = vmax.f32 %v7974, 0.0
  %v8157 = vmax.f32 %v7976, 0.0
  %v8158 = vmax.f32 %v8060, 0.0
  %v8159 = vmax.f32 %v8062, 0.0
  %v8160 = vmax.f32 %v8146, 0.0
  %v8161 = vmax.f32 %v8148, 0.0
  %v8162 = vpack.c.bf16 %v8156, %v8150
  %v8163 = vpack.c.bf16 %v8157, %v8151
  %v8164 = vpack.c.bf16 %v8158, %v8152
  %v8165 = vpack.c.bf16 %v8159, %v8153
  %v8166 = vpack.c.bf16 %v8160, %v8154
  %v8167 = vpack.c.bf16 %v8161, %v8155
  %8168 = vst [vmem:[#allocation3] sm:$0xff] %v8162
  %8169 = vst [vmem:[#allocation3 + $0x8] sm:$0xff] %v8163
  %8170 = vst [vmem:[#allocation3 + $0x10] sm:$0xff] %v8164
  %8171 = vst [vmem:[#allocation3 + $0x18] sm:$0xff] %v8165
  %8172 = vst [vmem:[#allocation3 + $0x20] sm:$0xff] %v8166
  %vm8173 = vcmask 891904
  %8174 = vst.msk [vmem:[#allocation3 + $0x28] sm:$0xff] %vm8173, %v8167
  %8175 = vst [vmem:[#allocation4] sm:$0xff] 0
  %8176 = vst [vmem:[#allocation4 + $0x8] sm:$0xff] 0
  %8177 = vst [vmem:[#allocation4 + $0x10] sm:$0xff] 0
  %8178 = vst [vmem:[#allocation4 + $0x18] sm:$0xff] 0
  %vm8179 = vcmask 924672
  %8180 = vst.msk [vmem:[#allocation4 + $0x20] sm:$0xff] %vm8179, 0
  %v8181 = vld [vmem:[#allocation3] sm:$0xff]
  %8183 = vrot.lane.b32.xlu0 %v8181, 26
  %v8184 = vpop.permute.xlu0 %8183
  %vm8186 = vcmask 400592
  %8187 = vst.msk [vmem:[#allocation4] sm:$0xff] %vm8186, %v8184
  %v8188 = vld [vmem:[#allocation3] sm:$0xff]
  %8190 = vrot.lane.b32.xlu0 %v8188, 18
  %v8191 = vpop.permute.xlu0 %8190
  %vm8193 = vcmask 605592
  %8194 = vst.msk [vmem:[#allocation4] sm:$0xff] %vm8193, %v8191
  %v8195 = vld [vmem:[#allocation3] sm:$0xff]
  %8197 = vrot.lane.b32.xlu0 %v8195, 10
  %v8198 = vpop.permute.xlu0 %8197
  %vm8200 = vcmask 810592
  %8201 = vst.msk [vmem:[#allocation4] sm:$0xff] %vm8200, %v8198
  %v8202 = vld [vmem:[#allocation3] sm:$0xff]
  %8204 = vrot.lane.b32.xlu0 %v8202, 2
  %v8205 = vpop.permute.xlu0 %8204
  %vm8207 = vcmask 1015592
  %8208 = vst.msk [vmem:[#allocation4] sm:$0xff] %vm8207, %v8205
  %v8209 = vld [vmem:[#allocation3 + $0x8] sm:$0xff]
  %8211 = vrot.lane.b32.xlu0 %v8209, 122
  %v8212 = vpop.permute.xlu0 %8211
  %vm8214 = vcmask 1048560
  %8215 = vst.msk [vmem:[#allocation4] sm:$0xff] %vm8214, %v8212
  %vm8216 = vcmask 171008
  %8217 = vst.msk [vmem:[#allocation4 + $0x8] sm:$0xff] %vm8216, %v8212
  %v8218 = vld [vmem:[#allocation3 + $0x8] sm:$0xff]
  %8220 = vrot.lane.b32.xlu0 %v8218, 114
  %v8221 = vpop.permute.xlu0 %8220
  %vm8223 = vcmask 375992
  %8224 = vst.msk [vmem:[#allocation4 + $0x8] sm:$0xff] %vm8223, %v8221
  %v8225 = vld [vmem:[#allocation3 + $0x8] sm:$0xff]
  %8227 = vrot.lane.b32.xlu0 %v8225, 106
  %v8228 = vpop.permute.xlu0 %8227
  %vm8230 = vcmask 580992
  %8231 = vst.msk [vmem:[#allocation4 + $0x8] sm:$0xff] %vm8230, %v8228
  %v8232 = vld [vmem:[#allocation3 + $0x8] sm:$0xff]
  %8234 = vrot.lane.b32.xlu0 %v8232, 98
  %v8235 = vpop.permute.xlu0 %8234
  %vm8237 = vcmask 785992
  %8238 = vst.msk [vmem:[#allocation4 + $0x8] sm:$0xff] %vm8237, %v8235
  %v8239 = vld [vmem:[#allocation3 + $0x10] sm:$0xff]
  %8241 = vrot.lane.b32.xlu0 %v8239, 90
  %v8242 = vpop.permute.xlu0 %8241
  %vm8244 = vcmask 990992
  %8245 = vst.msk [vmem:[#allocation4 + $0x8] sm:$0xff] %vm8244, %v8242
  %v8246 = vld [vmem:[#allocation3 + $0x10] sm:$0xff]
  %8248 = vrot.lane.b32.xlu0 %v8246, 82
  %v8249 = vpop.permute.xlu0 %8248
  %vm8251 = vcmask 1048536
  %8252 = vst.msk [vmem:[#allocation4 + $0x8] sm:$0xff] %vm8251, %v8249
  %vm8253 = vcmask 146432
  %8254 = vst.msk [vmem:[#allocation4 + $0x10] sm:$0xff] %vm8253, %v8249
  %v8255 = vld [vmem:[#allocation3 + $0x10] sm:$0xff]
  %8257 = vrot.lane.b32.xlu0 %v8255, 74
  %v8258 = vpop.permute.xlu0 %8257
  %vm8260 = vcmask 351392
  %8261 = vst.msk [vmem:[#allocation4 + $0x10] sm:$0xff] %vm8260, %v8258
  %v8262 = vld [vmem:[#allocation3 + $0x10] sm:$0xff]
  %v8263 = vld [vmem:[#allocation3 + $0x18] sm:$0xff]
  %8266 = vrot.lane.b32.xlu0 %v8262, 66
  %v8267 = vpop.permute.xlu0 %8266
  %8268 = vrot.lane.b32.xlu0 %v8263, 66
  %v8269 = vpop.permute.xlu0 %8268
  %vm8270 = vcmask 539648
  %v8271 = vsel %vm8270, %v8267, %v8269
  %vm8273 = vcmask 556392
  %8274 = vst.msk [vmem:[#allocation4 + $0x10] sm:$0xff] %vm8273, %v8271
  %v8275 = vld [vmem:[#allocation3 + $0x18] sm:$0xff]
  %8277 = vrot.lane.b32.xlu0 %v8275, 58
  %v8278 = vpop.permute.xlu0 %8277
  %vm8280 = vcmask 761392
  %8281 = vst.msk [vmem:[#allocation4 + $0x10] sm:$0xff] %vm8280, %v8278
  %v8282 = vld [vmem:[#allocation3 + $0x18] sm:$0xff]
  %8284 = vrot.lane.b32.xlu0 %v8282, 50
  %v8285 = vpop.permute.xlu0 %8284
  %vm8287 = vcmask 966392
  %8288 = vst.msk [vmem:[#allocation4 + $0x10] sm:$0xff] %vm8287, %v8285
  %v8289 = vld [vmem:[#allocation3 + $0x18] sm:$0xff]
  %8291 = vrot.lane.b32.xlu0 %v8289, 42
  %v8292 = vpop.permute.xlu0 %8291
  %vm8294 = vcmask 1048512
  %8295 = vst.msk [vmem:[#allocation4 + $0x10] sm:$0xff] %vm8294, %v8292
  %vm8296 = vcmask 121856
  %8297 = vst.msk [vmem:[#allocation4 + $0x18] sm:$0xff] %vm8296, %v8292
  %v8298 = vld [vmem:[#allocation3 + $0x18] sm:$0xff]
  %v8299 = vld [vmem:[#allocation3 + $0x20] sm:$0xff]
  %8302 = vrot.lane.b32.xlu0 %v8298, 34
  %v8303 = vpop.permute.xlu0 %8302
  %8304 = vrot.lane.b32.xlu0 %v8299, 34
  %v8305 = vpop.permute.xlu0 %8304
  %vm8306 = vcmask 277504
  %v8307 = vsel %vm8306, %v8303, %v8305
  %vm8309 = vcmask 326792
  %8310 = vst.msk [vmem:[#allocation4 + $0x18] sm:$0xff] %vm8309, %v8307
  %v8311 = vld [vmem:[#allocation3 + $0x20] sm:$0xff]
  %8313 = vrot.lane.b32.xlu0 %v8311, 26
  %v8314 = vpop.permute.xlu0 %8313
  %vm8316 = vcmask 531792
  %8317 = vst.msk [vmem:[#allocation4 + $0x18] sm:$0xff] %vm8316, %v8314
  %v8318 = vld [vmem:[#allocation3 + $0x20] sm:$0xff]
  %8320 = vrot.lane.b32.xlu0 %v8318, 18
  %v8321 = vpop.permute.xlu0 %8320
  %vm8323 = vcmask 736792
  %8324 = vst.msk [vmem:[#allocation4 + $0x18] sm:$0xff] %vm8323, %v8321
  %v8325 = vld [vmem:[#allocation3 + $0x20] sm:$0xff]
  %8327 = vrot.lane.b32.xlu0 %v8325, 10
  %v8328 = vpop.permute.xlu0 %8327
  %vm8330 = vcmask 941792
  %8331 = vst.msk [vmem:[#allocation4 + $0x18] sm:$0xff] %vm8330, %v8328
  %v8332 = vld [vmem:[#allocation3 + $0x20] sm:$0xff]
  %v8333 = vld [vmem:[#allocation3 + $0x28] sm:$0xff]
  %8336 = vrot.lane.b32.xlu0 %v8332, 2
  %v8337 = vpop.permute.xlu0 %8336
  %8338 = vrot.lane.b32.xlu0 %v8333, 2
  %v8339 = vpop.permute.xlu0 %8338
  %vm8340 = vcmask 15360
  %v8341 = vsel %vm8340, %v8337, %v8339
  %vm8344 = vcmask 1048488
  %8345 = vst.msk [vmem:[#allocation4 + $0x18] sm:$0xff] %vm8344, %v8337
  %vm8346 = vcmask 97280
  %8347 = vst.msk [vmem:[#allocation4 + $0x20] sm:$0xff] %vm8346, %v8341
  %v8348 = vld [vmem:[#allocation3 + $0x28] sm:$0xff]
  %8350 = vrot.lane.b32.xlu0 %v8348, 122
  %v8351 = vpop.permute.xlu0 %8350
  %vm8353 = vcmask 302192
  %8354 = vst.msk [vmem:[#allocation4 + $0x20] sm:$0xff] %vm8353, %v8351
  %v8355 = vld [vmem:[#allocation3 + $0x28] sm:$0xff]
  %8357 = vrot.lane.b32.xlu0 %v8355, 114
  %v8358 = vpop.permute.xlu0 %8357
  %vm8360 = vcmask 507192
  %8361 = vst.msk [vmem:[#allocation4 + $0x20] sm:$0xff] %vm8360, %v8358
  %v8362 = vld [vmem:[#allocation3 + $0x28] sm:$0xff]
  %8364 = vrot.lane.b32.xlu0 %v8362, 106
  %v8365 = vpop.permute.xlu0 %8364
  %vm8367 = vcmask 712192
  %8368 = vst.msk [vmem:[#allocation4 + $0x20] sm:$0xff] %vm8367, %v8365
  %v8369 = vld [vmem:[#allocation4] sm:$0xff]
  %v8370 = vld [vmem:[#allocation4 + $0x8] sm:$0xff]
  %v8371 = vld [vmem:[#allocation4 + $0x10] sm:$0xff]
  %v8372 = vld [vmem:[#allocation4 + $0x18] sm:$0xff]
  %v8373 = vld [vmem:[#allocation4 + $0x20] sm:$0xff]
  %8374 = vst [vmem:[#allocation5] sm:$0xff] %v8369
  %8375 = vst [vmem:[#allocation5 + $0x8] sm:$0xff] %v8370
  %8376 = vst [vmem:[#allocation5 + $0x10] sm:$0xff] %v8371
  %8377 = vst [vmem:[#allocation5 + $0x18] sm:$0xff] %v8372
  %vm8378 = vcmask 498688
  %8379 = vst.msk [vmem:[#allocation5 + $0x20] sm:$0xff] %vm8378, %v8373
  %v8380 = vld [vmem:[#allocation4] sm:$0xff]
  %v8381 = vld [vmem:[#allocation4 + $0x8] sm:$0xff]
  %v8382 = vld [vmem:[#allocation4 + $0x10] sm:$0xff]
  %v8383 = vld [vmem:[#allocation4 + $0x18] sm:$0xff]
  %v8384 = vld [vmem:[#allocation4 + $0x20] sm:$0xff]
  %8390 = vrot.lane.b32.xlu0 %v8380, 127
  %v8391 = vpop.permute.xlu0 %8390
  %8392 = vrot.lane.b32.xlu0 %v8381, 127
  %v8393 = vpop.permute.xlu0 %8392
  %8394 = vrot.lane.b32.xlu0 %v8382, 127
  %v8395 = vpop.permute.xlu0 %8394
  %8396 = vrot.lane.b32.xlu0 %v8383, 127
  %v8397 = vpop.permute.xlu0 %8396
  %8398 = vrot.lane.b32.xlu0 %v8384, 127
  %v8399 = vpop.permute.xlu0 %8398
  %v8400 = vsel %vm109, %v8391, %v8393
  %v8401 = vsel %vm109, %v8393, %v8395
  %v8402 = vsel %vm109, %v8395, %v8397
  %v8403 = vsel %vm109, %v8397, %v8399
  %8409 = vst [vmem:[#allocation5 + $0x28] sm:$0xff] %v8400
  %8410 = vst [vmem:[#allocation5 + $0x30] sm:$0xff] %v8401
  %8411 = vst [vmem:[#allocation5 + $0x38] sm:$0xff] %v8402
  %8412 = vst [vmem:[#allocation5 + $0x40] sm:$0xff] %v8403
  %8413 = vst.msk [vmem:[#allocation5 + $0x48] sm:$0xff] %vm8378, %v8399
  %v8414 = vld [vmem:[#allocation4] sm:$0xff]
  %v8415 = vld [vmem:[#allocation4 + $0x8] sm:$0xff]
  %v8416 = vld [vmem:[#allocation4 + $0x10] sm:$0xff]
  %v8417 = vld [vmem:[#allocation4 + $0x18] sm:$0xff]
  %v8418 = vld [vmem:[#allocation4 + $0x20] sm:$0xff]
  %8424 = vrot.lane.b32.xlu0 %v8414, 126
  %v8425 = vpop.permute.xlu0 %8424
  %8426 = vrot.lane.b32.xlu0 %v8415, 126
  %v8427 = vpop.permute.xlu0 %8426
  %8428 = vrot.lane.b32.xlu0 %v8416, 126
  %v8429 = vpop.permute.xlu0 %8428
  %8430 = vrot.lane.b32.xlu0 %v8417, 126
  %v8431 = vpop.permute.xlu0 %8430
  %8432 = vrot.lane.b32.xlu0 %v8418, 126
  %v8433 = vpop.permute.xlu0 %8432
  %v8434 = vsel %vm159, %v8425, %v8427
  %v8435 = vsel %vm159, %v8427, %v8429
  %v8436 = vsel %vm159, %v8429, %v8431
  %v8437 = vsel %vm159, %v8431, %v8433
  %8443 = vst [vmem:[#allocation5 + $0x50] sm:$0xff] %v8434
  %8444 = vst [vmem:[#allocation5 + $0x58] sm:$0xff] %v8435
  %8445 = vst [vmem:[#allocation5 + $0x60] sm:$0xff] %v8436
  %8446 = vst [vmem:[#allocation5 + $0x68] sm:$0xff] %v8437
  %8447 = vst.msk [vmem:[#allocation5 + $0x70] sm:$0xff] %vm8378, %v8433
  %v8448 = vld [vmem:[#allocation4] sm:$0xff]
  %v8449 = vld [vmem:[#allocation4 + $0x8] sm:$0xff]
  %v8450 = vld [vmem:[#allocation4 + $0x10] sm:$0xff]
  %v8451 = vld [vmem:[#allocation4 + $0x18] sm:$0xff]
  %v8452 = vld [vmem:[#allocation4 + $0x20] sm:$0xff]
  %8458 = vrot.lane.b32.xlu0 %v8448, 103
  %v8459 = vpop.permute.xlu0 %8458
  %8460 = vrot.lane.b32.xlu0 %v8449, 103
  %v8461 = vpop.permute.xlu0 %8460
  %8462 = vrot.lane.b32.xlu0 %v8450, 103
  %v8463 = vpop.permute.xlu0 %8462
  %8464 = vrot.lane.b32.xlu0 %v8451, 103
  %v8465 = vpop.permute.xlu0 %8464
  %8466 = vrot.lane.b32.xlu0 %v8452, 103
  %v8467 = vpop.permute.xlu0 %8466
  %vm8468 = vcmask 842752
  %v8469 = vsel %vm8468, %v8459, %v8461
  %v8470 = vsel %vm8468, %v8461, %v8463
  %v8471 = vsel %vm8468, %v8463, %v8465
  %v8472 = vsel %vm8468, %v8465, %v8467
  %8478 = vst [vmem:[#allocation5 + $0x78] sm:$0xff] %v8469
  %8479 = vst [vmem:[#allocation5 + $0x80] sm:$0xff] %v8470
  %8480 = vst [vmem:[#allocation5 + $0x88] sm:$0xff] %v8471
  %8481 = vst [vmem:[#allocation5 + $0x90] sm:$0xff] %v8472
  %8482 = vst.msk [vmem:[#allocation5 + $0x98] sm:$0xff] %vm8378, %v8467
  %v8483 = vld [vmem:[#allocation4] sm:$0xff]
  %v8484 = vld [vmem:[#allocation4 + $0x8] sm:$0xff]
  %v8485 = vld [vmem:[#allocation4 + $0x10] sm:$0xff]
  %v8486 = vld [vmem:[#allocation4 + $0x18] sm:$0xff]
  %v8487 = vld [vmem:[#allocation4 + $0x20] sm:$0xff]
  %8493 = vrot.lane.b32.xlu0 %v8483, 102
  %v8494 = vpop.permute.xlu0 %8493
  %8495 = vrot.lane.b32.xlu0 %v8484, 102
  %v8496 = vpop.permute.xlu0 %8495
  %8497 = vrot.lane.b32.xlu0 %v8485, 102
  %v8498 = vpop.permute.xlu0 %8497
  %8499 = vrot.lane.b32.xlu0 %v8486, 102
  %v8500 = vpop.permute.xlu0 %8499
  %8501 = vrot.lane.b32.xlu0 %v8487, 102
  %v8502 = vpop.permute.xlu0 %8501
  %vm8503 = vcmask 834560
  %v8504 = vsel %vm8503, %v8494, %v8496
  %v8505 = vsel %vm8503, %v8496, %v8498
  %v8506 = vsel %vm8503, %v8498, %v8500
  %v8507 = vsel %vm8503, %v8500, %v8502
  %8513 = vst [vmem:[#allocation5 + $0xa0] sm:$0xff] %v8504
  %8514 = vst [vmem:[#allocation5 + $0xa8] sm:$0xff] %v8505
  %8515 = vst [vmem:[#allocation5 + $0xb0] sm:$0xff] %v8506
  %8516 = vst [vmem:[#allocation5 + $0xb8] sm:$0xff] %v8507
  %8517 = vst.msk [vmem:[#allocation5 + $0xc0] sm:$0xff] %vm8378, %v8502
  %v8518 = vld [vmem:[#allocation4] sm:$0xff]
  %v8519 = vld [vmem:[#allocation4 + $0x8] sm:$0xff]
  %v8520 = vld [vmem:[#allocation4 + $0x10] sm:$0xff]
  %v8521 = vld [vmem:[#allocation4 + $0x18] sm:$0xff]
  %v8522 = vld [vmem:[#allocation4 + $0x20] sm:$0xff]
  %8528 = vrot.lane.b32.xlu0 %v8518, 101
  %v8529 = vpop.permute.xlu0 %8528
  %8530 = vrot.lane.b32.xlu0 %v8519, 101
  %v8531 = vpop.permute.xlu0 %8530
  %8532 = vrot.lane.b32.xlu0 %v8520, 101
  %v8533 = vpop.permute.xlu0 %8532
  %8534 = vrot.lane.b32.xlu0 %v8521, 101
  %v8535 = vpop.permute.xlu0 %8534
  %8536 = vrot.lane.b32.xlu0 %v8522, 101
  %v8537 = vpop.permute.xlu0 %8536
  %vm8538 = vcmask 826368
  %v8539 = vsel %vm8538, %v8529, %v8531
  %v8540 = vsel %vm8538, %v8531, %v8533
  %v8541 = vsel %vm8538, %v8533, %v8535
  %v8542 = vsel %vm8538, %v8535, %v8537
  %8548 = vst [vmem:[#allocation5 + $0xc8] sm:$0xff] %v8539
  %8549 = vst [vmem:[#allocation5 + $0xd0] sm:$0xff] %v8540
  %8550 = vst [vmem:[#allocation5 + $0xd8] sm:$0xff] %v8541
  %8551 = vst [vmem:[#allocation5 + $0xe0] sm:$0xff] %v8542
  %8552 = vst.msk [vmem:[#allocation5 + $0xe8] sm:$0xff] %vm8378, %v8537
  %v8553 = vld [vmem:[#allocation4] sm:$0xff]
  %v8554 = vld [vmem:[#allocation4 + $0x8] sm:$0xff]
  %v8555 = vld [vmem:[#allocation4 + $0x10] sm:$0xff]
  %v8556 = vld [vmem:[#allocation4 + $0x18] sm:$0xff]
  %v8557 = vld [vmem:[#allocation4 + $0x20] sm:$0xff]
  %8563 = vrot.lane.b32.xlu0 %v8553, 78
  %v8564 = vpop.permute.xlu0 %8563
  %8565 = vrot.lane.b32.xlu0 %v8554, 78
  %v8566 = vpop.permute.xlu0 %8565
  %8567 = vrot.lane.b32.xlu0 %v8555, 78
  %v8568 = vpop.permute.xlu0 %8567
  %8569 = vrot.lane.b32.xlu0 %v8556, 78
  %v8570 = vpop.permute.xlu0 %8569
  %8571 = vrot.lane.b32.xlu0 %v8557, 78
  %v8572 = vpop.permute.xlu0 %8571
  %v8573 = vsel %vm6024, %v8564, %v8566
  %v8574 = vsel %vm6024, %v8566, %v8568
  %v8575 = vsel %vm6024, %v8568, %v8570
  %v8576 = vsel %vm6024, %v8570, %v8572
  %8582 = vst [vmem:[#allocation5 + $0xf0] sm:$0xff] %v8573
  %8583 = vst [vmem:[#allocation5 + $0xf8] sm:$0xff] %v8574
  %8584 = vst [vmem:[#allocation5 + $0x100] sm:$0xff] %v8575
  %8585 = vst [vmem:[#allocation5 + $0x108] sm:$0xff] %v8576
  %8586 = vst.msk [vmem:[#allocation5 + $0x110] sm:$0xff] %vm8378, %v8572
  %v8587 = vld [vmem:[#allocation4] sm:$0xff]
  %v8588 = vld [vmem:[#allocation4 + $0x8] sm:$0xff]
  %v8589 = vld [vmem:[#allocation4 + $0x10] sm:$0xff]
  %v8590 = vld [vmem:[#allocation4 + $0x18] sm:$0xff]
  %v8591 = vld [vmem:[#allocation4 + $0x20] sm:$0xff]
  %8597 = vrot.lane.b32.xlu0 %v8587, 77
  %v8598 = vpop.permute.xlu0 %8597
  %8599 = vrot.lane.b32.xlu0 %v8588, 77
  %v8600 = vpop.permute.xlu0 %8599
  %8601 = vrot.lane.b32.xlu0 %v8589, 77
  %v8602 = vpop.permute.xlu0 %8601
  %8603 = vrot.lane.b32.xlu0 %v8590, 77
  %v8604 = vpop.permute.xlu0 %8603
  %8605 = vrot.lane.b32.xlu0 %v8591, 77
  %v8606 = vpop.permute.xlu0 %8605
  %v8607 = vsel %vm6083, %v8598, %v8600
  %v8608 = vsel %vm6083, %v8600, %v8602
  %v8609 = vsel %vm6083, %v8602, %v8604
  %v8610 = vsel %vm6083, %v8604, %v8606
  %8616 = vst [vmem:[#allocation5 + $0x118] sm:$0xff] %v8607
  %8617 = vst [vmem:[#allocation5 + $0x120] sm:$0xff] %v8608
  %8618 = vst [vmem:[#allocation5 + $0x128] sm:$0xff] %v8609
  %8619 = vst [vmem:[#allocation5 + $0x130] sm:$0xff] %v8610
  %8620 = vst.msk [vmem:[#allocation5 + $0x138] sm:$0xff] %vm8378, %v8606
  %v8621 = vld [vmem:[#allocation4] sm:$0xff]
  %v8622 = vld [vmem:[#allocation4 + $0x8] sm:$0xff]
  %v8623 = vld [vmem:[#allocation4 + $0x10] sm:$0xff]
  %v8624 = vld [vmem:[#allocation4 + $0x18] sm:$0xff]
  %v8625 = vld [vmem:[#allocation4 + $0x20] sm:$0xff]
  %8631 = vrot.lane.b32.xlu0 %v8621, 76
  %v8632 = vpop.permute.xlu0 %8631
  %8633 = vrot.lane.b32.xlu0 %v8622, 76
  %v8634 = vpop.permute.xlu0 %8633
  %8635 = vrot.lane.b32.xlu0 %v8623, 76
  %v8636 = vpop.permute.xlu0 %8635
  %8637 = vrot.lane.b32.xlu0 %v8624, 76
  %v8638 = vpop.permute.xlu0 %8637
  %8639 = vrot.lane.b32.xlu0 %v8625, 76
  %v8640 = vpop.permute.xlu0 %8639
  %vm8641 = vcmask 621568
  %v8642 = vsel %vm8641, %v8632, %v8634
  %v8643 = vsel %vm8641, %v8634, %v8636
  %v8644 = vsel %vm8641, %v8636, %v8638
  %v8645 = vsel %vm8641, %v8638, %v8640
  %8651 = vst [vmem:[#allocation5 + $0x140] sm:$0xff] %v8642
  %8652 = vst [vmem:[#allocation5 + $0x148] sm:$0xff] %v8643
  %8653 = vst [vmem:[#allocation5 + $0x150] sm:$0xff] %v8644
  %8654 = vst [vmem:[#allocation5 + $0x158] sm:$0xff] %v8645
  %8655 = vst.msk [vmem:[#allocation5 + $0x160] sm:$0xff] %vm8378, %v8640
  %v8656 = vld [vmem:[%s3] sm:$0xff]
  %v8657 = vld [vmem:[%s3 + $0x8] sm:$0xff]
  %v8658 = vld [vmem:[%s3 + $0x10] sm:$0xff]
  %v8659 = vld [vmem:[%s3 + $0x18] sm:$0xff]
  %v8660 = vld [vmem:[#allocation5] sm:$0xff]
  %v8661 = vld [vmem:[#allocation5 + $0x8] sm:$0xff]
  %v8662 = vld [vmem:[#allocation5 + $0x10] sm:$0xff]
  %v8663 = vld [vmem:[#allocation5 + $0x18] sm:$0xff]
  %v8664 = vld [vmem:[#allocation5 + $0x20] sm:$0xff]
  %v8665 = vld [vmem:[#allocation5 + $0x28] sm:$0xff]
  %v8666 = vld [vmem:[#allocation5 + $0x30] sm:$0xff]
  %v8667 = vld [vmem:[#allocation5 + $0x38] sm:$0xff]
  %v8668 = vld [vmem:[#allocation5 + $0x40] sm:$0xff]
  %v8669 = vld [vmem:[#allocation5 + $0x48] sm:$0xff]
  %v8670 = vld [vmem:[#allocation5 + $0x50] sm:$0xff]
  %v8671 = vld [vmem:[#allocation5 + $0x58] sm:$0xff]
  %v8672 = vld [vmem:[#allocation5 + $0x60] sm:$0xff]
  %v8673 = vld [vmem:[#allocation5 + $0x68] sm:$0xff]
  %v8674 = vld [vmem:[#allocation5 + $0x70] sm:$0xff]
  %v8675 = vld [vmem:[#allocation5 + $0x78] sm:$0xff]
  %v8676 = vld [vmem:[#allocation5 + $0x80] sm:$0xff]
  %v8677 = vld [vmem:[#allocation5 + $0x88] sm:$0xff]
  %v8678 = vld [vmem:[#allocation5 + $0x90] sm:$0xff]
  %v8679 = vld [vmem:[#allocation5 + $0x98] sm:$0xff]
  %v8680 = vld [vmem:[#allocation5 + $0xa0] sm:$0xff]
  %v8681 = vld [vmem:[#allocation5 + $0xa8] sm:$0xff]
  %v8682 = vld [vmem:[#allocation5 + $0xb0] sm:$0xff]
  %v8683 = vld [vmem:[#allocation5 + $0xb8] sm:$0xff]
  %v8684 = vld [vmem:[#allocation5 + $0xc0] sm:$0xff]
  %v8685 = vld [vmem:[#allocation5 + $0xc8] sm:$0xff]
  %v8686 = vld [vmem:[#allocation5 + $0xd0] sm:$0xff]
  %v8687 = vld [vmem:[#allocation5 + $0xd8] sm:$0xff]
  %v8688 = vld [vmem:[#allocation5 + $0xe0] sm:$0xff]
  %v8689 = vld [vmem:[#allocation5 + $0xe8] sm:$0xff]
  %v8690 = vld [vmem:[#allocation5 + $0xf0] sm:$0xff]
  %v8691 = vld [vmem:[#allocation5 + $0xf8] sm:$0xff]
  %v8692 = vld [vmem:[#allocation5 + $0x100] sm:$0xff]
  %v8693 = vld [vmem:[#allocation5 + $0x108] sm:$0xff]
  %v8694 = vld [vmem:[#allocation5 + $0x110] sm:$0xff]
  %v8695 = vld [vmem:[#allocation5 + $0x118] sm:$0xff]
  %v8696 = vld [vmem:[#allocation5 + $0x120] sm:$0xff]
  %v8697 = vld [vmem:[#allocation5 + $0x128] sm:$0xff]
  %v8698 = vld [vmem:[#allocation5 + $0x130] sm:$0xff]
  %v8699 = vld [vmem:[#allocation5 + $0x138] sm:$0xff]
  %v8700 = vld [vmem:[#allocation5 + $0x140] sm:$0xff]
  %v8701 = vld [vmem:[#allocation5 + $0x148] sm:$0xff]
  %v8702 = vld [vmem:[#allocation5 + $0x150] sm:$0xff]
  %v8703 = vld [vmem:[#allocation5 + $0x158] sm:$0xff]
  %v8704 = vld [vmem:[#allocation5 + $0x160] sm:$0xff]
  %v8705 = vld [vmem:[%s4] sm:$0xff]
  %v8706 = vld [vmem:[%s4 + $0x8] sm:$0xff]
  %v8707 = vld [vmem:[%s4 + $0x10] sm:$0xff]
  %v8708 = vld [vmem:[%s4 + $0x18] sm:$0xff]
  %8710 = vset.pattern.permute.xlu0 0
  %8711 = vperm.xlu0 %8710, %v8705
  %v8712 = vpop.permute.xlu0 %8711
  %8715 = vset.pattern.permute.xlu0 0
  %8716 = vperm.xlu0 %8715, %v8706
  %v8717 = vpop.permute.xlu0 %8716
  %8720 = vset.pattern.permute.xlu0 0
  %8721 = vperm.xlu0 %8720, %v8707
  %v8722 = vpop.permute.xlu0 %8721
  %8725 = vset.pattern.permute.xlu0 0
  %8726 = vperm.xlu0 %8725, %v8708
  %v8727 = vpop.permute.xlu0 %8726
  %v8733 = vunpack.c.l.b16 %v8656
  %v8734 = vunpack.c.h.b16 %v8656
  %v8735 = vunpack.c.l.b16 %v8657
  %v8736 = vunpack.c.h.b16 %v8657
  %v8737 = vunpack.c.l.b16 %v8658
  %v8738 = vunpack.c.h.b16 %v8658
  %v8739 = vunpack.c.l.b16 %v8659
  %v8740 = vunpack.c.h.b16 %v8659
  %v8741 = vpack.c.b16 %v8735, %v8733
  %v8742 = vpack.c.b16 %v8736, %v8734
  %v8743 = vpack.c.b16 %v8739, %v8737
  %v8744 = vpack.c.b16 %v8740, %v8738
  %vm8747 = vcmask 130048
  %v8749 = vsel %vm8747, %v8742, 0
  %v8752 = vsel %vm8747, %v8744, 0
  %8754 = vmatprep.subr.bf16.mxu0 %v8661
  %8755 = vmatpush1.bf16.msra.mxu0 %v8660
  %8756 = vmatprep.subr.bf16.mxu0 %v8666
  %8757 = vmatpush1.bf16.msra.mxu0 %v8665
  %8758 = vmatprep.subr.bf16.mxu0 %v8671
  %8759 = vmatpush1.bf16.msra.mxu0 %v8670
  %8760 = vmatprep.subr.bf16.mxu0 %v8676
  %8761 = vmatpush1.bf16.msra.mxu0 %v8675
  %8762 = vmatprep.subr.bf16.mxu0 %v8681
  %8763 = vmatpush1.bf16.msra.mxu0 %v8680
  %8764 = vmatprep.subr.bf16.mxu0 %v8686
  %8765 = vmatpush1.bf16.msra.mxu0 %v8685
  %8766 = vmatprep.subr.bf16.mxu0 %v8691
  %8767 = vmatpush1.bf16.msra.mxu0 %v8690
  %8768 = vmatprep.subr.bf16.mxu0 %v8696
  %8769 = vmatpush1.bf16.msra.mxu0 %v8695
  %8770 = vmatprep.subr.bf16.mxu0 %v8701
  %8771 = vmatpush1.bf16.msra.mxu0 %v8700
  %8772 = vmatprep.subr.bf16.mxu0 0
  %8773 = vmatpush1.bf16.msra.mxu0 0
  %8774 = vmatprep.subr.bf16.mxu0 0
  %8775 = vmatpush1.bf16.msra.mxu0 0
  %8776 = vmatprep.subr.bf16.mxu0 0
  %8777 = vmatpush1.bf16.msra.mxu0 0
  %8778 = vmatprep.subr.bf16.mxu0 0
  %8779 = vmatpush1.bf16.msra.mxu0 0
  %8780 = vmatprep.subr.bf16.mxu0 0
  %8781 = vmatpush1.bf16.msra.mxu0 0
  %8782 = vmatprep.subr.bf16.mxu0 0
  %8783 = vmatpush1.bf16.msra.mxu0 0
  %8784 = vmatprep.subr.bf16.mxu0 0
  %8785 = vmatpush1.bf16.msra.mxu0 0
  %8786 = vmatprep.mubr.bf16.mxu0 %v8749
  %8787 = vmatmul.mubr.bf16.gmra.mrb[0].mxu0 %v8741
  %v8788 = vpop.f32.mrb[0].mxu0
  %v8789 = vadd.f32 %v8712, %v8788
  %v8790 = vpop.f32.mrb[0].mxu0
  %v8791 = vadd.f32 %v8712, %v8790
  %v8792 = vpop.f32.mrb[0].mxu0
  %v8793 = vadd.f32 %v8717, %v8792
  %v8794 = vpop.f32.mrb[0].mxu0
  %v8795 = vadd.f32 %v8717, %v8794
  %8796 = vmatprep.mubr.bf16.mxu0 %v8752
  %8797 = vmatmul.mubr.bf16.gmra.mrb[0].mxu0 %v8743
  %v8798 = vpop.f32.mrb[0].mxu0
  %v8799 = vadd.f32 %v8722, %v8798
  %v8800 = vpop.f32.mrb[0].mxu0
  %v8801 = vadd.f32 %v8722, %v8800
  %v8802 = vpop.f32.mrb[0].mxu0
  %v8803 = vadd.f32 %v8727, %v8802
  %v8804 = vpop.f32.mrb[0].mxu0
  %v8805 = vadd.f32 %v8727, %v8804
  %8806 = vdwg.mxu0
  %8807 = vmatprep.subr.bf16.mxu0 %v8663
  %8808 = vmatpush1.bf16.msra.mxu0 %v8662
  %8809 = vmatprep.subr.bf16.mxu0 %v8668
  %8810 = vmatpush1.bf16.msra.mxu0 %v8667
  %8811 = vmatprep.subr.bf16.mxu0 %v8673
  %8812 = vmatpush1.bf16.msra.mxu0 %v8672
  %8813 = vmatprep.subr.bf16.mxu0 %v8678
  %8814 = vmatpush1.bf16.msra.mxu0 %v8677
  %8815 = vmatprep.subr.bf16.mxu0 %v8683
  %8816 = vmatpush1.bf16.msra.mxu0 %v8682
  %8817 = vmatprep.subr.bf16.mxu0 %v8688
  %8818 = vmatpush1.bf16.msra.mxu0 %v8687
  %8819 = vmatprep.subr.bf16.mxu0 %v8693
  %8820 = vmatpush1.bf16.msra.mxu0 %v8692
  %8821 = vmatprep.subr.bf16.mxu0 %v8698
  %8822 = vmatpush1.bf16.msra.mxu0 %v8697
  %8823 = vmatprep.subr.bf16.mxu0 %v8703
  %8824 = vmatpush1.bf16.msra.mxu0 %v8702
  %8825 = vmatprep.subr.bf16.mxu0 0
  %8826 = vmatpush1.bf16.msra.mxu0 0
  %8827 = vmatprep.subr.bf16.mxu0 0
  %8828 = vmatpush1.bf16.msra.mxu0 0
  %8829 = vmatprep.subr.bf16.mxu0 0
  %8830 = vmatpush1.bf16.msra.mxu0 0
  %8831 = vmatprep.subr.bf16.mxu0 0
  %8832 = vmatpush1.bf16.msra.mxu0 0
  %8833 = vmatprep.subr.bf16.mxu0 0
  %8834 = vmatpush1.bf16.msra.mxu0 0
  %8835 = vmatprep.subr.bf16.mxu0 0
  %8836 = vmatpush1.bf16.msra.mxu0 0
  %8837 = vmatprep.subr.bf16.mxu0 0
  %8838 = vmatpush1.bf16.msra.mxu0 0
  %8839 = vmatprep.mubr.bf16.mxu0 %v8749
  %8840 = vmatmul.mubr.bf16.gmra.mrb[0].mxu0 %v8741
  %v8841 = vpop.f32.mrb[0].mxu0
  %v8842 = vadd.f32 %v8712, %v8841
  %v8843 = vpop.f32.mrb[0].mxu0
  %v8844 = vadd.f32 %v8712, %v8843
  %v8845 = vpop.f32.mrb[0].mxu0
  %v8846 = vadd.f32 %v8717, %v8845
  %v8847 = vpop.f32.mrb[0].mxu0
  %v8848 = vadd.f32 %v8717, %v8847
  %8849 = vmatprep.mubr.bf16.mxu0 %v8752
  %8850 = vmatmul.mubr.bf16.gmra.mrb[0].mxu0 %v8743
  %v8851 = vpop.f32.mrb[0].mxu0
  %v8852 = vadd.f32 %v8722, %v8851
  %v8853 = vpop.f32.mrb[0].mxu0
  %v8854 = vadd.f32 %v8722, %v8853
  %v8855 = vpop.f32.mrb[0].mxu0
  %v8856 = vadd.f32 %v8727, %v8855
  %v8857 = vpop.f32.mrb[0].mxu0
  %v8858 = vadd.f32 %v8727, %v8857
  %8859 = vdwg.mxu0
  %8860 = vmatprep.subr.bf16.mxu0 0
  %8861 = vmatpush1.bf16.msra.mxu0 %v8664
  %8862 = vmatprep.subr.bf16.mxu0 0
  %8863 = vmatpush1.bf16.msra.mxu0 %v8669
  %8864 = vmatprep.subr.bf16.mxu0 0
  %8865 = vmatpush1.bf16.msra.mxu0 %v8674
  %8866 = vmatprep.subr.bf16.mxu0 0
  %8867 = vmatpush1.bf16.msra.mxu0 %v8679
  %8868 = vmatprep.subr.bf16.mxu0 0
  %8869 = vmatpush1.bf16.msra.mxu0 %v8684
  %8870 = vmatprep.subr.bf16.mxu0 0
  %8871 = vmatpush1.bf16.msra.mxu0 %v8689
  %8872 = vmatprep.subr.bf16.mxu0 0
  %8873 = vmatpush1.bf16.msra.mxu0 %v8694
  %8874 = vmatprep.subr.bf16.mxu0 0
  %8875 = vmatpush1.bf16.msra.mxu0 %v8699
  %8876 = vmatprep.subr.bf16.mxu0 0
  %8877 = vmatpush1.bf16.msra.mxu0 %v8704
  %8878 = vmatprep.subr.bf16.mxu0 0
  %8879 = vmatpush1.bf16.msra.mxu0 0
  %8880 = vmatprep.subr.bf16.mxu0 0
  %8881 = vmatpush1.bf16.msra.mxu0 0
  %8882 = vmatprep.subr.bf16.mxu0 0
  %8883 = vmatpush1.bf16.msra.mxu0 0
  %8884 = vmatprep.subr.bf16.mxu0 0
  %8885 = vmatpush1.bf16.msra.mxu0 0
  %8886 = vmatprep.subr.bf16.mxu0 0
  %8887 = vmatpush1.bf16.msra.mxu0 0
  %8888 = vmatprep.subr.bf16.mxu0 0
  %8889 = vmatpush1.bf16.msra.mxu0 0
  %8890 = vmatprep.subr.bf16.mxu0 0
  %8891 = vmatpush1.bf16.msra.mxu0 0
  %8892 = vmatprep.mubr.bf16.mxu0 %v8749
  %8893 = vmatmul.mubr.bf16.gmra.mrb[0].mxu0 %v8741
  %v8894 = vpop.f32.mrb[0].mxu0
  %v8895 = vadd.f32 %v8712, %v8894
  %v8896 = vpop.f32.mrb[0].mxu0
  %v8897 = vpop.f32.mrb[0].mxu0
  %v8898 = vadd.f32 %v8717, %v8897
  %v8899 = vpop.f32.mrb[0].mxu0
  %8900 = vmatprep.mubr.bf16.mxu0 %v8752
  %8901 = vmatmul.mubr.bf16.gmra.mrb[0].mxu0 %v8743
  %v8902 = vpop.f32.mrb[0].mxu0
  %v8903 = vadd.f32 %v8722, %v8902
  %v8904 = vpop.f32.mrb[0].mxu0
  %v8905 = vpop.f32.mrb[0].mxu0
  %v8906 = vadd.f32 %v8727, %v8905
  %v8907 = vpop.f32.mrb[0].mxu0
  %8908 = vdwg.mxu0
  %v8909 = vmax.f32 %v8789, 0.0
  %v8910 = vmax.f32 %v8791, 0.0
  %v8911 = vmax.f32 %v8842, 0.0
  %v8912 = vmax.f32 %v8844, 0.0
  %v8913 = vmax.f32 %v8895, 0.0
  %v8914 = vmax.f32 %v8793, 0.0
  %v8915 = vmax.f32 %v8795, 0.0
  %v8916 = vmax.f32 %v8846, 0.0
  %v8917 = vmax.f32 %v8848, 0.0
  %v8918 = vmax.f32 %v8898, 0.0
  %v8919 = vmax.f32 %v8799, 0.0
  %v8920 = vmax.f32 %v8801, 0.0
  %v8921 = vmax.f32 %v8852, 0.0
  %v8922 = vmax.f32 %v8854, 0.0
  %v8923 = vmax.f32 %v8903, 0.0
  %v8924 = vmax.f32 %v8803, 0.0
  %v8925 = vmax.f32 %v8805, 0.0
  %v8926 = vmax.f32 %v8856, 0.0
  %v8927 = vmax.f32 %v8858, 0.0
  %v8928 = vmax.f32 %v8906, 0.0
  %v8929 = vpack.c.bf16 %v8914, %v8909
  %v8930 = vpack.c.bf16 %v8915, %v8910
  %v8931 = vpack.c.bf16 %v8916, %v8911
  %v8932 = vpack.c.bf16 %v8917, %v8912
  %v8933 = vpack.c.bf16 %v8918, %v8913
  %v8934 = vpack.c.bf16 %v8924, %v8919
  %v8935 = vpack.c.bf16 %v8925, %v8920
  %v8936 = vpack.c.bf16 %v8926, %v8921
  %v8937 = vpack.c.bf16 %v8927, %v8922
  %v8938 = vpack.c.bf16 %v8928, %v8923
  %v8939 = vld [vmem:[%s7] sm:$0xff]
  %v8940 = vld [vmem:[%s7 + $0x8] sm:$0xff]
  %v8941 = vld [vmem:[%s7 + $0x10] sm:$0xff]
  %v8942 = vld [vmem:[%s7 + $0x18] sm:$0xff]
  %v8943 = vld [vmem:[%s7 + $0x20] sm:$0xff]
  %v8944 = vld [vmem:[%s7 + $0x28] sm:$0xff]
  %v8945 = vld [vmem:[%s7 + $0x30] sm:$0xff]
  %v8946 = vld [vmem:[%s7 + $0x38] sm:$0xff]
  %v8947 = vld [vmem:[%s7 + $0x40] sm:$0xff]
  %v8948 = vld [vmem:[%s7 + $0x48] sm:$0xff]
  %v8949 = vld [vmem:[%s7 + $0x50] sm:$0xff]
  %v8950 = vld [vmem:[%s7 + $0x58] sm:$0xff]
  %v8951 = vld [vmem:[%s7 + $0x60] sm:$0xff]
  %v8952 = vld [vmem:[%s7 + $0x68] sm:$0xff]
  %v8953 = vld [vmem:[%s7 + $0x70] sm:$0xff]
  %v8954 = vld [vmem:[%s7 + $0x78] sm:$0xff]
  %v8955 = vld [vmem:[%s7 + $0x80] sm:$0xff]
  %v8956 = vld [vmem:[%s7 + $0x88] sm:$0xff]
  %v8957 = vld [vmem:[%s7 + $0x90] sm:$0xff]
  %v8958 = vld [vmem:[%s7 + $0x98] sm:$0xff]
  %v8959 = vld [vmem:[%s7 + $0xa0] sm:$0xff]
  %v8960 = vld [vmem:[%s7 + $0xa8] sm:$0xff]
  %v8961 = vld [vmem:[%s7 + $0xb0] sm:$0xff]
  %v8962 = vld [vmem:[%s7 + $0xb8] sm:$0xff]
  %v8963 = vld [vmem:[%s7 + $0xc0] sm:$0xff]
  %v8964 = vld [vmem:[%s7 + $0xc8] sm:$0xff]
  %v8965 = vld [vmem:[%s7 + $0xd0] sm:$0xff]
  %v8966 = vld [vmem:[%s7 + $0xd8] sm:$0xff]
  %v8967 = vld [vmem:[%s7 + $0xe0] sm:$0xff]
  %v8968 = vld [vmem:[%s7 + $0xe8] sm:$0xff]
  %v8969 = vld [vmem:[%s7 + $0xf0] sm:$0xff]
  %v8970 = vld [vmem:[%s7 + $0xf8] sm:$0xff]
  %v8971 = vld [vmem:[%s7 + $0x100] sm:$0xff]
  %v8972 = vld [vmem:[%s7 + $0x108] sm:$0xff]
  %v8973 = vld [vmem:[%s7 + $0x110] sm:$0xff]
  %v8974 = vld [vmem:[%s7 + $0x118] sm:$0xff]
  %v8975 = vld [vmem:[%s7 + $0x120] sm:$0xff]
  %v8976 = vld [vmem:[%s7 + $0x128] sm:$0xff]
  %v8977 = vld [vmem:[%s7 + $0x130] sm:$0xff]
  %v8978 = vld [vmem:[%s7 + $0x138] sm:$0xff]
  %v8979 = vld [vmem:[%s7 + $0x140] sm:$0xff]
  %v8980 = vld [vmem:[%s7 + $0x148] sm:$0xff]
  %v8981 = vld [vmem:[%s7 + $0x150] sm:$0xff]
  %v8982 = vld [vmem:[%s7 + $0x158] sm:$0xff]
  %v8983 = vld [vmem:[%s7 + $0x160] sm:$0xff]
  %v8984 = vld [vmem:[%s7 + $0x168] sm:$0xff]
  %v8985 = vld [vmem:[%s7 + $0x170] sm:$0xff]
  %v8986 = vld [vmem:[%s7 + $0x178] sm:$0xff]
  %v8987 = vld [vmem:[%s7 + $0x180] sm:$0xff]
  %v8988 = vld [vmem:[%s7 + $0x188] sm:$0xff]
  %v8989 = vld [vmem:[%s7 + $0x190] sm:$0xff]
  %v8990 = vld [vmem:[%s7 + $0x198] sm:$0xff]
  %v8991 = vld [vmem:[%s7 + $0x1a0] sm:$0xff]
  %v8992 = vld [vmem:[%s7 + $0x1a8] sm:$0xff]
  %v8993 = vld [vmem:[%s7 + $0x1b0] sm:$0xff]
  %v8994 = vld [vmem:[%s7 + $0x1b8] sm:$0xff]
  %v8995 = vld [vmem:[%s7 + $0x1c0] sm:$0xff]
  %v8996 = vld [vmem:[%s7 + $0x1c8] sm:$0xff]
  %v8997 = vld [vmem:[%s7 + $0x1d0] sm:$0xff]
  %v8998 = vld [vmem:[%s7 + $0x1d8] sm:$0xff]
  %v8999 = vld [vmem:[%s7 + $0x1e0] sm:$0xff]
  %v9000 = vld [vmem:[%s7 + $0x1e8] sm:$0xff]
  %v9001 = vld [vmem:[%s7 + $0x1f0] sm:$0xff]
  %v9002 = vld [vmem:[%s7 + $0x1f8] sm:$0xff]
  %v9003 = vld [vmem:[%s7 + $0x200] sm:$0xff]
  %v9004 = vld [vmem:[%s7 + $0x208] sm:$0xff]
  %v9005 = vld [vmem:[%s7 + $0x210] sm:$0xff]
  %v9006 = vld [vmem:[%s7 + $0x218] sm:$0xff]
  %v9007 = vld [vmem:[%s7 + $0x220] sm:$0xff]
  %v9008 = vld [vmem:[%s7 + $0x228] sm:$0xff]
  %v9009 = vld [vmem:[%s7 + $0x230] sm:$0xff]
  %v9010 = vld [vmem:[%s7 + $0x238] sm:$0x77]
  %v9083 = vunpack.c.l.b16 %v8939
  %v9084 = vunpack.c.h.b16 %v8939
  %v9085 = vunpack.c.l.b16 %v8940
  %v9086 = vunpack.c.h.b16 %v8940
  %v9087 = vunpack.c.l.b16 %v8941
  %v9088 = vunpack.c.h.b16 %v8941
  %v9089 = vunpack.c.l.b16 %v8942
  %v9090 = vunpack.c.h.b16 %v8942
  %v9091 = vunpack.c.l.b16 %v8943
  %v9092 = vunpack.c.h.b16 %v8943
  %v9093 = vunpack.c.l.b16 %v8944
  %v9094 = vunpack.c.h.b16 %v8944
  %v9095 = vunpack.c.l.b16 %v8945
  %v9096 = vunpack.c.h.b16 %v8945
  %v9097 = vunpack.c.l.b16 %v8946
  %v9098 = vunpack.c.h.b16 %v8946
  %v9099 = vunpack.c.l.b16 %v8947
  %v9100 = vunpack.c.h.b16 %v8947
  %v9101 = vunpack.c.l.b16 %v8948
  %v9102 = vunpack.c.h.b16 %v8948
  %v9103 = vunpack.c.l.b16 %v8949
  %v9104 = vunpack.c.h.b16 %v8949
  %v9105 = vunpack.c.l.b16 %v8950
  %v9106 = vunpack.c.h.b16 %v8950
  %v9107 = vunpack.c.l.b16 %v8951
  %v9108 = vunpack.c.h.b16 %v8951
  %v9109 = vunpack.c.l.b16 %v8952
  %v9110 = vunpack.c.h.b16 %v8952
  %v9111 = vunpack.c.l.b16 %v8953
  %v9112 = vunpack.c.h.b16 %v8953
  %v9113 = vunpack.c.l.b16 %v8954
  %v9114 = vunpack.c.h.b16 %v8954
  %v9115 = vunpack.c.l.b16 %v8955
  %v9116 = vunpack.c.h.b16 %v8955
  %v9117 = vunpack.c.l.b16 %v8956
  %v9118 = vunpack.c.h.b16 %v8956
  %v9119 = vunpack.c.l.b16 %v8957
  %v9120 = vunpack.c.h.b16 %v8957
  %v9121 = vunpack.c.l.b16 %v8958
  %v9122 = vunpack.c.h.b16 %v8958
  %v9123 = vunpack.c.l.b16 %v8959
  %v9124 = vunpack.c.h.b16 %v8959
  %v9125 = vunpack.c.l.b16 %v8960
  %v9126 = vunpack.c.h.b16 %v8960
  %v9127 = vunpack.c.l.b16 %v8961
  %v9128 = vunpack.c.h.b16 %v8961
  %v9129 = vunpack.c.l.b16 %v8962
  %v9130 = vunpack.c.h.b16 %v8962
  %v9131 = vunpack.c.l.b16 %v8963
  %v9132 = vunpack.c.h.b16 %v8963
  %v9133 = vunpack.c.l.b16 %v8964
  %v9134 = vunpack.c.h.b16 %v8964
  %v9135 = vunpack.c.l.b16 %v8965
  %v9136 = vunpack.c.h.b16 %v8965
  %v9137 = vunpack.c.l.b16 %v8966
  %v9138 = vunpack.c.h.b16 %v8966
  %v9139 = vunpack.c.l.b16 %v8967
  %v9140 = vunpack.c.h.b16 %v8967
  %v9141 = vunpack.c.l.b16 %v8968
  %v9142 = vunpack.c.h.b16 %v8968
  %v9143 = vunpack.c.l.b16 %v8969
  %v9144 = vunpack.c.h.b16 %v8969
  %v9145 = vunpack.c.l.b16 %v8970
  %v9146 = vunpack.c.h.b16 %v8970
  %v9147 = vunpack.c.l.b16 %v8971
  %v9148 = vunpack.c.h.b16 %v8971
  %v9149 = vunpack.c.l.b16 %v8972
  %v9150 = vunpack.c.h.b16 %v8972
  %v9151 = vunpack.c.l.b16 %v8973
  %v9152 = vunpack.c.h.b16 %v8973
  %v9153 = vunpack.c.l.b16 %v8974
  %v9154 = vunpack.c.h.b16 %v8974
  %v9155 = vunpack.c.l.b16 %v8975
  %v9156 = vunpack.c.h.b16 %v8975
  %v9157 = vunpack.c.l.b16 %v8976
  %v9158 = vunpack.c.h.b16 %v8976
  %v9159 = vunpack.c.l.b16 %v8977
  %v9160 = vunpack.c.h.b16 %v8977
  %v9161 = vunpack.c.l.b16 %v8978
  %v9162 = vunpack.c.h.b16 %v8978
  %v9163 = vunpack.c.l.b16 %v8979
  %v9164 = vunpack.c.h.b16 %v8979
  %v9165 = vunpack.c.l.b16 %v8980
  %v9166 = vunpack.c.h.b16 %v8980
  %v9167 = vunpack.c.l.b16 %v8981
  %v9168 = vunpack.c.h.b16 %v8981
  %v9169 = vunpack.c.l.b16 %v8982
  %v9170 = vunpack.c.h.b16 %v8982
  %v9171 = vunpack.c.l.b16 %v8983
  %v9172 = vunpack.c.h.b16 %v8983
  %v9173 = vunpack.c.l.b16 %v8984
  %v9174 = vunpack.c.h.b16 %v8984
  %v9175 = vunpack.c.l.b16 %v8985
  %v9176 = vunpack.c.h.b16 %v8985
  %v9177 = vunpack.c.l.b16 %v8986
  %v9178 = vunpack.c.h.b16 %v8986
  %v9179 = vunpack.c.l.b16 %v8987
  %v9180 = vunpack.c.h.b16 %v8987
  %v9181 = vunpack.c.l.b16 %v8988
  %v9182 = vunpack.c.h.b16 %v8988
  %v9183 = vunpack.c.l.b16 %v8989
  %v9184 = vunpack.c.h.b16 %v8989
  %v9185 = vunpack.c.l.b16 %v8990
  %v9186 = vunpack.c.h.b16 %v8990
  %v9187 = vunpack.c.l.b16 %v8991
  %v9188 = vunpack.c.h.b16 %v8991
  %v9189 = vunpack.c.l.b16 %v8992
  %v9190 = vunpack.c.h.b16 %v8992
  %v9191 = vunpack.c.l.b16 %v8993
  %v9192 = vunpack.c.h.b16 %v8993
  %v9193 = vunpack.c.l.b16 %v8994
  %v9194 = vunpack.c.h.b16 %v8994
  %v9195 = vunpack.c.l.b16 %v8995
  %v9196 = vunpack.c.h.b16 %v8995
  %v9197 = vunpack.c.l.b16 %v8996
  %v9198 = vunpack.c.h.b16 %v8996
  %v9199 = vunpack.c.l.b16 %v8997
  %v9200 = vunpack.c.h.b16 %v8997
  %v9201 = vunpack.c.l.b16 %v8998
  %v9202 = vunpack.c.h.b16 %v8998
  %v9203 = vunpack.c.l.b16 %v8999
  %v9204 = vunpack.c.h.b16 %v8999
  %v9205 = vunpack.c.l.b16 %v9000
  %v9206 = vunpack.c.h.b16 %v9000
  %v9207 = vunpack.c.l.b16 %v9001
  %v9208 = vunpack.c.h.b16 %v9001
  %v9209 = vunpack.c.l.b16 %v9002
  %v9210 = vunpack.c.h.b16 %v9002
  %v9211 = vunpack.c.l.b16 %v9003
  %v9212 = vunpack.c.h.b16 %v9003
  %v9213 = vunpack.c.l.b16 %v9004
  %v9214 = vunpack.c.h.b16 %v9004
  %v9215 = vunpack.c.l.b16 %v9005
  %v9216 = vunpack.c.h.b16 %v9005
  %v9217 = vunpack.c.l.b16 %v9006
  %v9218 = vunpack.c.h.b16 %v9006
  %v9219 = vunpack.c.l.b16 %v9007
  %v9220 = vunpack.c.h.b16 %v9007
  %v9221 = vunpack.c.l.b16 %v9008
  %v9222 = vunpack.c.h.b16 %v9008
  %v9223 = vunpack.c.l.b16 %v9009
  %v9224 = vunpack.c.h.b16 %v9009
  %v9225 = vunpack.c.l.b16 %v9010
  %v9226 = vunpack.c.h.b16 %v9010
  %v9227 = vpack.c.b16 %v9085, %v9083
  %v9228 = vpack.c.b16 %v9086, %v9084
  %v9229 = vpack.c.b16 %v9089, %v9087
  %v9230 = vpack.c.b16 %v9090, %v9088
  %v9231 = vpack.c.b16 %v9093, %v9091
  %v9232 = vpack.c.b16 %v9094, %v9092
  %v9233 = vpack.c.b16 %v9097, %v9095
  %v9234 = vpack.c.b16 %v9098, %v9096
  %v9235 = vpack.c.b16 %v9101, %v9099
  %v9236 = vpack.c.b16 %v9102, %v9100
  %v9237 = vpack.c.b16 %v9105, %v9103
  %v9238 = vpack.c.b16 %v9106, %v9104
  %v9239 = vpack.c.b16 %v9109, %v9107
  %v9240 = vpack.c.b16 %v9110, %v9108
  %v9241 = vpack.c.b16 %v9113, %v9111
  %v9242 = vpack.c.b16 %v9114, %v9112
  %v9243 = vpack.c.b16 %v9117, %v9115
  %v9244 = vpack.c.b16 %v9118, %v9116
  %v9245 = vpack.c.b16 %v9121, %v9119
  %v9246 = vpack.c.b16 %v9122, %v9120
  %v9247 = vpack.c.b16 %v9125, %v9123
  %v9248 = vpack.c.b16 %v9126, %v9124
  %v9249 = vpack.c.b16 %v9129, %v9127
  %v9250 = vpack.c.b16 %v9130, %v9128
  %v9251 = vpack.c.b16 %v9133, %v9131
  %v9252 = vpack.c.b16 %v9134, %v9132
  %v9253 = vpack.c.b16 %v9137, %v9135
  %v9254 = vpack.c.b16 %v9138, %v9136
  %v9255 = vpack.c.b16 %v9141, %v9139
  %v9256 = vpack.c.b16 %v9142, %v9140
  %v9257 = vpack.c.b16 %v9145, %v9143
  %v9258 = vpack.c.b16 %v9146, %v9144
  %v9259 = vpack.c.b16 %v9149, %v9147
  %v9260 = vpack.c.b16 %v9150, %v9148
  %v9261 = vpack.c.b16 %v9153, %v9151
  %v9262 = vpack.c.b16 %v9154, %v9152
  %v9263 = vpack.c.b16 %v9157, %v9155
  %v9264 = vpack.c.b16 %v9158, %v9156
  %v9265 = vpack.c.b16 %v9161, %v9159
  %v9266 = vpack.c.b16 %v9162, %v9160
  %v9267 = vpack.c.b16 %v9165, %v9163
  %v9268 = vpack.c.b16 %v9166, %v9164
  %v9269 = vpack.c.b16 %v9169, %v9167
  %v9270 = vpack.c.b16 %v9170, %v9168
  %v9271 = vpack.c.b16 %v9173, %v9171
  %v9272 = vpack.c.b16 %v9174, %v9172
  %v9273 = vpack.c.b16 %v9177, %v9175
  %v9274 = vpack.c.b16 %v9178, %v9176
  %v9275 = vpack.c.b16 %v9181, %v9179
  %v9276 = vpack.c.b16 %v9182, %v9180
  %v9277 = vpack.c.b16 %v9185, %v9183
  %v9278 = vpack.c.b16 %v9186, %v9184
  %v9279 = vpack.c.b16 %v9189, %v9187
  %v9280 = vpack.c.b16 %v9190, %v9188
  %v9281 = vpack.c.b16 %v9193, %v9191
  %v9282 = vpack.c.b16 %v9194, %v9192
  %v9283 = vpack.c.b16 %v9197, %v9195
  %v9284 = vpack.c.b16 %v9198, %v9196
  %v9285 = vpack.c.b16 %v9201, %v9199
  %v9286 = vpack.c.b16 %v9202, %v9200
  %v9287 = vpack.c.b16 %v9205, %v9203
  %v9288 = vpack.c.b16 %v9206, %v9204
  %v9289 = vpack.c.b16 %v9209, %v9207
  %v9290 = vpack.c.b16 %v9210, %v9208
  %v9291 = vpack.c.b16 %v9213, %v9211
  %v9292 = vpack.c.b16 %v9214, %v9212
  %v9293 = vpack.c.b16 %v9217, %v9215
  %v9294 = vpack.c.b16 %v9218, %v9216
  %v9295 = vpack.c.b16 %v9221, %v9219
  %v9296 = vpack.c.b16 %v9222, %v9220
  %v9297 = vpack.c.b16 %v9225, %v9223
  %v9298 = vpack.c.b16 %v9226, %v9224
  %v9370 = vsel %vm8378, %v8933, 0
  %v9373 = vsel %vm8378, %v8938, 0
  %vm9375 = vcmask 1045504
  %vm9376 = vcmask 1046528
  %v9377 = vsel %vm9375, 4294967295, 65535
  %v9378 = vsel %vm9376, %v9377, 0
  %v9380 = vand.u32 %v9297, %v9378
  %v9383 = vand.u32 %v9298, %v9378
  %9385 = vmatprep.subr.bf16.mxu0 %v9228
  %9386 = vmatpush1.bf16.msra.mxu0 %v9227
  %9387 = vmatprep.subr.bf16.mxu0 %v9230
  %9388 = vmatpush1.bf16.msra.mxu0 %v9229
  %9389 = vmatprep.subr.bf16.mxu0 %v9232
  %9390 = vmatpush1.bf16.msra.mxu0 %v9231
  %9391 = vmatprep.subr.bf16.mxu0 %v9234
  %9392 = vmatpush1.bf16.msra.mxu0 %v9233
  %9393 = vmatprep.subr.bf16.mxu0 %v9236
  %9394 = vmatpush1.bf16.msra.mxu0 %v9235
  %9395 = vmatprep.subr.bf16.mxu0 %v9238
  %9396 = vmatpush1.bf16.msra.mxu0 %v9237
  %9397 = vmatprep.subr.bf16.mxu0 %v9240
  %9398 = vmatpush1.bf16.msra.mxu0 %v9239
  %9399 = vmatprep.subr.bf16.mxu0 %v9242
  %9400 = vmatpush1.bf16.msra.mxu0 %v9241
  %9401 = vmatprep.subr.bf16.mxu0 %v9244
  %9402 = vmatpush1.bf16.msra.mxu0 %v9243
  %9403 = vmatprep.subr.bf16.mxu0 %v9246
  %9404 = vmatpush1.bf16.msra.mxu0 %v9245
  %9405 = vmatprep.subr.bf16.mxu0 %v9248
  %9406 = vmatpush1.bf16.msra.mxu0 %v9247
  %9407 = vmatprep.subr.bf16.mxu0 %v9250
  %9408 = vmatpush1.bf16.msra.mxu0 %v9249
  %9409 = vmatprep.subr.bf16.mxu0 %v9252
  %9410 = vmatpush1.bf16.msra.mxu0 %v9251
  %9411 = vmatprep.subr.bf16.mxu0 %v9254
  %9412 = vmatpush1.bf16.msra.mxu0 %v9253
  %9413 = vmatprep.subr.bf16.mxu0 %v9256
  %9414 = vmatpush1.bf16.msra.mxu0 %v9255
  %9415 = vmatprep.subr.bf16.mxu0 %v9258
  %9416 = vmatpush1.bf16.msra.mxu0 %v9257
  %9417 = vmatprep.mubr.bf16.mxu0 %v8930
  %9418 = vmatmul.mubr.bf16.gmra.mrb[0].mxu0 %v8929
  %v9419 = vpop.f32.mrb[0].mxu0
  %v9420 = vadd.f32 0.0, %v9419
  %v9421 = vpop.f32.mrb[0].mxu0
  %v9422 = vadd.f32 0.0, %v9421
  %v9423 = vpop.f32.mrb[0].mxu0
  %v9424 = vadd.f32 0.0, %v9423
  %v9425 = vpop.f32.mrb[0].mxu0
  %v9426 = vadd.f32 0.0, %v9425
  %9427 = vmatprep.mubr.bf16.mxu0 %v8935
  %9428 = vmatmul.mubr.bf16.gmra.mrb[0].mxu0 %v8934
  %v9429 = vpop.f32.mrb[0].mxu0
  %v9430 = vadd.f32 0.0, %v9429
  %v9431 = vpop.f32.mrb[0].mxu0
  %v9432 = vadd.f32 0.0, %v9431
  %v9433 = vpop.f32.mrb[0].mxu0
  %v9434 = vadd.f32 0.0, %v9433
  %v9435 = vpop.f32.mrb[0].mxu0
  %v9436 = vadd.f32 0.0, %v9435
  %9437 = vdwg.mxu0
  %9438 = vmatprep.subr.bf16.mxu0 %v9260
  %9439 = vmatpush1.bf16.msra.mxu0 %v9259
  %9440 = vmatprep.subr.bf16.mxu0 %v9262
  %9441 = vmatpush1.bf16.msra.mxu0 %v9261
  %9442 = vmatprep.subr.bf16.mxu0 %v9264
  %9443 = vmatpush1.bf16.msra.mxu0 %v9263
  %9444 = vmatprep.subr.bf16.mxu0 %v9266
  %9445 = vmatpush1.bf16.msra.mxu0 %v9265
  %9446 = vmatprep.subr.bf16.mxu0 %v9268
  %9447 = vmatpush1.bf16.msra.mxu0 %v9267
  %9448 = vmatprep.subr.bf16.mxu0 %v9270
  %9449 = vmatpush1.bf16.msra.mxu0 %v9269
  %9450 = vmatprep.subr.bf16.mxu0 %v9272
  %9451 = vmatpush1.bf16.msra.mxu0 %v9271
  %9452 = vmatprep.subr.bf16.mxu0 %v9274
  %9453 = vmatpush1.bf16.msra.mxu0 %v9273
  %9454 = vmatprep.subr.bf16.mxu0 %v9276
  %9455 = vmatpush1.bf16.msra.mxu0 %v9275
  %9456 = vmatprep.subr.bf16.mxu0 %v9278
  %9457 = vmatpush1.bf16.msra.mxu0 %v9277
  %9458 = vmatprep.subr.bf16.mxu0 %v9280
  %9459 = vmatpush1.bf16.msra.mxu0 %v9279
  %9460 = vmatprep.subr.bf16.mxu0 %v9282
  %9461 = vmatpush1.bf16.msra.mxu0 %v9281
  %9462 = vmatprep.subr.bf16.mxu0 %v9284
  %9463 = vmatpush1.bf16.msra.mxu0 %v9283
  %9464 = vmatprep.subr.bf16.mxu0 %v9286
  %9465 = vmatpush1.bf16.msra.mxu0 %v9285
  %9466 = vmatprep.subr.bf16.mxu0 %v9288
  %9467 = vmatpush1.bf16.msra.mxu0 %v9287
  %9468 = vmatprep.subr.bf16.mxu0 %v9290
  %9469 = vmatpush1.bf16.msra.mxu0 %v9289
  %9470 = vmatprep.mubr.bf16.mxu0 %v8932
  %9471 = vmatmul.mubr.bf16.gmra.mrb[0].mxu0 %v8931
  %v9472 = vpop.f32.mrb[0].mxu0
  %v9473 = vadd.f32 %v9420, %v9472
  %v9474 = vpop.f32.mrb[0].mxu0
  %v9475 = vadd.f32 %v9422, %v9474
  %v9476 = vpop.f32.mrb[0].mxu0
  %v9477 = vadd.f32 %v9424, %v9476
  %v9478 = vpop.f32.mrb[0].mxu0
  %v9479 = vadd.f32 %v9426, %v9478
  %9480 = vmatprep.mubr.bf16.mxu0 %v8937
  %9481 = vmatmul.mubr.bf16.gmra.mrb[0].mxu0 %v8936
  %v9482 = vpop.f32.mrb[0].mxu0
  %v9483 = vadd.f32 %v9430, %v9482
  %v9484 = vpop.f32.mrb[0].mxu0
  %v9485 = vadd.f32 %v9432, %v9484
  %v9486 = vpop.f32.mrb[0].mxu0
  %v9487 = vadd.f32 %v9434, %v9486
  %v9488 = vpop.f32.mrb[0].mxu0
  %v9489 = vadd.f32 %v9436, %v9488
  %9490 = vdwg.mxu0
  %9491 = vmatprep.subr.bf16.mxu0 %v9292
  %9492 = vmatpush1.bf16.msra.mxu0 %v9291
  %9493 = vmatprep.subr.bf16.mxu0 %v9294
  %9494 = vmatpush1.bf16.msra.mxu0 %v9293
  %9495 = vmatprep.subr.bf16.mxu0 %v9296
  %9496 = vmatpush1.bf16.msra.mxu0 %v9295
  %9497 = vmatprep.subr.bf16.mxu0 %v9383
  %9498 = vmatpush1.bf16.msra.mxu0 %v9380
  %9499 = vmatprep.subr.bf16.mxu0 0
  %9500 = vmatpush1.bf16.msra.mxu0 0
  %9501 = vmatprep.subr.bf16.mxu0 0
  %9502 = vmatpush1.bf16.msra.mxu0 0
  %9503 = vmatprep.subr.bf16.mxu0 0
  %9504 = vmatpush1.bf16.msra.mxu0 0
  %9505 = vmatprep.subr.bf16.mxu0 0
  %9506 = vmatpush1.bf16.msra.mxu0 0
  %9507 = vmatprep.subr.bf16.mxu0 0
  %9508 = vmatpush1.bf16.msra.mxu0 0
  %9509 = vmatprep.subr.bf16.mxu0 0
  %9510 = vmatpush1.bf16.msra.mxu0 0
  %9511 = vmatprep.subr.bf16.mxu0 0
  %9512 = vmatpush1.bf16.msra.mxu0 0
  %9513 = vmatprep.subr.bf16.mxu0 0
  %9514 = vmatpush1.bf16.msra.mxu0 0
  %9515 = vmatprep.subr.bf16.mxu0 0
  %9516 = vmatpush1.bf16.msra.mxu0 0
  %9517 = vmatprep.subr.bf16.mxu0 0
  %9518 = vmatpush1.bf16.msra.mxu0 0
  %9519 = vmatprep.subr.bf16.mxu0 0
  %9520 = vmatpush1.bf16.msra.mxu0 0
  %9521 = vmatprep.subr.bf16.mxu0 0
  %9522 = vmatpush1.bf16.msra.mxu0 0
  %9523 = vmatprep.mubr.bf16.mxu0 0
  %9524 = vmatmul.mubr.bf16.gmra.mrb[0].mxu0 %v9370
  %v9525 = vpop.f32.mrb[0].mxu0
  %v9526 = vadd.f32 %v9473, %v9525
  %v9527 = vpop.f32.mrb[0].mxu0
  %v9528 = vadd.f32 %v9475, %v9527
  %v9529 = vpop.f32.mrb[0].mxu0
  %v9530 = vadd.f32 %v9477, %v9529
  %v9531 = vpop.f32.mrb[0].mxu0
  %v9532 = vadd.f32 %v9479, %v9531
  %9533 = vmatprep.mubr.bf16.mxu0 0
  %9534 = vmatmul.mubr.bf16.gmra.mrb[0].mxu0 %v9373
  %v9535 = vpop.f32.mrb[0].mxu0
  %v9536 = vadd.f32 %v9483, %v9535
  %v9537 = vpop.f32.mrb[0].mxu0
  %v9538 = vadd.f32 %v9485, %v9537
  %v9539 = vpop.f32.mrb[0].mxu0
  %v9540 = vadd.f32 %v9487, %v9539
  %v9541 = vpop.f32.mrb[0].mxu0
  %v9542 = vadd.f32 %v9489, %v9541
  %9543 = vdwg.mxu0
  %v9544 = vpack.c.bf16 %v9530, %v9526
  %v9545 = vpack.c.bf16 %v9532, %v9528
  %v9546 = vpack.c.bf16 %v9540, %v9536
  %v9547 = vpack.c.bf16 %v9542, %v9538
  %v9548 = vld [vmem:[%s5] sm:$0xf]
  %v9549 = vld [vmem:[%s5 + $0x4] sm:$0xf]
  %v9550 = vld [vmem:[%s5 + $0x8] sm:$0xf]
  %v9551 = vld [vmem:[%s5 + $0xc] sm:$0xf]
  %v9552 = vld [vmem:[%s5 + $0x10] sm:$0xf]
  %v9553 = vld [vmem:[%s5 + $0x14] sm:$0xf]
  %v9554 = vld [vmem:[%s6] sm:$0xff]
  %v9555 = vld [vmem:[%s6 + $0x8] sm:$0xff]
  %v9556 = vld [vmem:[%s6 + $0x10] sm:$0xff]
  %v9557 = vld [vmem:[%s6 + $0x18] sm:$0xff]
  %v9558 = vld [vmem:[%s6 + $0x20] sm:$0xff]
  %v9559 = vld [vmem:[%s6 + $0x28] sm:$0xff]
  %9561 = vset.pattern.permute.xlu0 0
  %9562 = vperm.xlu0 %9561, %v9554
  %v9563 = vpop.permute.xlu0 %9562
  %9566 = vset.pattern.permute.xlu0 0
  %9567 = vperm.xlu0 %9566, %v9555
  %v9568 = vpop.permute.xlu0 %9567
  %9571 = vset.pattern.permute.xlu0 0
  %9572 = vperm.xlu0 %9571, %v9556
  %v9573 = vpop.permute.xlu0 %9572
  %9576 = vset.pattern.permute.xlu0 0
  %9577 = vperm.xlu0 %9576, %v9557
  %v9578 = vpop.permute.xlu0 %9577
  %9581 = vset.pattern.permute.xlu0 0
  %9582 = vperm.xlu0 %9581, %v9558
  %v9583 = vpop.permute.xlu0 %9582
  %9586 = vset.pattern.permute.xlu0 0
  %9587 = vperm.xlu0 %9586, %v9559
  %v9588 = vpop.permute.xlu0 %9587
  %v9596 = vunpack.c.l.b16 %v9548
  %v9597 = vunpack.c.l.b16 %v9549
  %v9598 = vunpack.c.l.b16 %v9550
  %v9599 = vunpack.c.l.b16 %v9551
  %v9600 = vunpack.c.l.b16 %v9552
  %v9601 = vunpack.c.l.b16 %v9553
  %v9602 = vpack.c.b16 %v9597, %v9596
  %v9603 = vpack.c.b16 %v9599, %v9598
  %v9604 = vpack.c.b16 %v9601, %v9600
  %vm9605 = vcmask 261120
  %v9607 = vsel %vm9605, %v9602, 0
  %v9610 = vsel %vm9605, %v9603, 0
  %v9613 = vsel %vm9605, %v9604, 0
  %9615 = vmatprep.subr.bf16.mxu0 %v9545
  %9616 = vmatpush1.bf16.msra.mxu0 %v9544
  %9617 = vmatprep.subr.bf16.mxu0 %v9547
  %9618 = vmatpush1.bf16.msra.mxu0 %v9546
  %9619 = vmatprep.subr.bf16.mxu0 0
  %9620 = vmatpush1.bf16.msra.mxu0 0
  %9621 = vmatprep.subr.bf16.mxu0 0
  %9622 = vmatpush1.bf16.msra.mxu0 0
  %9623 = vmatprep.subr.bf16.mxu0 0
  %9624 = vmatpush1.bf16.msra.mxu0 0
  %9625 = vmatprep.subr.bf16.mxu0 0
  %9626 = vmatpush1.bf16.msra.mxu0 0
  %9627 = vmatprep.subr.bf16.mxu0 0
  %9628 = vmatpush1.bf16.msra.mxu0 0
  %9629 = vmatprep.subr.bf16.mxu0 0
  %9630 = vmatpush1.bf16.msra.mxu0 0
  %9631 = vmatprep.subr.bf16.mxu0 0
  %9632 = vmatpush1.bf16.msra.mxu0 0
  %9633 = vmatprep.subr.bf16.mxu0 0
  %9634 = vmatpush1.bf16.msra.mxu0 0
  %9635 = vmatprep.subr.bf16.mxu0 0
  %9636 = vmatpush1.bf16.msra.mxu0 0
  %9637 = vmatprep.subr.bf16.mxu0 0
  %9638 = vmatpush1.bf16.msra.mxu0 0
  %9639 = vmatprep.subr.bf16.mxu0 0
  %9640 = vmatpush1.bf16.msra.mxu0 0
  %9641 = vmatprep.subr.bf16.mxu0 0
  %9642 = vmatpush1.bf16.msra.mxu0 0
  %9643 = vmatprep.subr.bf16.mxu0 0
  %9644 = vmatpush1.bf16.msra.mxu0 0
  %9645 = vmatprep.subr.bf16.mxu0 0
  %9646 = vmatpush1.bf16.msra.mxu0 0
  %9647 = vmatprep.mubr.bf16.mxu0 0
  %9648 = vmatmul.mubr.bf16.gmra.mrb[0].mxu0 %v9607
  %v9649 = vpop.f32.mrb[0].mxu0
  %v9650 = vadd.f32 %v9563, %v9649
  %v9651 = vpop.f32.mrb[0].mxu0
  %v9652 = vadd.f32 %v9563, %v9651
  %v9653 = vpop.f32.mrb[0].mxu0
  %v9654 = vadd.f32 %v9568, %v9653
  %v9655 = vpop.f32.mrb[0].mxu0
  %v9656 = vadd.f32 %v9568, %v9655
  %9657 = vmatprep.mubr.bf16.mxu0 0
  %9658 = vmatmul.mubr.bf16.gmra.mrb[0].mxu0 %v9610
  %v9659 = vpop.f32.mrb[0].mxu0
  %v9660 = vadd.f32 %v9573, %v9659
  %v9661 = vpop.f32.mrb[0].mxu0
  %v9662 = vadd.f32 %v9573, %v9661
  %v9663 = vpop.f32.mrb[0].mxu0
  %v9664 = vadd.f32 %v9578, %v9663
  %v9665 = vpop.f32.mrb[0].mxu0
  %v9666 = vadd.f32 %v9578, %v9665
  %9667 = vmatprep.mubr.bf16.mxu0 0
  %9668 = vmatmul.mubr.bf16.gmra.mrb[0].mxu0 %v9613
  %v9669 = vpop.f32.mrb[0].mxu0
  %v9670 = vadd.f32 %v9583, %v9669
  %v9671 = vpop.f32.mrb[0].mxu0
  %v9672 = vadd.f32 %v9583, %v9671
  %v9673 = vpop.f32.mrb[0].mxu0
  %v9674 = vadd.f32 %v9588, %v9673
  %v9675 = vpop.f32.mrb[0].mxu0
  %v9676 = vadd.f32 %v9588, %v9675
  %9677 = vdwg.mxu0
  %v9678 = vmax.f32 %v9650, 0.0
  %v9679 = vmax.f32 %v9652, 0.0
  %v9680 = vmax.f32 %v9654, 0.0
  %v9681 = vmax.f32 %v9656, 0.0
  %v9682 = vmax.f32 %v9660, 0.0
  %v9683 = vmax.f32 %v9662, 0.0
  %v9684 = vmax.f32 %v9664, 0.0
  %v9685 = vmax.f32 %v9666, 0.0
  %v9686 = vmax.f32 %v9670, 0.0
  %v9687 = vmax.f32 %v9672, 0.0
  %v9688 = vmax.f32 %v9674, 0.0
  %v9689 = vmax.f32 %v9676, 0.0
  %v9690 = vpack.c.bf16 %v9680, %v9678
  %v9691 = vpack.c.bf16 %v9681, %v9679
  %v9692 = vpack.c.bf16 %v9684, %v9682
  %v9693 = vpack.c.bf16 %v9685, %v9683
  %v9694 = vpack.c.bf16 %v9688, %v9686
  %v9695 = vpack.c.bf16 %v9689, %v9687
  %v9696 = vld [vmem:[%s8] sm:$0xff]
  %v9697 = vld [vmem:[%s8 + $0x8] sm:$0xff]
  %v9698 = vld [vmem:[%s8 + $0x10] sm:$0xff]
  %v9699 = vld [vmem:[%s8 + $0x18] sm:$0xff]
  %v9700 = vld [vmem:[%s8 + $0x20] sm:$0xff]
  %v9701 = vld [vmem:[%s8 + $0x28] sm:$0xff]
  %v9702 = vld [vmem:[%s8 + $0x30] sm:$0xff]
  %v9703 = vld [vmem:[%s8 + $0x38] sm:$0xff]
  %v9704 = vld [vmem:[%s8 + $0x40] sm:$0xff]
  %v9705 = vld [vmem:[%s8 + $0x48] sm:$0xff]
  %v9706 = vld [vmem:[%s8 + $0x50] sm:$0xff]
  %v9707 = vld [vmem:[%s8 + $0x58] sm:$0xff]
  %v9708 = vld [vmem:[%s8 + $0x60] sm:$0xff]
  %v9709 = vld [vmem:[%s8 + $0x68] sm:$0xff]
  %v9710 = vld [vmem:[%s8 + $0x70] sm:$0xff]
  %v9711 = vld [vmem:[%s8 + $0x78] sm:$0xff]
  %v9712 = vld [vmem:[%s8 + $0x80] sm:$0xff]
  %v9713 = vld [vmem:[%s8 + $0x88] sm:$0xff]
  %v9714 = vld [vmem:[%s8 + $0x90] sm:$0xff]
  %v9715 = vld [vmem:[%s8 + $0x98] sm:$0xff]
  %v9716 = vld [vmem:[%s8 + $0xa0] sm:$0xff]
  %v9717 = vld [vmem:[%s8 + $0xa8] sm:$0xff]
  %v9718 = vld [vmem:[%s8 + $0xb0] sm:$0xff]
  %v9719 = vld [vmem:[%s8 + $0xb8] sm:$0xff]
  %v9720 = vld [vmem:[%s8 + $0xc0] sm:$0xff]
  %v9721 = vld [vmem:[%s8 + $0xc8] sm:$0xff]
  %v9722 = vld [vmem:[%s8 + $0xd0] sm:$0xff]
  %v9723 = vld [vmem:[%s8 + $0xd8] sm:$0xff]
  %v9724 = vld [vmem:[%s8 + $0xe0] sm:$0xff]
  %v9725 = vld [vmem:[%s8 + $0xe8] sm:$0xff]
  %v9726 = vld [vmem:[%s8 + $0xf0] sm:$0xff]
  %v9727 = vld [vmem:[%s8 + $0xf8] sm:$0xff]
  %v9728 = vld [vmem:[%s8 + $0x100] sm:$0xff]
  %v9729 = vld [vmem:[%s8 + $0x108] sm:$0xff]
  %v9730 = vld [vmem:[%s8 + $0x110] sm:$0xff]
  %v9731 = vld [vmem:[%s8 + $0x118] sm:$0xff]
  %v9732 = vld [vmem:[%s9] sm:$0xf]
  %v9734 = vlaneseq
  %v9735 = vshrl.u32 %v9734, 7
  %v9736 = vsub.s32 0, %v9735
  %v9737 = vrot.slane %v9732, %v9736
  %v9738 = vlaneseq
  %v9739 = vshrl.u32 %v9738, 7
  %v9740 = vsub.s32 1, %v9739
  %v9741 = vrot.slane %v9732, %v9740
  %v9742 = vlaneseq
  %v9743 = vshrl.u32 %v9742, 7
  %v9744 = vsub.s32 2, %v9743
  %v9745 = vrot.slane %v9732, %v9744
  %v9746 = vlaneseq
  %v9747 = vshrl.u32 %v9746, 7
  %v9748 = vsub.s32 3, %v9747
  %v9749 = vrot.slane %v9732, %v9748
  %v9790 = vunpack.c.l.b16 %v9696
  %v9791 = vunpack.c.h.b16 %v9696
  %v9792 = vunpack.c.l.b16 %v9697
  %v9793 = vunpack.c.h.b16 %v9697
  %v9794 = vunpack.c.l.b16 %v9698
  %v9795 = vunpack.c.h.b16 %v9698
  %v9796 = vunpack.c.l.b16 %v9699
  %v9797 = vunpack.c.h.b16 %v9699
  %v9798 = vunpack.c.l.b16 %v9700
  %v9799 = vunpack.c.h.b16 %v9700
  %v9800 = vunpack.c.l.b16 %v9701
  %v9801 = vunpack.c.h.b16 %v9701
  %v9802 = vunpack.c.l.b16 %v9702
  %v9803 = vunpack.c.h.b16 %v9702
  %v9804 = vunpack.c.l.b16 %v9703
  %v9805 = vunpack.c.h.b16 %v9703
  %v9806 = vunpack.c.l.b16 %v9704
  %v9807 = vunpack.c.h.b16 %v9704
  %v9808 = vunpack.c.l.b16 %v9705
  %v9809 = vunpack.c.h.b16 %v9705
  %v9810 = vunpack.c.l.b16 %v9706
  %v9811 = vunpack.c.h.b16 %v9706
  %v9812 = vunpack.c.l.b16 %v9707
  %v9813 = vunpack.c.h.b16 %v9707
  %v9814 = vunpack.c.l.b16 %v9708
  %v9815 = vunpack.c.h.b16 %v9708
  %v9816 = vunpack.c.l.b16 %v9709
  %v9817 = vunpack.c.h.b16 %v9709
  %v9818 = vunpack.c.l.b16 %v9710
  %v9819 = vunpack.c.h.b16 %v9710
  %v9820 = vunpack.c.l.b16 %v9711
  %v9821 = vunpack.c.h.b16 %v9711
  %v9822 = vunpack.c.l.b16 %v9712
  %v9823 = vunpack.c.h.b16 %v9712
  %v9824 = vunpack.c.l.b16 %v9713
  %v9825 = vunpack.c.h.b16 %v9713
  %v9826 = vunpack.c.l.b16 %v9714
  %v9827 = vunpack.c.h.b16 %v9714
  %v9828 = vunpack.c.l.b16 %v9715
  %v9829 = vunpack.c.h.b16 %v9715
  %v9830 = vunpack.c.l.b16 %v9716
  %v9831 = vunpack.c.h.b16 %v9716
  %v9832 = vunpack.c.l.b16 %v9717
  %v9833 = vunpack.c.h.b16 %v9717
  %v9834 = vunpack.c.l.b16 %v9718
  %v9835 = vunpack.c.h.b16 %v9718
  %v9836 = vunpack.c.l.b16 %v9719
  %v9837 = vunpack.c.h.b16 %v9719
  %v9838 = vunpack.c.l.b16 %v9720
  %v9839 = vunpack.c.h.b16 %v9720
  %v9840 = vunpack.c.l.b16 %v9721
  %v9841 = vunpack.c.h.b16 %v9721
  %v9842 = vunpack.c.l.b16 %v9722
  %v9843 = vunpack.c.h.b16 %v9722
  %v9844 = vunpack.c.l.b16 %v9723
  %v9845 = vunpack.c.h.b16 %v9723
  %v9846 = vunpack.c.l.b16 %v9724
  %v9847 = vunpack.c.h.b16 %v9724
  %v9848 = vunpack.c.l.b16 %v9725
  %v9849 = vunpack.c.h.b16 %v9725
  %v9850 = vunpack.c.l.b16 %v9726
  %v9851 = vunpack.c.h.b16 %v9726
  %v9852 = vunpack.c.l.b16 %v9727
  %v9853 = vunpack.c.h.b16 %v9727
  %v9854 = vunpack.c.l.b16 %v9728
  %v9855 = vunpack.c.h.b16 %v9728
  %v9856 = vunpack.c.l.b16 %v9729
  %v9857 = vunpack.c.h.b16 %v9729
  %v9858 = vunpack.c.l.b16 %v9730
  %v9859 = vunpack.c.h.b16 %v9730
  %v9860 = vunpack.c.l.b16 %v9731
  %v9861 = vunpack.c.h.b16 %v9731
  %v9862 = vpack.c.b16 %v9794, %v9790
  %v9863 = vpack.c.b16 %v9795, %v9791
  %v9864 = vpack.c.b16 %v9796, %v9792
  %v9865 = vpack.c.b16 %v9797, %v9793
  %v9866 = vpack.c.b16 %v9802, %v9798
  %v9867 = vpack.c.b16 %v9803, %v9799
  %v9868 = vpack.c.b16 %v9804, %v9800
  %v9869 = vpack.c.b16 %v9805, %v9801
  %v9870 = vpack.c.b16 %v9810, %v9806
  %v9871 = vpack.c.b16 %v9811, %v9807
  %v9872 = vpack.c.b16 %v9812, %v9808
  %v9873 = vpack.c.b16 %v9813, %v9809
  %v9874 = vpack.c.b16 %v9818, %v9814
  %v9875 = vpack.c.b16 %v9819, %v9815
  %v9876 = vpack.c.b16 %v9820, %v9816
  %v9877 = vpack.c.b16 %v9821, %v9817
  %v9878 = vpack.c.b16 %v9826, %v9822
  %v9879 = vpack.c.b16 %v9827, %v9823
  %v9880 = vpack.c.b16 %v9828, %v9824
  %v9881 = vpack.c.b16 %v9829, %v9825
  %v9882 = vpack.c.b16 %v9834, %v9830
  %v9883 = vpack.c.b16 %v9835, %v9831
  %v9884 = vpack.c.b16 %v9836, %v9832
  %v9885 = vpack.c.b16 %v9837, %v9833
  %v9886 = vpack.c.b16 %v9842, %v9838
  %v9887 = vpack.c.b16 %v9843, %v9839
  %v9888 = vpack.c.b16 %v9844, %v9840
  %v9889 = vpack.c.b16 %v9845, %v9841
  %v9890 = vpack.c.b16 %v9850, %v9846
  %v9891 = vpack.c.b16 %v9851, %v9847
  %v9892 = vpack.c.b16 %v9852, %v9848
  %v9893 = vpack.c.b16 %v9853, %v9849
  %v9894 = vpack.c.b16 %v9858, %v9854
  %v9895 = vpack.c.b16 %v9859, %v9855
  %v9896 = vpack.c.b16 %v9860, %v9856
  %v9897 = vpack.c.b16 %v9861, %v9857
  %v9935 = vsel %vm8747, %v9691, 0
  %v9938 = vsel %vm8747, %v9693, 0
  %v9941 = vsel %vm8747, %v9695, 0
  %9943 = vmatprep.subr.bf16.mxu0 %v9863
  %9944 = vmatpush1.bf16.msra.mxu0 %v9862
  %9945 = vmatprep.subr.bf16.mxu0 %v9867
  %9946 = vmatpush1.bf16.msra.mxu0 %v9866
  %9947 = vmatprep.subr.bf16.mxu0 %v9871
  %9948 = vmatpush1.bf16.msra.mxu0 %v9870
  %9949 = vmatprep.subr.bf16.mxu0 %v9875
  %9950 = vmatpush1.bf16.msra.mxu0 %v9874
  %9951 = vmatprep.subr.bf16.mxu0 %v9879
  %9952 = vmatpush1.bf16.msra.mxu0 %v9878
  %9953 = vmatprep.subr.bf16.mxu0 %v9883
  %9954 = vmatpush1.bf16.msra.mxu0 %v9882
  %9955 = vmatprep.subr.bf16.mxu0 %v9887
  %9956 = vmatpush1.bf16.msra.mxu0 %v9886
  %9957 = vmatprep.subr.bf16.mxu0 %v9891
  %9958 = vmatpush1.bf16.msra.mxu0 %v9890
  %9959 = vmatprep.subr.bf16.mxu0 %v9895
  %9960 = vmatpush1.bf16.msra.mxu0 %v9894
  %9961 = vmatprep.subr.bf16.mxu0 0
  %9962 = vmatpush1.bf16.msra.mxu0 0
  %9963 = vmatprep.subr.bf16.mxu0 0
  %9964 = vmatpush1.bf16.msra.mxu0 0
  %9965 = vmatprep.subr.bf16.mxu0 0
  %9966 = vmatpush1.bf16.msra.mxu0 0
  %9967 = vmatprep.subr.bf16.mxu0 0
  %9968 = vmatpush1.bf16.msra.mxu0 0
  %9969 = vmatprep.subr.bf16.mxu0 0
  %9970 = vmatpush1.bf16.msra.mxu0 0
  %9971 = vmatprep.subr.bf16.mxu0 0
  %9972 = vmatpush1.bf16.msra.mxu0 0
  %9973 = vmatprep.subr.bf16.mxu0 0
  %9974 = vmatpush1.bf16.msra.mxu0 0
  %9975 = vmatprep.mubr.bf16.mxu0 %v9935
  %9976 = vmatmul.mubr.bf16.gmra.mrb[0].mxu0 %v9690
  %v9977 = vpop.f32.mrb[0].mxu0
  %v9978 = vadd.f32 %v9737, %v9977
  %v9979 = vpop.f32.mrb[0].mxu0
  %v9980 = vadd.f32 %v9741, %v9979
  %v9981 = vpop.f32.mrb[0].mxu0
  %v9982 = vadd.f32 %v9737, %v9981
  %v9983 = vpop.f32.mrb[0].mxu0
  %v9984 = vadd.f32 %v9741, %v9983
  %9985 = vmatprep.mubr.bf16.mxu0 %v9938
  %9986 = vmatmul.mubr.bf16.gmra.mrb[0].mxu0 %v9692
  %v9987 = vpop.f32.mrb[0].mxu0
  %v9988 = vadd.f32 %v9737, %v9987
  %v9989 = vpop.f32.mrb[0].mxu0
  %v9990 = vadd.f32 %v9741, %v9989
  %v9991 = vpop.f32.mrb[0].mxu0
  %v9992 = vadd.f32 %v9737, %v9991
  %v9993 = vpop.f32.mrb[0].mxu0
  %v9994 = vadd.f32 %v9741, %v9993
  %9995 = vmatprep.mubr.bf16.mxu0 %v9941
  %9996 = vmatmul.mubr.bf16.gmra.mrb[0].mxu0 %v9694
  %v9997 = vpop.f32.mrb[0].mxu0
  %v9998 = vadd.f32 %v9737, %v9997
  %v9999 = vpop.f32.mrb[0].mxu0
  %v10000 = vadd.f32 %v9741, %v9999
  %v10001 = vpop.f32.mrb[0].mxu0
  %v10002 = vadd.f32 %v9737, %v10001
  %v10003 = vpop.f32.mrb[0].mxu0
  %v10004 = vadd.f32 %v9741, %v10003
  %10005 = vdwg.mxu0
  %10006 = vmatprep.subr.bf16.mxu0 %v9865
  %10007 = vmatpush1.bf16.msra.mxu0 %v9864
  %10008 = vmatprep.subr.bf16.mxu0 %v9869
  %10009 = vmatpush1.bf16.msra.mxu0 %v9868
  %10010 = vmatprep.subr.bf16.mxu0 %v9873
  %10011 = vmatpush1.bf16.msra.mxu0 %v9872
  %10012 = vmatprep.subr.bf16.mxu0 %v9877
  %10013 = vmatpush1.bf16.msra.mxu0 %v9876
  %10014 = vmatprep.subr.bf16.mxu0 %v9881
  %10015 = vmatpush1.bf16.msra.mxu0 %v9880
  %10016 = vmatprep.subr.bf16.mxu0 %v9885
  %10017 = vmatpush1.bf16.msra.mxu0 %v9884
  %10018 = vmatprep.subr.bf16.mxu0 %v9889
  %10019 = vmatpush1.bf16.msra.mxu0 %v9888
  %10020 = vmatprep.subr.bf16.mxu0 %v9893
  %10021 = vmatpush1.bf16.msra.mxu0 %v9892
  %10022 = vmatprep.subr.bf16.mxu0 %v9897
  %10023 = vmatpush1.bf16.msra.mxu0 %v9896
  %10024 = vmatprep.subr.bf16.mxu0 0
  %10025 = vmatpush1.bf16.msra.mxu0 0
  %10026 = vmatprep.subr.bf16.mxu0 0
  %10027 = vmatpush1.bf16.msra.mxu0 0
  %10028 = vmatprep.subr.bf16.mxu0 0
  %10029 = vmatpush1.bf16.msra.mxu0 0
  %10030 = vmatprep.subr.bf16.mxu0 0
  %10031 = vmatpush1.bf16.msra.mxu0 0
  %10032 = vmatprep.subr.bf16.mxu0 0
  %10033 = vmatpush1.bf16.msra.mxu0 0
  %10034 = vmatprep.subr.bf16.mxu0 0
  %10035 = vmatpush1.bf16.msra.mxu0 0
  %10036 = vmatprep.subr.bf16.mxu0 0
  %10037 = vmatpush1.bf16.msra.mxu0 0
  %10038 = vmatprep.mubr.bf16.mxu0 %v9935
  %10039 = vmatmul.mubr.bf16.gmra.mrb[0].mxu0 %v9690
  %v10040 = vpop.f32.mrb[0].mxu0
  %v10041 = vadd.f32 %v9745, %v10040
  %v10042 = vpop.f32.mrb[0].mxu0
  %v10043 = vadd.f32 %v9749, %v10042
  %v10044 = vpop.f32.mrb[0].mxu0
  %v10045 = vadd.f32 %v9745, %v10044
  %v10046 = vpop.f32.mrb[0].mxu0
  %v10047 = vadd.f32 %v9749, %v10046
  %10048 = vmatprep.mubr.bf16.mxu0 %v9938
  %10049 = vmatmul.mubr.bf16.gmra.mrb[0].mxu0 %v9692
  %v10050 = vpop.f32.mrb[0].mxu0
  %v10051 = vadd.f32 %v9745, %v10050
  %v10052 = vpop.f32.mrb[0].mxu0
  %v10053 = vadd.f32 %v9749, %v10052
  %v10054 = vpop.f32.mrb[0].mxu0
  %v10055 = vadd.f32 %v9745, %v10054
  %v10056 = vpop.f32.mrb[0].mxu0
  %v10057 = vadd.f32 %v9749, %v10056
  %10058 = vmatprep.mubr.bf16.mxu0 %v9941
  %10059 = vmatmul.mubr.bf16.gmra.mrb[0].mxu0 %v9694
  %v10060 = vpop.f32.mrb[0].mxu0
  %v10061 = vadd.f32 %v9745, %v10060
  %v10062 = vpop.f32.mrb[0].mxu0
  %v10063 = vadd.f32 %v9749, %v10062
  %v10064 = vpop.f32.mrb[0].mxu0
  %v10065 = vadd.f32 %v9745, %v10064
  %v10066 = vpop.f32.mrb[0].mxu0
  %v10067 = vadd.f32 %v9749, %v10066
  %10068 = vdwg.mxu0
  %v10069 = vmax.f32 %v9978, 0.0
  %v10070 = vmax.f32 %v9980, 0.0
  %v10071 = vmax.f32 %v10041, 0.0
  %v10072 = vmax.f32 %v10043, 0.0
  %v10073 = vmax.f32 %v9982, 0.0
  %v10074 = vmax.f32 %v9984, 0.0
  %v10075 = vmax.f32 %v10045, 0.0
  %v10076 = vmax.f32 %v10047, 0.0
  %v10077 = vmax.f32 %v9988, 0.0
  %v10078 = vmax.f32 %v9990, 0.0
  %v10079 = vmax.f32 %v10051, 0.0
  %v10080 = vmax.f32 %v10053, 0.0
  %v10081 = vmax.f32 %v9992, 0.0
  %v10082 = vmax.f32 %v9994, 0.0
  %v10083 = vmax.f32 %v10055, 0.0
  %v10084 = vmax.f32 %v10057, 0.0
  %v10085 = vmax.f32 %v9998, 0.0
  %v10086 = vmax.f32 %v10000, 0.0
  %v10087 = vmax.f32 %v10061, 0.0
  %v10088 = vmax.f32 %v10063, 0.0
  %v10089 = vmax.f32 %v10002, 0.0
  %v10090 = vmax.f32 %v10004, 0.0
  %v10091 = vmax.f32 %v10065, 0.0
  %v10092 = vmax.f32 %v10067, 0.0
  %10093 = vst [vmem:[%s10] sm:$0xff] %v10069
  %10094 = vst [vmem:[%s10 + $0x8] sm:$0xff] %v10070
  %10095 = vst [vmem:[%s10 + $0x10] sm:$0xff] %v10071
  %10096 = vst [vmem:[%s10 + $0x18] sm:$0xff] %v10072
  %10097 = vst [vmem:[%s10 + $0x20] sm:$0xff] %v10073
  %10098 = vst [vmem:[%s10 + $0x28] sm:$0xff] %v10074
  %10099 = vst [vmem:[%s10 + $0x30] sm:$0xff] %v10075
  %10100 = vst [vmem:[%s10 + $0x38] sm:$0xff] %v10076
  %10101 = vst [vmem:[%s10 + $0x40] sm:$0xff] %v10077
  %10102 = vst [vmem:[%s10 + $0x48] sm:$0xff] %v10078
  %10103 = vst [vmem:[%s10 + $0x50] sm:$0xff] %v10079
  %10104 = vst [vmem:[%s10 + $0x58] sm:$0xff] %v10080
  %10105 = vst [vmem:[%s10 + $0x60] sm:$0xff] %v10081
  %10106 = vst [vmem:[%s10 + $0x68] sm:$0xff] %v10082
  %10107 = vst [vmem:[%s10 + $0x70] sm:$0xff] %v10083
  %10108 = vst [vmem:[%s10 + $0x78] sm:$0xff] %v10084
  %10109 = vst [vmem:[%s10 + $0x80] sm:$0xff] %v10085
  %10110 = vst [vmem:[%s10 + $0x88] sm:$0xff] %v10086
  %10111 = vst [vmem:[%s10 + $0x90] sm:$0xff] %v10087
  %10112 = vst [vmem:[%s10 + $0x98] sm:$0xff] %v10088
  %10113 = vst [vmem:[%s10 + $0xa0] sm:$0xff] %v10089
  %10114 = vst [vmem:[%s10 + $0xa8] sm:$0xff] %v10090
  %10115 = vst [vmem:[%s10 + $0xb0] sm:$0xff] %v10091
  %10116 = vst [vmem:[%s10 + $0xb8] sm:$0xff] %v10092
  // Predicated region
  $region42: #{model_forward.1} parent=0 // pred_check
    _
  $region43: #{model_forward.1} parent=0 // pred_check_branch
    %10118 = sbr.rel (0) target = $region45
  $region44: #{model_forward.1} parent=0 // pred_region
    _
  $region45: #{model_forward.1} parent=0 // pred_fallthru
    _
  // Predicated region
  $region46: #{model_forward.1} parent=0 // pred_check
    _
  $region47: #{model_forward.1} parent=0 // pred_check_branch
    %10120 = sbr.rel (0) target = $region49
  $region48: #{model_forward.1} parent=0 // pred_region
    _
  $region49: #{model_forward.1} parent=0 // pred_fallthru
    _

</llo_original>
